<compile_context>
chip_gen: v5e
topology: v5e:2x2
jax: 0.10.0
libtpu: 0.0.40
codegen_flags: <defaults>
</compile_context>

<pallas_src>
import functools

import jax
import jax.numpy as jnp
from jax import lax
from jax.experimental import pallas as pl
from jax.experimental.pallas import tpu as pltpu


# ----------------------------------------------------------------------------
# One-time parameter repacking (PyTorch layouts -> kernel layouts)
# ----------------------------------------------------------------------------
def prepare_params(params, obs_shape, use_max_pool):
    """Repack PyTorch-shaped params for the fused kernel.

    conv weights (Cout, Cin, 2, 2) -> (4, Cin, Cout)   (tap-major, t = kh*2+kw)
    mlp weights  (out, in)         -> (in, out); mlp[0] additionally repacked to
                 (Hf*Wf, C3, out) with PyTorch's channel-major flatten folded in.
    biases -> (1, out) rows for broadcasting.
    """
    _, H, W = obs_shape
    conv_w, conv_b = [], []
    for l in (1, 2, 3):
        w = params[f"conv{l}_w"]                       # (Cout, Cin, 2, 2)
        cout, cin_l = w.shape[0], w.shape[1]
        conv_w.append(jnp.transpose(w, (2, 3, 1, 0)).reshape(4, cin_l, cout))
        conv_b.append(params[f"conv{l}_b"].reshape(1, cout))

    # spatial size after the conv stack (mirrors MinigridConv.__init__)
    res_n, res_m = H - 1, W - 1
    if use_max_pool:
        res_n, res_m = res_n // 2, res_m // 2
    res_n, res_m = res_n - 2, res_m - 2
    c3 = conv_w[2].shape[-1]
    P = res_n * res_m

    mlp = []
    for i, (w, b) in enumerate(params["mlp"]):
        wt = w.T                                        # (in, out)
        if i == 0:
            # PyTorch flatten order of the embedding is (c, h, w); fold the
            # reordering into the weight: (emb, out) -> (P, C3, out), P=(h,w).
            wt = wt.reshape(c3, P, -1).transpose(1, 0, 2)
        mlp.append((wt, b.reshape(1, -1)))
    return {"conv_w": tuple(conv_w), "conv_b": tuple(conv_b), "mlp": mlp}


# ----------------------------------------------------------------------------
# Fused forward kernel (use_max_pool=False path)
# ----------------------------------------------------------------------------
def _fused_forward(obs_nchw, prep, *, batch_tile=8):
    B, Cin, H, W = obs_nchw.shape
    conv_w, conv_b, mlp = prep["conv_w"], prep["conv_b"], prep["mlp"]
    num_mlp = len(mlp)
    num_actions = mlp[-1][0].shape[-1]
    c1, c2, c3 = (w.shape[-1] for w in conv_w)
    hid0 = mlp[0][0].shape[-1]

    # ---- layout glue on the (small) input only: NCHW -> NHWC -> (B*H*W, Cin)
    x = jnp.transpose(obs_nchw, (0, 2, 3, 1)).astype(jnp.float32)
    bt = B if B <= batch_tile else batch_tile
    B_pad = pl.cdiv(B, bt) * bt
    assert B_pad == bt or bt % 8 == 0, "batch tile must be a multiple of 8"
    if B_pad != B:
        x = jnp.pad(x, ((0, B_pad - B), (0, 0), (0, 0), (0, 0)))
    x2d = x.reshape(B_pad * H * W, Cin)

    # static geometry of the row-major activation buffers
    HW = H * W
    S = W + 1                      # largest tap shift (dh*W + dw)
    M = bt * HW
    L1, L2, L3 = M - S, M - 2 * S, M - 3 * S
    Hf, Wf = H - 3, W - 3          # conv3 output spatial size
    P = Hf * Wf
    taps = tuple((dh, dw) for dh in (0, 1) for dw in (0, 1))

    def kernel(x_ref, w1_ref, b1_ref, w2_ref, b2_ref, w3_ref, b3_ref, *rest):
        mlp_refs = rest[:2 * num_mlp]
        o_ref = rest[2 * num_mlp]
        s1, s2, s3, emb = rest[2 * num_mlp + 1:]

        def conv(in_ref, w_ref, b_ref, out_ref, L):
            # 2x2 VALID conv + ReLU as 4 accumulated matmuls over shifted
            # row-slices; rows whose (h, w) touch the border hold garbage that
            # is provably never read by later layers.
            acc = None
            for t, (dh, dw) in enumerate(taps):
                s = dh * W + dw
                part = jnp.dot(in_ref[s:s + L, :], w_ref[t],
                               preferred_element_type=jnp.float32)
                acc = part if acc is None else acc + part
            out_ref[...] = jnp.maximum(acc + b_ref[...], 0.0)

        conv(x_ref, w1_ref, b1_ref, s1, L1)
        conv(s1, w2_ref, b2_ref, s2, L2)
        conv(s2, w3_ref, b3_ref, s3, L3)

        # Gather the valid (Hf x Wf) sub-grid of every image into a dense
        # (bt, P, C3) buffer (contiguous row copies only).
        for b in range(bt):
            for h in range(Hf):
                r0 = b * HW + h * W
                emb[b, h * Wf:(h + 1) * Wf, :] = s3[r0:r0 + Wf, :]

        # MLP layer 0: contraction over (spatial position, channel); the
        # channel-major flatten permutation is already baked into w0.
        w0 = mlp_refs[0]
        h0 = jnp.zeros((bt, hid0), jnp.float32)
        for q in range(P):
            h0 = h0 + jnp.dot(emb[:, q, :], w0[q],
                              preferred_element_type=jnp.float32)
        h0 = h0 + mlp_refs[1][...]
        if num_mlp > 1:
            h0 = jnp.maximum(h0, 0.0)

        out = h0
        for i in range(1, num_mlp):
            out = jnp.dot(out, mlp_refs[2 * i][...],
                          preferred_element_type=jnp.float32) + mlp_refs[2 * i + 1][...]
            if i < num_mlp - 1:
                out = jnp.maximum(out, 0.0)
        o_ref[...] = out.astype(o_ref.dtype)

    # ---- specs -------------------------------------------------------------
    in_specs = [pl.BlockSpec((bt * HW, Cin), lambda i: (i, 0))]
    flat_inputs = [x2d]
    for w, b in zip(conv_w, conv_b):
        in_specs.append(pl.BlockSpec(w.shape, lambda i: (0, 0, 0)))
        in_specs.append(pl.BlockSpec(b.shape, lambda i: (0, 0)))
        flat_inputs += [w, b]
    for w, b in mlp:
        if w.ndim == 3:
            in_specs.append(pl.BlockSpec(w.shape, lambda i: (0, 0, 0)))
        else:
            in_specs.append(pl.BlockSpec(w.shape, lambda i: (0, 0)))
        in_specs.append(pl.BlockSpec(b.shape, lambda i: (0, 0)))
        flat_inputs += [w, b]

    # advisory cost estimate for the XLA scheduler
    steps = B_pad // bt
    flops = 2 * (L1 * 4 * Cin * c1 + L2 * 4 * c1 * c2 + L3 * 4 * c2 * c3
                 + bt * P * c3 * hid0)
    prev = hid0
    for w, _ in mlp[1:]:
        flops += 2 * bt * prev * w.shape[-1]
        prev = w.shape[-1]
    flops *= steps
    nbytes = (x2d.size + sum(a.size for a in flat_inputs[1:])
              + B_pad * num_actions) * 4

    out = pl.pallas_call(
        kernel,
        out_shape=jax.ShapeDtypeStruct((B_pad, num_actions), jnp.float32),
        grid_spec=pltpu.PrefetchScalarGridSpec(
            num_scalar_prefetch=0,
            grid=(steps,),
            in_specs=in_specs,
            out_specs=pl.BlockSpec((bt, num_actions), lambda i: (i, 0)),
            scratch_shapes=[
                pltpu.VMEM((L1, c1), jnp.float32),
                pltpu.VMEM((L2, c2), jnp.float32),
                pltpu.VMEM((L3, c3), jnp.float32),
                pltpu.VMEM((bt, P, c3), jnp.float32),
            ]),
        compiler_params=pltpu.CompilerParams(
            dimension_semantics=("parallel",)),
        cost_estimate=pl.CostEstimate(
            flops=int(flops), transcendentals=0, bytes_accessed=int(nbytes)),
    )(*flat_inputs)
    return out[:B]


# ----------------------------------------------------------------------------
# Fallback path for use_max_pool=True (per-layer Pallas matmuls + XLA pooling)
# ----------------------------------------------------------------------------
def _matmul_bias_act_kernel(x_ref, w_ref, b_ref, o_ref, *, apply_relu):
    y = jnp.dot(x_ref[...], w_ref[...], preferred_element_type=jnp.float32)
    y = y + b_ref[...]
    if apply_relu:
        y = jnp.maximum(y, 0.0)
    o_ref[...] = y.astype(o_ref.dtype)


def _matmul_bias_act(x, w, b2d, *, apply_relu):
    M, _ = x.shape
    N = w.shape[1]
    return pl.pallas_call(
        functools.partial(_matmul_bias_act_kernel, apply_relu=apply_relu),
        out_shape=jax.ShapeDtypeStruct((M, N), jnp.float32),
        in_specs=[pl.BlockSpec(memory_space=pltpu.MemorySpace.VMEM)] * 3,
        out_specs=pl.BlockSpec(memory_space=pltpu.MemorySpace.VMEM),
    )(x, w, b2d)


def _max_pool_2x2_nhwc(x):
    N, H, W, C = x.shape
    Hp, Wp = H // 2, W // 2
    return x[:, :Hp * 2, :Wp * 2, :].reshape(N, Hp, 2, Wp, 2, C).max(axis=(2, 4))


def _fallback_forward(obs_nchw, prep):
    x = jnp.transpose(obs_nchw, (0, 2, 3, 1)).astype(jnp.float32)

    def conv(x, w_taps, b2d):
        N, H, W, Cin = x.shape
        Ho, Wo = H - 1, W - 1
        p = jnp.concatenate(
            [x[:, dh:dh + Ho, dw:dw + Wo, :] for dh in (0, 1) for dw in (0, 1)],
            axis=-1).reshape(N * Ho * Wo, 4 * Cin)
        y = _matmul_bias_act(p, w_taps.reshape(4 * Cin, -1), b2d, apply_relu=True)
        return y.reshape(N, Ho, Wo, -1)

    x = conv(x, prep["conv_w"][0], prep["conv_b"][0])
    x = _max_pool_2x2_nhwc(x)
    x = conv(x, prep["conv_w"][1], prep["conv_b"][1])
    x = conv(x, prep["conv_w"][2], prep["conv_b"][2])
    h = x.reshape(x.shape[0], -1)          # NHWC flatten; perm folded into mlp[0]
    mlp = prep["mlp"]
    for i, (w, b2d) in enumerate(mlp):
        wmat = w.reshape(-1, w.shape[-1]) if w.ndim == 3 else w
        h = _matmul_bias_act(h, wmat, b2d, apply_relu=(i < len(mlp) - 1))
    return h


# ----------------------------------------------------------------------------
# Public forward
# ----------------------------------------------------------------------------
def minigrid_formula_dqn_forward(obs_nchw, prep, *, use_max_pool=False,
                                 batch_tile=8):
    if use_max_pool:
        # TODO(synk): the max-pool variant is not fused into the single-kernel
        # path; it uses per-layer Pallas matmul kernels + XLA pooling instead.
        return _fallback_forward(obs_nchw, prep)
    return _fused_forward(obs_nchw, prep, batch_tile=batch_tile)


# ----------------------------------------------------------------------------
# Deterministic parameter init (PyTorch-shaped weights)
# ----------------------------------------------------------------------------
def init_params(key, obs_shape, num_actions, conv_out_channels, inter_lin_out,
                use_max_pool):
    cin, H, W = obs_shape
    c1, c2, c3 = conv_out_channels

    def uinit(k, shape, fan_in):
        bound = 1.0 / float(fan_in) ** 0.5
        return jax.random.uniform(k, shape, jnp.float32, -bound, bound)

    keys = iter(jax.random.split(key, 32))
    params = {
        "conv1_w": uinit(next(keys), (c1, cin, 2, 2), cin * 4),
        "conv1_b": uinit(next(keys), (c1,), cin * 4),
        "conv2_w": uinit(next(keys), (c2, c1, 2, 2), c1 * 4),
        "conv2_b": uinit(next(keys), (c2,), c1 * 4),
        "conv3_w": uinit(next(keys), (c3, c2, 2, 2), c2 * 4),
        "conv3_b": uinit(next(keys), (c3,), c2 * 4),
    }

    res_n, res_m = H - 1, W - 1
    if use_max_pool:
        res_n, res_m = res_n // 2, res_m // 2
    res_n, res_m = res_n - 2, res_m - 2
    emb = res_n * res_m * c3

    sizes = [emb] + list(inter_lin_out) + [num_actions]
    mlp = []
    for fin, fout in zip(sizes[:-1], sizes[1:]):
        mlp.append((uinit(next(keys), (fout, fin), fin),
                    uinit(next(keys), (fout,), fin)))
    params["mlp"] = mlp
    return params


# ----------------------------------------------------------------------------
# Pure-JAX reference (operates on the original PyTorch-layout params)
# ----------------------------------------------------------------------------
def reference_forward(obs_nchw, params, *, use_max_pool=False):
    x = jnp.transpose(obs_nchw, (0, 2, 3, 1)).astype(jnp.float32)

    def conv(x, w, b):
        w_hwio = jnp.transpose(w, (2, 3, 1, 0))
        y = lax.conv_general_dilated(
            x, w_hwio, window_strides=(1, 1), padding="VALID",
            dimension_numbers=("NHWC", "HWIO", "NHWC"))
        return jax.nn.relu(y + b)

    x = conv(x, params["conv1_w"], params["conv1_b"])
    if use_max_pool:
        x = _max_pool_2x2_nhwc(x)
    x = conv(x, params["conv2_w"], params["conv2_b"])
    x = conv(x, params["conv3_w"], params["conv3_b"])
    x = jnp.transpose(x, (0, 3, 1, 2)).reshape(x.shape[0], -1)
    for i, (w, b) in enumerate(params["mlp"]):
        x = x @ w.T + b
        if i != len(params["mlp"]) - 1:
            x = jax.nn.relu(x)
    return x


if __name__ == "__main__":
    obs_shape = (3, 7, 7)
    num_actions = 6
    conv_out_channels = (16, 32, 32)
    inter_lin_out = (64,)
    use_max_pool = False

    key = jax.random.PRNGKey(0)
    k_obs1, k_obs2, k_params = jax.random.split(key, 3)
    params = init_params(k_params, obs_shape, num_actions, conv_out_channels,
                         inter_lin_out, use_max_pool)
    prep = prepare_params(params, obs_shape, use_max_pool)

    fwd = jax.jit(functools.partial(minigrid_formula_dqn_forward,
                                    use_max_pool=use_max_pool, batch_tile=8))

    # batch=16 exercises the multi-step parallel grid; batch=10 exercises the
    # batch-padding path.
    for k_obs, batch in ((k_obs1, 16), (k_obs2, 10)):
        obs = jax.random.normal(k_obs, (batch,) + obs_shape, dtype=jnp.float32)
        out = jax.block_until_ready(fwd(obs, prep))
        ref = reference_forward(obs, params, use_max_pool=use_max_pool)
        assert out.shape == (batch, num_actions), out.shape
        assert jnp.allclose(out, ref, atol=1e-3, rtol=1e-3), \
            f"batch={batch}: max err {jnp.abs(out - ref).max()}"

    print("KERNEL_OK")
</pallas_src>

<mosaic_0001>
module attributes {stable_mosaic.version = 11 : i64} {
  func.func @kernel(%arg0: i32, %arg1: memref<392x3xf32, #tpu.memory_space<vmem>>, %arg2: memref<4x3x16xf32, #tpu.memory_space<vmem>>, %arg3: memref<1x16xf32, #tpu.memory_space<vmem>>, %arg4: memref<4x16x32xf32, #tpu.memory_space<vmem>>, %arg5: memref<1x32xf32, #tpu.memory_space<vmem>>, %arg6: memref<4x32x32xf32, #tpu.memory_space<vmem>>, %arg7: memref<1x32xf32, #tpu.memory_space<vmem>>, %arg8: memref<16x32x64xf32, #tpu.memory_space<vmem>>, %arg9: memref<1x64xf32, #tpu.memory_space<vmem>>, %arg10: memref<64x6xf32, #tpu.memory_space<vmem>>, %arg11: memref<1x6xf32, #tpu.memory_space<vmem>>, %arg12: memref<8x6xf32, #tpu.memory_space<vmem>>, %arg13: memref<384x16xf32, #tpu.memory_space<vmem>>, %arg14: memref<376x32xf32, #tpu.memory_space<vmem>>, %arg15: memref<368x32xf32, #tpu.memory_space<vmem>>, %arg16: memref<8x16x32xf32, #tpu.memory_space<vmem>>) attributes {dimension_semantics = [#tpu.dimension_semantics<parallel>], iteration_bounds = array<i64: 2>, scalar_prefetch = 0 : i64, scratch_operands = 4 : i64, tpu.core_type = #tpu.core_type<tc>, window_params = [{transform_indices = @transform_0, window_bounds = array<i64: 392, 3>}, {pipeline_mode = #tpu.pipeline_mode<synchronous>, transform_indices = @transform_1, window_bounds = array<i64: 4, 3, 16>}, {pipeline_mode = #tpu.pipeline_mode<synchronous>, transform_indices = @transform_2, window_bounds = array<i64: 1, 16>}, {pipeline_mode = #tpu.pipeline_mode<synchronous>, transform_indices = @transform_3, window_bounds = array<i64: 4, 16, 32>}, {pipeline_mode = #tpu.pipeline_mode<synchronous>, transform_indices = @transform_4, window_bounds = array<i64: 1, 32>}, {pipeline_mode = #tpu.pipeline_mode<synchronous>, transform_indices = @transform_5, window_bounds = array<i64: 4, 32, 32>}, {pipeline_mode = #tpu.pipeline_mode<synchronous>, transform_indices = @transform_6, window_bounds = array<i64: 1, 32>}, {pipeline_mode = #tpu.pipeline_mode<synchronous>, transform_indices = @transform_7, window_bounds = array<i64: 16, 32, 64>}, {pipeline_mode = #tpu.pipeline_mode<synchronous>, transform_indices = @transform_8, window_bounds = array<i64: 1, 64>}, {pipeline_mode = #tpu.pipeline_mode<synchronous>, transform_indices = @transform_9, window_bounds = array<i64: 64, 6>}, {pipeline_mode = #tpu.pipeline_mode<synchronous>, transform_indices = @transform_10, window_bounds = array<i64: 1, 6>}, {transform_indices = @transform_11, window_bounds = array<i64: 8, 6>}]} {
    %c0 = arith.constant 0 : index
    %c0_0 = arith.constant 0 : index
    %0 = vector.load %arg1[%c0, %c0_0] : memref<392x3xf32, #tpu.memory_space<vmem>>, vector<384x3xf32>
    %c0_1 = arith.constant 0 : index
    %c0_2 = arith.constant 0 : index
    %c0_3 = arith.constant 0 : index
    %1 = vector.load %arg2[%c0_1, %c0_2, %c0_3] : memref<4x3x16xf32, #tpu.memory_space<vmem>>, vector<1x3x16xf32>
    %2 = vector.shape_cast %1 : vector<1x3x16xf32> to vector<3x16xf32>
    %cst = arith.constant dense<0.000000e+00> : vector<384x16xf32>
    %3 = tpu.matmul %0, %2, %cst {dimension_numbers = #tpu.dot_dimension_numbers<[1], [0], [0], [1], [0, 0, 1, 1], [], []>} : vector<384x3xf32>, vector<3x16xf32>, vector<384x16xf32> -> vector<384x16xf32>
    %c1 = arith.constant 1 : index
    %c0_4 = arith.constant 0 : index
    %4 = vector.load %arg1[%c1, %c0_4] : memref<392x3xf32, #tpu.memory_space<vmem>>, vector<384x3xf32>
    %c1_5 = arith.constant 1 : index
    %c0_6 = arith.constant 0 : index
    %c0_7 = arith.constant 0 : index
    %5 = vector.load %arg2[%c1_5, %c0_6, %c0_7] : memref<4x3x16xf32, #tpu.memory_space<vmem>>, vector<1x3x16xf32>
    %6 = vector.shape_cast %5 : vector<1x3x16xf32> to vector<3x16xf32>
    %cst_8 = arith.constant dense<0.000000e+00> : vector<384x16xf32>
    %7 = tpu.matmul %4, %6, %cst_8 {dimension_numbers = #tpu.dot_dimension_numbers<[1], [0], [0], [1], [0, 0, 1, 1], [], []>} : vector<384x3xf32>, vector<3x16xf32>, vector<384x16xf32> -> vector<384x16xf32>
    %8 = arith.addf %3, %7 : vector<384x16xf32>
    %c7 = arith.constant 7 : index
    %c0_9 = arith.constant 0 : index
    %9 = vector.load %arg1[%c7, %c0_9] : memref<392x3xf32, #tpu.memory_space<vmem>>, vector<384x3xf32>
    %c2 = arith.constant 2 : index
    %c0_10 = arith.constant 0 : index
    %c0_11 = arith.constant 0 : index
    %10 = vector.load %arg2[%c2, %c0_10, %c0_11] : memref<4x3x16xf32, #tpu.memory_space<vmem>>, vector<1x3x16xf32>
    %11 = vector.shape_cast %10 : vector<1x3x16xf32> to vector<3x16xf32>
    %cst_12 = arith.constant dense<0.000000e+00> : vector<384x16xf32>
    %12 = tpu.matmul %9, %11, %cst_12 {dimension_numbers = #tpu.dot_dimension_numbers<[1], [0], [0], [1], [0, 0, 1, 1], [], []>} : vector<384x3xf32>, vector<3x16xf32>, vector<384x16xf32> -> vector<384x16xf32>
    %13 = arith.addf %8, %12 : vector<384x16xf32>
    %c8 = arith.constant 8 : index
    %c0_13 = arith.constant 0 : index
    %14 = vector.load %arg1[%c8, %c0_13] : memref<392x3xf32, #tpu.memory_space<vmem>>, vector<384x3xf32>
    %c3 = arith.constant 3 : index
    %c0_14 = arith.constant 0 : index
    %c0_15 = arith.constant 0 : index
    %15 = vector.load %arg2[%c3, %c0_14, %c0_15] : memref<4x3x16xf32, #tpu.memory_space<vmem>>, vector<1x3x16xf32>
    %16 = vector.shape_cast %15 : vector<1x3x16xf32> to vector<3x16xf32>
    %cst_16 = arith.constant dense<0.000000e+00> : vector<384x16xf32>
    %17 = tpu.matmul %14, %16, %cst_16 {dimension_numbers = #tpu.dot_dimension_numbers<[1], [0], [0], [1], [0, 0, 1, 1], [], []>} : vector<384x3xf32>, vector<3x16xf32>, vector<384x16xf32> -> vector<384x16xf32>
    %18 = arith.addf %13, %17 : vector<384x16xf32>
    %c0_17 = arith.constant 0 : index
    %c0_18 = arith.constant 0 : index
    %19 = vector.load %arg3[%c0_17, %c0_18] : memref<1x16xf32, #tpu.memory_space<vmem>>, vector<1x16xf32>
    %20 = vector.broadcast %19 : vector<1x16xf32> to vector<384x16xf32>
    %21 = arith.addf %18, %20 : vector<384x16xf32>
    %cst_19 = arith.constant 0.000000e+00 : f32
    %22 = vector.broadcast %cst_19 : f32 to vector<384x16xf32>
    %23 = arith.maximumf %21, %22 : vector<384x16xf32>
    %c0_20 = arith.constant 0 : index
    %c0_21 = arith.constant 0 : index
    %24 = vector.load %arg13[%c0_20, %c0_21] : memref<384x16xf32, #tpu.memory_space<vmem>>, vector<384x16xf32>
    tpu.vector_store %arg13[%c0_20, %c0_21], %23 {strides = array<i32>} : memref<384x16xf32, #tpu.memory_space<vmem>>, vector<384x16xf32>,
    %c0_22 = arith.constant 0 : index
    %c0_23 = arith.constant 0 : index
    %25 = vector.load %arg13[%c0_22, %c0_23] : memref<384x16xf32, #tpu.memory_space<vmem>>, vector<376x16xf32>
    %c0_24 = arith.constant 0 : index
    %c0_25 = arith.constant 0 : index
    %c0_26 = arith.constant 0 : index
    %26 = vector.load %arg4[%c0_24, %c0_25, %c0_26] : memref<4x16x32xf32, #tpu.memory_space<vmem>>, vector<1x16x32xf32>
    %27 = vector.shape_cast %26 : vector<1x16x32xf32> to vector<16x32xf32>
    %cst_27 = arith.constant dense<0.000000e+00> : vector<376x32xf32>
    %28 = tpu.matmul %25, %27, %cst_27 {dimension_numbers = #tpu.dot_dimension_numbers<[1], [0], [0], [1], [0, 0, 1, 1], [], []>} : vector<376x16xf32>, vector<16x32xf32>, vector<376x32xf32> -> vector<376x32xf32>
    %c1_28 = arith.constant 1 : index
    %c0_29 = arith.constant 0 : index
    %29 = vector.load %arg13[%c1_28, %c0_29] : memref<384x16xf32, #tpu.memory_space<vmem>>, vector<376x16xf32>
    %c1_30 = arith.constant 1 : index
    %c0_31 = arith.constant 0 : index
    %c0_32 = arith.constant 0 : index
    %30 = vector.load %arg4[%c1_30, %c0_31, %c0_32] : memref<4x16x32xf32, #tpu.memory_space<vmem>>, vector<1x16x32xf32>
    %31 = vector.shape_cast %30 : vector<1x16x32xf32> to vector<16x32xf32>
    %cst_33 = arith.constant dense<0.000000e+00> : vector<376x32xf32>
    %32 = tpu.matmul %29, %31, %cst_33 {dimension_numbers = #tpu.dot_dimension_numbers<[1], [0], [0], [1], [0, 0, 1, 1], [], []>} : vector<376x16xf32>, vector<16x32xf32>, vector<376x32xf32> -> vector<376x32xf32>
    %33 = arith.addf %28, %32 : vector<376x32xf32>
    %c7_34 = arith.constant 7 : index
    %c0_35 = arith.constant 0 : index
    %34 = vector.load %arg13[%c7_34, %c0_35] : memref<384x16xf32, #tpu.memory_space<vmem>>, vector<376x16xf32>
    %c2_36 = arith.constant 2 : index
    %c0_37 = arith.constant 0 : index
    %c0_38 = arith.constant 0 : index
    %35 = vector.load %arg4[%c2_36, %c0_37, %c0_38] : memref<4x16x32xf32, #tpu.memory_space<vmem>>, vector<1x16x32xf32>
    %36 = vector.shape_cast %35 : vector<1x16x32xf32> to vector<16x32xf32>
    %cst_39 = arith.constant dense<0.000000e+00> : vector<376x32xf32>
    %37 = tpu.matmul %34, %36, %cst_39 {dimension_numbers = #tpu.dot_dimension_numbers<[1], [0], [0], [1], [0, 0, 1, 1], [], []>} : vector<376x16xf32>, vector<16x32xf32>, vector<376x32xf32> -> vector<376x32xf32>
    %38 = arith.addf %33, %37 : vector<376x32xf32>
    %c8_40 = arith.constant 8 : index
    %c0_41 = arith.constant 0 : index
    %39 = vector.load %arg13[%c8_40, %c0_41] : memref<384x16xf32, #tpu.memory_space<vmem>>, vector<376x16xf32>
    %c3_42 = arith.constant 3 : index
    %c0_43 = arith.constant 0 : index
    %c0_44 = arith.constant 0 : index
    %40 = vector.load %arg4[%c3_42, %c0_43, %c0_44] : memref<4x16x32xf32, #tpu.memory_space<vmem>>, vector<1x16x32xf32>
    %41 = vector.shape_cast %40 : vector<1x16x32xf32> to vector<16x32xf32>
    %cst_45 = arith.constant dense<0.000000e+00> : vector<376x32xf32>
    %42 = tpu.matmul %39, %41, %cst_45 {dimension_numbers = #tpu.dot_dimension_numbers<[1], [0], [0], [1], [0, 0, 1, 1], [], []>} : vector<376x16xf32>, vector<16x32xf32>, vector<376x32xf32> -> vector<376x32xf32>
    %43 = arith.addf %38, %42 : vector<376x32xf32>
    %c0_46 = arith.constant 0 : index
    %c0_47 = arith.constant 0 : index
    %44 = vector.load %arg5[%c0_46, %c0_47] : memref<1x32xf32, #tpu.memory_space<vmem>>, vector<1x32xf32>
    %45 = vector.broadcast %44 : vector<1x32xf32> to vector<376x32xf32>
    %46 = arith.addf %43, %45 : vector<376x32xf32>
    %cst_48 = arith.constant 0.000000e+00 : f32
    %47 = vector.broadcast %cst_48 : f32 to vector<376x32xf32>
    %48 = arith.maximumf %46, %47 : vector<376x32xf32>
    %c0_49 = arith.constant 0 : index
    %c0_50 = arith.constant 0 : index
    %49 = vector.load %arg14[%c0_49, %c0_50] : memref<376x32xf32, #tpu.memory_space<vmem>>, vector<376x32xf32>
    tpu.vector_store %arg14[%c0_49, %c0_50], %48 {strides = array<i32>} : memref<376x32xf32, #tpu.memory_space<vmem>>, vector<376x32xf32>,
    %c0_51 = arith.constant 0 : index
    %c0_52 = arith.constant 0 : index
    %50 = vector.load %arg14[%c0_51, %c0_52] : memref<376x32xf32, #tpu.memory_space<vmem>>, vector<368x32xf32>
    %c0_53 = arith.constant 0 : index
    %c0_54 = arith.constant 0 : index
    %c0_55 = arith.constant 0 : index
    %51 = vector.load %arg6[%c0_53, %c0_54, %c0_55] : memref<4x32x32xf32, #tpu.memory_space<vmem>>, vector<1x32x32xf32>
    %52 = vector.shape_cast %51 : vector<1x32x32xf32> to vector<32x32xf32>
    %cst_56 = arith.constant dense<0.000000e+00> : vector<368x32xf32>
    %53 = tpu.matmul %50, %52, %cst_56 {dimension_numbers = #tpu.dot_dimension_numbers<[1], [0], [0], [1], [0, 0, 1, 1], [], []>} : vector<368x32xf32>, vector<32x32xf32>, vector<368x32xf32> -> vector<368x32xf32>
    %c1_57 = arith.constant 1 : index
    %c0_58 = arith.constant 0 : index
    %54 = vector.load %arg14[%c1_57, %c0_58] : memref<376x32xf32, #tpu.memory_space<vmem>>, vector<368x32xf32>
    %c1_59 = arith.constant 1 : index
    %c0_60 = arith.constant 0 : index
    %c0_61 = arith.constant 0 : index
    %55 = vector.load %arg6[%c1_59, %c0_60, %c0_61] : memref<4x32x32xf32, #tpu.memory_space<vmem>>, vector<1x32x32xf32>
    %56 = vector.shape_cast %55 : vector<1x32x32xf32> to vector<32x32xf32>
    %cst_62 = arith.constant dense<0.000000e+00> : vector<368x32xf32>
    %57 = tpu.matmul %54, %56, %cst_62 {dimension_numbers = #tpu.dot_dimension_numbers<[1], [0], [0], [1], [0, 0, 1, 1], [], []>} : vector<368x32xf32>, vector<32x32xf32>, vector<368x32xf32> -> vector<368x32xf32>
    %58 = arith.addf %53, %57 : vector<368x32xf32>
    %c7_63 = arith.constant 7 : index
    %c0_64 = arith.constant 0 : index
    %59 = vector.load %arg14[%c7_63, %c0_64] : memref<376x32xf32, #tpu.memory_space<vmem>>, vector<368x32xf32>
    %c2_65 = arith.constant 2 : index
    %c0_66 = arith.constant 0 : index
    %c0_67 = arith.constant 0 : index
    %60 = vector.load %arg6[%c2_65, %c0_66, %c0_67] : memref<4x32x32xf32, #tpu.memory_space<vmem>>, vector<1x32x32xf32>
    %61 = vector.shape_cast %60 : vector<1x32x32xf32> to vector<32x32xf32>
    %cst_68 = arith.constant dense<0.000000e+00> : vector<368x32xf32>
    %62 = tpu.matmul %59, %61, %cst_68 {dimension_numbers = #tpu.dot_dimension_numbers<[1], [0], [0], [1], [0, 0, 1, 1], [], []>} : vector<368x32xf32>, vector<32x32xf32>, vector<368x32xf32> -> vector<368x32xf32>
    %63 = arith.addf %58, %62 : vector<368x32xf32>
    %c8_69 = arith.constant 8 : index
    %c0_70 = arith.constant 0 : index
    %64 = vector.load %arg14[%c8_69, %c0_70] : memref<376x32xf32, #tpu.memory_space<vmem>>, vector<368x32xf32>
    %c3_71 = arith.constant 3 : index
    %c0_72 = arith.constant 0 : index
    %c0_73 = arith.constant 0 : index
    %65 = vector.load %arg6[%c3_71, %c0_72, %c0_73] : memref<4x32x32xf32, #tpu.memory_space<vmem>>, vector<1x32x32xf32>
    %66 = vector.shape_cast %65 : vector<1x32x32xf32> to vector<32x32xf32>
    %cst_74 = arith.constant dense<0.000000e+00> : vector<368x32xf32>
    %67 = tpu.matmul %64, %66, %cst_74 {dimension_numbers = #tpu.dot_dimension_numbers<[1], [0], [0], [1], [0, 0, 1, 1], [], []>} : vector<368x32xf32>, vector<32x32xf32>, vector<368x32xf32> -> vector<368x32xf32>
    %68 = arith.addf %63, %67 : vector<368x32xf32>
    %c0_75 = arith.constant 0 : index
    %c0_76 = arith.constant 0 : index
    %69 = vector.load %arg7[%c0_75, %c0_76] : memref<1x32xf32, #tpu.memory_space<vmem>>, vector<1x32xf32>
    %70 = vector.broadcast %69 : vector<1x32xf32> to vector<368x32xf32>
    %71 = arith.addf %68, %70 : vector<368x32xf32>
    %cst_77 = arith.constant 0.000000e+00 : f32
    %72 = vector.broadcast %cst_77 : f32 to vector<368x32xf32>
    %73 = arith.maximumf %71, %72 : vector<368x32xf32>
    %c0_78 = arith.constant 0 : index
    %c0_79 = arith.constant 0 : index
    %74 = vector.load %arg15[%c0_78, %c0_79] : memref<368x32xf32, #tpu.memory_space<vmem>>, vector<368x32xf32>
    tpu.vector_store %arg15[%c0_78, %c0_79], %73 {strides = array<i32>} : memref<368x32xf32, #tpu.memory_space<vmem>>, vector<368x32xf32>,
    %c0_80 = arith.constant 0 : index
    %c0_81 = arith.constant 0 : index
    %75 = vector.load %arg15[%c0_80, %c0_81] : memref<368x32xf32, #tpu.memory_space<vmem>>, vector<4x32xf32>
    %c0_82 = arith.constant 0 : index
    %c0_83 = arith.constant 0 : index
    %c0_84 = arith.constant 0 : index
    %76 = vector.load %arg16[%c0_82, %c0_83, %c0_84] : memref<8x16x32xf32, #tpu.memory_space<vmem>>, vector<1x4x32xf32>
    %77 = vector.shape_cast %76 : vector<1x4x32xf32> to vector<4x32xf32>
    %78 = vector.shape_cast %75 : vector<4x32xf32> to vector<1x4x32xf32>
    tpu.vector_store %arg16[%c0_82, %c0_83, %c0_84], %78 {strides = array<i32>} : memref<8x16x32xf32, #tpu.memory_space<vmem>>, vector<1x4x32xf32>,
    %c7_85 = arith.constant 7 : index
    %c0_86 = arith.constant 0 : index
    %79 = vector.load %arg15[%c7_85, %c0_86] : memref<368x32xf32, #tpu.memory_space<vmem>>, vector<4x32xf32>
    %c0_87 = arith.constant 0 : index
    %c4 = arith.constant 4 : index
    %c0_88 = arith.constant 0 : index
    %80 = vector.load %arg16[%c0_87, %c4, %c0_88] : memref<8x16x32xf32, #tpu.memory_space<vmem>>, vector<1x4x32xf32>
    %81 = vector.shape_cast %80 : vector<1x4x32xf32> to vector<4x32xf32>
    %82 = vector.shape_cast %79 : vector<4x32xf32> to vector<1x4x32xf32>
    tpu.vector_store %arg16[%c0_87, %c4, %c0_88], %82 {strides = array<i32>} : memref<8x16x32xf32, #tpu.memory_space<vmem>>, vector<1x4x32xf32>,
    %c14 = arith.constant 14 : index
    %c0_89 = arith.constant 0 : index
    %83 = vector.load %arg15[%c14, %c0_89] : memref<368x32xf32, #tpu.memory_space<vmem>>, vector<4x32xf32>
    %c0_90 = arith.constant 0 : index
    %c8_91 = arith.constant 8 : index
    %c0_92 = arith.constant 0 : index
    %84 = vector.load %arg16[%c0_90, %c8_91, %c0_92] : memref<8x16x32xf32, #tpu.memory_space<vmem>>, vector<1x4x32xf32>
    %85 = vector.shape_cast %84 : vector<1x4x32xf32> to vector<4x32xf32>
    %86 = vector.shape_cast %83 : vector<4x32xf32> to vector<1x4x32xf32>
    tpu.vector_store %arg16[%c0_90, %c8_91, %c0_92], %86 {strides = array<i32>} : memref<8x16x32xf32, #tpu.memory_space<vmem>>, vector<1x4x32xf32>,
    %c21 = arith.constant 21 : index
    %c0_93 = arith.constant 0 : index
    %87 = vector.load %arg15[%c21, %c0_93] : memref<368x32xf32, #tpu.memory_space<vmem>>, vector<4x32xf32>
    %c0_94 = arith.constant 0 : index
    %c12 = arith.constant 12 : index
    %c0_95 = arith.constant 0 : index
    %88 = vector.load %arg16[%c0_94, %c12, %c0_95] : memref<8x16x32xf32, #tpu.memory_space<vmem>>, vector<1x4x32xf32>
    %89 = vector.shape_cast %88 : vector<1x4x32xf32> to vector<4x32xf32>
    %90 = vector.shape_cast %87 : vector<4x32xf32> to vector<1x4x32xf32>
    tpu.vector_store %arg16[%c0_94, %c12, %c0_95], %90 {strides = array<i32>} : memref<8x16x32xf32, #tpu.memory_space<vmem>>, vector<1x4x32xf32>,
    %c49 = arith.constant 49 : index
    %c0_96 = arith.constant 0 : index
    %91 = vector.load %arg15[%c49, %c0_96] : memref<368x32xf32, #tpu.memory_space<vmem>>, vector<4x32xf32>
    %c1_97 = arith.constant 1 : index
    %c0_98 = arith.constant 0 : index
    %c0_99 = arith.constant 0 : index
    %92 = vector.load %arg16[%c1_97, %c0_98, %c0_99] : memref<8x16x32xf32, #tpu.memory_space<vmem>>, vector<1x4x32xf32>
    %93 = vector.shape_cast %92 : vector<1x4x32xf32> to vector<4x32xf32>
    %94 = vector.shape_cast %91 : vector<4x32xf32> to vector<1x4x32xf32>
    tpu.vector_store %arg16[%c1_97, %c0_98, %c0_99], %94 {strides = array<i32>} : memref<8x16x32xf32, #tpu.memory_space<vmem>>, vector<1x4x32xf32>,
    %c56 = arith.constant 56 : index
    %c0_100 = arith.constant 0 : index
    %95 = vector.load %arg15[%c56, %c0_100] : memref<368x32xf32, #tpu.memory_space<vmem>>, vector<4x32xf32>
    %c1_101 = arith.constant 1 : index
    %c4_102 = arith.constant 4 : index
    %c0_103 = arith.constant 0 : index
    %96 = vector.load %arg16[%c1_101, %c4_102, %c0_103] : memref<8x16x32xf32, #tpu.memory_space<vmem>>, vector<1x4x32xf32>
    %97 = vector.shape_cast %96 : vector<1x4x32xf32> to vector<4x32xf32>
    %98 = vector.shape_cast %95 : vector<4x32xf32> to vector<1x4x32xf32>
    tpu.vector_store %arg16[%c1_101, %c4_102, %c0_103], %98 {strides = array<i32>} : memref<8x16x32xf32, #tpu.memory_space<vmem>>, vector<1x4x32xf32>,
    %c63 = arith.constant 63 : index
    %c0_104 = arith.constant 0 : index
    %99 = vector.load %arg15[%c63, %c0_104] : memref<368x32xf32, #tpu.memory_space<vmem>>, vector<4x32xf32>
    %c1_105 = arith.constant 1 : index
    %c8_106 = arith.constant 8 : index
    %c0_107 = arith.constant 0 : index
    %100 = vector.load %arg16[%c1_105, %c8_106, %c0_107] : memref<8x16x32xf32, #tpu.memory_space<vmem>>, vector<1x4x32xf32>
    %101 = vector.shape_cast %100 : vector<1x4x32xf32> to vector<4x32xf32>
    %102 = vector.shape_cast %99 : vector<4x32xf32> to vector<1x4x32xf32>
    tpu.vector_store %arg16[%c1_105, %c8_106, %c0_107], %102 {strides = array<i32>} : memref<8x16x32xf32, #tpu.memory_space<vmem>>, vector<1x4x32xf32>,
    %c70 = arith.constant 70 : index
    %c0_108 = arith.constant 0 : index
    %103 = vector.load %arg15[%c70, %c0_108] : memref<368x32xf32, #tpu.memory_space<vmem>>, vector<4x32xf32>
    %c1_109 = arith.constant 1 : index
    %c12_110 = arith.constant 12 : index
    %c0_111 = arith.constant 0 : index
    %104 = vector.load %arg16[%c1_109, %c12_110, %c0_111] : memref<8x16x32xf32, #tpu.memory_space<vmem>>, vector<1x4x32xf32>
    %105 = vector.shape_cast %104 : vector<1x4x32xf32> to vector<4x32xf32>
    %106 = vector.shape_cast %103 : vector<4x32xf32> to vector<1x4x32xf32>
    tpu.vector_store %arg16[%c1_109, %c12_110, %c0_111], %106 {strides = array<i32>} : memref<8x16x32xf32, #tpu.memory_space<vmem>>, vector<1x4x32xf32>,
    %c98 = arith.constant 98 : index
    %c0_112 = arith.constant 0 : index
    %107 = vector.load %arg15[%c98, %c0_112] : memref<368x32xf32, #tpu.memory_space<vmem>>, vector<4x32xf32>
    %c2_113 = arith.constant 2 : index
    %c0_114 = arith.constant 0 : index
    %c0_115 = arith.constant 0 : index
    %108 = vector.load %arg16[%c2_113, %c0_114, %c0_115] : memref<8x16x32xf32, #tpu.memory_space<vmem>>, vector<1x4x32xf32>
    %109 = vector.shape_cast %108 : vector<1x4x32xf32> to vector<4x32xf32>
    %110 = vector.shape_cast %107 : vector<4x32xf32> to vector<1x4x32xf32>
    tpu.vector_store %arg16[%c2_113, %c0_114, %c0_115], %110 {strides = array<i32>} : memref<8x16x32xf32, #tpu.memory_space<vmem>>, vector<1x4x32xf32>,
    %c105 = arith.constant 105 : index
    %c0_116 = arith.constant 0 : index
    %111 = vector.load %arg15[%c105, %c0_116] : memref<368x32xf32, #tpu.memory_space<vmem>>, vector<4x32xf32>
    %c2_117 = arith.constant 2 : index
    %c4_118 = arith.constant 4 : index
    %c0_119 = arith.constant 0 : index
    %112 = vector.load %arg16[%c2_117, %c4_118, %c0_119] : memref<8x16x32xf32, #tpu.memory_space<vmem>>, vector<1x4x32xf32>
    %113 = vector.shape_cast %112 : vector<1x4x32xf32> to vector<4x32xf32>
    %114 = vector.shape_cast %111 : vector<4x32xf32> to vector<1x4x32xf32>
    tpu.vector_store %arg16[%c2_117, %c4_118, %c0_119], %114 {strides = array<i32>} : memref<8x16x32xf32, #tpu.memory_space<vmem>>, vector<1x4x32xf32>,
    %c112 = arith.constant 112 : index
    %c0_120 = arith.constant 0 : index
    %115 = vector.load %arg15[%c112, %c0_120] : memref<368x32xf32, #tpu.memory_space<vmem>>, vector<4x32xf32>
    %c2_121 = arith.constant 2 : index
    %c8_122 = arith.constant 8 : index
    %c0_123 = arith.constant 0 : index
    %116 = vector.load %arg16[%c2_121, %c8_122, %c0_123] : memref<8x16x32xf32, #tpu.memory_space<vmem>>, vector<1x4x32xf32>
    %117 = vector.shape_cast %116 : vector<1x4x32xf32> to vector<4x32xf32>
    %118 = vector.shape_cast %115 : vector<4x32xf32> to vector<1x4x32xf32>
    tpu.vector_store %arg16[%c2_121, %c8_122, %c0_123], %118 {strides = array<i32>} : memref<8x16x32xf32, #tpu.memory_space<vmem>>, vector<1x4x32xf32>,
    %c119 = arith.constant 119 : index
    %c0_124 = arith.constant 0 : index
    %119 = vector.load %arg15[%c119, %c0_124] : memref<368x32xf32, #tpu.memory_space<vmem>>, vector<4x32xf32>
    %c2_125 = arith.constant 2 : index
    %c12_126 = arith.constant 12 : index
    %c0_127 = arith.constant 0 : index
    %120 = vector.load %arg16[%c2_125, %c12_126, %c0_127] : memref<8x16x32xf32, #tpu.memory_space<vmem>>, vector<1x4x32xf32>
    %121 = vector.shape_cast %120 : vector<1x4x32xf32> to vector<4x32xf32>
    %122 = vector.shape_cast %119 : vector<4x32xf32> to vector<1x4x32xf32>
    tpu.vector_store %arg16[%c2_125, %c12_126, %c0_127], %122 {strides = array<i32>} : memref<8x16x32xf32, #tpu.memory_space<vmem>>, vector<1x4x32xf32>,
    %c147 = arith.constant 147 : index
    %c0_128 = arith.constant 0 : index
    %123 = vector.load %arg15[%c147, %c0_128] : memref<368x32xf32, #tpu.memory_space<vmem>>, vector<4x32xf32>
    %c3_129 = arith.constant 3 : index
    %c0_130 = arith.constant 0 : index
    %c0_131 = arith.constant 0 : index
    %124 = vector.load %arg16[%c3_129, %c0_130, %c0_131] : memref<8x16x32xf32, #tpu.memory_space<vmem>>, vector<1x4x32xf32>
    %125 = vector.shape_cast %124 : vector<1x4x32xf32> to vector<4x32xf32>
    %126 = vector.shape_cast %123 : vector<4x32xf32> to vector<1x4x32xf32>
    tpu.vector_store %arg16[%c3_129, %c0_130, %c0_131], %126 {strides = array<i32>} : memref<8x16x32xf32, #tpu.memory_space<vmem>>, vector<1x4x32xf32>,
    %c154 = arith.constant 154 : index
    %c0_132 = arith.constant 0 : index
    %127 = vector.load %arg15[%c154, %c0_132] : memref<368x32xf32, #tpu.memory_space<vmem>>, vector<4x32xf32>
    %c3_133 = arith.constant 3 : index
    %c4_134 = arith.constant 4 : index
    %c0_135 = arith.constant 0 : index
    %128 = vector.load %arg16[%c3_133, %c4_134, %c0_135] : memref<8x16x32xf32, #tpu.memory_space<vmem>>, vector<1x4x32xf32>
    %129 = vector.shape_cast %128 : vector<1x4x32xf32> to vector<4x32xf32>
    %130 = vector.shape_cast %127 : vector<4x32xf32> to vector<1x4x32xf32>
    tpu.vector_store %arg16[%c3_133, %c4_134, %c0_135], %130 {strides = array<i32>} : memref<8x16x32xf32, #tpu.memory_space<vmem>>, vector<1x4x32xf32>,
    %c161 = arith.constant 161 : index
    %c0_136 = arith.constant 0 : index
    %131 = vector.load %arg15[%c161, %c0_136] : memref<368x32xf32, #tpu.memory_space<vmem>>, vector<4x32xf32>
    %c3_137 = arith.constant 3 : index
    %c8_138 = arith.constant 8 : index
    %c0_139 = arith.constant 0 : index
    %132 = vector.load %arg16[%c3_137, %c8_138, %c0_139] : memref<8x16x32xf32, #tpu.memory_space<vmem>>, vector<1x4x32xf32>
    %133 = vector.shape_cast %132 : vector<1x4x32xf32> to vector<4x32xf32>
    %134 = vector.shape_cast %131 : vector<4x32xf32> to vector<1x4x32xf32>
    tpu.vector_store %arg16[%c3_137, %c8_138, %c0_139], %134 {strides = array<i32>} : memref<8x16x32xf32, #tpu.memory_space<vmem>>, vector<1x4x32xf32>,
    %c168 = arith.constant 168 : index
    %c0_140 = arith.constant 0 : index
    %135 = vector.load %arg15[%c168, %c0_140] : memref<368x32xf32, #tpu.memory_space<vmem>>, vector<4x32xf32>
    %c3_141 = arith.constant 3 : index
    %c12_142 = arith.constant 12 : index
    %c0_143 = arith.constant 0 : index
    %136 = vector.load %arg16[%c3_141, %c12_142, %c0_143] : memref<8x16x32xf32, #tpu.memory_space<vmem>>, vector<1x4x32xf32>
    %137 = vector.shape_cast %136 : vector<1x4x32xf32> to vector<4x32xf32>
    %138 = vector.shape_cast %135 : vector<4x32xf32> to vector<1x4x32xf32>
    tpu.vector_store %arg16[%c3_141, %c12_142, %c0_143], %138 {strides = array<i32>} : memref<8x16x32xf32, #tpu.memory_space<vmem>>, vector<1x4x32xf32>,
    %c196 = arith.constant 196 : index
    %c0_144 = arith.constant 0 : index
    %139 = vector.load %arg15[%c196, %c0_144] : memref<368x32xf32, #tpu.memory_space<vmem>>, vector<4x32xf32>
    %c4_145 = arith.constant 4 : index
    %c0_146 = arith.constant 0 : index
    %c0_147 = arith.constant 0 : index
    %140 = vector.load %arg16[%c4_145, %c0_146, %c0_147] : memref<8x16x32xf32, #tpu.memory_space<vmem>>, vector<1x4x32xf32>
    %141 = vector.shape_cast %140 : vector<1x4x32xf32> to vector<4x32xf32>
    %142 = vector.shape_cast %139 : vector<4x32xf32> to vector<1x4x32xf32>
    tpu.vector_store %arg16[%c4_145, %c0_146, %c0_147], %142 {strides = array<i32>} : memref<8x16x32xf32, #tpu.memory_space<vmem>>, vector<1x4x32xf32>,
    %c203 = arith.constant 203 : index
    %c0_148 = arith.constant 0 : index
    %143 = vector.load %arg15[%c203, %c0_148] : memref<368x32xf32, #tpu.memory_space<vmem>>, vector<4x32xf32>
    %c4_149 = arith.constant 4 : index
    %c4_150 = arith.constant 4 : index
    %c0_151 = arith.constant 0 : index
    %144 = vector.load %arg16[%c4_149, %c4_150, %c0_151] : memref<8x16x32xf32, #tpu.memory_space<vmem>>, vector<1x4x32xf32>
    %145 = vector.shape_cast %144 : vector<1x4x32xf32> to vector<4x32xf32>
    %146 = vector.shape_cast %143 : vector<4x32xf32> to vector<1x4x32xf32>
    tpu.vector_store %arg16[%c4_149, %c4_150, %c0_151], %146 {strides = array<i32>} : memref<8x16x32xf32, #tpu.memory_space<vmem>>, vector<1x4x32xf32>,
    %c210 = arith.constant 210 : index
    %c0_152 = arith.constant 0 : index
    %147 = vector.load %arg15[%c210, %c0_152] : memref<368x32xf32, #tpu.memory_space<vmem>>, vector<4x32xf32>
    %c4_153 = arith.constant 4 : index
    %c8_154 = arith.constant 8 : index
    %c0_155 = arith.constant 0 : index
    %148 = vector.load %arg16[%c4_153, %c8_154, %c0_155] : memref<8x16x32xf32, #tpu.memory_space<vmem>>, vector<1x4x32xf32>
    %149 = vector.shape_cast %148 : vector<1x4x32xf32> to vector<4x32xf32>
    %150 = vector.shape_cast %147 : vector<4x32xf32> to vector<1x4x32xf32>
    tpu.vector_store %arg16[%c4_153, %c8_154, %c0_155], %150 {strides = array<i32>} : memref<8x16x32xf32, #tpu.memory_space<vmem>>, vector<1x4x32xf32>,
    %c217 = arith.constant 217 : index
    %c0_156 = arith.constant 0 : index
    %151 = vector.load %arg15[%c217, %c0_156] : memref<368x32xf32, #tpu.memory_space<vmem>>, vector<4x32xf32>
    %c4_157 = arith.constant 4 : index
    %c12_158 = arith.constant 12 : index
    %c0_159 = arith.constant 0 : index
    %152 = vector.load %arg16[%c4_157, %c12_158, %c0_159] : memref<8x16x32xf32, #tpu.memory_space<vmem>>, vector<1x4x32xf32>
    %153 = vector.shape_cast %152 : vector<1x4x32xf32> to vector<4x32xf32>
    %154 = vector.shape_cast %151 : vector<4x32xf32> to vector<1x4x32xf32>
    tpu.vector_store %arg16[%c4_157, %c12_158, %c0_159], %154 {strides = array<i32>} : memref<8x16x32xf32, #tpu.memory_space<vmem>>, vector<1x4x32xf32>,
    %c245 = arith.constant 245 : index
    %c0_160 = arith.constant 0 : index
    %155 = vector.load %arg15[%c245, %c0_160] : memref<368x32xf32, #tpu.memory_space<vmem>>, vector<4x32xf32>
    %c5 = arith.constant 5 : index
    %c0_161 = arith.constant 0 : index
    %c0_162 = arith.constant 0 : index
    %156 = vector.load %arg16[%c5, %c0_161, %c0_162] : memref<8x16x32xf32, #tpu.memory_space<vmem>>, vector<1x4x32xf32>
    %157 = vector.shape_cast %156 : vector<1x4x32xf32> to vector<4x32xf32>
    %158 = vector.shape_cast %155 : vector<4x32xf32> to vector<1x4x32xf32>
    tpu.vector_store %arg16[%c5, %c0_161, %c0_162], %158 {strides = array<i32>} : memref<8x16x32xf32, #tpu.memory_space<vmem>>, vector<1x4x32xf32>,
    %c252 = arith.constant 252 : index
    %c0_163 = arith.constant 0 : index
    %159 = vector.load %arg15[%c252, %c0_163] : memref<368x32xf32, #tpu.memory_space<vmem>>, vector<4x32xf32>
    %c5_164 = arith.constant 5 : index
    %c4_165 = arith.constant 4 : index
    %c0_166 = arith.constant 0 : index
    %160 = vector.load %arg16[%c5_164, %c4_165, %c0_166] : memref<8x16x32xf32, #tpu.memory_space<vmem>>, vector<1x4x32xf32>
    %161 = vector.shape_cast %160 : vector<1x4x32xf32> to vector<4x32xf32>
    %162 = vector.shape_cast %159 : vector<4x32xf32> to vector<1x4x32xf32>
    tpu.vector_store %arg16[%c5_164, %c4_165, %c0_166], %162 {strides = array<i32>} : memref<8x16x32xf32, #tpu.memory_space<vmem>>, vector<1x4x32xf32>,
    %c259 = arith.constant 259 : index
    %c0_167 = arith.constant 0 : index
    %163 = vector.load %arg15[%c259, %c0_167] : memref<368x32xf32, #tpu.memory_space<vmem>>, vector<4x32xf32>
    %c5_168 = arith.constant 5 : index
    %c8_169 = arith.constant 8 : index
    %c0_170 = arith.constant 0 : index
    %164 = vector.load %arg16[%c5_168, %c8_169, %c0_170] : memref<8x16x32xf32, #tpu.memory_space<vmem>>, vector<1x4x32xf32>
    %165 = vector.shape_cast %164 : vector<1x4x32xf32> to vector<4x32xf32>
    %166 = vector.shape_cast %163 : vector<4x32xf32> to vector<1x4x32xf32>
    tpu.vector_store %arg16[%c5_168, %c8_169, %c0_170], %166 {strides = array<i32>} : memref<8x16x32xf32, #tpu.memory_space<vmem>>, vector<1x4x32xf32>,
    %c266 = arith.constant 266 : index
    %c0_171 = arith.constant 0 : index
    %167 = vector.load %arg15[%c266, %c0_171] : memref<368x32xf32, #tpu.memory_space<vmem>>, vector<4x32xf32>
    %c5_172 = arith.constant 5 : index
    %c12_173 = arith.constant 12 : index
    %c0_174 = arith.constant 0 : index
    %168 = vector.load %arg16[%c5_172, %c12_173, %c0_174] : memref<8x16x32xf32, #tpu.memory_space<vmem>>, vector<1x4x32xf32>
    %169 = vector.shape_cast %168 : vector<1x4x32xf32> to vector<4x32xf32>
    %170 = vector.shape_cast %167 : vector<4x32xf32> to vector<1x4x32xf32>
    tpu.vector_store %arg16[%c5_172, %c12_173, %c0_174], %170 {strides = array<i32>} : memref<8x16x32xf32, #tpu.memory_space<vmem>>, vector<1x4x32xf32>,
    %c294 = arith.constant 294 : index
    %c0_175 = arith.constant 0 : index
    %171 = vector.load %arg15[%c294, %c0_175] : memref<368x32xf32, #tpu.memory_space<vmem>>, vector<4x32xf32>
    %c6 = arith.constant 6 : index
    %c0_176 = arith.constant 0 : index
    %c0_177 = arith.constant 0 : index
    %172 = vector.load %arg16[%c6, %c0_176, %c0_177] : memref<8x16x32xf32, #tpu.memory_space<vmem>>, vector<1x4x32xf32>
    %173 = vector.shape_cast %172 : vector<1x4x32xf32> to vector<4x32xf32>
    %174 = vector.shape_cast %171 : vector<4x32xf32> to vector<1x4x32xf32>
    tpu.vector_store %arg16[%c6, %c0_176, %c0_177], %174 {strides = array<i32>} : memref<8x16x32xf32, #tpu.memory_space<vmem>>, vector<1x4x32xf32>,
    %c301 = arith.constant 301 : index
    %c0_178 = arith.constant 0 : index
    %175 = vector.load %arg15[%c301, %c0_178] : memref<368x32xf32, #tpu.memory_space<vmem>>, vector<4x32xf32>
    %c6_179 = arith.constant 6 : index
    %c4_180 = arith.constant 4 : index
    %c0_181 = arith.constant 0 : index
    %176 = vector.load %arg16[%c6_179, %c4_180, %c0_181] : memref<8x16x32xf32, #tpu.memory_space<vmem>>, vector<1x4x32xf32>
    %177 = vector.shape_cast %176 : vector<1x4x32xf32> to vector<4x32xf32>
    %178 = vector.shape_cast %175 : vector<4x32xf32> to vector<1x4x32xf32>
    tpu.vector_store %arg16[%c6_179, %c4_180, %c0_181], %178 {strides = array<i32>} : memref<8x16x32xf32, #tpu.memory_space<vmem>>, vector<1x4x32xf32>,
    %c308 = arith.constant 308 : index
    %c0_182 = arith.constant 0 : index
    %179 = vector.load %arg15[%c308, %c0_182] : memref<368x32xf32, #tpu.memory_space<vmem>>, vector<4x32xf32>
    %c6_183 = arith.constant 6 : index
    %c8_184 = arith.constant 8 : index
    %c0_185 = arith.constant 0 : index
    %180 = vector.load %arg16[%c6_183, %c8_184, %c0_185] : memref<8x16x32xf32, #tpu.memory_space<vmem>>, vector<1x4x32xf32>
    %181 = vector.shape_cast %180 : vector<1x4x32xf32> to vector<4x32xf32>
    %182 = vector.shape_cast %179 : vector<4x32xf32> to vector<1x4x32xf32>
    tpu.vector_store %arg16[%c6_183, %c8_184, %c0_185], %182 {strides = array<i32>} : memref<8x16x32xf32, #tpu.memory_space<vmem>>, vector<1x4x32xf32>,
    %c315 = arith.constant 315 : index
    %c0_186 = arith.constant 0 : index
    %183 = vector.load %arg15[%c315, %c0_186] : memref<368x32xf32, #tpu.memory_space<vmem>>, vector<4x32xf32>
    %c6_187 = arith.constant 6 : index
    %c12_188 = arith.constant 12 : index
    %c0_189 = arith.constant 0 : index
    %184 = vector.load %arg16[%c6_187, %c12_188, %c0_189] : memref<8x16x32xf32, #tpu.memory_space<vmem>>, vector<1x4x32xf32>
    %185 = vector.shape_cast %184 : vector<1x4x32xf32> to vector<4x32xf32>
    %186 = vector.shape_cast %183 : vector<4x32xf32> to vector<1x4x32xf32>
    tpu.vector_store %arg16[%c6_187, %c12_188, %c0_189], %186 {strides = array<i32>} : memref<8x16x32xf32, #tpu.memory_space<vmem>>, vector<1x4x32xf32>,
    %c343 = arith.constant 343 : index
    %c0_190 = arith.constant 0 : index
    %187 = vector.load %arg15[%c343, %c0_190] : memref<368x32xf32, #tpu.memory_space<vmem>>, vector<4x32xf32>
    %c7_191 = arith.constant 7 : index
    %c0_192 = arith.constant 0 : index
    %c0_193 = arith.constant 0 : index
    %188 = vector.load %arg16[%c7_191, %c0_192, %c0_193] : memref<8x16x32xf32, #tpu.memory_space<vmem>>, vector<1x4x32xf32>
    %189 = vector.shape_cast %188 : vector<1x4x32xf32> to vector<4x32xf32>
    %190 = vector.shape_cast %187 : vector<4x32xf32> to vector<1x4x32xf32>
    tpu.vector_store %arg16[%c7_191, %c0_192, %c0_193], %190 {strides = array<i32>} : memref<8x16x32xf32, #tpu.memory_space<vmem>>, vector<1x4x32xf32>,
    %c350 = arith.constant 350 : index
    %c0_194 = arith.constant 0 : index
    %191 = vector.load %arg15[%c350, %c0_194] : memref<368x32xf32, #tpu.memory_space<vmem>>, vector<4x32xf32>
    %c7_195 = arith.constant 7 : index
    %c4_196 = arith.constant 4 : index
    %c0_197 = arith.constant 0 : index
    %192 = vector.load %arg16[%c7_195, %c4_196, %c0_197] : memref<8x16x32xf32, #tpu.memory_space<vmem>>, vector<1x4x32xf32>
    %193 = vector.shape_cast %192 : vector<1x4x32xf32> to vector<4x32xf32>
    %194 = vector.shape_cast %191 : vector<4x32xf32> to vector<1x4x32xf32>
    tpu.vector_store %arg16[%c7_195, %c4_196, %c0_197], %194 {strides = array<i32>} : memref<8x16x32xf32, #tpu.memory_space<vmem>>, vector<1x4x32xf32>,
    %c357 = arith.constant 357 : index
    %c0_198 = arith.constant 0 : index
    %195 = vector.load %arg15[%c357, %c0_198] : memref<368x32xf32, #tpu.memory_space<vmem>>, vector<4x32xf32>
    %c7_199 = arith.constant 7 : index
    %c8_200 = arith.constant 8 : index
    %c0_201 = arith.constant 0 : index
    %196 = vector.load %arg16[%c7_199, %c8_200, %c0_201] : memref<8x16x32xf32, #tpu.memory_space<vmem>>, vector<1x4x32xf32>
    %197 = vector.shape_cast %196 : vector<1x4x32xf32> to vector<4x32xf32>
    %198 = vector.shape_cast %195 : vector<4x32xf32> to vector<1x4x32xf32>
    tpu.vector_store %arg16[%c7_199, %c8_200, %c0_201], %198 {strides = array<i32>} : memref<8x16x32xf32, #tpu.memory_space<vmem>>, vector<1x4x32xf32>,
    %c364 = arith.constant 364 : index
    %c0_202 = arith.constant 0 : index
    %199 = vector.load %arg15[%c364, %c0_202] : memref<368x32xf32, #tpu.memory_space<vmem>>, vector<4x32xf32>
    %c7_203 = arith.constant 7 : index
    %c12_204 = arith.constant 12 : index
    %c0_205 = arith.constant 0 : index
    %200 = vector.load %arg16[%c7_203, %c12_204, %c0_205] : memref<8x16x32xf32, #tpu.memory_space<vmem>>, vector<1x4x32xf32>
    %201 = vector.shape_cast %200 : vector<1x4x32xf32> to vector<4x32xf32>
    %202 = vector.shape_cast %199 : vector<4x32xf32> to vector<1x4x32xf32>
    tpu.vector_store %arg16[%c7_203, %c12_204, %c0_205], %202 {strides = array<i32>} : memref<8x16x32xf32, #tpu.memory_space<vmem>>, vector<1x4x32xf32>,
    %cst_206 = arith.constant 0.000000e+00 : f32
    %203 = vector.broadcast %cst_206 : f32 to vector<8x64xf32>
    %c0_207 = arith.constant 0 : index
    %c0_208 = arith.constant 0 : index
    %c0_209 = arith.constant 0 : index
    %204 = vector.load %arg16[%c0_207, %c0_208, %c0_209] : memref<8x16x32xf32, #tpu.memory_space<vmem>>, vector<8x1x32xf32>
    %205 = vector.shape_cast %204 : vector<8x1x32xf32> to vector<8x32xf32>
    %c0_210 = arith.constant 0 : index
    %c0_211 = arith.constant 0 : index
    %c0_212 = arith.constant 0 : index
    %206 = vector.load %arg8[%c0_210, %c0_211, %c0_212] : memref<16x32x64xf32, #tpu.memory_space<vmem>>, vector<1x32x64xf32>
    %207 = vector.shape_cast %206 : vector<1x32x64xf32> to vector<32x64xf32>
    %cst_213 = arith.constant dense<0.000000e+00> : vector<8x64xf32>
    %208 = tpu.matmul %205, %207, %cst_213 {dimension_numbers = #tpu.dot_dimension_numbers<[1], [0], [0], [1], [0, 0, 1, 1], [], []>} : vector<8x32xf32>, vector<32x64xf32>, vector<8x64xf32> -> vector<8x64xf32>
    %209 = arith.addf %203, %208 : vector<8x64xf32>
    %c0_214 = arith.constant 0 : index
    %c1_215 = arith.constant 1 : index
    %c0_216 = arith.constant 0 : index
    %210 = vector.load %arg16[%c0_214, %c1_215, %c0_216] : memref<8x16x32xf32, #tpu.memory_space<vmem>>, vector<8x1x32xf32>
    %211 = vector.shape_cast %210 : vector<8x1x32xf32> to vector<8x32xf32>
    %c1_217 = arith.constant 1 : index
    %c0_218 = arith.constant 0 : index
    %c0_219 = arith.constant 0 : index
    %212 = vector.load %arg8[%c1_217, %c0_218, %c0_219] : memref<16x32x64xf32, #tpu.memory_space<vmem>>, vector<1x32x64xf32>
    %213 = vector.shape_cast %212 : vector<1x32x64xf32> to vector<32x64xf32>
    %cst_220 = arith.constant dense<0.000000e+00> : vector<8x64xf32>
    %214 = tpu.matmul %211, %213, %cst_220 {dimension_numbers = #tpu.dot_dimension_numbers<[1], [0], [0], [1], [0, 0, 1, 1], [], []>} : vector<8x32xf32>, vector<32x64xf32>, vector<8x64xf32> -> vector<8x64xf32>
    %215 = arith.addf %209, %214 : vector<8x64xf32>
    %c0_221 = arith.constant 0 : index
    %c2_222 = arith.constant 2 : index
    %c0_223 = arith.constant 0 : index
    %216 = vector.load %arg16[%c0_221, %c2_222, %c0_223] : memref<8x16x32xf32, #tpu.memory_space<vmem>>, vector<8x1x32xf32>
    %217 = vector.shape_cast %216 : vector<8x1x32xf32> to vector<8x32xf32>
    %c2_224 = arith.constant 2 : index
    %c0_225 = arith.constant 0 : index
    %c0_226 = arith.constant 0 : index
    %218 = vector.load %arg8[%c2_224, %c0_225, %c0_226] : memref<16x32x64xf32, #tpu.memory_space<vmem>>, vector<1x32x64xf32>
    %219 = vector.shape_cast %218 : vector<1x32x64xf32> to vector<32x64xf32>
    %cst_227 = arith.constant dense<0.000000e+00> : vector<8x64xf32>
    %220 = tpu.matmul %217, %219, %cst_227 {dimension_numbers = #tpu.dot_dimension_numbers<[1], [0], [0], [1], [0, 0, 1, 1], [], []>} : vector<8x32xf32>, vector<32x64xf32>, vector<8x64xf32> -> vector<8x64xf32>
    %221 = arith.addf %215, %220 : vector<8x64xf32>
    %c0_228 = arith.constant 0 : index
    %c3_229 = arith.constant 3 : index
    %c0_230 = arith.constant 0 : index
    %222 = vector.load %arg16[%c0_228, %c3_229, %c0_230] : memref<8x16x32xf32, #tpu.memory_space<vmem>>, vector<8x1x32xf32>
    %223 = vector.shape_cast %222 : vector<8x1x32xf32> to vector<8x32xf32>
    %c3_231 = arith.constant 3 : index
    %c0_232 = arith.constant 0 : index
    %c0_233 = arith.constant 0 : index
    %224 = vector.load %arg8[%c3_231, %c0_232, %c0_233] : memref<16x32x64xf32, #tpu.memory_space<vmem>>, vector<1x32x64xf32>
    %225 = vector.shape_cast %224 : vector<1x32x64xf32> to vector<32x64xf32>
    %cst_234 = arith.constant dense<0.000000e+00> : vector<8x64xf32>
    %226 = tpu.matmul %223, %225, %cst_234 {dimension_numbers = #tpu.dot_dimension_numbers<[1], [0], [0], [1], [0, 0, 1, 1], [], []>} : vector<8x32xf32>, vector<32x64xf32>, vector<8x64xf32> -> vector<8x64xf32>
    %227 = arith.addf %221, %226 : vector<8x64xf32>
    %c0_235 = arith.constant 0 : index
    %c4_236 = arith.constant 4 : index
    %c0_237 = arith.constant 0 : index
    %228 = vector.load %arg16[%c0_235, %c4_236, %c0_237] : memref<8x16x32xf32, #tpu.memory_space<vmem>>, vector<8x1x32xf32>
    %229 = vector.shape_cast %228 : vector<8x1x32xf32> to vector<8x32xf32>
    %c4_238 = arith.constant 4 : index
    %c0_239 = arith.constant 0 : index
    %c0_240 = arith.constant 0 : index
    %230 = vector.load %arg8[%c4_238, %c0_239, %c0_240] : memref<16x32x64xf32, #tpu.memory_space<vmem>>, vector<1x32x64xf32>
    %231 = vector.shape_cast %230 : vector<1x32x64xf32> to vector<32x64xf32>
    %cst_241 = arith.constant dense<0.000000e+00> : vector<8x64xf32>
    %232 = tpu.matmul %229, %231, %cst_241 {dimension_numbers = #tpu.dot_dimension_numbers<[1], [0], [0], [1], [0, 0, 1, 1], [], []>} : vector<8x32xf32>, vector<32x64xf32>, vector<8x64xf32> -> vector<8x64xf32>
    %233 = arith.addf %227, %232 : vector<8x64xf32>
    %c0_242 = arith.constant 0 : index
    %c5_243 = arith.constant 5 : index
    %c0_244 = arith.constant 0 : index
    %234 = vector.load %arg16[%c0_242, %c5_243, %c0_244] : memref<8x16x32xf32, #tpu.memory_space<vmem>>, vector<8x1x32xf32>
    %235 = vector.shape_cast %234 : vector<8x1x32xf32> to vector<8x32xf32>
    %c5_245 = arith.constant 5 : index
    %c0_246 = arith.constant 0 : index
    %c0_247 = arith.constant 0 : index
    %236 = vector.load %arg8[%c5_245, %c0_246, %c0_247] : memref<16x32x64xf32, #tpu.memory_space<vmem>>, vector<1x32x64xf32>
    %237 = vector.shape_cast %236 : vector<1x32x64xf32> to vector<32x64xf32>
    %cst_248 = arith.constant dense<0.000000e+00> : vector<8x64xf32>
    %238 = tpu.matmul %235, %237, %cst_248 {dimension_numbers = #tpu.dot_dimension_numbers<[1], [0], [0], [1], [0, 0, 1, 1], [], []>} : vector<8x32xf32>, vector<32x64xf32>, vector<8x64xf32> -> vector<8x64xf32>
    %239 = arith.addf %233, %238 : vector<8x64xf32>
    %c0_249 = arith.constant 0 : index
    %c6_250 = arith.constant 6 : index
    %c0_251 = arith.constant 0 : index
    %240 = vector.load %arg16[%c0_249, %c6_250, %c0_251] : memref<8x16x32xf32, #tpu.memory_space<vmem>>, vector<8x1x32xf32>
    %241 = vector.shape_cast %240 : vector<8x1x32xf32> to vector<8x32xf32>
    %c6_252 = arith.constant 6 : index
    %c0_253 = arith.constant 0 : index
    %c0_254 = arith.constant 0 : index
    %242 = vector.load %arg8[%c6_252, %c0_253, %c0_254] : memref<16x32x64xf32, #tpu.memory_space<vmem>>, vector<1x32x64xf32>
    %243 = vector.shape_cast %242 : vector<1x32x64xf32> to vector<32x64xf32>
    %cst_255 = arith.constant dense<0.000000e+00> : vector<8x64xf32>
    %244 = tpu.matmul %241, %243, %cst_255 {dimension_numbers = #tpu.dot_dimension_numbers<[1], [0], [0], [1], [0, 0, 1, 1], [], []>} : vector<8x32xf32>, vector<32x64xf32>, vector<8x64xf32> -> vector<8x64xf32>
    %245 = arith.addf %239, %244 : vector<8x64xf32>
    %c0_256 = arith.constant 0 : index
    %c7_257 = arith.constant 7 : index
    %c0_258 = arith.constant 0 : index
    %246 = vector.load %arg16[%c0_256, %c7_257, %c0_258] : memref<8x16x32xf32, #tpu.memory_space<vmem>>, vector<8x1x32xf32>
    %247 = vector.shape_cast %246 : vector<8x1x32xf32> to vector<8x32xf32>
    %c7_259 = arith.constant 7 : index
    %c0_260 = arith.constant 0 : index
    %c0_261 = arith.constant 0 : index
    %248 = vector.load %arg8[%c7_259, %c0_260, %c0_261] : memref<16x32x64xf32, #tpu.memory_space<vmem>>, vector<1x32x64xf32>
    %249 = vector.shape_cast %248 : vector<1x32x64xf32> to vector<32x64xf32>
    %cst_262 = arith.constant dense<0.000000e+00> : vector<8x64xf32>
    %250 = tpu.matmul %247, %249, %cst_262 {dimension_numbers = #tpu.dot_dimension_numbers<[1], [0], [0], [1], [0, 0, 1, 1], [], []>} : vector<8x32xf32>, vector<32x64xf32>, vector<8x64xf32> -> vector<8x64xf32>
    %251 = arith.addf %245, %250 : vector<8x64xf32>
    %c0_263 = arith.constant 0 : index
    %c8_264 = arith.constant 8 : index
    %c0_265 = arith.constant 0 : index
    %252 = vector.load %arg16[%c0_263, %c8_264, %c0_265] : memref<8x16x32xf32, #tpu.memory_space<vmem>>, vector<8x1x32xf32>
    %253 = vector.shape_cast %252 : vector<8x1x32xf32> to vector<8x32xf32>
    %c8_266 = arith.constant 8 : index
    %c0_267 = arith.constant 0 : index
    %c0_268 = arith.constant 0 : index
    %254 = vector.load %arg8[%c8_266, %c0_267, %c0_268] : memref<16x32x64xf32, #tpu.memory_space<vmem>>, vector<1x32x64xf32>
    %255 = vector.shape_cast %254 : vector<1x32x64xf32> to vector<32x64xf32>
    %cst_269 = arith.constant dense<0.000000e+00> : vector<8x64xf32>
    %256 = tpu.matmul %253, %255, %cst_269 {dimension_numbers = #tpu.dot_dimension_numbers<[1], [0], [0], [1], [0, 0, 1, 1], [], []>} : vector<8x32xf32>, vector<32x64xf32>, vector<8x64xf32> -> vector<8x64xf32>
    %257 = arith.addf %251, %256 : vector<8x64xf32>
    %c0_270 = arith.constant 0 : index
    %c9 = arith.constant 9 : index
    %c0_271 = arith.constant 0 : index
    %258 = vector.load %arg16[%c0_270, %c9, %c0_271] : memref<8x16x32xf32, #tpu.memory_space<vmem>>, vector<8x1x32xf32>
    %259 = vector.shape_cast %258 : vector<8x1x32xf32> to vector<8x32xf32>
    %c9_272 = arith.constant 9 : index
    %c0_273 = arith.constant 0 : index
    %c0_274 = arith.constant 0 : index
    %260 = vector.load %arg8[%c9_272, %c0_273, %c0_274] : memref<16x32x64xf32, #tpu.memory_space<vmem>>, vector<1x32x64xf32>
    %261 = vector.shape_cast %260 : vector<1x32x64xf32> to vector<32x64xf32>
    %cst_275 = arith.constant dense<0.000000e+00> : vector<8x64xf32>
    %262 = tpu.matmul %259, %261, %cst_275 {dimension_numbers = #tpu.dot_dimension_numbers<[1], [0], [0], [1], [0, 0, 1, 1], [], []>} : vector<8x32xf32>, vector<32x64xf32>, vector<8x64xf32> -> vector<8x64xf32>
    %263 = arith.addf %257, %262 : vector<8x64xf32>
    %c0_276 = arith.constant 0 : index
    %c10 = arith.constant 10 : index
    %c0_277 = arith.constant 0 : index
    %264 = vector.load %arg16[%c0_276, %c10, %c0_277] : memref<8x16x32xf32, #tpu.memory_space<vmem>>, vector<8x1x32xf32>
    %265 = vector.shape_cast %264 : vector<8x1x32xf32> to vector<8x32xf32>
    %c10_278 = arith.constant 10 : index
    %c0_279 = arith.constant 0 : index
    %c0_280 = arith.constant 0 : index
    %266 = vector.load %arg8[%c10_278, %c0_279, %c0_280] : memref<16x32x64xf32, #tpu.memory_space<vmem>>, vector<1x32x64xf32>
    %267 = vector.shape_cast %266 : vector<1x32x64xf32> to vector<32x64xf32>
    %cst_281 = arith.constant dense<0.000000e+00> : vector<8x64xf32>
    %268 = tpu.matmul %265, %267, %cst_281 {dimension_numbers = #tpu.dot_dimension_numbers<[1], [0], [0], [1], [0, 0, 1, 1], [], []>} : vector<8x32xf32>, vector<32x64xf32>, vector<8x64xf32> -> vector<8x64xf32>
    %269 = arith.addf %263, %268 : vector<8x64xf32>
    %c0_282 = arith.constant 0 : index
    %c11 = arith.constant 11 : index
    %c0_283 = arith.constant 0 : index
    %270 = vector.load %arg16[%c0_282, %c11, %c0_283] : memref<8x16x32xf32, #tpu.memory_space<vmem>>, vector<8x1x32xf32>
    %271 = vector.shape_cast %270 : vector<8x1x32xf32> to vector<8x32xf32>
    %c11_284 = arith.constant 11 : index
    %c0_285 = arith.constant 0 : index
    %c0_286 = arith.constant 0 : index
    %272 = vector.load %arg8[%c11_284, %c0_285, %c0_286] : memref<16x32x64xf32, #tpu.memory_space<vmem>>, vector<1x32x64xf32>
    %273 = vector.shape_cast %272 : vector<1x32x64xf32> to vector<32x64xf32>
    %cst_287 = arith.constant dense<0.000000e+00> : vector<8x64xf32>
    %274 = tpu.matmul %271, %273, %cst_287 {dimension_numbers = #tpu.dot_dimension_numbers<[1], [0], [0], [1], [0, 0, 1, 1], [], []>} : vector<8x32xf32>, vector<32x64xf32>, vector<8x64xf32> -> vector<8x64xf32>
    %275 = arith.addf %269, %274 : vector<8x64xf32>
    %c0_288 = arith.constant 0 : index
    %c12_289 = arith.constant 12 : index
    %c0_290 = arith.constant 0 : index
    %276 = vector.load %arg16[%c0_288, %c12_289, %c0_290] : memref<8x16x32xf32, #tpu.memory_space<vmem>>, vector<8x1x32xf32>
    %277 = vector.shape_cast %276 : vector<8x1x32xf32> to vector<8x32xf32>
    %c12_291 = arith.constant 12 : index
    %c0_292 = arith.constant 0 : index
    %c0_293 = arith.constant 0 : index
    %278 = vector.load %arg8[%c12_291, %c0_292, %c0_293] : memref<16x32x64xf32, #tpu.memory_space<vmem>>, vector<1x32x64xf32>
    %279 = vector.shape_cast %278 : vector<1x32x64xf32> to vector<32x64xf32>
    %cst_294 = arith.constant dense<0.000000e+00> : vector<8x64xf32>
    %280 = tpu.matmul %277, %279, %cst_294 {dimension_numbers = #tpu.dot_dimension_numbers<[1], [0], [0], [1], [0, 0, 1, 1], [], []>} : vector<8x32xf32>, vector<32x64xf32>, vector<8x64xf32> -> vector<8x64xf32>
    %281 = arith.addf %275, %280 : vector<8x64xf32>
    %c0_295 = arith.constant 0 : index
    %c13 = arith.constant 13 : index
    %c0_296 = arith.constant 0 : index
    %282 = vector.load %arg16[%c0_295, %c13, %c0_296] : memref<8x16x32xf32, #tpu.memory_space<vmem>>, vector<8x1x32xf32>
    %283 = vector.shape_cast %282 : vector<8x1x32xf32> to vector<8x32xf32>
    %c13_297 = arith.constant 13 : index
    %c0_298 = arith.constant 0 : index
    %c0_299 = arith.constant 0 : index
    %284 = vector.load %arg8[%c13_297, %c0_298, %c0_299] : memref<16x32x64xf32, #tpu.memory_space<vmem>>, vector<1x32x64xf32>
    %285 = vector.shape_cast %284 : vector<1x32x64xf32> to vector<32x64xf32>
    %cst_300 = arith.constant dense<0.000000e+00> : vector<8x64xf32>
    %286 = tpu.matmul %283, %285, %cst_300 {dimension_numbers = #tpu.dot_dimension_numbers<[1], [0], [0], [1], [0, 0, 1, 1], [], []>} : vector<8x32xf32>, vector<32x64xf32>, vector<8x64xf32> -> vector<8x64xf32>
    %287 = arith.addf %281, %286 : vector<8x64xf32>
    %c0_301 = arith.constant 0 : index
    %c14_302 = arith.constant 14 : index
    %c0_303 = arith.constant 0 : index
    %288 = vector.load %arg16[%c0_301, %c14_302, %c0_303] : memref<8x16x32xf32, #tpu.memory_space<vmem>>, vector<8x1x32xf32>
    %289 = vector.shape_cast %288 : vector<8x1x32xf32> to vector<8x32xf32>
    %c14_304 = arith.constant 14 : index
    %c0_305 = arith.constant 0 : index
    %c0_306 = arith.constant 0 : index
    %290 = vector.load %arg8[%c14_304, %c0_305, %c0_306] : memref<16x32x64xf32, #tpu.memory_space<vmem>>, vector<1x32x64xf32>
    %291 = vector.shape_cast %290 : vector<1x32x64xf32> to vector<32x64xf32>
    %cst_307 = arith.constant dense<0.000000e+00> : vector<8x64xf32>
    %292 = tpu.matmul %289, %291, %cst_307 {dimension_numbers = #tpu.dot_dimension_numbers<[1], [0], [0], [1], [0, 0, 1, 1], [], []>} : vector<8x32xf32>, vector<32x64xf32>, vector<8x64xf32> -> vector<8x64xf32>
    %293 = arith.addf %287, %292 : vector<8x64xf32>
    %c0_308 = arith.constant 0 : index
    %c15 = arith.constant 15 : index
    %c0_309 = arith.constant 0 : index
    %294 = vector.load %arg16[%c0_308, %c15, %c0_309] : memref<8x16x32xf32, #tpu.memory_space<vmem>>, vector<8x1x32xf32>
    %295 = vector.shape_cast %294 : vector<8x1x32xf32> to vector<8x32xf32>
    %c15_310 = arith.constant 15 : index
    %c0_311 = arith.constant 0 : index
    %c0_312 = arith.constant 0 : index
    %296 = vector.load %arg8[%c15_310, %c0_311, %c0_312] : memref<16x32x64xf32, #tpu.memory_space<vmem>>, vector<1x32x64xf32>
    %297 = vector.shape_cast %296 : vector<1x32x64xf32> to vector<32x64xf32>
    %cst_313 = arith.constant dense<0.000000e+00> : vector<8x64xf32>
    %298 = tpu.matmul %295, %297, %cst_313 {dimension_numbers = #tpu.dot_dimension_numbers<[1], [0], [0], [1], [0, 0, 1, 1], [], []>} : vector<8x32xf32>, vector<32x64xf32>, vector<8x64xf32> -> vector<8x64xf32>
    %299 = arith.addf %293, %298 : vector<8x64xf32>
    %c0_314 = arith.constant 0 : index
    %c0_315 = arith.constant 0 : index
    %300 = vector.load %arg9[%c0_314, %c0_315] : memref<1x64xf32, #tpu.memory_space<vmem>>, vector<1x64xf32>
    %301 = vector.broadcast %300 : vector<1x64xf32> to vector<8x64xf32>
    %302 = arith.addf %299, %301 : vector<8x64xf32>
    %cst_316 = arith.constant 0.000000e+00 : f32
    %303 = vector.broadcast %cst_316 : f32 to vector<8x64xf32>
    %304 = arith.maximumf %302, %303 : vector<8x64xf32>
    %c0_317 = arith.constant 0 : index
    %c0_318 = arith.constant 0 : index
    %305 = vector.load %arg10[%c0_317, %c0_318] : memref<64x6xf32, #tpu.memory_space<vmem>>, vector<64x6xf32>
    %cst_319 = arith.constant dense<0.000000e+00> : vector<8x6xf32>
    %306 = tpu.matmul %304, %305, %cst_319 {dimension_numbers = #tpu.dot_dimension_numbers<[1], [0], [0], [1], [0, 0, 1, 1], [], []>} : vector<8x64xf32>, vector<64x6xf32>, vector<8x6xf32> -> vector<8x6xf32>
    %c0_320 = arith.constant 0 : index
    %c0_321 = arith.constant 0 : index
    %307 = vector.load %arg11[%c0_320, %c0_321] : memref<1x6xf32, #tpu.memory_space<vmem>>, vector<1x6xf32>
    %308 = vector.broadcast %307 : vector<1x6xf32> to vector<8x6xf32>
    %309 = arith.addf %306, %308 : vector<8x6xf32>
    %c0_322 = arith.constant 0 : index
    %c0_323 = arith.constant 0 : index
    %310 = vector.load %arg12[%c0_322, %c0_323] : memref<8x6xf32, #tpu.memory_space<vmem>>, vector<8x6xf32>
    tpu.vector_store %arg12[%c0_322, %c0_323], %309 {strides = array<i32>} : memref<8x6xf32, #tpu.memory_space<vmem>>, vector<8x6xf32>,
    return
  }
  func.func @transform_0(%arg0: i32) -> (i32, i32) {
    %c0_i32 = arith.constant 0 : i32
    %c0_i32_0 = arith.constant 0 : i32
    return %arg0, %c0_i32 : i32, i32
  }
  func.func @transform_1(%arg0: i32) -> (i32, i32, i32) {
    %c0_i32 = arith.constant 0 : i32
    %c0_i32_0 = arith.constant 0 : i32
    %c0_i32_1 = arith.constant 0 : i32
    %c0_i32_2 = arith.constant 0 : i32
    return %c0_i32, %c0_i32_0, %c0_i32_1 : i32, i32, i32
  }
  func.func @transform_2(%arg0: i32) -> (i32, i32) {
    %c0_i32 = arith.constant 0 : i32
    %c0_i32_0 = arith.constant 0 : i32
    %c0_i32_1 = arith.constant 0 : i32
    return %c0_i32, %c0_i32_0 : i32, i32
  }
  func.func @transform_3(%arg0: i32) -> (i32, i32, i32) {
    %c0_i32 = arith.constant 0 : i32
    %c0_i32_0 = arith.constant 0 : i32
    %c0_i32_1 = arith.constant 0 : i32
    %c0_i32_2 = arith.constant 0 : i32
    return %c0_i32, %c0_i32_0, %c0_i32_1 : i32, i32, i32
  }
  func.func @transform_4(%arg0: i32) -> (i32, i32) {
    %c0_i32 = arith.constant 0 : i32
    %c0_i32_0 = arith.constant 0 : i32
    %c0_i32_1 = arith.constant 0 : i32
    return %c0_i32, %c0_i32_0 : i32, i32
  }
  func.func @transform_5(%arg0: i32) -> (i32, i32, i32) {
    %c0_i32 = arith.constant 0 : i32
    %c0_i32_0 = arith.constant 0 : i32
    %c0_i32_1 = arith.constant 0 : i32
    %c0_i32_2 = arith.constant 0 : i32
    return %c0_i32, %c0_i32_0, %c0_i32_1 : i32, i32, i32
  }
  func.func @transform_6(%arg0: i32) -> (i32, i32) {
    %c0_i32 = arith.constant 0 : i32
    %c0_i32_0 = arith.constant 0 : i32
    %c0_i32_1 = arith.constant 0 : i32
    return %c0_i32, %c0_i32_0 : i32, i32
  }
  func.func @transform_7(%arg0: i32) -> (i32, i32, i32) {
    %c0_i32 = arith.constant 0 : i32
    %c0_i32_0 = arith.constant 0 : i32
    %c0_i32_1 = arith.constant 0 : i32
    %c0_i32_2 = arith.constant 0 : i32
    return %c0_i32, %c0_i32_0, %c0_i32_1 : i32, i32, i32
  }
  func.func @transform_8(%arg0: i32) -> (i32, i32) {
    %c0_i32 = arith.constant 0 : i32
    %c0_i32_0 = arith.constant 0 : i32
    %c0_i32_1 = arith.constant 0 : i32
    return %c0_i32, %c0_i32_0 : i32, i32
  }
  func.func @transform_9(%arg0: i32) -> (i32, i32) {
    %c0_i32 = arith.constant 0 : i32
    %c0_i32_0 = arith.constant 0 : i32
    %c0_i32_1 = arith.constant 0 : i32
    return %c0_i32, %c0_i32_0 : i32, i32
  }
  func.func @transform_10(%arg0: i32) -> (i32, i32) {
    %c0_i32 = arith.constant 0 : i32
    %c0_i32_0 = arith.constant 0 : i32
    %c0_i32_1 = arith.constant 0 : i32
    return %c0_i32, %c0_i32_0 : i32, i32
  }
  func.func @transform_11(%arg0: i32) -> (i32, i32) {
    %c0_i32 = arith.constant 0 : i32
    %c0_i32_0 = arith.constant 0 : i32
    return %arg0, %c0_i32 : i32, i32
  }
}

</mosaic_0001>

<llo_original>
// kernel: minigrid_formula_dqn_forward.1
$region0: #{minigrid_formula_dqn_forward.1}
  #allocation0 [shape = 'u32[]', space=smem, size = 0x4, offset = 0x4, fixed_abs, tag = 'smem constant byte address 0x4 - core index']
  #allocation1 [shape = 'u32[72,128]{1,0:T(1,128)}', space=vmem, size = 0x9000, scoped, tag = 'internal scratch']
  #allocation2 [shape = 'f32[384,16]{1,0:T(8,128)}', space=vmem, size = 0x30000, scoped, tag = 'scratch operand']
  #allocation3 [shape = 'f32[376,32]{1,0:T(8,128)}', space=vmem, size = 0x2f000, scoped, tag = 'scratch operand']
  #allocation4 [shape = 'f32[368,32]{1,0:T(8,128)}', space=vmem, size = 0x2e000, scoped, tag = 'scratch operand']
  #allocation5 [shape = 'f32[8,16,32]{2,1,0:T(8,128)}', space=vmem, size = 0x10000, scoped, tag = 'scratch operand']
  %s0 = inlined_call_operand.vmem [shape: f32[784,3], index: 0, kind: input, shape index: {}]
  %s1 = inlined_call_operand.vmem [shape: f32[4,3,16], index: 1, kind: input, shape index: {}]
  %s2 = inlined_call_operand.vmem [shape: f32[1,16], index: 2, kind: input, shape index: {}]
  %s3 = inlined_call_operand.vmem [shape: f32[4,16,32], index: 3, kind: input, shape index: {}]
  %s4 = inlined_call_operand.vmem [shape: f32[1,32], index: 4, kind: input, shape index: {}]
  %s5 = inlined_call_operand.vmem [shape: f32[4,32,32], index: 5, kind: input, shape index: {}]
  %s6 = inlined_call_operand.vmem [shape: f32[1,32], index: 6, kind: input, shape index: {}]
  %s7 = inlined_call_operand.vmem [shape: f32[16,32,64], index: 7, kind: input, shape index: {}]
  %s8 = inlined_call_operand.vmem [shape: f32[1,64], index: 8, kind: input, shape index: {}]
  %s9 = inlined_call_operand.vmem [shape: f32[64,6], index: 9, kind: input, shape index: {}]
  %s10 = inlined_call_operand.vmem [shape: f32[1,6], index: 10, kind: input, shape index: {}]
  %s11 = inlined_call_operand.vmem [shape: f32[16,6], index: 11, kind: output, shape index: {}]
  %s12 = sld [smem:[#allocation0]]
  $region77: #{minigrid_formula_dqn_forward.1} parent=0
    _
  %s14 = ssub.s32 1, %s12
  %s15 = scalar_select 0, %s14, %s12
  loop: start=0, step=1, limit=4
  $region2: #{minigrid_formula_dqn_forward.1} parent=0 // loop_pre_header
    _
  $region3: #{minigrid_formula_dqn_forward.1} parent=0 // loop_header
    %s17 = sphi 0, %s21
    %p18 = scmp.ge.s32.totalorder %s17, 4
    %s27 = sphi 0, %s29
    %s30 = sphi 0, %s27
    %s31 = sphi 0, %s30
    %s47 = sphi 0, %s31
    %s51 = sphi 0, %s51
    %s53 = sphi 0, %s51
    %s54 = sphi 0, %s53
    %s68 = sphi 0, %s54
    %s72 = sphi 0, %s72
    %s74 = sphi 0, %s72
    %s75 = sphi 0, %s74
    %s89 = sphi 0, %s75
    %s93 = sphi 0, %s93
    %s95 = sphi 0, %s93
    %s96 = sphi 0, %s95
    %s110 = sphi 0, %s96
    %s114 = sphi 0, %s114
    %s116 = sphi 0, %s114
    %s117 = sphi 0, %s116
    %s131 = sphi 0, %s117
    %s135 = sphi 0, %s135
    %s137 = sphi 0, %s135
    %s138 = sphi 0, %s137
    %s152 = sphi 0, %s138
    %s156 = sphi 0, %s156
    %s158 = sphi 0, %s156
    %s159 = sphi 0, %s158
    %s173 = sphi 0, %s159
    %s177 = sphi 0, %s177
    %s179 = sphi 0, %s177
    %s180 = sphi 0, %s179
    %s194 = sphi 0, %s180
    %s198 = sphi 0, %s198
    %s200 = sphi 0, %s198
    %s201 = sphi 0, %s200
    %s215 = sphi 0, %s201
    %s219 = sphi 0, %s219
    %s221 = sphi 0, %s219
    %s222 = sphi 0, %s221
    %s236 = sphi 0, %s222
    %s240 = sphi 0, %s240
    %s242 = sphi 0, %s240
    %s243 = sphi 0, %s242
    %s257 = sphi 0, %s243
    %s263 = sphi 0, %s265
    %s266 = sphi 0, %s263
    %s267 = sphi 0, %s266
    %s283 = sphi 0, %s267
  $region4: #{minigrid_formula_dqn_forward.1} parent=0 // loop_header_branch
    %20 = sbr.rel (%p18) target = $region8
  $region5: #{minigrid_formula_dqn_forward.1} parent=0 // loop_body
    %s22 = ssub.s32 %s17, 1
    %s23 = ssub.s32 %s17, 2
    %s24 = sadd.s32 %s17, 1
    %s25 = ssub.s32 %s17, %s24
    %p26 = scmp.eq.s32.totalorder %s25, 0
    %s28 = sadd.s32 %s27, 1
    %s29 = scalar_select %p26, %s27, %s28
    %p32 = pneg %p26
    %p33 = scmp.eq.s32.totalorder %s17, 1
    %p34 = por %p32, %p33
    %p35 = scmp.ne.s32.totalorder %s27, %s30
    %p36 = scmp.eq.s32.totalorder %s17, 0
    %p37 = por %p35, %p36
    %p38 = scmp.ne.s32.totalorder %s27, %s30
    %p39 = scmp.eq.s32.totalorder %s22, 1
    %p40 = por %p38, %p39
    %p41 = scmp.ne.s32.totalorder %s30, %s31
    %p42 = scmp.eq.s32.totalorder %s22, 0
    %p43 = por %p41, %p42
    %p44 = scmp.ne.s32.totalorder %s30, %s31
    %p45 = scmp.eq.s32.totalorder %s23, 1
    %p46 = por %p44, %p45
    %p48 = scmp.ne.s32.totalorder %s31, %s47
    %p49 = scmp.eq.s32.totalorder %s23, 0
    %p50 = por %p48, %p49
    %s52 = sadd.s32 %s51, 1
    %p55 = scmp.eq.s32.totalorder %s17, 1
    %p56 = scmp.ne.s32.totalorder %s51, %s53
    %p57 = scmp.eq.s32.totalorder %s17, 0
    %p58 = por %p56, %p57
    %p59 = scmp.ne.s32.totalorder %s51, %s53
    %p60 = scmp.eq.s32.totalorder %s22, 1
    %p61 = por %p59, %p60
    %p62 = scmp.ne.s32.totalorder %s53, %s54
    %p63 = scmp.eq.s32.totalorder %s22, 0
    %p64 = por %p62, %p63
    %p65 = scmp.ne.s32.totalorder %s53, %s54
    %p66 = scmp.eq.s32.totalorder %s23, 1
    %p67 = por %p65, %p66
    %p69 = scmp.ne.s32.totalorder %s54, %s68
    %p70 = scmp.eq.s32.totalorder %s23, 0
    %p71 = por %p69, %p70
    %s73 = sadd.s32 %s72, 1
    %p76 = scmp.eq.s32.totalorder %s17, 1
    %p77 = scmp.ne.s32.totalorder %s72, %s74
    %p78 = scmp.eq.s32.totalorder %s17, 0
    %p79 = por %p77, %p78
    %p80 = scmp.ne.s32.totalorder %s72, %s74
    %p81 = scmp.eq.s32.totalorder %s22, 1
    %p82 = por %p80, %p81
    %p83 = scmp.ne.s32.totalorder %s74, %s75
    %p84 = scmp.eq.s32.totalorder %s22, 0
    %p85 = por %p83, %p84
    %p86 = scmp.ne.s32.totalorder %s74, %s75
    %p87 = scmp.eq.s32.totalorder %s23, 1
    %p88 = por %p86, %p87
    %p90 = scmp.ne.s32.totalorder %s75, %s89
    %p91 = scmp.eq.s32.totalorder %s23, 0
    %p92 = por %p90, %p91
    %s94 = sadd.s32 %s93, 1
    %p97 = scmp.eq.s32.totalorder %s17, 1
    %p98 = scmp.ne.s32.totalorder %s93, %s95
    %p99 = scmp.eq.s32.totalorder %s17, 0
    %p100 = por %p98, %p99
    %p101 = scmp.ne.s32.totalorder %s93, %s95
    %p102 = scmp.eq.s32.totalorder %s22, 1
    %p103 = por %p101, %p102
    %p104 = scmp.ne.s32.totalorder %s95, %s96
    %p105 = scmp.eq.s32.totalorder %s22, 0
    %p106 = por %p104, %p105
    %p107 = scmp.ne.s32.totalorder %s95, %s96
    %p108 = scmp.eq.s32.totalorder %s23, 1
    %p109 = por %p107, %p108
    %p111 = scmp.ne.s32.totalorder %s96, %s110
    %p112 = scmp.eq.s32.totalorder %s23, 0
    %p113 = por %p111, %p112
    %s115 = sadd.s32 %s114, 1
    %p118 = scmp.eq.s32.totalorder %s17, 1
    %p119 = scmp.ne.s32.totalorder %s114, %s116
    %p120 = scmp.eq.s32.totalorder %s17, 0
    %p121 = por %p119, %p120
    %p122 = scmp.ne.s32.totalorder %s114, %s116
    %p123 = scmp.eq.s32.totalorder %s22, 1
    %p124 = por %p122, %p123
    %p125 = scmp.ne.s32.totalorder %s116, %s117
    %p126 = scmp.eq.s32.totalorder %s22, 0
    %p127 = por %p125, %p126
    %p128 = scmp.ne.s32.totalorder %s116, %s117
    %p129 = scmp.eq.s32.totalorder %s23, 1
    %p130 = por %p128, %p129
    %p132 = scmp.ne.s32.totalorder %s117, %s131
    %p133 = scmp.eq.s32.totalorder %s23, 0
    %p134 = por %p132, %p133
    %s136 = sadd.s32 %s135, 1
    %p139 = scmp.eq.s32.totalorder %s17, 1
    %p140 = scmp.ne.s32.totalorder %s135, %s137
    %p141 = scmp.eq.s32.totalorder %s17, 0
    %p142 = por %p140, %p141
    %p143 = scmp.ne.s32.totalorder %s135, %s137
    %p144 = scmp.eq.s32.totalorder %s22, 1
    %p145 = por %p143, %p144
    %p146 = scmp.ne.s32.totalorder %s137, %s138
    %p147 = scmp.eq.s32.totalorder %s22, 0
    %p148 = por %p146, %p147
    %p149 = scmp.ne.s32.totalorder %s137, %s138
    %p150 = scmp.eq.s32.totalorder %s23, 1
    %p151 = por %p149, %p150
    %p153 = scmp.ne.s32.totalorder %s138, %s152
    %p154 = scmp.eq.s32.totalorder %s23, 0
    %p155 = por %p153, %p154
    %s157 = sadd.s32 %s156, 1
    %p160 = scmp.eq.s32.totalorder %s17, 1
    %p161 = scmp.ne.s32.totalorder %s156, %s158
    %p162 = scmp.eq.s32.totalorder %s17, 0
    %p163 = por %p161, %p162
    %p164 = scmp.ne.s32.totalorder %s156, %s158
    %p165 = scmp.eq.s32.totalorder %s22, 1
    %p166 = por %p164, %p165
    %p167 = scmp.ne.s32.totalorder %s158, %s159
    %p168 = scmp.eq.s32.totalorder %s22, 0
    %p169 = por %p167, %p168
    %p170 = scmp.ne.s32.totalorder %s158, %s159
    %p171 = scmp.eq.s32.totalorder %s23, 1
    %p172 = por %p170, %p171
    %p174 = scmp.ne.s32.totalorder %s159, %s173
    %p175 = scmp.eq.s32.totalorder %s23, 0
    %p176 = por %p174, %p175
    %s178 = sadd.s32 %s177, 1
    %p181 = scmp.eq.s32.totalorder %s17, 1
    %p182 = scmp.ne.s32.totalorder %s177, %s179
    %p183 = scmp.eq.s32.totalorder %s17, 0
    %p184 = por %p182, %p183
    %p185 = scmp.ne.s32.totalorder %s177, %s179
    %p186 = scmp.eq.s32.totalorder %s22, 1
    %p187 = por %p185, %p186
    %p188 = scmp.ne.s32.totalorder %s179, %s180
    %p189 = scmp.eq.s32.totalorder %s22, 0
    %p190 = por %p188, %p189
    %p191 = scmp.ne.s32.totalorder %s179, %s180
    %p192 = scmp.eq.s32.totalorder %s23, 1
    %p193 = por %p191, %p192
    %p195 = scmp.ne.s32.totalorder %s180, %s194
    %p196 = scmp.eq.s32.totalorder %s23, 0
    %p197 = por %p195, %p196
    %s199 = sadd.s32 %s198, 1
    %p202 = scmp.eq.s32.totalorder %s17, 1
    %p203 = scmp.ne.s32.totalorder %s198, %s200
    %p204 = scmp.eq.s32.totalorder %s17, 0
    %p205 = por %p203, %p204
    %p206 = scmp.ne.s32.totalorder %s198, %s200
    %p207 = scmp.eq.s32.totalorder %s22, 1
    %p208 = por %p206, %p207
    %p209 = scmp.ne.s32.totalorder %s200, %s201
    %p210 = scmp.eq.s32.totalorder %s22, 0
    %p211 = por %p209, %p210
    %p212 = scmp.ne.s32.totalorder %s200, %s201
    %p213 = scmp.eq.s32.totalorder %s23, 1
    %p214 = por %p212, %p213
    %p216 = scmp.ne.s32.totalorder %s201, %s215
    %p217 = scmp.eq.s32.totalorder %s23, 0
    %p218 = por %p216, %p217
    %s220 = sadd.s32 %s219, 1
    %p223 = scmp.eq.s32.totalorder %s17, 1
    %p224 = scmp.ne.s32.totalorder %s219, %s221
    %p225 = scmp.eq.s32.totalorder %s17, 0
    %p226 = por %p224, %p225
    %p227 = scmp.ne.s32.totalorder %s219, %s221
    %p228 = scmp.eq.s32.totalorder %s22, 1
    %p229 = por %p227, %p228
    %p230 = scmp.ne.s32.totalorder %s221, %s222
    %p231 = scmp.eq.s32.totalorder %s22, 0
    %p232 = por %p230, %p231
    %p233 = scmp.ne.s32.totalorder %s221, %s222
    %p234 = scmp.eq.s32.totalorder %s23, 1
    %p235 = por %p233, %p234
    %p237 = scmp.ne.s32.totalorder %s222, %s236
    %p238 = scmp.eq.s32.totalorder %s23, 0
    %p239 = por %p237, %p238
    %s241 = sadd.s32 %s240, 1
    %p244 = scmp.eq.s32.totalorder %s17, 1
    %p245 = scmp.ne.s32.totalorder %s240, %s242
    %p246 = scmp.eq.s32.totalorder %s17, 0
    %p247 = por %p245, %p246
    %p248 = scmp.ne.s32.totalorder %s240, %s242
    %p249 = scmp.eq.s32.totalorder %s22, 1
    %p250 = por %p248, %p249
    %p251 = scmp.ne.s32.totalorder %s242, %s243
    %p252 = scmp.eq.s32.totalorder %s22, 0
    %p253 = por %p251, %p252
    %p254 = scmp.ne.s32.totalorder %s242, %s243
    %p255 = scmp.eq.s32.totalorder %s23, 1
    %p256 = por %p254, %p255
    %p258 = scmp.ne.s32.totalorder %s243, %s257
    %p259 = scmp.eq.s32.totalorder %s23, 0
    %p260 = por %p258, %p259
    %s261 = ssub.s32 %s17, %s24
    %p262 = scmp.eq.s32.totalorder %s261, 0
    %s264 = sadd.s32 %s263, 1
    %s265 = scalar_select %p262, %s263, %s264
    %p268 = pneg %p262
    %p269 = scmp.eq.s32.totalorder %s17, 1
    %p270 = por %p268, %p269
    %p271 = scmp.ne.s32.totalorder %s263, %s266
    %p272 = scmp.eq.s32.totalorder %s17, 0
    %p273 = por %p271, %p272
    %p274 = scmp.ne.s32.totalorder %s263, %s266
    %p275 = scmp.eq.s32.totalorder %s22, 1
    %p276 = por %p274, %p275
    %p277 = scmp.ne.s32.totalorder %s266, %s267
    %p278 = scmp.eq.s32.totalorder %s22, 0
    %p279 = por %p277, %p278
    %p280 = scmp.ne.s32.totalorder %s266, %s267
    %p281 = scmp.eq.s32.totalorder %s23, 1
    %p282 = por %p280, %p281
    %p284 = scmp.ne.s32.totalorder %s267, %s283
    %p285 = scmp.eq.s32.totalorder %s23, 0
    %p286 = por %p284, %p285
    %p287 = scmp.le.s32.totalorder 1, %s17
    %p288 = scmp.lt.s32.totalorder %s17, 3
    %p289 = pnand %p287, %p288
    %p290 = pneg %p289
    // Predicated region
    $region9: #{minigrid_formula_dqn_forward.1} parent=5 // pred_check
      _
    $region10: #{minigrid_formula_dqn_forward.1} parent=5 // pred_check_branch
      %292 = sbr.rel (%p289) target = $region12
    $region11: #{minigrid_formula_dqn_forward.1} parent=5 // pred_region
      %s293 = ssub.s32 %s17, 1
      // Predicated region
      $region13: #{minigrid_formula_dqn_forward.1} parent=11 // pred_check
        %p294 = pneg %p64
      $region14: #{minigrid_formula_dqn_forward.1} parent=11 // pred_check_branch
        %296 = sbr.rel (%p294) target = $region16
      $region15: #{minigrid_formula_dqn_forward.1} parent=11 // pred_region
        _
      $region16: #{minigrid_formula_dqn_forward.1} parent=11 // pred_fallthru
        _
      // Predicated region
      $region17: #{minigrid_formula_dqn_forward.1} parent=11 // pred_check
        %p297 = pneg %p85
      $region18: #{minigrid_formula_dqn_forward.1} parent=11 // pred_check_branch
        %299 = sbr.rel (%p297) target = $region20
      $region19: #{minigrid_formula_dqn_forward.1} parent=11 // pred_region
        _
      $region20: #{minigrid_formula_dqn_forward.1} parent=11 // pred_fallthru
        _
      // Predicated region
      $region21: #{minigrid_formula_dqn_forward.1} parent=11 // pred_check
        %p300 = pneg %p106
      $region22: #{minigrid_formula_dqn_forward.1} parent=11 // pred_check_branch
        %302 = sbr.rel (%p300) target = $region24
      $region23: #{minigrid_formula_dqn_forward.1} parent=11 // pred_region
        _
      $region24: #{minigrid_formula_dqn_forward.1} parent=11 // pred_fallthru
        _
      // Predicated region
      $region25: #{minigrid_formula_dqn_forward.1} parent=11 // pred_check
        %p303 = pneg %p127
      $region26: #{minigrid_formula_dqn_forward.1} parent=11 // pred_check_branch
        %305 = sbr.rel (%p303) target = $region28
      $region27: #{minigrid_formula_dqn_forward.1} parent=11 // pred_region
        _
      $region28: #{minigrid_formula_dqn_forward.1} parent=11 // pred_fallthru
        _
      // Predicated region
      $region29: #{minigrid_formula_dqn_forward.1} parent=11 // pred_check
        %p306 = pneg %p148
      $region30: #{minigrid_formula_dqn_forward.1} parent=11 // pred_check_branch
        %308 = sbr.rel (%p306) target = $region32
      $region31: #{minigrid_formula_dqn_forward.1} parent=11 // pred_region
        _
      $region32: #{minigrid_formula_dqn_forward.1} parent=11 // pred_fallthru
        _
      // Predicated region
      $region33: #{minigrid_formula_dqn_forward.1} parent=11 // pred_check
        %p309 = pneg %p169
      $region34: #{minigrid_formula_dqn_forward.1} parent=11 // pred_check_branch
        %311 = sbr.rel (%p309) target = $region36
      $region35: #{minigrid_formula_dqn_forward.1} parent=11 // pred_region
        _
      $region36: #{minigrid_formula_dqn_forward.1} parent=11 // pred_fallthru
        _
      // Predicated region
      $region37: #{minigrid_formula_dqn_forward.1} parent=11 // pred_check
        %p312 = pneg %p190
      $region38: #{minigrid_formula_dqn_forward.1} parent=11 // pred_check_branch
        %314 = sbr.rel (%p312) target = $region40
      $region39: #{minigrid_formula_dqn_forward.1} parent=11 // pred_region
        _
      $region40: #{minigrid_formula_dqn_forward.1} parent=11 // pred_fallthru
        _
      // Predicated region
      $region41: #{minigrid_formula_dqn_forward.1} parent=11 // pred_check
        %p315 = pneg %p211
      $region42: #{minigrid_formula_dqn_forward.1} parent=11 // pred_check_branch
        %317 = sbr.rel (%p315) target = $region44
      $region43: #{minigrid_formula_dqn_forward.1} parent=11 // pred_region
        _
      $region44: #{minigrid_formula_dqn_forward.1} parent=11 // pred_fallthru
        _
      // Predicated region
      $region45: #{minigrid_formula_dqn_forward.1} parent=11 // pred_check
        %p318 = pneg %p232
      $region46: #{minigrid_formula_dqn_forward.1} parent=11 // pred_check_branch
        %320 = sbr.rel (%p318) target = $region48
      $region47: #{minigrid_formula_dqn_forward.1} parent=11 // pred_region
        _
      $region48: #{minigrid_formula_dqn_forward.1} parent=11 // pred_fallthru
        _
      // Predicated region
      $region49: #{minigrid_formula_dqn_forward.1} parent=11 // pred_check
        %p321 = pneg %p253
      $region50: #{minigrid_formula_dqn_forward.1} parent=11 // pred_check_branch
        %323 = sbr.rel (%p321) target = $region52
      $region51: #{minigrid_formula_dqn_forward.1} parent=11 // pred_region
        _
      $region52: #{minigrid_formula_dqn_forward.1} parent=11 // pred_fallthru
        _
    $region12: #{minigrid_formula_dqn_forward.1} parent=5 // pred_fallthru
      _
    %p324 = scmp.lt.s32.totalorder %s17, 2
    // Predicated region
    $region53: #{minigrid_formula_dqn_forward.1} parent=5 // pred_check
      %p325 = pneg %p324
    $region54: #{minigrid_formula_dqn_forward.1} parent=5 // pred_check_branch
      %327 = sbr.rel (%p325) target = $region56
    $region55: #{minigrid_formula_dqn_forward.1} parent=5 // pred_region
      // Predicated region
      $region57: #{minigrid_formula_dqn_forward.1} parent=55 // pred_check
        %p328 = pneg %p37
      $region58: #{minigrid_formula_dqn_forward.1} parent=55 // pred_check_branch
        %330 = sbr.rel (%p328) target = $region60
      $region59: #{minigrid_formula_dqn_forward.1} parent=55 // pred_region
        %s331 = smul.u32 49, %s17
        %p332 = scmp.lt.s32.totalorder %s331, 97
        %s333 = scalar_select %p332, %s331, 97
        %s334 = smul.addr %s333, 8
        %s335 = scalar_lea.vmem %s0, %s334
        %s336 = smul.u32 49, %s17
      $region60: #{minigrid_formula_dqn_forward.1} parent=55 // pred_fallthru
        _
    $region56: #{minigrid_formula_dqn_forward.1} parent=5 // pred_fallthru
      _
    %p337 = scmp.le.s32.totalorder 1, %s17
    %p338 = scmp.lt.s32.totalorder %s17, 3
    %p339 = pnand %p337, %p338
    %p340 = pneg %p339
    // Predicated region
    $region61: #{minigrid_formula_dqn_forward.1} parent=5 // pred_check
      _
    $region62: #{minigrid_formula_dqn_forward.1} parent=5 // pred_check_branch
      %342 = sbr.rel (%p339) target = $region64
    $region63: #{minigrid_formula_dqn_forward.1} parent=5 // pred_region
      %s343 = ssub.s32 %s17, 1
      %s344 = smul.u32 49, %s22
      %p345 = scmp.lt.s32.totalorder %s344, 97
      %s346 = scalar_select %p345, %s344, 97
      %s347 = smul.addr %s346, 8
      %s348 = scalar_lea.vmem %s0, %s347
      %p349 = pneg %p43
      %p350 = pneg %p40
      %p351 = pneg %p64
      %p352 = pneg %p61
      %p353 = pneg %p85
      %p354 = pneg %p82
      %p355 = pneg %p106
      %p356 = pneg %p103
      %p357 = pneg %p127
      %p358 = pneg %p124
      %p359 = pneg %p148
      %p360 = pneg %p145
      %p361 = pneg %p169
      %p362 = pneg %p166
      %p363 = pneg %p190
      %p364 = pneg %p187
      %p365 = pneg %p211
      %p366 = pneg %p208
      %p367 = pneg %p232
      %p368 = pneg %p229
      %p369 = pneg %p253
      %p370 = pneg %p250
      %p371 = pneg %p279
      %p372 = pneg %p276
      %p373 = scmp.lt.s32.totalorder %s22, 1
      %s374 = scalar_select %p373, %s22, 1
      %s375 = smul.addr %s374, 8
      %s376 = scalar_lea.vmem %s11, %s375
      %s377 = smul.u32 49, %s22
      %p378 = scmp.lt.s32.totalorder %s377, 97
      %s379 = scalar_select %p378, %s377, 97
      %s380 = smul.addr %s379, 8
      %s381 = scalar_lea.vmem %s0, %s380
      %s382 = smul.u32 49, %s22
      %p383 = scmp.lt.s32.totalorder %s22, 1
      %s384 = scalar_select %p383, %s22, 1
      %s385 = smul.addr %s384, 8
      %s386 = scalar_lea.vmem %s11, %s385
      %v387 = vld [vmem:[%s381] sm:$0xff]
      %v388 = vld [vmem:[%s381 + $0x8] sm:$0xff]
      %v389 = vld [vmem:[%s381 + $0x10] sm:$0xff]
      %v390 = vld [vmem:[%s381 + $0x18] sm:$0xff]
      %v391 = vld [vmem:[%s381 + $0x20] sm:$0xff]
      %v392 = vld [vmem:[%s381 + $0x28] sm:$0xff]
      %v393 = vld [vmem:[%s381 + $0x30] sm:$0xff]
      %v394 = vld [vmem:[%s381 + $0x38] sm:$0xff]
      %v395 = vld [vmem:[%s381 + $0x40] sm:$0xff]
      %v396 = vld [vmem:[%s381 + $0x48] sm:$0xff]
      %v397 = vld [vmem:[%s381 + $0x50] sm:$0xff]
      %v398 = vld [vmem:[%s381 + $0x58] sm:$0xff]
      %v399 = vld [vmem:[%s381 + $0x60] sm:$0xff]
      %v400 = vld [vmem:[%s381 + $0x68] sm:$0xff]
      %v401 = vld [vmem:[%s381 + $0x70] sm:$0xff]
      %v402 = vld [vmem:[%s381 + $0x78] sm:$0xff]
      %v403 = vld [vmem:[%s381 + $0x80] sm:$0xff]
      %v404 = vld [vmem:[%s381 + $0x88] sm:$0xff]
      %v405 = vld [vmem:[%s381 + $0x90] sm:$0xff]
      %v406 = vld [vmem:[%s381 + $0x98] sm:$0xff]
      %v407 = vld [vmem:[%s381 + $0xa0] sm:$0xff]
      %v408 = vld [vmem:[%s381 + $0xa8] sm:$0xff]
      %v409 = vld [vmem:[%s381 + $0xb0] sm:$0xff]
      %v410 = vld [vmem:[%s381 + $0xb8] sm:$0xff]
      %v411 = vld [vmem:[%s381 + $0xc0] sm:$0xff]
      %v412 = vld [vmem:[%s381 + $0xc8] sm:$0xff]
      %v413 = vld [vmem:[%s381 + $0xd0] sm:$0xff]
      %v414 = vld [vmem:[%s381 + $0xd8] sm:$0xff]
      %v415 = vld [vmem:[%s381 + $0xe0] sm:$0xff]
      %v416 = vld [vmem:[%s381 + $0xe8] sm:$0xff]
      %v417 = vld [vmem:[%s381 + $0xf0] sm:$0xff]
      %v418 = vld [vmem:[%s381 + $0xf8] sm:$0xff]
      %v419 = vld [vmem:[%s381 + $0x100] sm:$0xff]
      %v420 = vld [vmem:[%s381 + $0x108] sm:$0xff]
      %v421 = vld [vmem:[%s381 + $0x110] sm:$0xff]
      %v422 = vld [vmem:[%s381 + $0x118] sm:$0xff]
      %v423 = vld [vmem:[%s381 + $0x120] sm:$0xff]
      %v424 = vld [vmem:[%s381 + $0x128] sm:$0xff]
      %v425 = vld [vmem:[%s381 + $0x130] sm:$0xff]
      %v426 = vld [vmem:[%s381 + $0x138] sm:$0xff]
      %v427 = vld [vmem:[%s381 + $0x140] sm:$0xff]
      %v428 = vld [vmem:[%s381 + $0x148] sm:$0xff]
      %v429 = vld [vmem:[%s381 + $0x150] sm:$0xff]
      %v430 = vld [vmem:[%s381 + $0x158] sm:$0xff]
      %v431 = vld [vmem:[%s381 + $0x160] sm:$0xff]
      %v432 = vld [vmem:[%s381 + $0x168] sm:$0xff]
      %v433 = vld [vmem:[%s381 + $0x170] sm:$0xff]
      %v434 = vld [vmem:[%s381 + $0x178] sm:$0xff]
      %v435 = vld [vmem:[%s1] sm:$0x7]
      %v436 = vld [vmem:[%s381 + $0x1] sm:$0xff]
      %v437 = vld [vmem:[%s381 + $0x9] sm:$0xff]
      %v438 = vld [vmem:[%s381 + $0x11] sm:$0xff]
      %v439 = vld [vmem:[%s381 + $0x19] sm:$0xff]
      %v440 = vld [vmem:[%s381 + $0x21] sm:$0xff]
      %v441 = vld [vmem:[%s381 + $0x29] sm:$0xff]
      %v442 = vld [vmem:[%s381 + $0x31] sm:$0xff]
      %v443 = vld [vmem:[%s381 + $0x39] sm:$0xff]
      %v444 = vld [vmem:[%s381 + $0x41] sm:$0xff]
      %v445 = vld [vmem:[%s381 + $0x49] sm:$0xff]
      %v446 = vld [vmem:[%s381 + $0x51] sm:$0xff]
      %v447 = vld [vmem:[%s381 + $0x59] sm:$0xff]
      %v448 = vld [vmem:[%s381 + $0x61] sm:$0xff]
      %v449 = vld [vmem:[%s381 + $0x69] sm:$0xff]
      %v450 = vld [vmem:[%s381 + $0x71] sm:$0xff]
      %v451 = vld [vmem:[%s381 + $0x79] sm:$0xff]
      %v452 = vld [vmem:[%s381 + $0x81] sm:$0xff]
      %v453 = vld [vmem:[%s381 + $0x89] sm:$0xff]
      %v454 = vld [vmem:[%s381 + $0x91] sm:$0xff]
      %v455 = vld [vmem:[%s381 + $0x99] sm:$0xff]
      %v456 = vld [vmem:[%s381 + $0xa1] sm:$0xff]
      %v457 = vld [vmem:[%s381 + $0xa9] sm:$0xff]
      %v458 = vld [vmem:[%s381 + $0xb1] sm:$0xff]
      %v459 = vld [vmem:[%s381 + $0xb9] sm:$0xff]
      %v460 = vld [vmem:[%s381 + $0xc1] sm:$0xff]
      %v461 = vld [vmem:[%s381 + $0xc9] sm:$0xff]
      %v462 = vld [vmem:[%s381 + $0xd1] sm:$0xff]
      %v463 = vld [vmem:[%s381 + $0xd9] sm:$0xff]
      %v464 = vld [vmem:[%s381 + $0xe1] sm:$0xff]
      %v465 = vld [vmem:[%s381 + $0xe9] sm:$0xff]
      %v466 = vld [vmem:[%s381 + $0xf1] sm:$0xff]
      %v467 = vld [vmem:[%s381 + $0xf9] sm:$0xff]
      %v468 = vld [vmem:[%s381 + $0x101] sm:$0xff]
      %v469 = vld [vmem:[%s381 + $0x109] sm:$0xff]
      %v470 = vld [vmem:[%s381 + $0x111] sm:$0xff]
      %v471 = vld [vmem:[%s381 + $0x119] sm:$0xff]
      %v472 = vld [vmem:[%s381 + $0x121] sm:$0xff]
      %v473 = vld [vmem:[%s381 + $0x129] sm:$0xff]
      %v474 = vld [vmem:[%s381 + $0x131] sm:$0xff]
      %v475 = vld [vmem:[%s381 + $0x139] sm:$0xff]
      %v476 = vld [vmem:[%s381 + $0x141] sm:$0xff]
      %v477 = vld [vmem:[%s381 + $0x149] sm:$0xff]
      %v478 = vld [vmem:[%s381 + $0x151] sm:$0xff]
      %v479 = vld [vmem:[%s381 + $0x159] sm:$0xff]
      %v480 = vld [vmem:[%s381 + $0x161] sm:$0xff]
      %v481 = vld [vmem:[%s381 + $0x169] sm:$0xff]
      %v482 = vld [vmem:[%s381 + $0x171] sm:$0xff]
      %v483 = vld [vmem:[%s381 + $0x179] sm:$0xff]
      %s484 = scalar_lea.vmem %s1, 4
      %v485 = vld [vmem:[%s484] sm:$0x7]
      %vm486 = vcmask 23552
      %v488 = vsel %vm486, %v436, 0
      %v491 = vsel %vm486, %v437, 0
      %v494 = vsel %vm486, %v438, 0
      %v497 = vsel %vm486, %v439, 0
      %v500 = vsel %vm486, %v440, 0
      %v503 = vsel %vm486, %v441, 0
      %v506 = vsel %vm486, %v442, 0
      %v509 = vsel %vm486, %v443, 0
      %v512 = vsel %vm486, %v444, 0
      %v515 = vsel %vm486, %v445, 0
      %v518 = vsel %vm486, %v446, 0
      %v521 = vsel %vm486, %v447, 0
      %v524 = vsel %vm486, %v448, 0
      %v527 = vsel %vm486, %v449, 0
      %v530 = vsel %vm486, %v450, 0
      %v533 = vsel %vm486, %v451, 0
      %v536 = vsel %vm486, %v452, 0
      %v539 = vsel %vm486, %v453, 0
      %v542 = vsel %vm486, %v454, 0
      %v545 = vsel %vm486, %v455, 0
      %v548 = vsel %vm486, %v456, 0
      %v551 = vsel %vm486, %v457, 0
      %v554 = vsel %vm486, %v458, 0
      %v557 = vsel %vm486, %v459, 0
      %v560 = vsel %vm486, %v460, 0
      %v563 = vsel %vm486, %v461, 0
      %v566 = vsel %vm486, %v462, 0
      %v569 = vsel %vm486, %v463, 0
      %v572 = vsel %vm486, %v464, 0
      %v575 = vsel %vm486, %v465, 0
      %v578 = vsel %vm486, %v466, 0
      %v581 = vsel %vm486, %v467, 0
      %v584 = vsel %vm486, %v468, 0
      %v587 = vsel %vm486, %v469, 0
      %v590 = vsel %vm486, %v470, 0
      %v593 = vsel %vm486, %v471, 0
      %v596 = vsel %vm486, %v472, 0
      %v599 = vsel %vm486, %v473, 0
      %v602 = vsel %vm486, %v474, 0
      %v605 = vsel %vm486, %v475, 0
      %v608 = vsel %vm486, %v476, 0
      %v611 = vsel %vm486, %v477, 0
      %v614 = vsel %vm486, %v478, 0
      %v617 = vsel %vm486, %v479, 0
      %v620 = vsel %vm486, %v480, 0
      %v623 = vsel %vm486, %v481, 0
      %v626 = vsel %vm486, %v482, 0
      %v629 = vsel %vm486, %v483, 0
      %vm631 = vcmask 1042432
      %v633 = vsel %vm631, %v485, 0
      %635 = vmatpush.msra.mxu0 0.0
      %636 = vmatpush.msra.mxu0 0.0
      %637 = vmatpush.msra.mxu0 0.0
      %638 = vmatpush.msra.mxu0 0.0
      %639 = vmatpush.msra.mxu0 0.0
      %640 = vmatpush.msra.mxu0 0.0
      %641 = vmatpush.msra.mxu0 0.0
      %642 = vmatpush.msra.mxu0 0.0
      %643 = vmatpush.msra.mxu0 0.0
      %644 = vmatpush.msra.mxu0 0.0
      %645 = vmatpush.msra.mxu0 0.0
      %646 = vmatpush.msra.mxu0 0.0
      %647 = vmatpush.msra.mxu0 0.0
      %648 = vmatpush.msra.mxu0 0.0
      %649 = vmatpush.msra.mxu0 0.0
      %650 = vmatpush.msra.mxu0 %v633
      %651 = vmatmul.f32.gmra.mxu0 %v488
      %v652 = vpop.f32.mrf.mxu0
      %v653 = vadd.f32 0.0, %v652
      %654 = vmatmul.f32.gmra.mxu0 %v491
      %v655 = vpop.f32.mrf.mxu0
      %v656 = vadd.f32 0.0, %v655
      %657 = vmatmul.f32.gmra.mxu0 %v494
      %v658 = vpop.f32.mrf.mxu0
      %v659 = vadd.f32 0.0, %v658
      %660 = vmatmul.f32.gmra.mxu0 %v497
      %v661 = vpop.f32.mrf.mxu0
      %v662 = vadd.f32 0.0, %v661
      %663 = vmatmul.f32.gmra.mxu0 %v500
      %v664 = vpop.f32.mrf.mxu0
      %v665 = vadd.f32 0.0, %v664
      %666 = vmatmul.f32.gmra.mxu0 %v503
      %v667 = vpop.f32.mrf.mxu0
      %v668 = vadd.f32 0.0, %v667
      %669 = vmatmul.f32.gmra.mxu0 %v506
      %v670 = vpop.f32.mrf.mxu0
      %v671 = vadd.f32 0.0, %v670
      %672 = vmatmul.f32.gmra.mxu0 %v509
      %v673 = vpop.f32.mrf.mxu0
      %v674 = vadd.f32 0.0, %v673
      %675 = vmatmul.f32.gmra.mxu0 %v512
      %v676 = vpop.f32.mrf.mxu0
      %v677 = vadd.f32 0.0, %v676
      %678 = vmatmul.f32.gmra.mxu0 %v515
      %v679 = vpop.f32.mrf.mxu0
      %v680 = vadd.f32 0.0, %v679
      %681 = vmatmul.f32.gmra.mxu0 %v518
      %v682 = vpop.f32.mrf.mxu0
      %v683 = vadd.f32 0.0, %v682
      %684 = vmatmul.f32.gmra.mxu0 %v521
      %v685 = vpop.f32.mrf.mxu0
      %v686 = vadd.f32 0.0, %v685
      %687 = vmatmul.f32.gmra.mxu0 %v524
      %v688 = vpop.f32.mrf.mxu0
      %v689 = vadd.f32 0.0, %v688
      %690 = vmatmul.f32.gmra.mxu0 %v527
      %v691 = vpop.f32.mrf.mxu0
      %v692 = vadd.f32 0.0, %v691
      %693 = vmatmul.f32.gmra.mxu0 %v530
      %v694 = vpop.f32.mrf.mxu0
      %v695 = vadd.f32 0.0, %v694
      %696 = vmatmul.f32.gmra.mxu0 %v533
      %v697 = vpop.f32.mrf.mxu0
      %v698 = vadd.f32 0.0, %v697
      %699 = vmatmul.f32.gmra.mxu0 %v536
      %v700 = vpop.f32.mrf.mxu0
      %v701 = vadd.f32 0.0, %v700
      %702 = vmatmul.f32.gmra.mxu0 %v539
      %v703 = vpop.f32.mrf.mxu0
      %v704 = vadd.f32 0.0, %v703
      %705 = vmatmul.f32.gmra.mxu0 %v542
      %v706 = vpop.f32.mrf.mxu0
      %v707 = vadd.f32 0.0, %v706
      %708 = vmatmul.f32.gmra.mxu0 %v545
      %v709 = vpop.f32.mrf.mxu0
      %v710 = vadd.f32 0.0, %v709
      %711 = vmatmul.f32.gmra.mxu0 %v548
      %v712 = vpop.f32.mrf.mxu0
      %v713 = vadd.f32 0.0, %v712
      %714 = vmatmul.f32.gmra.mxu0 %v551
      %v715 = vpop.f32.mrf.mxu0
      %v716 = vadd.f32 0.0, %v715
      %717 = vmatmul.f32.gmra.mxu0 %v554
      %v718 = vpop.f32.mrf.mxu0
      %v719 = vadd.f32 0.0, %v718
      %720 = vmatmul.f32.gmra.mxu0 %v557
      %v721 = vpop.f32.mrf.mxu0
      %v722 = vadd.f32 0.0, %v721
      %723 = vmatmul.f32.gmra.mxu0 %v560
      %v724 = vpop.f32.mrf.mxu0
      %v725 = vadd.f32 0.0, %v724
      %726 = vmatmul.f32.gmra.mxu0 %v563
      %v727 = vpop.f32.mrf.mxu0
      %v728 = vadd.f32 0.0, %v727
      %729 = vmatmul.f32.gmra.mxu0 %v566
      %v730 = vpop.f32.mrf.mxu0
      %v731 = vadd.f32 0.0, %v730
      %732 = vmatmul.f32.gmra.mxu0 %v569
      %v733 = vpop.f32.mrf.mxu0
      %v734 = vadd.f32 0.0, %v733
      %735 = vmatmul.f32.gmra.mxu0 %v572
      %v736 = vpop.f32.mrf.mxu0
      %v737 = vadd.f32 0.0, %v736
      %738 = vmatmul.f32.gmra.mxu0 %v575
      %v739 = vpop.f32.mrf.mxu0
      %v740 = vadd.f32 0.0, %v739
      %741 = vmatmul.f32.gmra.mxu0 %v578
      %v742 = vpop.f32.mrf.mxu0
      %v743 = vadd.f32 0.0, %v742
      %744 = vmatmul.f32.gmra.mxu0 %v581
      %v745 = vpop.f32.mrf.mxu0
      %v746 = vadd.f32 0.0, %v745
      %747 = vmatmul.f32.gmra.mxu0 %v584
      %v748 = vpop.f32.mrf.mxu0
      %v749 = vadd.f32 0.0, %v748
      %750 = vmatmul.f32.gmra.mxu0 %v587
      %v751 = vpop.f32.mrf.mxu0
      %v752 = vadd.f32 0.0, %v751
      %753 = vmatmul.f32.gmra.mxu0 %v590
      %v754 = vpop.f32.mrf.mxu0
      %v755 = vadd.f32 0.0, %v754
      %756 = vmatmul.f32.gmra.mxu0 %v593
      %v757 = vpop.f32.mrf.mxu0
      %v758 = vadd.f32 0.0, %v757
      %759 = vmatmul.f32.gmra.mxu0 %v596
      %v760 = vpop.f32.mrf.mxu0
      %v761 = vadd.f32 0.0, %v760
      %762 = vmatmul.f32.gmra.mxu0 %v599
      %v763 = vpop.f32.mrf.mxu0
      %v764 = vadd.f32 0.0, %v763
      %765 = vmatmul.f32.gmra.mxu0 %v602
      %v766 = vpop.f32.mrf.mxu0
      %v767 = vadd.f32 0.0, %v766
      %768 = vmatmul.f32.gmra.mxu0 %v605
      %v769 = vpop.f32.mrf.mxu0
      %v770 = vadd.f32 0.0, %v769
      %771 = vmatmul.f32.gmra.mxu0 %v608
      %v772 = vpop.f32.mrf.mxu0
      %v773 = vadd.f32 0.0, %v772
      %774 = vmatmul.f32.gmra.mxu0 %v611
      %v775 = vpop.f32.mrf.mxu0
      %v776 = vadd.f32 0.0, %v775
      %777 = vmatmul.f32.gmra.mxu0 %v614
      %v778 = vpop.f32.mrf.mxu0
      %v779 = vadd.f32 0.0, %v778
      %780 = vmatmul.f32.gmra.mxu0 %v617
      %v781 = vpop.f32.mrf.mxu0
      %v782 = vadd.f32 0.0, %v781
      %783 = vmatmul.f32.gmra.mxu0 %v620
      %v784 = vpop.f32.mrf.mxu0
      %v785 = vadd.f32 0.0, %v784
      %786 = vmatmul.f32.gmra.mxu0 %v623
      %v787 = vpop.f32.mrf.mxu0
      %v788 = vadd.f32 0.0, %v787
      %789 = vmatmul.f32.gmra.mxu0 %v626
      %v790 = vpop.f32.mrf.mxu0
      %v791 = vadd.f32 0.0, %v790
      %792 = vmatmul.f32.gmra.mxu0 %v629
      %v793 = vpop.f32.mrf.mxu0
      %v794 = vadd.f32 0.0, %v793
      %795 = vdwg.mxu0
      %v797 = vsel %vm486, %v387, 0
      %v800 = vsel %vm486, %v388, 0
      %v803 = vsel %vm486, %v389, 0
      %v806 = vsel %vm486, %v390, 0
      %v809 = vsel %vm486, %v391, 0
      %v812 = vsel %vm486, %v392, 0
      %v815 = vsel %vm486, %v393, 0
      %v818 = vsel %vm486, %v394, 0
      %v821 = vsel %vm486, %v395, 0
      %v824 = vsel %vm486, %v396, 0
      %v827 = vsel %vm486, %v397, 0
      %v830 = vsel %vm486, %v398, 0
      %v833 = vsel %vm486, %v399, 0
      %v836 = vsel %vm486, %v400, 0
      %v839 = vsel %vm486, %v401, 0
      %v842 = vsel %vm486, %v402, 0
      %v845 = vsel %vm486, %v403, 0
      %v848 = vsel %vm486, %v404, 0
      %v851 = vsel %vm486, %v405, 0
      %v854 = vsel %vm486, %v406, 0
      %v857 = vsel %vm486, %v407, 0
      %v860 = vsel %vm486, %v408, 0
      %v863 = vsel %vm486, %v409, 0
      %v866 = vsel %vm486, %v410, 0
      %v869 = vsel %vm486, %v411, 0
      %v872 = vsel %vm486, %v412, 0
      %v875 = vsel %vm486, %v413, 0
      %v878 = vsel %vm486, %v414, 0
      %v881 = vsel %vm486, %v415, 0
      %v884 = vsel %vm486, %v416, 0
      %v887 = vsel %vm486, %v417, 0
      %v890 = vsel %vm486, %v418, 0
      %v893 = vsel %vm486, %v419, 0
      %v896 = vsel %vm486, %v420, 0
      %v899 = vsel %vm486, %v421, 0
      %v902 = vsel %vm486, %v422, 0
      %v905 = vsel %vm486, %v423, 0
      %v908 = vsel %vm486, %v424, 0
      %v911 = vsel %vm486, %v425, 0
      %v914 = vsel %vm486, %v426, 0
      %v917 = vsel %vm486, %v427, 0
      %v920 = vsel %vm486, %v428, 0
      %v923 = vsel %vm486, %v429, 0
      %v926 = vsel %vm486, %v430, 0
      %v929 = vsel %vm486, %v431, 0
      %v932 = vsel %vm486, %v432, 0
      %v935 = vsel %vm486, %v433, 0
      %v938 = vsel %vm486, %v434, 0
      %v941 = vsel %vm631, %v435, 0
      %943 = vmatpush.msra.mxu0 0.0
      %944 = vmatpush.msra.mxu0 0.0
      %945 = vmatpush.msra.mxu0 0.0
      %946 = vmatpush.msra.mxu0 0.0
      %947 = vmatpush.msra.mxu0 0.0
      %948 = vmatpush.msra.mxu0 0.0
      %949 = vmatpush.msra.mxu0 0.0
      %950 = vmatpush.msra.mxu0 0.0
      %951 = vmatpush.msra.mxu0 0.0
      %952 = vmatpush.msra.mxu0 0.0
      %953 = vmatpush.msra.mxu0 0.0
      %954 = vmatpush.msra.mxu0 0.0
      %955 = vmatpush.msra.mxu0 0.0
      %956 = vmatpush.msra.mxu0 0.0
      %957 = vmatpush.msra.mxu0 0.0
      %958 = vmatpush.msra.mxu0 %v941
      %959 = vmatmul.f32.gmra.mxu0 %v797
      %v960 = vpop.f32.mrf.mxu0
      %v961 = vadd.f32 %v653, %v960
      %962 = vmatmul.f32.gmra.mxu0 %v800
      %v963 = vpop.f32.mrf.mxu0
      %v964 = vadd.f32 %v656, %v963
      %965 = vmatmul.f32.gmra.mxu0 %v803
      %v966 = vpop.f32.mrf.mxu0
      %v967 = vadd.f32 %v659, %v966
      %968 = vmatmul.f32.gmra.mxu0 %v806
      %v969 = vpop.f32.mrf.mxu0
      %v970 = vadd.f32 %v662, %v969
      %971 = vmatmul.f32.gmra.mxu0 %v809
      %v972 = vpop.f32.mrf.mxu0
      %v973 = vadd.f32 %v665, %v972
      %974 = vmatmul.f32.gmra.mxu0 %v812
      %v975 = vpop.f32.mrf.mxu0
      %v976 = vadd.f32 %v668, %v975
      %977 = vmatmul.f32.gmra.mxu0 %v815
      %v978 = vpop.f32.mrf.mxu0
      %v979 = vadd.f32 %v671, %v978
      %980 = vmatmul.f32.gmra.mxu0 %v818
      %v981 = vpop.f32.mrf.mxu0
      %v982 = vadd.f32 %v674, %v981
      %983 = vmatmul.f32.gmra.mxu0 %v821
      %v984 = vpop.f32.mrf.mxu0
      %v985 = vadd.f32 %v677, %v984
      %986 = vmatmul.f32.gmra.mxu0 %v824
      %v987 = vpop.f32.mrf.mxu0
      %v988 = vadd.f32 %v680, %v987
      %989 = vmatmul.f32.gmra.mxu0 %v827
      %v990 = vpop.f32.mrf.mxu0
      %v991 = vadd.f32 %v683, %v990
      %992 = vmatmul.f32.gmra.mxu0 %v830
      %v993 = vpop.f32.mrf.mxu0
      %v994 = vadd.f32 %v686, %v993
      %995 = vmatmul.f32.gmra.mxu0 %v833
      %v996 = vpop.f32.mrf.mxu0
      %v997 = vadd.f32 %v689, %v996
      %998 = vmatmul.f32.gmra.mxu0 %v836
      %v999 = vpop.f32.mrf.mxu0
      %v1000 = vadd.f32 %v692, %v999
      %1001 = vmatmul.f32.gmra.mxu0 %v839
      %v1002 = vpop.f32.mrf.mxu0
      %v1003 = vadd.f32 %v695, %v1002
      %1004 = vmatmul.f32.gmra.mxu0 %v842
      %v1005 = vpop.f32.mrf.mxu0
      %v1006 = vadd.f32 %v698, %v1005
      %1007 = vmatmul.f32.gmra.mxu0 %v845
      %v1008 = vpop.f32.mrf.mxu0
      %v1009 = vadd.f32 %v701, %v1008
      %1010 = vmatmul.f32.gmra.mxu0 %v848
      %v1011 = vpop.f32.mrf.mxu0
      %v1012 = vadd.f32 %v704, %v1011
      %1013 = vmatmul.f32.gmra.mxu0 %v851
      %v1014 = vpop.f32.mrf.mxu0
      %v1015 = vadd.f32 %v707, %v1014
      %1016 = vmatmul.f32.gmra.mxu0 %v854
      %v1017 = vpop.f32.mrf.mxu0
      %v1018 = vadd.f32 %v710, %v1017
      %1019 = vmatmul.f32.gmra.mxu0 %v857
      %v1020 = vpop.f32.mrf.mxu0
      %v1021 = vadd.f32 %v713, %v1020
      %1022 = vmatmul.f32.gmra.mxu0 %v860
      %v1023 = vpop.f32.mrf.mxu0
      %v1024 = vadd.f32 %v716, %v1023
      %1025 = vmatmul.f32.gmra.mxu0 %v863
      %v1026 = vpop.f32.mrf.mxu0
      %v1027 = vadd.f32 %v719, %v1026
      %1028 = vmatmul.f32.gmra.mxu0 %v866
      %v1029 = vpop.f32.mrf.mxu0
      %v1030 = vadd.f32 %v722, %v1029
      %1031 = vmatmul.f32.gmra.mxu0 %v869
      %v1032 = vpop.f32.mrf.mxu0
      %v1033 = vadd.f32 %v725, %v1032
      %1034 = vmatmul.f32.gmra.mxu0 %v872
      %v1035 = vpop.f32.mrf.mxu0
      %v1036 = vadd.f32 %v728, %v1035
      %1037 = vmatmul.f32.gmra.mxu0 %v875
      %v1038 = vpop.f32.mrf.mxu0
      %v1039 = vadd.f32 %v731, %v1038
      %1040 = vmatmul.f32.gmra.mxu0 %v878
      %v1041 = vpop.f32.mrf.mxu0
      %v1042 = vadd.f32 %v734, %v1041
      %1043 = vmatmul.f32.gmra.mxu0 %v881
      %v1044 = vpop.f32.mrf.mxu0
      %v1045 = vadd.f32 %v737, %v1044
      %1046 = vmatmul.f32.gmra.mxu0 %v884
      %v1047 = vpop.f32.mrf.mxu0
      %v1048 = vadd.f32 %v740, %v1047
      %1049 = vmatmul.f32.gmra.mxu0 %v887
      %v1050 = vpop.f32.mrf.mxu0
      %v1051 = vadd.f32 %v743, %v1050
      %1052 = vmatmul.f32.gmra.mxu0 %v890
      %v1053 = vpop.f32.mrf.mxu0
      %v1054 = vadd.f32 %v746, %v1053
      %1055 = vmatmul.f32.gmra.mxu0 %v893
      %v1056 = vpop.f32.mrf.mxu0
      %v1057 = vadd.f32 %v749, %v1056
      %1058 = vmatmul.f32.gmra.mxu0 %v896
      %v1059 = vpop.f32.mrf.mxu0
      %v1060 = vadd.f32 %v752, %v1059
      %1061 = vmatmul.f32.gmra.mxu0 %v899
      %v1062 = vpop.f32.mrf.mxu0
      %v1063 = vadd.f32 %v755, %v1062
      %1064 = vmatmul.f32.gmra.mxu0 %v902
      %v1065 = vpop.f32.mrf.mxu0
      %v1066 = vadd.f32 %v758, %v1065
      %1067 = vmatmul.f32.gmra.mxu0 %v905
      %v1068 = vpop.f32.mrf.mxu0
      %v1069 = vadd.f32 %v761, %v1068
      %1070 = vmatmul.f32.gmra.mxu0 %v908
      %v1071 = vpop.f32.mrf.mxu0
      %v1072 = vadd.f32 %v764, %v1071
      %1073 = vmatmul.f32.gmra.mxu0 %v911
      %v1074 = vpop.f32.mrf.mxu0
      %v1075 = vadd.f32 %v767, %v1074
      %1076 = vmatmul.f32.gmra.mxu0 %v914
      %v1077 = vpop.f32.mrf.mxu0
      %v1078 = vadd.f32 %v770, %v1077
      %1079 = vmatmul.f32.gmra.mxu0 %v917
      %v1080 = vpop.f32.mrf.mxu0
      %v1081 = vadd.f32 %v773, %v1080
      %1082 = vmatmul.f32.gmra.mxu0 %v920
      %v1083 = vpop.f32.mrf.mxu0
      %v1084 = vadd.f32 %v776, %v1083
      %1085 = vmatmul.f32.gmra.mxu0 %v923
      %v1086 = vpop.f32.mrf.mxu0
      %v1087 = vadd.f32 %v779, %v1086
      %1088 = vmatmul.f32.gmra.mxu0 %v926
      %v1089 = vpop.f32.mrf.mxu0
      %v1090 = vadd.f32 %v782, %v1089
      %1091 = vmatmul.f32.gmra.mxu0 %v929
      %v1092 = vpop.f32.mrf.mxu0
      %v1093 = vadd.f32 %v785, %v1092
      %1094 = vmatmul.f32.gmra.mxu0 %v932
      %v1095 = vpop.f32.mrf.mxu0
      %v1096 = vadd.f32 %v788, %v1095
      %1097 = vmatmul.f32.gmra.mxu0 %v935
      %v1098 = vpop.f32.mrf.mxu0
      %v1099 = vadd.f32 %v791, %v1098
      %1100 = vmatmul.f32.gmra.mxu0 %v938
      %v1101 = vpop.f32.mrf.mxu0
      %v1102 = vadd.f32 %v794, %v1101
      %1103 = vdwg.mxu0
      %v1104 = vld [vmem:[%s381 + $0x7] sm:$0xff]
      %v1105 = vld [vmem:[%s381 + $0xf] sm:$0xff]
      %v1106 = vld [vmem:[%s381 + $0x17] sm:$0xff]
      %v1107 = vld [vmem:[%s381 + $0x1f] sm:$0xff]
      %v1108 = vld [vmem:[%s381 + $0x27] sm:$0xff]
      %v1109 = vld [vmem:[%s381 + $0x2f] sm:$0xff]
      %v1110 = vld [vmem:[%s381 + $0x37] sm:$0xff]
      %v1111 = vld [vmem:[%s381 + $0x3f] sm:$0xff]
      %v1112 = vld [vmem:[%s381 + $0x47] sm:$0xff]
      %v1113 = vld [vmem:[%s381 + $0x4f] sm:$0xff]
      %v1114 = vld [vmem:[%s381 + $0x57] sm:$0xff]
      %v1115 = vld [vmem:[%s381 + $0x5f] sm:$0xff]
      %v1116 = vld [vmem:[%s381 + $0x67] sm:$0xff]
      %v1117 = vld [vmem:[%s381 + $0x6f] sm:$0xff]
      %v1118 = vld [vmem:[%s381 + $0x77] sm:$0xff]
      %v1119 = vld [vmem:[%s381 + $0x7f] sm:$0xff]
      %v1120 = vld [vmem:[%s381 + $0x87] sm:$0xff]
      %v1121 = vld [vmem:[%s381 + $0x8f] sm:$0xff]
      %v1122 = vld [vmem:[%s381 + $0x97] sm:$0xff]
      %v1123 = vld [vmem:[%s381 + $0x9f] sm:$0xff]
      %v1124 = vld [vmem:[%s381 + $0xa7] sm:$0xff]
      %v1125 = vld [vmem:[%s381 + $0xaf] sm:$0xff]
      %v1126 = vld [vmem:[%s381 + $0xb7] sm:$0xff]
      %v1127 = vld [vmem:[%s381 + $0xbf] sm:$0xff]
      %v1128 = vld [vmem:[%s381 + $0xc7] sm:$0xff]
      %v1129 = vld [vmem:[%s381 + $0xcf] sm:$0xff]
      %v1130 = vld [vmem:[%s381 + $0xd7] sm:$0xff]
      %v1131 = vld [vmem:[%s381 + $0xdf] sm:$0xff]
      %v1132 = vld [vmem:[%s381 + $0xe7] sm:$0xff]
      %v1133 = vld [vmem:[%s381 + $0xef] sm:$0xff]
      %v1134 = vld [vmem:[%s381 + $0xf7] sm:$0xff]
      %v1135 = vld [vmem:[%s381 + $0xff] sm:$0xff]
      %v1136 = vld [vmem:[%s381 + $0x107] sm:$0xff]
      %v1137 = vld [vmem:[%s381 + $0x10f] sm:$0xff]
      %v1138 = vld [vmem:[%s381 + $0x117] sm:$0xff]
      %v1139 = vld [vmem:[%s381 + $0x11f] sm:$0xff]
      %v1140 = vld [vmem:[%s381 + $0x127] sm:$0xff]
      %v1141 = vld [vmem:[%s381 + $0x12f] sm:$0xff]
      %v1142 = vld [vmem:[%s381 + $0x137] sm:$0xff]
      %v1143 = vld [vmem:[%s381 + $0x13f] sm:$0xff]
      %v1144 = vld [vmem:[%s381 + $0x147] sm:$0xff]
      %v1145 = vld [vmem:[%s381 + $0x14f] sm:$0xff]
      %v1146 = vld [vmem:[%s381 + $0x157] sm:$0xff]
      %v1147 = vld [vmem:[%s381 + $0x15f] sm:$0xff]
      %v1148 = vld [vmem:[%s381 + $0x167] sm:$0xff]
      %v1149 = vld [vmem:[%s381 + $0x16f] sm:$0xff]
      %v1150 = vld [vmem:[%s381 + $0x177] sm:$0xff]
      %v1151 = vld [vmem:[%s381 + $0x17f] sm:$0xff]
      %s1152 = scalar_lea.vmem %s1, 8
      %v1153 = vld [vmem:[%s1152] sm:$0x7]
      %v1155 = vsel %vm486, %v1104, 0
      %v1158 = vsel %vm486, %v1105, 0
      %v1161 = vsel %vm486, %v1106, 0
      %v1164 = vsel %vm486, %v1107, 0
      %v1167 = vsel %vm486, %v1108, 0
      %v1170 = vsel %vm486, %v1109, 0
      %v1173 = vsel %vm486, %v1110, 0
      %v1176 = vsel %vm486, %v1111, 0
      %v1179 = vsel %vm486, %v1112, 0
      %v1182 = vsel %vm486, %v1113, 0
      %v1185 = vsel %vm486, %v1114, 0
      %v1188 = vsel %vm486, %v1115, 0
      %v1191 = vsel %vm486, %v1116, 0
      %v1194 = vsel %vm486, %v1117, 0
      %v1197 = vsel %vm486, %v1118, 0
      %v1200 = vsel %vm486, %v1119, 0
      %v1203 = vsel %vm486, %v1120, 0
      %v1206 = vsel %vm486, %v1121, 0
      %v1209 = vsel %vm486, %v1122, 0
      %v1212 = vsel %vm486, %v1123, 0
      %v1215 = vsel %vm486, %v1124, 0
      %v1218 = vsel %vm486, %v1125, 0
      %v1221 = vsel %vm486, %v1126, 0
      %v1224 = vsel %vm486, %v1127, 0
      %v1227 = vsel %vm486, %v1128, 0
      %v1230 = vsel %vm486, %v1129, 0
      %v1233 = vsel %vm486, %v1130, 0
      %v1236 = vsel %vm486, %v1131, 0
      %v1239 = vsel %vm486, %v1132, 0
      %v1242 = vsel %vm486, %v1133, 0
      %v1245 = vsel %vm486, %v1134, 0
      %v1248 = vsel %vm486, %v1135, 0
      %v1251 = vsel %vm486, %v1136, 0
      %v1254 = vsel %vm486, %v1137, 0
      %v1257 = vsel %vm486, %v1138, 0
      %v1260 = vsel %vm486, %v1139, 0
      %v1263 = vsel %vm486, %v1140, 0
      %v1266 = vsel %vm486, %v1141, 0
      %v1269 = vsel %vm486, %v1142, 0
      %v1272 = vsel %vm486, %v1143, 0
      %v1275 = vsel %vm486, %v1144, 0
      %v1278 = vsel %vm486, %v1145, 0
      %v1281 = vsel %vm486, %v1146, 0
      %v1284 = vsel %vm486, %v1147, 0
      %v1287 = vsel %vm486, %v1148, 0
      %v1290 = vsel %vm486, %v1149, 0
      %v1293 = vsel %vm486, %v1150, 0
      %v1296 = vsel %vm486, %v1151, 0
      %v1299 = vsel %vm631, %v1153, 0
      %1301 = vmatpush.msra.mxu0 0.0
      %1302 = vmatpush.msra.mxu0 0.0
      %1303 = vmatpush.msra.mxu0 0.0
      %1304 = vmatpush.msra.mxu0 0.0
      %1305 = vmatpush.msra.mxu0 0.0
      %1306 = vmatpush.msra.mxu0 0.0
      %1307 = vmatpush.msra.mxu0 0.0
      %1308 = vmatpush.msra.mxu0 0.0
      %1309 = vmatpush.msra.mxu0 0.0
      %1310 = vmatpush.msra.mxu0 0.0
      %1311 = vmatpush.msra.mxu0 0.0
      %1312 = vmatpush.msra.mxu0 0.0
      %1313 = vmatpush.msra.mxu0 0.0
      %1314 = vmatpush.msra.mxu0 0.0
      %1315 = vmatpush.msra.mxu0 0.0
      %1316 = vmatpush.msra.mxu0 %v1299
      %1317 = vmatmul.f32.gmra.mxu0 %v1155
      %v1318 = vpop.f32.mrf.mxu0
      %v1319 = vadd.f32 0.0, %v1318
      %1320 = vmatmul.f32.gmra.mxu0 %v1158
      %v1321 = vpop.f32.mrf.mxu0
      %v1322 = vadd.f32 0.0, %v1321
      %1323 = vmatmul.f32.gmra.mxu0 %v1161
      %v1324 = vpop.f32.mrf.mxu0
      %v1325 = vadd.f32 0.0, %v1324
      %1326 = vmatmul.f32.gmra.mxu0 %v1164
      %v1327 = vpop.f32.mrf.mxu0
      %v1328 = vadd.f32 0.0, %v1327
      %1329 = vmatmul.f32.gmra.mxu0 %v1167
      %v1330 = vpop.f32.mrf.mxu0
      %v1331 = vadd.f32 0.0, %v1330
      %1332 = vmatmul.f32.gmra.mxu0 %v1170
      %v1333 = vpop.f32.mrf.mxu0
      %v1334 = vadd.f32 0.0, %v1333
      %1335 = vmatmul.f32.gmra.mxu0 %v1173
      %v1336 = vpop.f32.mrf.mxu0
      %v1337 = vadd.f32 0.0, %v1336
      %1338 = vmatmul.f32.gmra.mxu0 %v1176
      %v1339 = vpop.f32.mrf.mxu0
      %v1340 = vadd.f32 0.0, %v1339
      %1341 = vmatmul.f32.gmra.mxu0 %v1179
      %v1342 = vpop.f32.mrf.mxu0
      %v1343 = vadd.f32 0.0, %v1342
      %1344 = vmatmul.f32.gmra.mxu0 %v1182
      %v1345 = vpop.f32.mrf.mxu0
      %v1346 = vadd.f32 0.0, %v1345
      %1347 = vmatmul.f32.gmra.mxu0 %v1185
      %v1348 = vpop.f32.mrf.mxu0
      %v1349 = vadd.f32 0.0, %v1348
      %1350 = vmatmul.f32.gmra.mxu0 %v1188
      %v1351 = vpop.f32.mrf.mxu0
      %v1352 = vadd.f32 0.0, %v1351
      %1353 = vmatmul.f32.gmra.mxu0 %v1191
      %v1354 = vpop.f32.mrf.mxu0
      %v1355 = vadd.f32 0.0, %v1354
      %1356 = vmatmul.f32.gmra.mxu0 %v1194
      %v1357 = vpop.f32.mrf.mxu0
      %v1358 = vadd.f32 0.0, %v1357
      %1359 = vmatmul.f32.gmra.mxu0 %v1197
      %v1360 = vpop.f32.mrf.mxu0
      %v1361 = vadd.f32 0.0, %v1360
      %1362 = vmatmul.f32.gmra.mxu0 %v1200
      %v1363 = vpop.f32.mrf.mxu0
      %v1364 = vadd.f32 0.0, %v1363
      %1365 = vmatmul.f32.gmra.mxu0 %v1203
      %v1366 = vpop.f32.mrf.mxu0
      %v1367 = vadd.f32 0.0, %v1366
      %1368 = vmatmul.f32.gmra.mxu0 %v1206
      %v1369 = vpop.f32.mrf.mxu0
      %v1370 = vadd.f32 0.0, %v1369
      %1371 = vmatmul.f32.gmra.mxu0 %v1209
      %v1372 = vpop.f32.mrf.mxu0
      %v1373 = vadd.f32 0.0, %v1372
      %1374 = vmatmul.f32.gmra.mxu0 %v1212
      %v1375 = vpop.f32.mrf.mxu0
      %v1376 = vadd.f32 0.0, %v1375
      %1377 = vmatmul.f32.gmra.mxu0 %v1215
      %v1378 = vpop.f32.mrf.mxu0
      %v1379 = vadd.f32 0.0, %v1378
      %1380 = vmatmul.f32.gmra.mxu0 %v1218
      %v1381 = vpop.f32.mrf.mxu0
      %v1382 = vadd.f32 0.0, %v1381
      %1383 = vmatmul.f32.gmra.mxu0 %v1221
      %v1384 = vpop.f32.mrf.mxu0
      %v1385 = vadd.f32 0.0, %v1384
      %1386 = vmatmul.f32.gmra.mxu0 %v1224
      %v1387 = vpop.f32.mrf.mxu0
      %v1388 = vadd.f32 0.0, %v1387
      %1389 = vmatmul.f32.gmra.mxu0 %v1227
      %v1390 = vpop.f32.mrf.mxu0
      %v1391 = vadd.f32 0.0, %v1390
      %1392 = vmatmul.f32.gmra.mxu0 %v1230
      %v1393 = vpop.f32.mrf.mxu0
      %v1394 = vadd.f32 0.0, %v1393
      %1395 = vmatmul.f32.gmra.mxu0 %v1233
      %v1396 = vpop.f32.mrf.mxu0
      %v1397 = vadd.f32 0.0, %v1396
      %1398 = vmatmul.f32.gmra.mxu0 %v1236
      %v1399 = vpop.f32.mrf.mxu0
      %v1400 = vadd.f32 0.0, %v1399
      %1401 = vmatmul.f32.gmra.mxu0 %v1239
      %v1402 = vpop.f32.mrf.mxu0
      %v1403 = vadd.f32 0.0, %v1402
      %1404 = vmatmul.f32.gmra.mxu0 %v1242
      %v1405 = vpop.f32.mrf.mxu0
      %v1406 = vadd.f32 0.0, %v1405
      %1407 = vmatmul.f32.gmra.mxu0 %v1245
      %v1408 = vpop.f32.mrf.mxu0
      %v1409 = vadd.f32 0.0, %v1408
      %1410 = vmatmul.f32.gmra.mxu0 %v1248
      %v1411 = vpop.f32.mrf.mxu0
      %v1412 = vadd.f32 0.0, %v1411
      %1413 = vmatmul.f32.gmra.mxu0 %v1251
      %v1414 = vpop.f32.mrf.mxu0
      %v1415 = vadd.f32 0.0, %v1414
      %1416 = vmatmul.f32.gmra.mxu0 %v1254
      %v1417 = vpop.f32.mrf.mxu0
      %v1418 = vadd.f32 0.0, %v1417
      %1419 = vmatmul.f32.gmra.mxu0 %v1257
      %v1420 = vpop.f32.mrf.mxu0
      %v1421 = vadd.f32 0.0, %v1420
      %1422 = vmatmul.f32.gmra.mxu0 %v1260
      %v1423 = vpop.f32.mrf.mxu0
      %v1424 = vadd.f32 0.0, %v1423
      %1425 = vmatmul.f32.gmra.mxu0 %v1263
      %v1426 = vpop.f32.mrf.mxu0
      %v1427 = vadd.f32 0.0, %v1426
      %1428 = vmatmul.f32.gmra.mxu0 %v1266
      %v1429 = vpop.f32.mrf.mxu0
      %v1430 = vadd.f32 0.0, %v1429
      %1431 = vmatmul.f32.gmra.mxu0 %v1269
      %v1432 = vpop.f32.mrf.mxu0
      %v1433 = vadd.f32 0.0, %v1432
      %1434 = vmatmul.f32.gmra.mxu0 %v1272
      %v1435 = vpop.f32.mrf.mxu0
      %v1436 = vadd.f32 0.0, %v1435
      %1437 = vmatmul.f32.gmra.mxu0 %v1275
      %v1438 = vpop.f32.mrf.mxu0
      %v1439 = vadd.f32 0.0, %v1438
      %1440 = vmatmul.f32.gmra.mxu0 %v1278
      %v1441 = vpop.f32.mrf.mxu0
      %v1442 = vadd.f32 0.0, %v1441
      %1443 = vmatmul.f32.gmra.mxu0 %v1281
      %v1444 = vpop.f32.mrf.mxu0
      %v1445 = vadd.f32 0.0, %v1444
      %1446 = vmatmul.f32.gmra.mxu0 %v1284
      %v1447 = vpop.f32.mrf.mxu0
      %v1448 = vadd.f32 0.0, %v1447
      %1449 = vmatmul.f32.gmra.mxu0 %v1287
      %v1450 = vpop.f32.mrf.mxu0
      %v1451 = vadd.f32 0.0, %v1450
      %1452 = vmatmul.f32.gmra.mxu0 %v1290
      %v1453 = vpop.f32.mrf.mxu0
      %v1454 = vadd.f32 0.0, %v1453
      %1455 = vmatmul.f32.gmra.mxu0 %v1293
      %v1456 = vpop.f32.mrf.mxu0
      %v1457 = vadd.f32 0.0, %v1456
      %1458 = vmatmul.f32.gmra.mxu0 %v1296
      %v1459 = vpop.f32.mrf.mxu0
      %v1460 = vadd.f32 0.0, %v1459
      %1461 = vdwg.mxu0
      %v1462 = vadd.f32 %v961, %v1319
      %v1463 = vadd.f32 %v964, %v1322
      %v1464 = vadd.f32 %v967, %v1325
      %v1465 = vadd.f32 %v970, %v1328
      %v1466 = vadd.f32 %v973, %v1331
      %v1467 = vadd.f32 %v976, %v1334
      %v1468 = vadd.f32 %v979, %v1337
      %v1469 = vadd.f32 %v982, %v1340
      %v1470 = vadd.f32 %v985, %v1343
      %v1471 = vadd.f32 %v988, %v1346
      %v1472 = vadd.f32 %v991, %v1349
      %v1473 = vadd.f32 %v994, %v1352
      %v1474 = vadd.f32 %v997, %v1355
      %v1475 = vadd.f32 %v1000, %v1358
      %v1476 = vadd.f32 %v1003, %v1361
      %v1477 = vadd.f32 %v1006, %v1364
      %v1478 = vadd.f32 %v1009, %v1367
      %v1479 = vadd.f32 %v1012, %v1370
      %v1480 = vadd.f32 %v1015, %v1373
      %v1481 = vadd.f32 %v1018, %v1376
      %v1482 = vadd.f32 %v1021, %v1379
      %v1483 = vadd.f32 %v1024, %v1382
      %v1484 = vadd.f32 %v1027, %v1385
      %v1485 = vadd.f32 %v1030, %v1388
      %v1486 = vadd.f32 %v1033, %v1391
      %v1487 = vadd.f32 %v1036, %v1394
      %v1488 = vadd.f32 %v1039, %v1397
      %v1489 = vadd.f32 %v1042, %v1400
      %v1490 = vadd.f32 %v1045, %v1403
      %v1491 = vadd.f32 %v1048, %v1406
      %v1492 = vadd.f32 %v1051, %v1409
      %v1493 = vadd.f32 %v1054, %v1412
      %v1494 = vadd.f32 %v1057, %v1415
      %v1495 = vadd.f32 %v1060, %v1418
      %v1496 = vadd.f32 %v1063, %v1421
      %v1497 = vadd.f32 %v1066, %v1424
      %v1498 = vadd.f32 %v1069, %v1427
      %v1499 = vadd.f32 %v1072, %v1430
      %v1500 = vadd.f32 %v1075, %v1433
      %v1501 = vadd.f32 %v1078, %v1436
      %v1502 = vadd.f32 %v1081, %v1439
      %v1503 = vadd.f32 %v1084, %v1442
      %v1504 = vadd.f32 %v1087, %v1445
      %v1505 = vadd.f32 %v1090, %v1448
      %v1506 = vadd.f32 %v1093, %v1451
      %v1507 = vadd.f32 %v1096, %v1454
      %v1508 = vadd.f32 %v1099, %v1457
      %v1509 = vadd.f32 %v1102, %v1460
      %v1510 = vld [vmem:[%s381 + $0x8] sm:$0xff]
      %v1511 = vld [vmem:[%s381 + $0x10] sm:$0xff]
      %v1512 = vld [vmem:[%s381 + $0x18] sm:$0xff]
      %v1513 = vld [vmem:[%s381 + $0x20] sm:$0xff]
      %v1514 = vld [vmem:[%s381 + $0x28] sm:$0xff]
      %v1515 = vld [vmem:[%s381 + $0x30] sm:$0xff]
      %v1516 = vld [vmem:[%s381 + $0x38] sm:$0xff]
      %v1517 = vld [vmem:[%s381 + $0x40] sm:$0xff]
      %v1518 = vld [vmem:[%s381 + $0x48] sm:$0xff]
      %v1519 = vld [vmem:[%s381 + $0x50] sm:$0xff]
      %v1520 = vld [vmem:[%s381 + $0x58] sm:$0xff]
      %v1521 = vld [vmem:[%s381 + $0x60] sm:$0xff]
      %v1522 = vld [vmem:[%s381 + $0x68] sm:$0xff]
      %v1523 = vld [vmem:[%s381 + $0x70] sm:$0xff]
      %v1524 = vld [vmem:[%s381 + $0x78] sm:$0xff]
      %v1525 = vld [vmem:[%s381 + $0x80] sm:$0xff]
      %v1526 = vld [vmem:[%s381 + $0x88] sm:$0xff]
      %v1527 = vld [vmem:[%s381 + $0x90] sm:$0xff]
      %v1528 = vld [vmem:[%s381 + $0x98] sm:$0xff]
      %v1529 = vld [vmem:[%s381 + $0xa0] sm:$0xff]
      %v1530 = vld [vmem:[%s381 + $0xa8] sm:$0xff]
      %v1531 = vld [vmem:[%s381 + $0xb0] sm:$0xff]
      %v1532 = vld [vmem:[%s381 + $0xb8] sm:$0xff]
      %v1533 = vld [vmem:[%s381 + $0xc0] sm:$0xff]
      %v1534 = vld [vmem:[%s381 + $0xc8] sm:$0xff]
      %v1535 = vld [vmem:[%s381 + $0xd0] sm:$0xff]
      %v1536 = vld [vmem:[%s381 + $0xd8] sm:$0xff]
      %v1537 = vld [vmem:[%s381 + $0xe0] sm:$0xff]
      %v1538 = vld [vmem:[%s381 + $0xe8] sm:$0xff]
      %v1539 = vld [vmem:[%s381 + $0xf0] sm:$0xff]
      %v1540 = vld [vmem:[%s381 + $0xf8] sm:$0xff]
      %v1541 = vld [vmem:[%s381 + $0x100] sm:$0xff]
      %v1542 = vld [vmem:[%s381 + $0x108] sm:$0xff]
      %v1543 = vld [vmem:[%s381 + $0x110] sm:$0xff]
      %v1544 = vld [vmem:[%s381 + $0x118] sm:$0xff]
      %v1545 = vld [vmem:[%s381 + $0x120] sm:$0xff]
      %v1546 = vld [vmem:[%s381 + $0x128] sm:$0xff]
      %v1547 = vld [vmem:[%s381 + $0x130] sm:$0xff]
      %v1548 = vld [vmem:[%s381 + $0x138] sm:$0xff]
      %v1549 = vld [vmem:[%s381 + $0x140] sm:$0xff]
      %v1550 = vld [vmem:[%s381 + $0x148] sm:$0xff]
      %v1551 = vld [vmem:[%s381 + $0x150] sm:$0xff]
      %v1552 = vld [vmem:[%s381 + $0x158] sm:$0xff]
      %v1553 = vld [vmem:[%s381 + $0x160] sm:$0xff]
      %v1554 = vld [vmem:[%s381 + $0x168] sm:$0xff]
      %v1555 = vld [vmem:[%s381 + $0x170] sm:$0xff]
      %v1556 = vld [vmem:[%s381 + $0x178] sm:$0xff]
      %v1557 = vld [vmem:[%s381 + $0x180] sm:$0xff]
      %s1558 = scalar_lea.vmem %s1, 12
      %v1559 = vld [vmem:[%s1558] sm:$0x7]
      %v1561 = vsel %vm486, %v1510, 0
      %v1564 = vsel %vm486, %v1511, 0
      %v1567 = vsel %vm486, %v1512, 0
      %v1570 = vsel %vm486, %v1513, 0
      %v1573 = vsel %vm486, %v1514, 0
      %v1576 = vsel %vm486, %v1515, 0
      %v1579 = vsel %vm486, %v1516, 0
      %v1582 = vsel %vm486, %v1517, 0
      %v1585 = vsel %vm486, %v1518, 0
      %v1588 = vsel %vm486, %v1519, 0
      %v1591 = vsel %vm486, %v1520, 0
      %v1594 = vsel %vm486, %v1521, 0
      %v1597 = vsel %vm486, %v1522, 0
      %v1600 = vsel %vm486, %v1523, 0
      %v1603 = vsel %vm486, %v1524, 0
      %v1606 = vsel %vm486, %v1525, 0
      %v1609 = vsel %vm486, %v1526, 0
      %v1612 = vsel %vm486, %v1527, 0
      %v1615 = vsel %vm486, %v1528, 0
      %v1618 = vsel %vm486, %v1529, 0
      %v1621 = vsel %vm486, %v1530, 0
      %v1624 = vsel %vm486, %v1531, 0
      %v1627 = vsel %vm486, %v1532, 0
      %v1630 = vsel %vm486, %v1533, 0
      %v1633 = vsel %vm486, %v1534, 0
      %v1636 = vsel %vm486, %v1535, 0
      %v1639 = vsel %vm486, %v1536, 0
      %v1642 = vsel %vm486, %v1537, 0
      %v1645 = vsel %vm486, %v1538, 0
      %v1648 = vsel %vm486, %v1539, 0
      %v1651 = vsel %vm486, %v1540, 0
      %v1654 = vsel %vm486, %v1541, 0
      %v1657 = vsel %vm486, %v1542, 0
      %v1660 = vsel %vm486, %v1543, 0
      %v1663 = vsel %vm486, %v1544, 0
      %v1666 = vsel %vm486, %v1545, 0
      %v1669 = vsel %vm486, %v1546, 0
      %v1672 = vsel %vm486, %v1547, 0
      %v1675 = vsel %vm486, %v1548, 0
      %v1678 = vsel %vm486, %v1549, 0
      %v1681 = vsel %vm486, %v1550, 0
      %v1684 = vsel %vm486, %v1551, 0
      %v1687 = vsel %vm486, %v1552, 0
      %v1690 = vsel %vm486, %v1553, 0
      %v1693 = vsel %vm486, %v1554, 0
      %v1696 = vsel %vm486, %v1555, 0
      %v1699 = vsel %vm486, %v1556, 0
      %v1702 = vsel %vm486, %v1557, 0
      %v1705 = vsel %vm631, %v1559, 0
      %1707 = vmatpush.msra.mxu0 0.0
      %1708 = vmatpush.msra.mxu0 0.0
      %1709 = vmatpush.msra.mxu0 0.0
      %1710 = vmatpush.msra.mxu0 0.0
      %1711 = vmatpush.msra.mxu0 0.0
      %1712 = vmatpush.msra.mxu0 0.0
      %1713 = vmatpush.msra.mxu0 0.0
      %1714 = vmatpush.msra.mxu0 0.0
      %1715 = vmatpush.msra.mxu0 0.0
      %1716 = vmatpush.msra.mxu0 0.0
      %1717 = vmatpush.msra.mxu0 0.0
      %1718 = vmatpush.msra.mxu0 0.0
      %1719 = vmatpush.msra.mxu0 0.0
      %1720 = vmatpush.msra.mxu0 0.0
      %1721 = vmatpush.msra.mxu0 0.0
      %1722 = vmatpush.msra.mxu0 %v1705
      %1723 = vmatmul.f32.gmra.mxu0 %v1561
      %v1724 = vpop.f32.mrf.mxu0
      %v1725 = vadd.f32 0.0, %v1724
      %1726 = vmatmul.f32.gmra.mxu0 %v1564
      %v1727 = vpop.f32.mrf.mxu0
      %v1728 = vadd.f32 0.0, %v1727
      %1729 = vmatmul.f32.gmra.mxu0 %v1567
      %v1730 = vpop.f32.mrf.mxu0
      %v1731 = vadd.f32 0.0, %v1730
      %1732 = vmatmul.f32.gmra.mxu0 %v1570
      %v1733 = vpop.f32.mrf.mxu0
      %v1734 = vadd.f32 0.0, %v1733
      %1735 = vmatmul.f32.gmra.mxu0 %v1573
      %v1736 = vpop.f32.mrf.mxu0
      %v1737 = vadd.f32 0.0, %v1736
      %1738 = vmatmul.f32.gmra.mxu0 %v1576
      %v1739 = vpop.f32.mrf.mxu0
      %v1740 = vadd.f32 0.0, %v1739
      %1741 = vmatmul.f32.gmra.mxu0 %v1579
      %v1742 = vpop.f32.mrf.mxu0
      %v1743 = vadd.f32 0.0, %v1742
      %1744 = vmatmul.f32.gmra.mxu0 %v1582
      %v1745 = vpop.f32.mrf.mxu0
      %v1746 = vadd.f32 0.0, %v1745
      %1747 = vmatmul.f32.gmra.mxu0 %v1585
      %v1748 = vpop.f32.mrf.mxu0
      %v1749 = vadd.f32 0.0, %v1748
      %1750 = vmatmul.f32.gmra.mxu0 %v1588
      %v1751 = vpop.f32.mrf.mxu0
      %v1752 = vadd.f32 0.0, %v1751
      %1753 = vmatmul.f32.gmra.mxu0 %v1591
      %v1754 = vpop.f32.mrf.mxu0
      %v1755 = vadd.f32 0.0, %v1754
      %1756 = vmatmul.f32.gmra.mxu0 %v1594
      %v1757 = vpop.f32.mrf.mxu0
      %v1758 = vadd.f32 0.0, %v1757
      %1759 = vmatmul.f32.gmra.mxu0 %v1597
      %v1760 = vpop.f32.mrf.mxu0
      %v1761 = vadd.f32 0.0, %v1760
      %1762 = vmatmul.f32.gmra.mxu0 %v1600
      %v1763 = vpop.f32.mrf.mxu0
      %v1764 = vadd.f32 0.0, %v1763
      %1765 = vmatmul.f32.gmra.mxu0 %v1603
      %v1766 = vpop.f32.mrf.mxu0
      %v1767 = vadd.f32 0.0, %v1766
      %1768 = vmatmul.f32.gmra.mxu0 %v1606
      %v1769 = vpop.f32.mrf.mxu0
      %v1770 = vadd.f32 0.0, %v1769
      %1771 = vmatmul.f32.gmra.mxu0 %v1609
      %v1772 = vpop.f32.mrf.mxu0
      %v1773 = vadd.f32 0.0, %v1772
      %1774 = vmatmul.f32.gmra.mxu0 %v1612
      %v1775 = vpop.f32.mrf.mxu0
      %v1776 = vadd.f32 0.0, %v1775
      %1777 = vmatmul.f32.gmra.mxu0 %v1615
      %v1778 = vpop.f32.mrf.mxu0
      %v1779 = vadd.f32 0.0, %v1778
      %1780 = vmatmul.f32.gmra.mxu0 %v1618
      %v1781 = vpop.f32.mrf.mxu0
      %v1782 = vadd.f32 0.0, %v1781
      %1783 = vmatmul.f32.gmra.mxu0 %v1621
      %v1784 = vpop.f32.mrf.mxu0
      %v1785 = vadd.f32 0.0, %v1784
      %1786 = vmatmul.f32.gmra.mxu0 %v1624
      %v1787 = vpop.f32.mrf.mxu0
      %v1788 = vadd.f32 0.0, %v1787
      %1789 = vmatmul.f32.gmra.mxu0 %v1627
      %v1790 = vpop.f32.mrf.mxu0
      %v1791 = vadd.f32 0.0, %v1790
      %1792 = vmatmul.f32.gmra.mxu0 %v1630
      %v1793 = vpop.f32.mrf.mxu0
      %v1794 = vadd.f32 0.0, %v1793
      %1795 = vmatmul.f32.gmra.mxu0 %v1633
      %v1796 = vpop.f32.mrf.mxu0
      %v1797 = vadd.f32 0.0, %v1796
      %1798 = vmatmul.f32.gmra.mxu0 %v1636
      %v1799 = vpop.f32.mrf.mxu0
      %v1800 = vadd.f32 0.0, %v1799
      %1801 = vmatmul.f32.gmra.mxu0 %v1639
      %v1802 = vpop.f32.mrf.mxu0
      %v1803 = vadd.f32 0.0, %v1802
      %1804 = vmatmul.f32.gmra.mxu0 %v1642
      %v1805 = vpop.f32.mrf.mxu0
      %v1806 = vadd.f32 0.0, %v1805
      %1807 = vmatmul.f32.gmra.mxu0 %v1645
      %v1808 = vpop.f32.mrf.mxu0
      %v1809 = vadd.f32 0.0, %v1808
      %1810 = vmatmul.f32.gmra.mxu0 %v1648
      %v1811 = vpop.f32.mrf.mxu0
      %v1812 = vadd.f32 0.0, %v1811
      %1813 = vmatmul.f32.gmra.mxu0 %v1651
      %v1814 = vpop.f32.mrf.mxu0
      %v1815 = vadd.f32 0.0, %v1814
      %1816 = vmatmul.f32.gmra.mxu0 %v1654
      %v1817 = vpop.f32.mrf.mxu0
      %v1818 = vadd.f32 0.0, %v1817
      %1819 = vmatmul.f32.gmra.mxu0 %v1657
      %v1820 = vpop.f32.mrf.mxu0
      %v1821 = vadd.f32 0.0, %v1820
      %1822 = vmatmul.f32.gmra.mxu0 %v1660
      %v1823 = vpop.f32.mrf.mxu0
      %v1824 = vadd.f32 0.0, %v1823
      %1825 = vmatmul.f32.gmra.mxu0 %v1663
      %v1826 = vpop.f32.mrf.mxu0
      %v1827 = vadd.f32 0.0, %v1826
      %1828 = vmatmul.f32.gmra.mxu0 %v1666
      %v1829 = vpop.f32.mrf.mxu0
      %v1830 = vadd.f32 0.0, %v1829
      %1831 = vmatmul.f32.gmra.mxu0 %v1669
      %v1832 = vpop.f32.mrf.mxu0
      %v1833 = vadd.f32 0.0, %v1832
      %1834 = vmatmul.f32.gmra.mxu0 %v1672
      %v1835 = vpop.f32.mrf.mxu0
      %v1836 = vadd.f32 0.0, %v1835
      %1837 = vmatmul.f32.gmra.mxu0 %v1675
      %v1838 = vpop.f32.mrf.mxu0
      %v1839 = vadd.f32 0.0, %v1838
      %1840 = vmatmul.f32.gmra.mxu0 %v1678
      %v1841 = vpop.f32.mrf.mxu0
      %v1842 = vadd.f32 0.0, %v1841
      %1843 = vmatmul.f32.gmra.mxu0 %v1681
      %v1844 = vpop.f32.mrf.mxu0
      %v1845 = vadd.f32 0.0, %v1844
      %1846 = vmatmul.f32.gmra.mxu0 %v1684
      %v1847 = vpop.f32.mrf.mxu0
      %v1848 = vadd.f32 0.0, %v1847
      %1849 = vmatmul.f32.gmra.mxu0 %v1687
      %v1850 = vpop.f32.mrf.mxu0
      %v1851 = vadd.f32 0.0, %v1850
      %1852 = vmatmul.f32.gmra.mxu0 %v1690
      %v1853 = vpop.f32.mrf.mxu0
      %v1854 = vadd.f32 0.0, %v1853
      %1855 = vmatmul.f32.gmra.mxu0 %v1693
      %v1856 = vpop.f32.mrf.mxu0
      %v1857 = vadd.f32 0.0, %v1856
      %1858 = vmatmul.f32.gmra.mxu0 %v1696
      %v1859 = vpop.f32.mrf.mxu0
      %v1860 = vadd.f32 0.0, %v1859
      %1861 = vmatmul.f32.gmra.mxu0 %v1699
      %v1862 = vpop.f32.mrf.mxu0
      %v1863 = vadd.f32 0.0, %v1862
      %1864 = vmatmul.f32.gmra.mxu0 %v1702
      %v1865 = vpop.f32.mrf.mxu0
      %v1866 = vadd.f32 0.0, %v1865
      %1867 = vdwg.mxu0
      %v1868 = vadd.f32 %v1462, %v1725
      %v1869 = vadd.f32 %v1463, %v1728
      %v1870 = vadd.f32 %v1464, %v1731
      %v1871 = vadd.f32 %v1465, %v1734
      %v1872 = vadd.f32 %v1466, %v1737
      %v1873 = vadd.f32 %v1467, %v1740
      %v1874 = vadd.f32 %v1468, %v1743
      %v1875 = vadd.f32 %v1469, %v1746
      %v1876 = vadd.f32 %v1470, %v1749
      %v1877 = vadd.f32 %v1471, %v1752
      %v1878 = vadd.f32 %v1472, %v1755
      %v1879 = vadd.f32 %v1473, %v1758
      %v1880 = vadd.f32 %v1474, %v1761
      %v1881 = vadd.f32 %v1475, %v1764
      %v1882 = vadd.f32 %v1476, %v1767
      %v1883 = vadd.f32 %v1477, %v1770
      %v1884 = vadd.f32 %v1478, %v1773
      %v1885 = vadd.f32 %v1479, %v1776
      %v1886 = vadd.f32 %v1480, %v1779
      %v1887 = vadd.f32 %v1481, %v1782
      %v1888 = vadd.f32 %v1482, %v1785
      %v1889 = vadd.f32 %v1483, %v1788
      %v1890 = vadd.f32 %v1484, %v1791
      %v1891 = vadd.f32 %v1485, %v1794
      %v1892 = vadd.f32 %v1486, %v1797
      %v1893 = vadd.f32 %v1487, %v1800
      %v1894 = vadd.f32 %v1488, %v1803
      %v1895 = vadd.f32 %v1489, %v1806
      %v1896 = vadd.f32 %v1490, %v1809
      %v1897 = vadd.f32 %v1491, %v1812
      %v1898 = vadd.f32 %v1492, %v1815
      %v1899 = vadd.f32 %v1493, %v1818
      %v1900 = vadd.f32 %v1494, %v1821
      %v1901 = vadd.f32 %v1495, %v1824
      %v1902 = vadd.f32 %v1496, %v1827
      %v1903 = vadd.f32 %v1497, %v1830
      %v1904 = vadd.f32 %v1498, %v1833
      %v1905 = vadd.f32 %v1499, %v1836
      %v1906 = vadd.f32 %v1500, %v1839
      %v1907 = vadd.f32 %v1501, %v1842
      %v1908 = vadd.f32 %v1502, %v1845
      %v1909 = vadd.f32 %v1503, %v1848
      %v1910 = vadd.f32 %v1504, %v1851
      %v1911 = vadd.f32 %v1505, %v1854
      %v1912 = vadd.f32 %v1506, %v1857
      %v1913 = vadd.f32 %v1507, %v1860
      %v1914 = vadd.f32 %v1508, %v1863
      %v1915 = vadd.f32 %v1509, %v1866
      %v1916 = vld [vmem:[%s2] sm:$0x1]
      %v1918 = vperm.slane %v1916, 0
      %v1920 = vadd.f32 %v1868, %v1918
      %v1921 = vadd.f32 %v1869, %v1918
      %v1922 = vadd.f32 %v1870, %v1918
      %v1923 = vadd.f32 %v1871, %v1918
      %v1924 = vadd.f32 %v1872, %v1918
      %v1925 = vadd.f32 %v1873, %v1918
      %v1926 = vadd.f32 %v1874, %v1918
      %v1927 = vadd.f32 %v1875, %v1918
      %v1928 = vadd.f32 %v1876, %v1918
      %v1929 = vadd.f32 %v1877, %v1918
      %v1930 = vadd.f32 %v1878, %v1918
      %v1931 = vadd.f32 %v1879, %v1918
      %v1932 = vadd.f32 %v1880, %v1918
      %v1933 = vadd.f32 %v1881, %v1918
      %v1934 = vadd.f32 %v1882, %v1918
      %v1935 = vadd.f32 %v1883, %v1918
      %v1936 = vadd.f32 %v1884, %v1918
      %v1937 = vadd.f32 %v1885, %v1918
      %v1938 = vadd.f32 %v1886, %v1918
      %v1939 = vadd.f32 %v1887, %v1918
      %v1940 = vadd.f32 %v1888, %v1918
      %v1941 = vadd.f32 %v1889, %v1918
      %v1942 = vadd.f32 %v1890, %v1918
      %v1943 = vadd.f32 %v1891, %v1918
      %v1944 = vadd.f32 %v1892, %v1918
      %v1945 = vadd.f32 %v1893, %v1918
      %v1946 = vadd.f32 %v1894, %v1918
      %v1947 = vadd.f32 %v1895, %v1918
      %v1948 = vadd.f32 %v1896, %v1918
      %v1949 = vadd.f32 %v1897, %v1918
      %v1950 = vadd.f32 %v1898, %v1918
      %v1951 = vadd.f32 %v1899, %v1918
      %v1952 = vadd.f32 %v1900, %v1918
      %v1953 = vadd.f32 %v1901, %v1918
      %v1954 = vadd.f32 %v1902, %v1918
      %v1955 = vadd.f32 %v1903, %v1918
      %v1956 = vadd.f32 %v1904, %v1918
      %v1957 = vadd.f32 %v1905, %v1918
      %v1958 = vadd.f32 %v1906, %v1918
      %v1959 = vadd.f32 %v1907, %v1918
      %v1960 = vadd.f32 %v1908, %v1918
      %v1961 = vadd.f32 %v1909, %v1918
      %v1962 = vadd.f32 %v1910, %v1918
      %v1963 = vadd.f32 %v1911, %v1918
      %v1964 = vadd.f32 %v1912, %v1918
      %v1965 = vadd.f32 %v1913, %v1918
      %v1966 = vadd.f32 %v1914, %v1918
      %v1967 = vadd.f32 %v1915, %v1918
      %v1968 = vmax.f32 %v1920, 0.0
      %v1969 = vmax.f32 %v1921, 0.0
      %v1970 = vmax.f32 %v1922, 0.0
      %v1971 = vmax.f32 %v1923, 0.0
      %v1972 = vmax.f32 %v1924, 0.0
      %v1973 = vmax.f32 %v1925, 0.0
      %v1974 = vmax.f32 %v1926, 0.0
      %v1975 = vmax.f32 %v1927, 0.0
      %v1976 = vmax.f32 %v1928, 0.0
      %v1977 = vmax.f32 %v1929, 0.0
      %v1978 = vmax.f32 %v1930, 0.0
      %v1979 = vmax.f32 %v1931, 0.0
      %v1980 = vmax.f32 %v1932, 0.0
      %v1981 = vmax.f32 %v1933, 0.0
      %v1982 = vmax.f32 %v1934, 0.0
      %v1983 = vmax.f32 %v1935, 0.0
      %v1984 = vmax.f32 %v1936, 0.0
      %v1985 = vmax.f32 %v1937, 0.0
      %v1986 = vmax.f32 %v1938, 0.0
      %v1987 = vmax.f32 %v1939, 0.0
      %v1988 = vmax.f32 %v1940, 0.0
      %v1989 = vmax.f32 %v1941, 0.0
      %v1990 = vmax.f32 %v1942, 0.0
      %v1991 = vmax.f32 %v1943, 0.0
      %v1992 = vmax.f32 %v1944, 0.0
      %v1993 = vmax.f32 %v1945, 0.0
      %v1994 = vmax.f32 %v1946, 0.0
      %v1995 = vmax.f32 %v1947, 0.0
      %v1996 = vmax.f32 %v1948, 0.0
      %v1997 = vmax.f32 %v1949, 0.0
      %v1998 = vmax.f32 %v1950, 0.0
      %v1999 = vmax.f32 %v1951, 0.0
      %v2000 = vmax.f32 %v1952, 0.0
      %v2001 = vmax.f32 %v1953, 0.0
      %v2002 = vmax.f32 %v1954, 0.0
      %v2003 = vmax.f32 %v1955, 0.0
      %v2004 = vmax.f32 %v1956, 0.0
      %v2005 = vmax.f32 %v1957, 0.0
      %v2006 = vmax.f32 %v1958, 0.0
      %v2007 = vmax.f32 %v1959, 0.0
      %v2008 = vmax.f32 %v1960, 0.0
      %v2009 = vmax.f32 %v1961, 0.0
      %v2010 = vmax.f32 %v1962, 0.0
      %v2011 = vmax.f32 %v1963, 0.0
      %v2012 = vmax.f32 %v1964, 0.0
      %v2013 = vmax.f32 %v1965, 0.0
      %v2014 = vmax.f32 %v1966, 0.0
      %v2015 = vmax.f32 %v1967, 0.0
      %vm2016 = vcmask 130048
      %2017 = vst.msk [vmem:[#allocation2] sm:$0xff] %vm2016, %v1968
      %2018 = vst.msk [vmem:[#allocation2 + $0x8] sm:$0xff] %vm2016, %v1969
      %2019 = vst.msk [vmem:[#allocation2 + $0x10] sm:$0xff] %vm2016, %v1970
      %2020 = vst.msk [vmem:[#allocation2 + $0x18] sm:$0xff] %vm2016, %v1971
      %2021 = vst.msk [vmem:[#allocation2 + $0x20] sm:$0xff] %vm2016, %v1972
      %2022 = vst.msk [vmem:[#allocation2 + $0x28] sm:$0xff] %vm2016, %v1973
      %2023 = vst.msk [vmem:[#allocation2 + $0x30] sm:$0xff] %vm2016, %v1974
      %2024 = vst.msk [vmem:[#allocation2 + $0x38] sm:$0xff] %vm2016, %v1975
      %2025 = vst.msk [vmem:[#allocation2 + $0x40] sm:$0xff] %vm2016, %v1976
      %2026 = vst.msk [vmem:[#allocation2 + $0x48] sm:$0xff] %vm2016, %v1977
      %2027 = vst.msk [vmem:[#allocation2 + $0x50] sm:$0xff] %vm2016, %v1978
      %2028 = vst.msk [vmem:[#allocation2 + $0x58] sm:$0xff] %vm2016, %v1979
      %2029 = vst.msk [vmem:[#allocation2 + $0x60] sm:$0xff] %vm2016, %v1980
      %2030 = vst.msk [vmem:[#allocation2 + $0x68] sm:$0xff] %vm2016, %v1981
      %2031 = vst.msk [vmem:[#allocation2 + $0x70] sm:$0xff] %vm2016, %v1982
      %2032 = vst.msk [vmem:[#allocation2 + $0x78] sm:$0xff] %vm2016, %v1983
      %2033 = vst.msk [vmem:[#allocation2 + $0x80] sm:$0xff] %vm2016, %v1984
      %2034 = vst.msk [vmem:[#allocation2 + $0x88] sm:$0xff] %vm2016, %v1985
      %2035 = vst.msk [vmem:[#allocation2 + $0x90] sm:$0xff] %vm2016, %v1986
      %2036 = vst.msk [vmem:[#allocation2 + $0x98] sm:$0xff] %vm2016, %v1987
      %2037 = vst.msk [vmem:[#allocation2 + $0xa0] sm:$0xff] %vm2016, %v1988
      %2038 = vst.msk [vmem:[#allocation2 + $0xa8] sm:$0xff] %vm2016, %v1989
      %2039 = vst.msk [vmem:[#allocation2 + $0xb0] sm:$0xff] %vm2016, %v1990
      %2040 = vst.msk [vmem:[#allocation2 + $0xb8] sm:$0xff] %vm2016, %v1991
      %2041 = vst.msk [vmem:[#allocation2 + $0xc0] sm:$0xff] %vm2016, %v1992
      %2042 = vst.msk [vmem:[#allocation2 + $0xc8] sm:$0xff] %vm2016, %v1993
      %2043 = vst.msk [vmem:[#allocation2 + $0xd0] sm:$0xff] %vm2016, %v1994
      %2044 = vst.msk [vmem:[#allocation2 + $0xd8] sm:$0xff] %vm2016, %v1995
      %2045 = vst.msk [vmem:[#allocation2 + $0xe0] sm:$0xff] %vm2016, %v1996
      %2046 = vst.msk [vmem:[#allocation2 + $0xe8] sm:$0xff] %vm2016, %v1997
      %2047 = vst.msk [vmem:[#allocation2 + $0xf0] sm:$0xff] %vm2016, %v1998
      %2048 = vst.msk [vmem:[#allocation2 + $0xf8] sm:$0xff] %vm2016, %v1999
      %2049 = vst.msk [vmem:[#allocation2 + $0x100] sm:$0xff] %vm2016, %v2000
      %2050 = vst.msk [vmem:[#allocation2 + $0x108] sm:$0xff] %vm2016, %v2001
      %2051 = vst.msk [vmem:[#allocation2 + $0x110] sm:$0xff] %vm2016, %v2002
      %2052 = vst.msk [vmem:[#allocation2 + $0x118] sm:$0xff] %vm2016, %v2003
      %2053 = vst.msk [vmem:[#allocation2 + $0x120] sm:$0xff] %vm2016, %v2004
      %2054 = vst.msk [vmem:[#allocation2 + $0x128] sm:$0xff] %vm2016, %v2005
      %2055 = vst.msk [vmem:[#allocation2 + $0x130] sm:$0xff] %vm2016, %v2006
      %2056 = vst.msk [vmem:[#allocation2 + $0x138] sm:$0xff] %vm2016, %v2007
      %2057 = vst.msk [vmem:[#allocation2 + $0x140] sm:$0xff] %vm2016, %v2008
      %2058 = vst.msk [vmem:[#allocation2 + $0x148] sm:$0xff] %vm2016, %v2009
      %2059 = vst.msk [vmem:[#allocation2 + $0x150] sm:$0xff] %vm2016, %v2010
      %2060 = vst.msk [vmem:[#allocation2 + $0x158] sm:$0xff] %vm2016, %v2011
      %2061 = vst.msk [vmem:[#allocation2 + $0x160] sm:$0xff] %vm2016, %v2012
      %2062 = vst.msk [vmem:[#allocation2 + $0x168] sm:$0xff] %vm2016, %v2013
      %2063 = vst.msk [vmem:[#allocation2 + $0x170] sm:$0xff] %vm2016, %v2014
      %2064 = vst.msk [vmem:[#allocation2 + $0x178] sm:$0xff] %vm2016, %v2015
      %v2065 = vld [vmem:[#allocation2] sm:$0xff]
      %v2066 = vld [vmem:[#allocation2 + $0x8] sm:$0xff]
      %v2067 = vld [vmem:[#allocation2 + $0x10] sm:$0xff]
      %v2068 = vld [vmem:[#allocation2 + $0x18] sm:$0xff]
      %v2069 = vld [vmem:[#allocation2 + $0x20] sm:$0xff]
      %v2070 = vld [vmem:[#allocation2 + $0x28] sm:$0xff]
      %v2071 = vld [vmem:[#allocation2 + $0x30] sm:$0xff]
      %v2072 = vld [vmem:[#allocation2 + $0x38] sm:$0xff]
      %v2073 = vld [vmem:[#allocation2 + $0x40] sm:$0xff]
      %v2074 = vld [vmem:[#allocation2 + $0x48] sm:$0xff]
      %v2075 = vld [vmem:[#allocation2 + $0x50] sm:$0xff]
      %v2076 = vld [vmem:[#allocation2 + $0x58] sm:$0xff]
      %v2077 = vld [vmem:[#allocation2 + $0x60] sm:$0xff]
      %v2078 = vld [vmem:[#allocation2 + $0x68] sm:$0xff]
      %v2079 = vld [vmem:[#allocation2 + $0x70] sm:$0xff]
      %v2080 = vld [vmem:[#allocation2 + $0x78] sm:$0xff]
      %v2081 = vld [vmem:[#allocation2 + $0x80] sm:$0xff]
      %v2082 = vld [vmem:[#allocation2 + $0x88] sm:$0xff]
      %v2083 = vld [vmem:[#allocation2 + $0x90] sm:$0xff]
      %v2084 = vld [vmem:[#allocation2 + $0x98] sm:$0xff]
      %v2085 = vld [vmem:[#allocation2 + $0xa0] sm:$0xff]
      %v2086 = vld [vmem:[#allocation2 + $0xa8] sm:$0xff]
      %v2087 = vld [vmem:[#allocation2 + $0xb0] sm:$0xff]
      %v2088 = vld [vmem:[#allocation2 + $0xb8] sm:$0xff]
      %v2089 = vld [vmem:[#allocation2 + $0xc0] sm:$0xff]
      %v2090 = vld [vmem:[#allocation2 + $0xc8] sm:$0xff]
      %v2091 = vld [vmem:[#allocation2 + $0xd0] sm:$0xff]
      %v2092 = vld [vmem:[#allocation2 + $0xd8] sm:$0xff]
      %v2093 = vld [vmem:[#allocation2 + $0xe0] sm:$0xff]
      %v2094 = vld [vmem:[#allocation2 + $0xe8] sm:$0xff]
      %v2095 = vld [vmem:[#allocation2 + $0xf0] sm:$0xff]
      %v2096 = vld [vmem:[#allocation2 + $0xf8] sm:$0xff]
      %v2097 = vld [vmem:[#allocation2 + $0x100] sm:$0xff]
      %v2098 = vld [vmem:[#allocation2 + $0x108] sm:$0xff]
      %v2099 = vld [vmem:[#allocation2 + $0x110] sm:$0xff]
      %v2100 = vld [vmem:[#allocation2 + $0x118] sm:$0xff]
      %v2101 = vld [vmem:[#allocation2 + $0x120] sm:$0xff]
      %v2102 = vld [vmem:[#allocation2 + $0x128] sm:$0xff]
      %v2103 = vld [vmem:[#allocation2 + $0x130] sm:$0xff]
      %v2104 = vld [vmem:[#allocation2 + $0x138] sm:$0xff]
      %v2105 = vld [vmem:[#allocation2 + $0x140] sm:$0xff]
      %v2106 = vld [vmem:[#allocation2 + $0x148] sm:$0xff]
      %v2107 = vld [vmem:[#allocation2 + $0x150] sm:$0xff]
      %v2108 = vld [vmem:[#allocation2 + $0x158] sm:$0xff]
      %v2109 = vld [vmem:[#allocation2 + $0x160] sm:$0xff]
      %v2110 = vld [vmem:[#allocation2 + $0x168] sm:$0xff]
      %v2111 = vld [vmem:[#allocation2 + $0x170] sm:$0xff]
      %v2112 = vld [vmem:[%s3] sm:$0xff]
      %v2113 = vld [vmem:[%s3 + $0x8] sm:$0xff]
      %v2114 = vld [vmem:[#allocation2 + $0x1] sm:$0xff]
      %v2115 = vld [vmem:[#allocation2 + $0x9] sm:$0xff]
      %v2116 = vld [vmem:[#allocation2 + $0x11] sm:$0xff]
      %v2117 = vld [vmem:[#allocation2 + $0x19] sm:$0xff]
      %v2118 = vld [vmem:[#allocation2 + $0x21] sm:$0xff]
      %v2119 = vld [vmem:[#allocation2 + $0x29] sm:$0xff]
      %v2120 = vld [vmem:[#allocation2 + $0x31] sm:$0xff]
      %v2121 = vld [vmem:[#allocation2 + $0x39] sm:$0xff]
      %v2122 = vld [vmem:[#allocation2 + $0x41] sm:$0xff]
      %v2123 = vld [vmem:[#allocation2 + $0x49] sm:$0xff]
      %v2124 = vld [vmem:[#allocation2 + $0x51] sm:$0xff]
      %v2125 = vld [vmem:[#allocation2 + $0x59] sm:$0xff]
      %v2126 = vld [vmem:[#allocation2 + $0x61] sm:$0xff]
      %v2127 = vld [vmem:[#allocation2 + $0x69] sm:$0xff]
      %v2128 = vld [vmem:[#allocation2 + $0x71] sm:$0xff]
      %v2129 = vld [vmem:[#allocation2 + $0x79] sm:$0xff]
      %v2130 = vld [vmem:[#allocation2 + $0x81] sm:$0xff]
      %v2131 = vld [vmem:[#allocation2 + $0x89] sm:$0xff]
      %v2132 = vld [vmem:[#allocation2 + $0x91] sm:$0xff]
      %v2133 = vld [vmem:[#allocation2 + $0x99] sm:$0xff]
      %v2134 = vld [vmem:[#allocation2 + $0xa1] sm:$0xff]
      %v2135 = vld [vmem:[#allocation2 + $0xa9] sm:$0xff]
      %v2136 = vld [vmem:[#allocation2 + $0xb1] sm:$0xff]
      %v2137 = vld [vmem:[#allocation2 + $0xb9] sm:$0xff]
      %v2138 = vld [vmem:[#allocation2 + $0xc1] sm:$0xff]
      %v2139 = vld [vmem:[#allocation2 + $0xc9] sm:$0xff]
      %v2140 = vld [vmem:[#allocation2 + $0xd1] sm:$0xff]
      %v2141 = vld [vmem:[#allocation2 + $0xd9] sm:$0xff]
      %v2142 = vld [vmem:[#allocation2 + $0xe1] sm:$0xff]
      %v2143 = vld [vmem:[#allocation2 + $0xe9] sm:$0xff]
      %v2144 = vld [vmem:[#allocation2 + $0xf1] sm:$0xff]
      %v2145 = vld [vmem:[#allocation2 + $0xf9] sm:$0xff]
      %v2146 = vld [vmem:[#allocation2 + $0x101] sm:$0xff]
      %v2147 = vld [vmem:[#allocation2 + $0x109] sm:$0xff]
      %v2148 = vld [vmem:[#allocation2 + $0x111] sm:$0xff]
      %v2149 = vld [vmem:[#allocation2 + $0x119] sm:$0xff]
      %v2150 = vld [vmem:[#allocation2 + $0x121] sm:$0xff]
      %v2151 = vld [vmem:[#allocation2 + $0x129] sm:$0xff]
      %v2152 = vld [vmem:[#allocation2 + $0x131] sm:$0xff]
      %v2153 = vld [vmem:[#allocation2 + $0x139] sm:$0xff]
      %v2154 = vld [vmem:[#allocation2 + $0x141] sm:$0xff]
      %v2155 = vld [vmem:[#allocation2 + $0x149] sm:$0xff]
      %v2156 = vld [vmem:[#allocation2 + $0x151] sm:$0xff]
      %v2157 = vld [vmem:[#allocation2 + $0x159] sm:$0xff]
      %v2158 = vld [vmem:[#allocation2 + $0x161] sm:$0xff]
      %v2159 = vld [vmem:[#allocation2 + $0x169] sm:$0xff]
      %v2160 = vld [vmem:[#allocation2 + $0x171] sm:$0xff]
      %s2161 = scalar_lea.vmem %s3, 16
      %v2162 = vld [vmem:[%s2161] sm:$0xff]
      %v2163 = vld [vmem:[%s2161 + $0x8] sm:$0xff]
      %v2165 = vsel %vm2016, %v2114, 0
      %v2168 = vsel %vm2016, %v2115, 0
      %v2171 = vsel %vm2016, %v2116, 0
      %v2174 = vsel %vm2016, %v2117, 0
      %v2177 = vsel %vm2016, %v2118, 0
      %v2180 = vsel %vm2016, %v2119, 0
      %v2183 = vsel %vm2016, %v2120, 0
      %v2186 = vsel %vm2016, %v2121, 0
      %v2189 = vsel %vm2016, %v2122, 0
      %v2192 = vsel %vm2016, %v2123, 0
      %v2195 = vsel %vm2016, %v2124, 0
      %v2198 = vsel %vm2016, %v2125, 0
      %v2201 = vsel %vm2016, %v2126, 0
      %v2204 = vsel %vm2016, %v2127, 0
      %v2207 = vsel %vm2016, %v2128, 0
      %v2210 = vsel %vm2016, %v2129, 0
      %v2213 = vsel %vm2016, %v2130, 0
      %v2216 = vsel %vm2016, %v2131, 0
      %v2219 = vsel %vm2016, %v2132, 0
      %v2222 = vsel %vm2016, %v2133, 0
      %v2225 = vsel %vm2016, %v2134, 0
      %v2228 = vsel %vm2016, %v2135, 0
      %v2231 = vsel %vm2016, %v2136, 0
      %v2234 = vsel %vm2016, %v2137, 0
      %v2237 = vsel %vm2016, %v2138, 0
      %v2240 = vsel %vm2016, %v2139, 0
      %v2243 = vsel %vm2016, %v2140, 0
      %v2246 = vsel %vm2016, %v2141, 0
      %v2249 = vsel %vm2016, %v2142, 0
      %v2252 = vsel %vm2016, %v2143, 0
      %v2255 = vsel %vm2016, %v2144, 0
      %v2258 = vsel %vm2016, %v2145, 0
      %v2261 = vsel %vm2016, %v2146, 0
      %v2264 = vsel %vm2016, %v2147, 0
      %v2267 = vsel %vm2016, %v2148, 0
      %v2270 = vsel %vm2016, %v2149, 0
      %v2273 = vsel %vm2016, %v2150, 0
      %v2276 = vsel %vm2016, %v2151, 0
      %v2279 = vsel %vm2016, %v2152, 0
      %v2282 = vsel %vm2016, %v2153, 0
      %v2285 = vsel %vm2016, %v2154, 0
      %v2288 = vsel %vm2016, %v2155, 0
      %v2291 = vsel %vm2016, %v2156, 0
      %v2294 = vsel %vm2016, %v2157, 0
      %v2297 = vsel %vm2016, %v2158, 0
      %v2300 = vsel %vm2016, %v2159, 0
      %v2303 = vsel %vm2016, %v2160, 0
      %2305 = vmatpush.msra.mxu0 0.0
      %2306 = vmatpush.msra.mxu0 0.0
      %2307 = vmatpush.msra.mxu0 0.0
      %2308 = vmatpush.msra.mxu0 0.0
      %2309 = vmatpush.msra.mxu0 0.0
      %2310 = vmatpush.msra.mxu0 0.0
      %2311 = vmatpush.msra.mxu0 0.0
      %2312 = vmatpush.msra.mxu0 0.0
      %2313 = vmatpush.msra.mxu0 0.0
      %2314 = vmatpush.msra.mxu0 0.0
      %2315 = vmatpush.msra.mxu0 0.0
      %2316 = vmatpush.msra.mxu0 0.0
      %2317 = vmatpush.msra.mxu0 0.0
      %2318 = vmatpush.msra.mxu0 0.0
      %2319 = vmatpush.msra.mxu0 %v2163
      %2320 = vmatpush.msra.mxu0 %v2162
      %2321 = vmatmul.f32.gmra.mxu0 %v2165
      %v2322 = vpop.f32.mrf.mxu0
      %v2323 = vadd.f32 0.0, %v2322
      %2324 = vmatmul.f32.gmra.mxu0 %v2168
      %v2325 = vpop.f32.mrf.mxu0
      %v2326 = vadd.f32 0.0, %v2325
      %2327 = vmatmul.f32.gmra.mxu0 %v2171
      %v2328 = vpop.f32.mrf.mxu0
      %v2329 = vadd.f32 0.0, %v2328
      %2330 = vmatmul.f32.gmra.mxu0 %v2174
      %v2331 = vpop.f32.mrf.mxu0
      %v2332 = vadd.f32 0.0, %v2331
      %2333 = vmatmul.f32.gmra.mxu0 %v2177
      %v2334 = vpop.f32.mrf.mxu0
      %v2335 = vadd.f32 0.0, %v2334
      %2336 = vmatmul.f32.gmra.mxu0 %v2180
      %v2337 = vpop.f32.mrf.mxu0
      %v2338 = vadd.f32 0.0, %v2337
      %2339 = vmatmul.f32.gmra.mxu0 %v2183
      %v2340 = vpop.f32.mrf.mxu0
      %v2341 = vadd.f32 0.0, %v2340
      %2342 = vmatmul.f32.gmra.mxu0 %v2186
      %v2343 = vpop.f32.mrf.mxu0
      %v2344 = vadd.f32 0.0, %v2343
      %2345 = vmatmul.f32.gmra.mxu0 %v2189
      %v2346 = vpop.f32.mrf.mxu0
      %v2347 = vadd.f32 0.0, %v2346
      %2348 = vmatmul.f32.gmra.mxu0 %v2192
      %v2349 = vpop.f32.mrf.mxu0
      %v2350 = vadd.f32 0.0, %v2349
      %2351 = vmatmul.f32.gmra.mxu0 %v2195
      %v2352 = vpop.f32.mrf.mxu0
      %v2353 = vadd.f32 0.0, %v2352
      %2354 = vmatmul.f32.gmra.mxu0 %v2198
      %v2355 = vpop.f32.mrf.mxu0
      %v2356 = vadd.f32 0.0, %v2355
      %2357 = vmatmul.f32.gmra.mxu0 %v2201
      %v2358 = vpop.f32.mrf.mxu0
      %v2359 = vadd.f32 0.0, %v2358
      %2360 = vmatmul.f32.gmra.mxu0 %v2204
      %v2361 = vpop.f32.mrf.mxu0
      %v2362 = vadd.f32 0.0, %v2361
      %2363 = vmatmul.f32.gmra.mxu0 %v2207
      %v2364 = vpop.f32.mrf.mxu0
      %v2365 = vadd.f32 0.0, %v2364
      %2366 = vmatmul.f32.gmra.mxu0 %v2210
      %v2367 = vpop.f32.mrf.mxu0
      %v2368 = vadd.f32 0.0, %v2367
      %2369 = vmatmul.f32.gmra.mxu0 %v2213
      %v2370 = vpop.f32.mrf.mxu0
      %v2371 = vadd.f32 0.0, %v2370
      %2372 = vmatmul.f32.gmra.mxu0 %v2216
      %v2373 = vpop.f32.mrf.mxu0
      %v2374 = vadd.f32 0.0, %v2373
      %2375 = vmatmul.f32.gmra.mxu0 %v2219
      %v2376 = vpop.f32.mrf.mxu0
      %v2377 = vadd.f32 0.0, %v2376
      %2378 = vmatmul.f32.gmra.mxu0 %v2222
      %v2379 = vpop.f32.mrf.mxu0
      %v2380 = vadd.f32 0.0, %v2379
      %2381 = vmatmul.f32.gmra.mxu0 %v2225
      %v2382 = vpop.f32.mrf.mxu0
      %v2383 = vadd.f32 0.0, %v2382
      %2384 = vmatmul.f32.gmra.mxu0 %v2228
      %v2385 = vpop.f32.mrf.mxu0
      %v2386 = vadd.f32 0.0, %v2385
      %2387 = vmatmul.f32.gmra.mxu0 %v2231
      %v2388 = vpop.f32.mrf.mxu0
      %v2389 = vadd.f32 0.0, %v2388
      %2390 = vmatmul.f32.gmra.mxu0 %v2234
      %v2391 = vpop.f32.mrf.mxu0
      %v2392 = vadd.f32 0.0, %v2391
      %2393 = vmatmul.f32.gmra.mxu0 %v2237
      %v2394 = vpop.f32.mrf.mxu0
      %v2395 = vadd.f32 0.0, %v2394
      %2396 = vmatmul.f32.gmra.mxu0 %v2240
      %v2397 = vpop.f32.mrf.mxu0
      %v2398 = vadd.f32 0.0, %v2397
      %2399 = vmatmul.f32.gmra.mxu0 %v2243
      %v2400 = vpop.f32.mrf.mxu0
      %v2401 = vadd.f32 0.0, %v2400
      %2402 = vmatmul.f32.gmra.mxu0 %v2246
      %v2403 = vpop.f32.mrf.mxu0
      %v2404 = vadd.f32 0.0, %v2403
      %2405 = vmatmul.f32.gmra.mxu0 %v2249
      %v2406 = vpop.f32.mrf.mxu0
      %v2407 = vadd.f32 0.0, %v2406
      %2408 = vmatmul.f32.gmra.mxu0 %v2252
      %v2409 = vpop.f32.mrf.mxu0
      %v2410 = vadd.f32 0.0, %v2409
      %2411 = vmatmul.f32.gmra.mxu0 %v2255
      %v2412 = vpop.f32.mrf.mxu0
      %v2413 = vadd.f32 0.0, %v2412
      %2414 = vmatmul.f32.gmra.mxu0 %v2258
      %v2415 = vpop.f32.mrf.mxu0
      %v2416 = vadd.f32 0.0, %v2415
      %2417 = vmatmul.f32.gmra.mxu0 %v2261
      %v2418 = vpop.f32.mrf.mxu0
      %v2419 = vadd.f32 0.0, %v2418
      %2420 = vmatmul.f32.gmra.mxu0 %v2264
      %v2421 = vpop.f32.mrf.mxu0
      %v2422 = vadd.f32 0.0, %v2421
      %2423 = vmatmul.f32.gmra.mxu0 %v2267
      %v2424 = vpop.f32.mrf.mxu0
      %v2425 = vadd.f32 0.0, %v2424
      %2426 = vmatmul.f32.gmra.mxu0 %v2270
      %v2427 = vpop.f32.mrf.mxu0
      %v2428 = vadd.f32 0.0, %v2427
      %2429 = vmatmul.f32.gmra.mxu0 %v2273
      %v2430 = vpop.f32.mrf.mxu0
      %v2431 = vadd.f32 0.0, %v2430
      %2432 = vmatmul.f32.gmra.mxu0 %v2276
      %v2433 = vpop.f32.mrf.mxu0
      %v2434 = vadd.f32 0.0, %v2433
      %2435 = vmatmul.f32.gmra.mxu0 %v2279
      %v2436 = vpop.f32.mrf.mxu0
      %v2437 = vadd.f32 0.0, %v2436
      %2438 = vmatmul.f32.gmra.mxu0 %v2282
      %v2439 = vpop.f32.mrf.mxu0
      %v2440 = vadd.f32 0.0, %v2439
      %2441 = vmatmul.f32.gmra.mxu0 %v2285
      %v2442 = vpop.f32.mrf.mxu0
      %v2443 = vadd.f32 0.0, %v2442
      %2444 = vmatmul.f32.gmra.mxu0 %v2288
      %v2445 = vpop.f32.mrf.mxu0
      %v2446 = vadd.f32 0.0, %v2445
      %2447 = vmatmul.f32.gmra.mxu0 %v2291
      %v2448 = vpop.f32.mrf.mxu0
      %v2449 = vadd.f32 0.0, %v2448
      %2450 = vmatmul.f32.gmra.mxu0 %v2294
      %v2451 = vpop.f32.mrf.mxu0
      %v2452 = vadd.f32 0.0, %v2451
      %2453 = vmatmul.f32.gmra.mxu0 %v2297
      %v2454 = vpop.f32.mrf.mxu0
      %v2455 = vadd.f32 0.0, %v2454
      %2456 = vmatmul.f32.gmra.mxu0 %v2300
      %v2457 = vpop.f32.mrf.mxu0
      %v2458 = vadd.f32 0.0, %v2457
      %2459 = vmatmul.f32.gmra.mxu0 %v2303
      %v2460 = vpop.f32.mrf.mxu0
      %v2461 = vadd.f32 0.0, %v2460
      %2462 = vdwg.mxu0
      %v2464 = vsel %vm2016, %v2065, 0
      %v2467 = vsel %vm2016, %v2066, 0
      %v2470 = vsel %vm2016, %v2067, 0
      %v2473 = vsel %vm2016, %v2068, 0
      %v2476 = vsel %vm2016, %v2069, 0
      %v2479 = vsel %vm2016, %v2070, 0
      %v2482 = vsel %vm2016, %v2071, 0
      %v2485 = vsel %vm2016, %v2072, 0
      %v2488 = vsel %vm2016, %v2073, 0
      %v2491 = vsel %vm2016, %v2074, 0
      %v2494 = vsel %vm2016, %v2075, 0
      %v2497 = vsel %vm2016, %v2076, 0
      %v2500 = vsel %vm2016, %v2077, 0
      %v2503 = vsel %vm2016, %v2078, 0
      %v2506 = vsel %vm2016, %v2079, 0
      %v2509 = vsel %vm2016, %v2080, 0
      %v2512 = vsel %vm2016, %v2081, 0
      %v2515 = vsel %vm2016, %v2082, 0
      %v2518 = vsel %vm2016, %v2083, 0
      %v2521 = vsel %vm2016, %v2084, 0
      %v2524 = vsel %vm2016, %v2085, 0
      %v2527 = vsel %vm2016, %v2086, 0
      %v2530 = vsel %vm2016, %v2087, 0
      %v2533 = vsel %vm2016, %v2088, 0
      %v2536 = vsel %vm2016, %v2089, 0
      %v2539 = vsel %vm2016, %v2090, 0
      %v2542 = vsel %vm2016, %v2091, 0
      %v2545 = vsel %vm2016, %v2092, 0
      %v2548 = vsel %vm2016, %v2093, 0
      %v2551 = vsel %vm2016, %v2094, 0
      %v2554 = vsel %vm2016, %v2095, 0
      %v2557 = vsel %vm2016, %v2096, 0
      %v2560 = vsel %vm2016, %v2097, 0
      %v2563 = vsel %vm2016, %v2098, 0
      %v2566 = vsel %vm2016, %v2099, 0
      %v2569 = vsel %vm2016, %v2100, 0
      %v2572 = vsel %vm2016, %v2101, 0
      %v2575 = vsel %vm2016, %v2102, 0
      %v2578 = vsel %vm2016, %v2103, 0
      %v2581 = vsel %vm2016, %v2104, 0
      %v2584 = vsel %vm2016, %v2105, 0
      %v2587 = vsel %vm2016, %v2106, 0
      %v2590 = vsel %vm2016, %v2107, 0
      %v2593 = vsel %vm2016, %v2108, 0
      %v2596 = vsel %vm2016, %v2109, 0
      %v2599 = vsel %vm2016, %v2110, 0
      %v2602 = vsel %vm2016, %v2111, 0
      %2604 = vmatpush.msra.mxu0 0.0
      %2605 = vmatpush.msra.mxu0 0.0
      %2606 = vmatpush.msra.mxu0 0.0
      %2607 = vmatpush.msra.mxu0 0.0
      %2608 = vmatpush.msra.mxu0 0.0
      %2609 = vmatpush.msra.mxu0 0.0
      %2610 = vmatpush.msra.mxu0 0.0
      %2611 = vmatpush.msra.mxu0 0.0
      %2612 = vmatpush.msra.mxu0 0.0
      %2613 = vmatpush.msra.mxu0 0.0
      %2614 = vmatpush.msra.mxu0 0.0
      %2615 = vmatpush.msra.mxu0 0.0
      %2616 = vmatpush.msra.mxu0 0.0
      %2617 = vmatpush.msra.mxu0 0.0
      %2618 = vmatpush.msra.mxu0 %v2113
      %2619 = vmatpush.msra.mxu0 %v2112
      %2620 = vmatmul.f32.gmra.mxu0 %v2464
      %v2621 = vpop.f32.mrf.mxu0
      %v2622 = vadd.f32 %v2323, %v2621
      %2623 = vmatmul.f32.gmra.mxu0 %v2467
      %v2624 = vpop.f32.mrf.mxu0
      %v2625 = vadd.f32 %v2326, %v2624
      %2626 = vmatmul.f32.gmra.mxu0 %v2470
      %v2627 = vpop.f32.mrf.mxu0
      %v2628 = vadd.f32 %v2329, %v2627
      %2629 = vmatmul.f32.gmra.mxu0 %v2473
      %v2630 = vpop.f32.mrf.mxu0
      %v2631 = vadd.f32 %v2332, %v2630
      %2632 = vmatmul.f32.gmra.mxu0 %v2476
      %v2633 = vpop.f32.mrf.mxu0
      %v2634 = vadd.f32 %v2335, %v2633
      %2635 = vmatmul.f32.gmra.mxu0 %v2479
      %v2636 = vpop.f32.mrf.mxu0
      %v2637 = vadd.f32 %v2338, %v2636
      %2638 = vmatmul.f32.gmra.mxu0 %v2482
      %v2639 = vpop.f32.mrf.mxu0
      %v2640 = vadd.f32 %v2341, %v2639
      %2641 = vmatmul.f32.gmra.mxu0 %v2485
      %v2642 = vpop.f32.mrf.mxu0
      %v2643 = vadd.f32 %v2344, %v2642
      %2644 = vmatmul.f32.gmra.mxu0 %v2488
      %v2645 = vpop.f32.mrf.mxu0
      %v2646 = vadd.f32 %v2347, %v2645
      %2647 = vmatmul.f32.gmra.mxu0 %v2491
      %v2648 = vpop.f32.mrf.mxu0
      %v2649 = vadd.f32 %v2350, %v2648
      %2650 = vmatmul.f32.gmra.mxu0 %v2494
      %v2651 = vpop.f32.mrf.mxu0
      %v2652 = vadd.f32 %v2353, %v2651
      %2653 = vmatmul.f32.gmra.mxu0 %v2497
      %v2654 = vpop.f32.mrf.mxu0
      %v2655 = vadd.f32 %v2356, %v2654
      %2656 = vmatmul.f32.gmra.mxu0 %v2500
      %v2657 = vpop.f32.mrf.mxu0
      %v2658 = vadd.f32 %v2359, %v2657
      %2659 = vmatmul.f32.gmra.mxu0 %v2503
      %v2660 = vpop.f32.mrf.mxu0
      %v2661 = vadd.f32 %v2362, %v2660
      %2662 = vmatmul.f32.gmra.mxu0 %v2506
      %v2663 = vpop.f32.mrf.mxu0
      %v2664 = vadd.f32 %v2365, %v2663
      %2665 = vmatmul.f32.gmra.mxu0 %v2509
      %v2666 = vpop.f32.mrf.mxu0
      %v2667 = vadd.f32 %v2368, %v2666
      %2668 = vmatmul.f32.gmra.mxu0 %v2512
      %v2669 = vpop.f32.mrf.mxu0
      %v2670 = vadd.f32 %v2371, %v2669
      %2671 = vmatmul.f32.gmra.mxu0 %v2515
      %v2672 = vpop.f32.mrf.mxu0
      %v2673 = vadd.f32 %v2374, %v2672
      %2674 = vmatmul.f32.gmra.mxu0 %v2518
      %v2675 = vpop.f32.mrf.mxu0
      %v2676 = vadd.f32 %v2377, %v2675
      %2677 = vmatmul.f32.gmra.mxu0 %v2521
      %v2678 = vpop.f32.mrf.mxu0
      %v2679 = vadd.f32 %v2380, %v2678
      %2680 = vmatmul.f32.gmra.mxu0 %v2524
      %v2681 = vpop.f32.mrf.mxu0
      %v2682 = vadd.f32 %v2383, %v2681
      %2683 = vmatmul.f32.gmra.mxu0 %v2527
      %v2684 = vpop.f32.mrf.mxu0
      %v2685 = vadd.f32 %v2386, %v2684
      %2686 = vmatmul.f32.gmra.mxu0 %v2530
      %v2687 = vpop.f32.mrf.mxu0
      %v2688 = vadd.f32 %v2389, %v2687
      %2689 = vmatmul.f32.gmra.mxu0 %v2533
      %v2690 = vpop.f32.mrf.mxu0
      %v2691 = vadd.f32 %v2392, %v2690
      %2692 = vmatmul.f32.gmra.mxu0 %v2536
      %v2693 = vpop.f32.mrf.mxu0
      %v2694 = vadd.f32 %v2395, %v2693
      %2695 = vmatmul.f32.gmra.mxu0 %v2539
      %v2696 = vpop.f32.mrf.mxu0
      %v2697 = vadd.f32 %v2398, %v2696
      %2698 = vmatmul.f32.gmra.mxu0 %v2542
      %v2699 = vpop.f32.mrf.mxu0
      %v2700 = vadd.f32 %v2401, %v2699
      %2701 = vmatmul.f32.gmra.mxu0 %v2545
      %v2702 = vpop.f32.mrf.mxu0
      %v2703 = vadd.f32 %v2404, %v2702
      %2704 = vmatmul.f32.gmra.mxu0 %v2548
      %v2705 = vpop.f32.mrf.mxu0
      %v2706 = vadd.f32 %v2407, %v2705
      %2707 = vmatmul.f32.gmra.mxu0 %v2551
      %v2708 = vpop.f32.mrf.mxu0
      %v2709 = vadd.f32 %v2410, %v2708
      %2710 = vmatmul.f32.gmra.mxu0 %v2554
      %v2711 = vpop.f32.mrf.mxu0
      %v2712 = vadd.f32 %v2413, %v2711
      %2713 = vmatmul.f32.gmra.mxu0 %v2557
      %v2714 = vpop.f32.mrf.mxu0
      %v2715 = vadd.f32 %v2416, %v2714
      %2716 = vmatmul.f32.gmra.mxu0 %v2560
      %v2717 = vpop.f32.mrf.mxu0
      %v2718 = vadd.f32 %v2419, %v2717
      %2719 = vmatmul.f32.gmra.mxu0 %v2563
      %v2720 = vpop.f32.mrf.mxu0
      %v2721 = vadd.f32 %v2422, %v2720
      %2722 = vmatmul.f32.gmra.mxu0 %v2566
      %v2723 = vpop.f32.mrf.mxu0
      %v2724 = vadd.f32 %v2425, %v2723
      %2725 = vmatmul.f32.gmra.mxu0 %v2569
      %v2726 = vpop.f32.mrf.mxu0
      %v2727 = vadd.f32 %v2428, %v2726
      %2728 = vmatmul.f32.gmra.mxu0 %v2572
      %v2729 = vpop.f32.mrf.mxu0
      %v2730 = vadd.f32 %v2431, %v2729
      %2731 = vmatmul.f32.gmra.mxu0 %v2575
      %v2732 = vpop.f32.mrf.mxu0
      %v2733 = vadd.f32 %v2434, %v2732
      %2734 = vmatmul.f32.gmra.mxu0 %v2578
      %v2735 = vpop.f32.mrf.mxu0
      %v2736 = vadd.f32 %v2437, %v2735
      %2737 = vmatmul.f32.gmra.mxu0 %v2581
      %v2738 = vpop.f32.mrf.mxu0
      %v2739 = vadd.f32 %v2440, %v2738
      %2740 = vmatmul.f32.gmra.mxu0 %v2584
      %v2741 = vpop.f32.mrf.mxu0
      %v2742 = vadd.f32 %v2443, %v2741
      %2743 = vmatmul.f32.gmra.mxu0 %v2587
      %v2744 = vpop.f32.mrf.mxu0
      %v2745 = vadd.f32 %v2446, %v2744
      %2746 = vmatmul.f32.gmra.mxu0 %v2590
      %v2747 = vpop.f32.mrf.mxu0
      %v2748 = vadd.f32 %v2449, %v2747
      %2749 = vmatmul.f32.gmra.mxu0 %v2593
      %v2750 = vpop.f32.mrf.mxu0
      %v2751 = vadd.f32 %v2452, %v2750
      %2752 = vmatmul.f32.gmra.mxu0 %v2596
      %v2753 = vpop.f32.mrf.mxu0
      %v2754 = vadd.f32 %v2455, %v2753
      %2755 = vmatmul.f32.gmra.mxu0 %v2599
      %v2756 = vpop.f32.mrf.mxu0
      %v2757 = vadd.f32 %v2458, %v2756
      %2758 = vmatmul.f32.gmra.mxu0 %v2602
      %v2759 = vpop.f32.mrf.mxu0
      %v2760 = vadd.f32 %v2461, %v2759
      %2761 = vdwg.mxu0
      %v2762 = vld [vmem:[#allocation2 + $0x7] sm:$0xff]
      %v2763 = vld [vmem:[#allocation2 + $0xf] sm:$0xff]
      %v2764 = vld [vmem:[#allocation2 + $0x17] sm:$0xff]
      %v2765 = vld [vmem:[#allocation2 + $0x1f] sm:$0xff]
      %v2766 = vld [vmem:[#allocation2 + $0x27] sm:$0xff]
      %v2767 = vld [vmem:[#allocation2 + $0x2f] sm:$0xff]
      %v2768 = vld [vmem:[#allocation2 + $0x37] sm:$0xff]
      %v2769 = vld [vmem:[#allocation2 + $0x3f] sm:$0xff]
      %v2770 = vld [vmem:[#allocation2 + $0x47] sm:$0xff]
      %v2771 = vld [vmem:[#allocation2 + $0x4f] sm:$0xff]
      %v2772 = vld [vmem:[#allocation2 + $0x57] sm:$0xff]
      %v2773 = vld [vmem:[#allocation2 + $0x5f] sm:$0xff]
      %v2774 = vld [vmem:[#allocation2 + $0x67] sm:$0xff]
      %v2775 = vld [vmem:[#allocation2 + $0x6f] sm:$0xff]
      %v2776 = vld [vmem:[#allocation2 + $0x77] sm:$0xff]
      %v2777 = vld [vmem:[#allocation2 + $0x7f] sm:$0xff]
      %v2778 = vld [vmem:[#allocation2 + $0x87] sm:$0xff]
      %v2779 = vld [vmem:[#allocation2 + $0x8f] sm:$0xff]
      %v2780 = vld [vmem:[#allocation2 + $0x97] sm:$0xff]
      %v2781 = vld [vmem:[#allocation2 + $0x9f] sm:$0xff]
      %v2782 = vld [vmem:[#allocation2 + $0xa7] sm:$0xff]
      %v2783 = vld [vmem:[#allocation2 + $0xaf] sm:$0xff]
      %v2784 = vld [vmem:[#allocation2 + $0xb7] sm:$0xff]
      %v2785 = vld [vmem:[#allocation2 + $0xbf] sm:$0xff]
      %v2786 = vld [vmem:[#allocation2 + $0xc7] sm:$0xff]
      %v2787 = vld [vmem:[#allocation2 + $0xcf] sm:$0xff]
      %v2788 = vld [vmem:[#allocation2 + $0xd7] sm:$0xff]
      %v2789 = vld [vmem:[#allocation2 + $0xdf] sm:$0xff]
      %v2790 = vld [vmem:[#allocation2 + $0xe7] sm:$0xff]
      %v2791 = vld [vmem:[#allocation2 + $0xef] sm:$0xff]
      %v2792 = vld [vmem:[#allocation2 + $0xf7] sm:$0xff]
      %v2793 = vld [vmem:[#allocation2 + $0xff] sm:$0xff]
      %v2794 = vld [vmem:[#allocation2 + $0x107] sm:$0xff]
      %v2795 = vld [vmem:[#allocation2 + $0x10f] sm:$0xff]
      %v2796 = vld [vmem:[#allocation2 + $0x117] sm:$0xff]
      %v2797 = vld [vmem:[#allocation2 + $0x11f] sm:$0xff]
      %v2798 = vld [vmem:[#allocation2 + $0x127] sm:$0xff]
      %v2799 = vld [vmem:[#allocation2 + $0x12f] sm:$0xff]
      %v2800 = vld [vmem:[#allocation2 + $0x137] sm:$0xff]
      %v2801 = vld [vmem:[#allocation2 + $0x13f] sm:$0xff]
      %v2802 = vld [vmem:[#allocation2 + $0x147] sm:$0xff]
      %v2803 = vld [vmem:[#allocation2 + $0x14f] sm:$0xff]
      %v2804 = vld [vmem:[#allocation2 + $0x157] sm:$0xff]
      %v2805 = vld [vmem:[#allocation2 + $0x15f] sm:$0xff]
      %v2806 = vld [vmem:[#allocation2 + $0x167] sm:$0xff]
      %v2807 = vld [vmem:[#allocation2 + $0x16f] sm:$0xff]
      %v2808 = vld [vmem:[#allocation2 + $0x177] sm:$0xff]
      %s2809 = scalar_lea.vmem %s3, 32
      %v2810 = vld [vmem:[%s2809] sm:$0xff]
      %v2811 = vld [vmem:[%s2809 + $0x8] sm:$0xff]
      %v2813 = vsel %vm2016, %v2762, 0
      %v2816 = vsel %vm2016, %v2763, 0
      %v2819 = vsel %vm2016, %v2764, 0
      %v2822 = vsel %vm2016, %v2765, 0
      %v2825 = vsel %vm2016, %v2766, 0
      %v2828 = vsel %vm2016, %v2767, 0
      %v2831 = vsel %vm2016, %v2768, 0
      %v2834 = vsel %vm2016, %v2769, 0
      %v2837 = vsel %vm2016, %v2770, 0
      %v2840 = vsel %vm2016, %v2771, 0
      %v2843 = vsel %vm2016, %v2772, 0
      %v2846 = vsel %vm2016, %v2773, 0
      %v2849 = vsel %vm2016, %v2774, 0
      %v2852 = vsel %vm2016, %v2775, 0
      %v2855 = vsel %vm2016, %v2776, 0
      %v2858 = vsel %vm2016, %v2777, 0
      %v2861 = vsel %vm2016, %v2778, 0
      %v2864 = vsel %vm2016, %v2779, 0
      %v2867 = vsel %vm2016, %v2780, 0
      %v2870 = vsel %vm2016, %v2781, 0
      %v2873 = vsel %vm2016, %v2782, 0
      %v2876 = vsel %vm2016, %v2783, 0
      %v2879 = vsel %vm2016, %v2784, 0
      %v2882 = vsel %vm2016, %v2785, 0
      %v2885 = vsel %vm2016, %v2786, 0
      %v2888 = vsel %vm2016, %v2787, 0
      %v2891 = vsel %vm2016, %v2788, 0
      %v2894 = vsel %vm2016, %v2789, 0
      %v2897 = vsel %vm2016, %v2790, 0
      %v2900 = vsel %vm2016, %v2791, 0
      %v2903 = vsel %vm2016, %v2792, 0
      %v2906 = vsel %vm2016, %v2793, 0
      %v2909 = vsel %vm2016, %v2794, 0
      %v2912 = vsel %vm2016, %v2795, 0
      %v2915 = vsel %vm2016, %v2796, 0
      %v2918 = vsel %vm2016, %v2797, 0
      %v2921 = vsel %vm2016, %v2798, 0
      %v2924 = vsel %vm2016, %v2799, 0
      %v2927 = vsel %vm2016, %v2800, 0
      %v2930 = vsel %vm2016, %v2801, 0
      %v2933 = vsel %vm2016, %v2802, 0
      %v2936 = vsel %vm2016, %v2803, 0
      %v2939 = vsel %vm2016, %v2804, 0
      %v2942 = vsel %vm2016, %v2805, 0
      %v2945 = vsel %vm2016, %v2806, 0
      %v2948 = vsel %vm2016, %v2807, 0
      %v2951 = vsel %vm2016, %v2808, 0
      %2953 = vmatpush.msra.mxu0 0.0
      %2954 = vmatpush.msra.mxu0 0.0
      %2955 = vmatpush.msra.mxu0 0.0
      %2956 = vmatpush.msra.mxu0 0.0
      %2957 = vmatpush.msra.mxu0 0.0
      %2958 = vmatpush.msra.mxu0 0.0
      %2959 = vmatpush.msra.mxu0 0.0
      %2960 = vmatpush.msra.mxu0 0.0
      %2961 = vmatpush.msra.mxu0 0.0
      %2962 = vmatpush.msra.mxu0 0.0
      %2963 = vmatpush.msra.mxu0 0.0
      %2964 = vmatpush.msra.mxu0 0.0
      %2965 = vmatpush.msra.mxu0 0.0
      %2966 = vmatpush.msra.mxu0 0.0
      %2967 = vmatpush.msra.mxu0 %v2811
      %2968 = vmatpush.msra.mxu0 %v2810
      %2969 = vmatmul.f32.gmra.mxu0 %v2813
      %v2970 = vpop.f32.mrf.mxu0
      %v2971 = vadd.f32 0.0, %v2970
      %2972 = vmatmul.f32.gmra.mxu0 %v2816
      %v2973 = vpop.f32.mrf.mxu0
      %v2974 = vadd.f32 0.0, %v2973
      %2975 = vmatmul.f32.gmra.mxu0 %v2819
      %v2976 = vpop.f32.mrf.mxu0
      %v2977 = vadd.f32 0.0, %v2976
      %2978 = vmatmul.f32.gmra.mxu0 %v2822
      %v2979 = vpop.f32.mrf.mxu0
      %v2980 = vadd.f32 0.0, %v2979
      %2981 = vmatmul.f32.gmra.mxu0 %v2825
      %v2982 = vpop.f32.mrf.mxu0
      %v2983 = vadd.f32 0.0, %v2982
      %2984 = vmatmul.f32.gmra.mxu0 %v2828
      %v2985 = vpop.f32.mrf.mxu0
      %v2986 = vadd.f32 0.0, %v2985
      %2987 = vmatmul.f32.gmra.mxu0 %v2831
      %v2988 = vpop.f32.mrf.mxu0
      %v2989 = vadd.f32 0.0, %v2988
      %2990 = vmatmul.f32.gmra.mxu0 %v2834
      %v2991 = vpop.f32.mrf.mxu0
      %v2992 = vadd.f32 0.0, %v2991
      %2993 = vmatmul.f32.gmra.mxu0 %v2837
      %v2994 = vpop.f32.mrf.mxu0
      %v2995 = vadd.f32 0.0, %v2994
      %2996 = vmatmul.f32.gmra.mxu0 %v2840
      %v2997 = vpop.f32.mrf.mxu0
      %v2998 = vadd.f32 0.0, %v2997
      %2999 = vmatmul.f32.gmra.mxu0 %v2843
      %v3000 = vpop.f32.mrf.mxu0
      %v3001 = vadd.f32 0.0, %v3000
      %3002 = vmatmul.f32.gmra.mxu0 %v2846
      %v3003 = vpop.f32.mrf.mxu0
      %v3004 = vadd.f32 0.0, %v3003
      %3005 = vmatmul.f32.gmra.mxu0 %v2849
      %v3006 = vpop.f32.mrf.mxu0
      %v3007 = vadd.f32 0.0, %v3006
      %3008 = vmatmul.f32.gmra.mxu0 %v2852
      %v3009 = vpop.f32.mrf.mxu0
      %v3010 = vadd.f32 0.0, %v3009
      %3011 = vmatmul.f32.gmra.mxu0 %v2855
      %v3012 = vpop.f32.mrf.mxu0
      %v3013 = vadd.f32 0.0, %v3012
      %3014 = vmatmul.f32.gmra.mxu0 %v2858
      %v3015 = vpop.f32.mrf.mxu0
      %v3016 = vadd.f32 0.0, %v3015
      %3017 = vmatmul.f32.gmra.mxu0 %v2861
      %v3018 = vpop.f32.mrf.mxu0
      %v3019 = vadd.f32 0.0, %v3018
      %3020 = vmatmul.f32.gmra.mxu0 %v2864
      %v3021 = vpop.f32.mrf.mxu0
      %v3022 = vadd.f32 0.0, %v3021
      %3023 = vmatmul.f32.gmra.mxu0 %v2867
      %v3024 = vpop.f32.mrf.mxu0
      %v3025 = vadd.f32 0.0, %v3024
      %3026 = vmatmul.f32.gmra.mxu0 %v2870
      %v3027 = vpop.f32.mrf.mxu0
      %v3028 = vadd.f32 0.0, %v3027
      %3029 = vmatmul.f32.gmra.mxu0 %v2873
      %v3030 = vpop.f32.mrf.mxu0
      %v3031 = vadd.f32 0.0, %v3030
      %3032 = vmatmul.f32.gmra.mxu0 %v2876
      %v3033 = vpop.f32.mrf.mxu0
      %v3034 = vadd.f32 0.0, %v3033
      %3035 = vmatmul.f32.gmra.mxu0 %v2879
      %v3036 = vpop.f32.mrf.mxu0
      %v3037 = vadd.f32 0.0, %v3036
      %3038 = vmatmul.f32.gmra.mxu0 %v2882
      %v3039 = vpop.f32.mrf.mxu0
      %v3040 = vadd.f32 0.0, %v3039
      %3041 = vmatmul.f32.gmra.mxu0 %v2885
      %v3042 = vpop.f32.mrf.mxu0
      %v3043 = vadd.f32 0.0, %v3042
      %3044 = vmatmul.f32.gmra.mxu0 %v2888
      %v3045 = vpop.f32.mrf.mxu0
      %v3046 = vadd.f32 0.0, %v3045
      %3047 = vmatmul.f32.gmra.mxu0 %v2891
      %v3048 = vpop.f32.mrf.mxu0
      %v3049 = vadd.f32 0.0, %v3048
      %3050 = vmatmul.f32.gmra.mxu0 %v2894
      %v3051 = vpop.f32.mrf.mxu0
      %v3052 = vadd.f32 0.0, %v3051
      %3053 = vmatmul.f32.gmra.mxu0 %v2897
      %v3054 = vpop.f32.mrf.mxu0
      %v3055 = vadd.f32 0.0, %v3054
      %3056 = vmatmul.f32.gmra.mxu0 %v2900
      %v3057 = vpop.f32.mrf.mxu0
      %v3058 = vadd.f32 0.0, %v3057
      %3059 = vmatmul.f32.gmra.mxu0 %v2903
      %v3060 = vpop.f32.mrf.mxu0
      %v3061 = vadd.f32 0.0, %v3060
      %3062 = vmatmul.f32.gmra.mxu0 %v2906
      %v3063 = vpop.f32.mrf.mxu0
      %v3064 = vadd.f32 0.0, %v3063
      %3065 = vmatmul.f32.gmra.mxu0 %v2909
      %v3066 = vpop.f32.mrf.mxu0
      %v3067 = vadd.f32 0.0, %v3066
      %3068 = vmatmul.f32.gmra.mxu0 %v2912
      %v3069 = vpop.f32.mrf.mxu0
      %v3070 = vadd.f32 0.0, %v3069
      %3071 = vmatmul.f32.gmra.mxu0 %v2915
      %v3072 = vpop.f32.mrf.mxu0
      %v3073 = vadd.f32 0.0, %v3072
      %3074 = vmatmul.f32.gmra.mxu0 %v2918
      %v3075 = vpop.f32.mrf.mxu0
      %v3076 = vadd.f32 0.0, %v3075
      %3077 = vmatmul.f32.gmra.mxu0 %v2921
      %v3078 = vpop.f32.mrf.mxu0
      %v3079 = vadd.f32 0.0, %v3078
      %3080 = vmatmul.f32.gmra.mxu0 %v2924
      %v3081 = vpop.f32.mrf.mxu0
      %v3082 = vadd.f32 0.0, %v3081
      %3083 = vmatmul.f32.gmra.mxu0 %v2927
      %v3084 = vpop.f32.mrf.mxu0
      %v3085 = vadd.f32 0.0, %v3084
      %3086 = vmatmul.f32.gmra.mxu0 %v2930
      %v3087 = vpop.f32.mrf.mxu0
      %v3088 = vadd.f32 0.0, %v3087
      %3089 = vmatmul.f32.gmra.mxu0 %v2933
      %v3090 = vpop.f32.mrf.mxu0
      %v3091 = vadd.f32 0.0, %v3090
      %3092 = vmatmul.f32.gmra.mxu0 %v2936
      %v3093 = vpop.f32.mrf.mxu0
      %v3094 = vadd.f32 0.0, %v3093
      %3095 = vmatmul.f32.gmra.mxu0 %v2939
      %v3096 = vpop.f32.mrf.mxu0
      %v3097 = vadd.f32 0.0, %v3096
      %3098 = vmatmul.f32.gmra.mxu0 %v2942
      %v3099 = vpop.f32.mrf.mxu0
      %v3100 = vadd.f32 0.0, %v3099
      %3101 = vmatmul.f32.gmra.mxu0 %v2945
      %v3102 = vpop.f32.mrf.mxu0
      %v3103 = vadd.f32 0.0, %v3102
      %3104 = vmatmul.f32.gmra.mxu0 %v2948
      %v3105 = vpop.f32.mrf.mxu0
      %v3106 = vadd.f32 0.0, %v3105
      %3107 = vmatmul.f32.gmra.mxu0 %v2951
      %v3108 = vpop.f32.mrf.mxu0
      %v3109 = vadd.f32 0.0, %v3108
      %3110 = vdwg.mxu0
      %v3111 = vadd.f32 %v2622, %v2971
      %v3112 = vadd.f32 %v2625, %v2974
      %v3113 = vadd.f32 %v2628, %v2977
      %v3114 = vadd.f32 %v2631, %v2980
      %v3115 = vadd.f32 %v2634, %v2983
      %v3116 = vadd.f32 %v2637, %v2986
      %v3117 = vadd.f32 %v2640, %v2989
      %v3118 = vadd.f32 %v2643, %v2992
      %v3119 = vadd.f32 %v2646, %v2995
      %v3120 = vadd.f32 %v2649, %v2998
      %v3121 = vadd.f32 %v2652, %v3001
      %v3122 = vadd.f32 %v2655, %v3004
      %v3123 = vadd.f32 %v2658, %v3007
      %v3124 = vadd.f32 %v2661, %v3010
      %v3125 = vadd.f32 %v2664, %v3013
      %v3126 = vadd.f32 %v2667, %v3016
      %v3127 = vadd.f32 %v2670, %v3019
      %v3128 = vadd.f32 %v2673, %v3022
      %v3129 = vadd.f32 %v2676, %v3025
      %v3130 = vadd.f32 %v2679, %v3028
      %v3131 = vadd.f32 %v2682, %v3031
      %v3132 = vadd.f32 %v2685, %v3034
      %v3133 = vadd.f32 %v2688, %v3037
      %v3134 = vadd.f32 %v2691, %v3040
      %v3135 = vadd.f32 %v2694, %v3043
      %v3136 = vadd.f32 %v2697, %v3046
      %v3137 = vadd.f32 %v2700, %v3049
      %v3138 = vadd.f32 %v2703, %v3052
      %v3139 = vadd.f32 %v2706, %v3055
      %v3140 = vadd.f32 %v2709, %v3058
      %v3141 = vadd.f32 %v2712, %v3061
      %v3142 = vadd.f32 %v2715, %v3064
      %v3143 = vadd.f32 %v2718, %v3067
      %v3144 = vadd.f32 %v2721, %v3070
      %v3145 = vadd.f32 %v2724, %v3073
      %v3146 = vadd.f32 %v2727, %v3076
      %v3147 = vadd.f32 %v2730, %v3079
      %v3148 = vadd.f32 %v2733, %v3082
      %v3149 = vadd.f32 %v2736, %v3085
      %v3150 = vadd.f32 %v2739, %v3088
      %v3151 = vadd.f32 %v2742, %v3091
      %v3152 = vadd.f32 %v2745, %v3094
      %v3153 = vadd.f32 %v2748, %v3097
      %v3154 = vadd.f32 %v2751, %v3100
      %v3155 = vadd.f32 %v2754, %v3103
      %v3156 = vadd.f32 %v2757, %v3106
      %v3157 = vadd.f32 %v2760, %v3109
      %v3158 = vld [vmem:[#allocation2 + $0x8] sm:$0xff]
      %v3159 = vld [vmem:[#allocation2 + $0x10] sm:$0xff]
      %v3160 = vld [vmem:[#allocation2 + $0x18] sm:$0xff]
      %v3161 = vld [vmem:[#allocation2 + $0x20] sm:$0xff]
      %v3162 = vld [vmem:[#allocation2 + $0x28] sm:$0xff]
      %v3163 = vld [vmem:[#allocation2 + $0x30] sm:$0xff]
      %v3164 = vld [vmem:[#allocation2 + $0x38] sm:$0xff]
      %v3165 = vld [vmem:[#allocation2 + $0x40] sm:$0xff]
      %v3166 = vld [vmem:[#allocation2 + $0x48] sm:$0xff]
      %v3167 = vld [vmem:[#allocation2 + $0x50] sm:$0xff]
      %v3168 = vld [vmem:[#allocation2 + $0x58] sm:$0xff]
      %v3169 = vld [vmem:[#allocation2 + $0x60] sm:$0xff]
      %v3170 = vld [vmem:[#allocation2 + $0x68] sm:$0xff]
      %v3171 = vld [vmem:[#allocation2 + $0x70] sm:$0xff]
      %v3172 = vld [vmem:[#allocation2 + $0x78] sm:$0xff]
      %v3173 = vld [vmem:[#allocation2 + $0x80] sm:$0xff]
      %v3174 = vld [vmem:[#allocation2 + $0x88] sm:$0xff]
      %v3175 = vld [vmem:[#allocation2 + $0x90] sm:$0xff]
      %v3176 = vld [vmem:[#allocation2 + $0x98] sm:$0xff]
      %v3177 = vld [vmem:[#allocation2 + $0xa0] sm:$0xff]
      %v3178 = vld [vmem:[#allocation2 + $0xa8] sm:$0xff]
      %v3179 = vld [vmem:[#allocation2 + $0xb0] sm:$0xff]
      %v3180 = vld [vmem:[#allocation2 + $0xb8] sm:$0xff]
      %v3181 = vld [vmem:[#allocation2 + $0xc0] sm:$0xff]
      %v3182 = vld [vmem:[#allocation2 + $0xc8] sm:$0xff]
      %v3183 = vld [vmem:[#allocation2 + $0xd0] sm:$0xff]
      %v3184 = vld [vmem:[#allocation2 + $0xd8] sm:$0xff]
      %v3185 = vld [vmem:[#allocation2 + $0xe0] sm:$0xff]
      %v3186 = vld [vmem:[#allocation2 + $0xe8] sm:$0xff]
      %v3187 = vld [vmem:[#allocation2 + $0xf0] sm:$0xff]
      %v3188 = vld [vmem:[#allocation2 + $0xf8] sm:$0xff]
      %v3189 = vld [vmem:[#allocation2 + $0x100] sm:$0xff]
      %v3190 = vld [vmem:[#allocation2 + $0x108] sm:$0xff]
      %v3191 = vld [vmem:[#allocation2 + $0x110] sm:$0xff]
      %v3192 = vld [vmem:[#allocation2 + $0x118] sm:$0xff]
      %v3193 = vld [vmem:[#allocation2 + $0x120] sm:$0xff]
      %v3194 = vld [vmem:[#allocation2 + $0x128] sm:$0xff]
      %v3195 = vld [vmem:[#allocation2 + $0x130] sm:$0xff]
      %v3196 = vld [vmem:[#allocation2 + $0x138] sm:$0xff]
      %v3197 = vld [vmem:[#allocation2 + $0x140] sm:$0xff]
      %v3198 = vld [vmem:[#allocation2 + $0x148] sm:$0xff]
      %v3199 = vld [vmem:[#allocation2 + $0x150] sm:$0xff]
      %v3200 = vld [vmem:[#allocation2 + $0x158] sm:$0xff]
      %v3201 = vld [vmem:[#allocation2 + $0x160] sm:$0xff]
      %v3202 = vld [vmem:[#allocation2 + $0x168] sm:$0xff]
      %v3203 = vld [vmem:[#allocation2 + $0x170] sm:$0xff]
      %v3204 = vld [vmem:[#allocation2 + $0x178] sm:$0xff]
      %s3205 = scalar_lea.vmem %s3, 48
      %v3206 = vld [vmem:[%s3205] sm:$0xff]
      %v3207 = vld [vmem:[%s3205 + $0x8] sm:$0xff]
      %v3209 = vsel %vm2016, %v3158, 0
      %v3212 = vsel %vm2016, %v3159, 0
      %v3215 = vsel %vm2016, %v3160, 0
      %v3218 = vsel %vm2016, %v3161, 0
      %v3221 = vsel %vm2016, %v3162, 0
      %v3224 = vsel %vm2016, %v3163, 0
      %v3227 = vsel %vm2016, %v3164, 0
      %v3230 = vsel %vm2016, %v3165, 0
      %v3233 = vsel %vm2016, %v3166, 0
      %v3236 = vsel %vm2016, %v3167, 0
      %v3239 = vsel %vm2016, %v3168, 0
      %v3242 = vsel %vm2016, %v3169, 0
      %v3245 = vsel %vm2016, %v3170, 0
      %v3248 = vsel %vm2016, %v3171, 0
      %v3251 = vsel %vm2016, %v3172, 0
      %v3254 = vsel %vm2016, %v3173, 0
      %v3257 = vsel %vm2016, %v3174, 0
      %v3260 = vsel %vm2016, %v3175, 0
      %v3263 = vsel %vm2016, %v3176, 0
      %v3266 = vsel %vm2016, %v3177, 0
      %v3269 = vsel %vm2016, %v3178, 0
      %v3272 = vsel %vm2016, %v3179, 0
      %v3275 = vsel %vm2016, %v3180, 0
      %v3278 = vsel %vm2016, %v3181, 0
      %v3281 = vsel %vm2016, %v3182, 0
      %v3284 = vsel %vm2016, %v3183, 0
      %v3287 = vsel %vm2016, %v3184, 0
      %v3290 = vsel %vm2016, %v3185, 0
      %v3293 = vsel %vm2016, %v3186, 0
      %v3296 = vsel %vm2016, %v3187, 0
      %v3299 = vsel %vm2016, %v3188, 0
      %v3302 = vsel %vm2016, %v3189, 0
      %v3305 = vsel %vm2016, %v3190, 0
      %v3308 = vsel %vm2016, %v3191, 0
      %v3311 = vsel %vm2016, %v3192, 0
      %v3314 = vsel %vm2016, %v3193, 0
      %v3317 = vsel %vm2016, %v3194, 0
      %v3320 = vsel %vm2016, %v3195, 0
      %v3323 = vsel %vm2016, %v3196, 0
      %v3326 = vsel %vm2016, %v3197, 0
      %v3329 = vsel %vm2016, %v3198, 0
      %v3332 = vsel %vm2016, %v3199, 0
      %v3335 = vsel %vm2016, %v3200, 0
      %v3338 = vsel %vm2016, %v3201, 0
      %v3341 = vsel %vm2016, %v3202, 0
      %v3344 = vsel %vm2016, %v3203, 0
      %v3347 = vsel %vm2016, %v3204, 0
      %3349 = vmatpush.msra.mxu0 0.0
      %3350 = vmatpush.msra.mxu0 0.0
      %3351 = vmatpush.msra.mxu0 0.0
      %3352 = vmatpush.msra.mxu0 0.0
      %3353 = vmatpush.msra.mxu0 0.0
      %3354 = vmatpush.msra.mxu0 0.0
      %3355 = vmatpush.msra.mxu0 0.0
      %3356 = vmatpush.msra.mxu0 0.0
      %3357 = vmatpush.msra.mxu0 0.0
      %3358 = vmatpush.msra.mxu0 0.0
      %3359 = vmatpush.msra.mxu0 0.0
      %3360 = vmatpush.msra.mxu0 0.0
      %3361 = vmatpush.msra.mxu0 0.0
      %3362 = vmatpush.msra.mxu0 0.0
      %3363 = vmatpush.msra.mxu0 %v3207
      %3364 = vmatpush.msra.mxu0 %v3206
      %3365 = vmatmul.f32.gmra.mxu0 %v3209
      %v3366 = vpop.f32.mrf.mxu0
      %v3367 = vadd.f32 0.0, %v3366
      %3368 = vmatmul.f32.gmra.mxu0 %v3212
      %v3369 = vpop.f32.mrf.mxu0
      %v3370 = vadd.f32 0.0, %v3369
      %3371 = vmatmul.f32.gmra.mxu0 %v3215
      %v3372 = vpop.f32.mrf.mxu0
      %v3373 = vadd.f32 0.0, %v3372
      %3374 = vmatmul.f32.gmra.mxu0 %v3218
      %v3375 = vpop.f32.mrf.mxu0
      %v3376 = vadd.f32 0.0, %v3375
      %3377 = vmatmul.f32.gmra.mxu0 %v3221
      %v3378 = vpop.f32.mrf.mxu0
      %v3379 = vadd.f32 0.0, %v3378
      %3380 = vmatmul.f32.gmra.mxu0 %v3224
      %v3381 = vpop.f32.mrf.mxu0
      %v3382 = vadd.f32 0.0, %v3381
      %3383 = vmatmul.f32.gmra.mxu0 %v3227
      %v3384 = vpop.f32.mrf.mxu0
      %v3385 = vadd.f32 0.0, %v3384
      %3386 = vmatmul.f32.gmra.mxu0 %v3230
      %v3387 = vpop.f32.mrf.mxu0
      %v3388 = vadd.f32 0.0, %v3387
      %3389 = vmatmul.f32.gmra.mxu0 %v3233
      %v3390 = vpop.f32.mrf.mxu0
      %v3391 = vadd.f32 0.0, %v3390
      %3392 = vmatmul.f32.gmra.mxu0 %v3236
      %v3393 = vpop.f32.mrf.mxu0
      %v3394 = vadd.f32 0.0, %v3393
      %3395 = vmatmul.f32.gmra.mxu0 %v3239
      %v3396 = vpop.f32.mrf.mxu0
      %v3397 = vadd.f32 0.0, %v3396
      %3398 = vmatmul.f32.gmra.mxu0 %v3242
      %v3399 = vpop.f32.mrf.mxu0
      %v3400 = vadd.f32 0.0, %v3399
      %3401 = vmatmul.f32.gmra.mxu0 %v3245
      %v3402 = vpop.f32.mrf.mxu0
      %v3403 = vadd.f32 0.0, %v3402
      %3404 = vmatmul.f32.gmra.mxu0 %v3248
      %v3405 = vpop.f32.mrf.mxu0
      %v3406 = vadd.f32 0.0, %v3405
      %3407 = vmatmul.f32.gmra.mxu0 %v3251
      %v3408 = vpop.f32.mrf.mxu0
      %v3409 = vadd.f32 0.0, %v3408
      %3410 = vmatmul.f32.gmra.mxu0 %v3254
      %v3411 = vpop.f32.mrf.mxu0
      %v3412 = vadd.f32 0.0, %v3411
      %3413 = vmatmul.f32.gmra.mxu0 %v3257
      %v3414 = vpop.f32.mrf.mxu0
      %v3415 = vadd.f32 0.0, %v3414
      %3416 = vmatmul.f32.gmra.mxu0 %v3260
      %v3417 = vpop.f32.mrf.mxu0
      %v3418 = vadd.f32 0.0, %v3417
      %3419 = vmatmul.f32.gmra.mxu0 %v3263
      %v3420 = vpop.f32.mrf.mxu0
      %v3421 = vadd.f32 0.0, %v3420
      %3422 = vmatmul.f32.gmra.mxu0 %v3266
      %v3423 = vpop.f32.mrf.mxu0
      %v3424 = vadd.f32 0.0, %v3423
      %3425 = vmatmul.f32.gmra.mxu0 %v3269
      %v3426 = vpop.f32.mrf.mxu0
      %v3427 = vadd.f32 0.0, %v3426
      %3428 = vmatmul.f32.gmra.mxu0 %v3272
      %v3429 = vpop.f32.mrf.mxu0
      %v3430 = vadd.f32 0.0, %v3429
      %3431 = vmatmul.f32.gmra.mxu0 %v3275
      %v3432 = vpop.f32.mrf.mxu0
      %v3433 = vadd.f32 0.0, %v3432
      %3434 = vmatmul.f32.gmra.mxu0 %v3278
      %v3435 = vpop.f32.mrf.mxu0
      %v3436 = vadd.f32 0.0, %v3435
      %3437 = vmatmul.f32.gmra.mxu0 %v3281
      %v3438 = vpop.f32.mrf.mxu0
      %v3439 = vadd.f32 0.0, %v3438
      %3440 = vmatmul.f32.gmra.mxu0 %v3284
      %v3441 = vpop.f32.mrf.mxu0
      %v3442 = vadd.f32 0.0, %v3441
      %3443 = vmatmul.f32.gmra.mxu0 %v3287
      %v3444 = vpop.f32.mrf.mxu0
      %v3445 = vadd.f32 0.0, %v3444
      %3446 = vmatmul.f32.gmra.mxu0 %v3290
      %v3447 = vpop.f32.mrf.mxu0
      %v3448 = vadd.f32 0.0, %v3447
      %3449 = vmatmul.f32.gmra.mxu0 %v3293
      %v3450 = vpop.f32.mrf.mxu0
      %v3451 = vadd.f32 0.0, %v3450
      %3452 = vmatmul.f32.gmra.mxu0 %v3296
      %v3453 = vpop.f32.mrf.mxu0
      %v3454 = vadd.f32 0.0, %v3453
      %3455 = vmatmul.f32.gmra.mxu0 %v3299
      %v3456 = vpop.f32.mrf.mxu0
      %v3457 = vadd.f32 0.0, %v3456
      %3458 = vmatmul.f32.gmra.mxu0 %v3302
      %v3459 = vpop.f32.mrf.mxu0
      %v3460 = vadd.f32 0.0, %v3459
      %3461 = vmatmul.f32.gmra.mxu0 %v3305
      %v3462 = vpop.f32.mrf.mxu0
      %v3463 = vadd.f32 0.0, %v3462
      %3464 = vmatmul.f32.gmra.mxu0 %v3308
      %v3465 = vpop.f32.mrf.mxu0
      %v3466 = vadd.f32 0.0, %v3465
      %3467 = vmatmul.f32.gmra.mxu0 %v3311
      %v3468 = vpop.f32.mrf.mxu0
      %v3469 = vadd.f32 0.0, %v3468
      %3470 = vmatmul.f32.gmra.mxu0 %v3314
      %v3471 = vpop.f32.mrf.mxu0
      %v3472 = vadd.f32 0.0, %v3471
      %3473 = vmatmul.f32.gmra.mxu0 %v3317
      %v3474 = vpop.f32.mrf.mxu0
      %v3475 = vadd.f32 0.0, %v3474
      %3476 = vmatmul.f32.gmra.mxu0 %v3320
      %v3477 = vpop.f32.mrf.mxu0
      %v3478 = vadd.f32 0.0, %v3477
      %3479 = vmatmul.f32.gmra.mxu0 %v3323
      %v3480 = vpop.f32.mrf.mxu0
      %v3481 = vadd.f32 0.0, %v3480
      %3482 = vmatmul.f32.gmra.mxu0 %v3326
      %v3483 = vpop.f32.mrf.mxu0
      %v3484 = vadd.f32 0.0, %v3483
      %3485 = vmatmul.f32.gmra.mxu0 %v3329
      %v3486 = vpop.f32.mrf.mxu0
      %v3487 = vadd.f32 0.0, %v3486
      %3488 = vmatmul.f32.gmra.mxu0 %v3332
      %v3489 = vpop.f32.mrf.mxu0
      %v3490 = vadd.f32 0.0, %v3489
      %3491 = vmatmul.f32.gmra.mxu0 %v3335
      %v3492 = vpop.f32.mrf.mxu0
      %v3493 = vadd.f32 0.0, %v3492
      %3494 = vmatmul.f32.gmra.mxu0 %v3338
      %v3495 = vpop.f32.mrf.mxu0
      %v3496 = vadd.f32 0.0, %v3495
      %3497 = vmatmul.f32.gmra.mxu0 %v3341
      %v3498 = vpop.f32.mrf.mxu0
      %v3499 = vadd.f32 0.0, %v3498
      %3500 = vmatmul.f32.gmra.mxu0 %v3344
      %v3501 = vpop.f32.mrf.mxu0
      %v3502 = vadd.f32 0.0, %v3501
      %3503 = vmatmul.f32.gmra.mxu0 %v3347
      %v3504 = vpop.f32.mrf.mxu0
      %v3505 = vadd.f32 0.0, %v3504
      %3506 = vdwg.mxu0
      %v3507 = vadd.f32 %v3111, %v3367
      %v3508 = vadd.f32 %v3112, %v3370
      %v3509 = vadd.f32 %v3113, %v3373
      %v3510 = vadd.f32 %v3114, %v3376
      %v3511 = vadd.f32 %v3115, %v3379
      %v3512 = vadd.f32 %v3116, %v3382
      %v3513 = vadd.f32 %v3117, %v3385
      %v3514 = vadd.f32 %v3118, %v3388
      %v3515 = vadd.f32 %v3119, %v3391
      %v3516 = vadd.f32 %v3120, %v3394
      %v3517 = vadd.f32 %v3121, %v3397
      %v3518 = vadd.f32 %v3122, %v3400
      %v3519 = vadd.f32 %v3123, %v3403
      %v3520 = vadd.f32 %v3124, %v3406
      %v3521 = vadd.f32 %v3125, %v3409
      %v3522 = vadd.f32 %v3126, %v3412
      %v3523 = vadd.f32 %v3127, %v3415
      %v3524 = vadd.f32 %v3128, %v3418
      %v3525 = vadd.f32 %v3129, %v3421
      %v3526 = vadd.f32 %v3130, %v3424
      %v3527 = vadd.f32 %v3131, %v3427
      %v3528 = vadd.f32 %v3132, %v3430
      %v3529 = vadd.f32 %v3133, %v3433
      %v3530 = vadd.f32 %v3134, %v3436
      %v3531 = vadd.f32 %v3135, %v3439
      %v3532 = vadd.f32 %v3136, %v3442
      %v3533 = vadd.f32 %v3137, %v3445
      %v3534 = vadd.f32 %v3138, %v3448
      %v3535 = vadd.f32 %v3139, %v3451
      %v3536 = vadd.f32 %v3140, %v3454
      %v3537 = vadd.f32 %v3141, %v3457
      %v3538 = vadd.f32 %v3142, %v3460
      %v3539 = vadd.f32 %v3143, %v3463
      %v3540 = vadd.f32 %v3144, %v3466
      %v3541 = vadd.f32 %v3145, %v3469
      %v3542 = vadd.f32 %v3146, %v3472
      %v3543 = vadd.f32 %v3147, %v3475
      %v3544 = vadd.f32 %v3148, %v3478
      %v3545 = vadd.f32 %v3149, %v3481
      %v3546 = vadd.f32 %v3150, %v3484
      %v3547 = vadd.f32 %v3151, %v3487
      %v3548 = vadd.f32 %v3152, %v3490
      %v3549 = vadd.f32 %v3153, %v3493
      %v3550 = vadd.f32 %v3154, %v3496
      %v3551 = vadd.f32 %v3155, %v3499
      %v3552 = vadd.f32 %v3156, %v3502
      %v3553 = vadd.f32 %v3157, %v3505
      %v3554 = vld [vmem:[%s4] sm:$0x1]
      %v3556 = vperm.slane %v3554, 0
      %v3558 = vadd.f32 %v3507, %v3556
      %v3559 = vadd.f32 %v3508, %v3556
      %v3560 = vadd.f32 %v3509, %v3556
      %v3561 = vadd.f32 %v3510, %v3556
      %v3562 = vadd.f32 %v3511, %v3556
      %v3563 = vadd.f32 %v3512, %v3556
      %v3564 = vadd.f32 %v3513, %v3556
      %v3565 = vadd.f32 %v3514, %v3556
      %v3566 = vadd.f32 %v3515, %v3556
      %v3567 = vadd.f32 %v3516, %v3556
      %v3568 = vadd.f32 %v3517, %v3556
      %v3569 = vadd.f32 %v3518, %v3556
      %v3570 = vadd.f32 %v3519, %v3556
      %v3571 = vadd.f32 %v3520, %v3556
      %v3572 = vadd.f32 %v3521, %v3556
      %v3573 = vadd.f32 %v3522, %v3556
      %v3574 = vadd.f32 %v3523, %v3556
      %v3575 = vadd.f32 %v3524, %v3556
      %v3576 = vadd.f32 %v3525, %v3556
      %v3577 = vadd.f32 %v3526, %v3556
      %v3578 = vadd.f32 %v3527, %v3556
      %v3579 = vadd.f32 %v3528, %v3556
      %v3580 = vadd.f32 %v3529, %v3556
      %v3581 = vadd.f32 %v3530, %v3556
      %v3582 = vadd.f32 %v3531, %v3556
      %v3583 = vadd.f32 %v3532, %v3556
      %v3584 = vadd.f32 %v3533, %v3556
      %v3585 = vadd.f32 %v3534, %v3556
      %v3586 = vadd.f32 %v3535, %v3556
      %v3587 = vadd.f32 %v3536, %v3556
      %v3588 = vadd.f32 %v3537, %v3556
      %v3589 = vadd.f32 %v3538, %v3556
      %v3590 = vadd.f32 %v3539, %v3556
      %v3591 = vadd.f32 %v3540, %v3556
      %v3592 = vadd.f32 %v3541, %v3556
      %v3593 = vadd.f32 %v3542, %v3556
      %v3594 = vadd.f32 %v3543, %v3556
      %v3595 = vadd.f32 %v3544, %v3556
      %v3596 = vadd.f32 %v3545, %v3556
      %v3597 = vadd.f32 %v3546, %v3556
      %v3598 = vadd.f32 %v3547, %v3556
      %v3599 = vadd.f32 %v3548, %v3556
      %v3600 = vadd.f32 %v3549, %v3556
      %v3601 = vadd.f32 %v3550, %v3556
      %v3602 = vadd.f32 %v3551, %v3556
      %v3603 = vadd.f32 %v3552, %v3556
      %v3604 = vadd.f32 %v3553, %v3556
      %v3605 = vmax.f32 %v3558, 0.0
      %v3606 = vmax.f32 %v3559, 0.0
      %v3607 = vmax.f32 %v3560, 0.0
      %v3608 = vmax.f32 %v3561, 0.0
      %v3609 = vmax.f32 %v3562, 0.0
      %v3610 = vmax.f32 %v3563, 0.0
      %v3611 = vmax.f32 %v3564, 0.0
      %v3612 = vmax.f32 %v3565, 0.0
      %v3613 = vmax.f32 %v3566, 0.0
      %v3614 = vmax.f32 %v3567, 0.0
      %v3615 = vmax.f32 %v3568, 0.0
      %v3616 = vmax.f32 %v3569, 0.0
      %v3617 = vmax.f32 %v3570, 0.0
      %v3618 = vmax.f32 %v3571, 0.0
      %v3619 = vmax.f32 %v3572, 0.0
      %v3620 = vmax.f32 %v3573, 0.0
      %v3621 = vmax.f32 %v3574, 0.0
      %v3622 = vmax.f32 %v3575, 0.0
      %v3623 = vmax.f32 %v3576, 0.0
      %v3624 = vmax.f32 %v3577, 0.0
      %v3625 = vmax.f32 %v3578, 0.0
      %v3626 = vmax.f32 %v3579, 0.0
      %v3627 = vmax.f32 %v3580, 0.0
      %v3628 = vmax.f32 %v3581, 0.0
      %v3629 = vmax.f32 %v3582, 0.0
      %v3630 = vmax.f32 %v3583, 0.0
      %v3631 = vmax.f32 %v3584, 0.0
      %v3632 = vmax.f32 %v3585, 0.0
      %v3633 = vmax.f32 %v3586, 0.0
      %v3634 = vmax.f32 %v3587, 0.0
      %v3635 = vmax.f32 %v3588, 0.0
      %v3636 = vmax.f32 %v3589, 0.0
      %v3637 = vmax.f32 %v3590, 0.0
      %v3638 = vmax.f32 %v3591, 0.0
      %v3639 = vmax.f32 %v3592, 0.0
      %v3640 = vmax.f32 %v3593, 0.0
      %v3641 = vmax.f32 %v3594, 0.0
      %v3642 = vmax.f32 %v3595, 0.0
      %v3643 = vmax.f32 %v3596, 0.0
      %v3644 = vmax.f32 %v3597, 0.0
      %v3645 = vmax.f32 %v3598, 0.0
      %v3646 = vmax.f32 %v3599, 0.0
      %v3647 = vmax.f32 %v3600, 0.0
      %v3648 = vmax.f32 %v3601, 0.0
      %v3649 = vmax.f32 %v3602, 0.0
      %v3650 = vmax.f32 %v3603, 0.0
      %v3651 = vmax.f32 %v3604, 0.0
      %vm3652 = vcmask 261120
      %3653 = vst.msk [vmem:[#allocation3] sm:$0xff] %vm3652, %v3605
      %3654 = vst.msk [vmem:[#allocation3 + $0x8] sm:$0xff] %vm3652, %v3606
      %3655 = vst.msk [vmem:[#allocation3 + $0x10] sm:$0xff] %vm3652, %v3607
      %3656 = vst.msk [vmem:[#allocation3 + $0x18] sm:$0xff] %vm3652, %v3608
      %3657 = vst.msk [vmem:[#allocation3 + $0x20] sm:$0xff] %vm3652, %v3609
      %3658 = vst.msk [vmem:[#allocation3 + $0x28] sm:$0xff] %vm3652, %v3610
      %3659 = vst.msk [vmem:[#allocation3 + $0x30] sm:$0xff] %vm3652, %v3611
      %3660 = vst.msk [vmem:[#allocation3 + $0x38] sm:$0xff] %vm3652, %v3612
      %3661 = vst.msk [vmem:[#allocation3 + $0x40] sm:$0xff] %vm3652, %v3613
      %3662 = vst.msk [vmem:[#allocation3 + $0x48] sm:$0xff] %vm3652, %v3614
      %3663 = vst.msk [vmem:[#allocation3 + $0x50] sm:$0xff] %vm3652, %v3615
      %3664 = vst.msk [vmem:[#allocation3 + $0x58] sm:$0xff] %vm3652, %v3616
      %3665 = vst.msk [vmem:[#allocation3 + $0x60] sm:$0xff] %vm3652, %v3617
      %3666 = vst.msk [vmem:[#allocation3 + $0x68] sm:$0xff] %vm3652, %v3618
      %3667 = vst.msk [vmem:[#allocation3 + $0x70] sm:$0xff] %vm3652, %v3619
      %3668 = vst.msk [vmem:[#allocation3 + $0x78] sm:$0xff] %vm3652, %v3620
      %3669 = vst.msk [vmem:[#allocation3 + $0x80] sm:$0xff] %vm3652, %v3621
      %3670 = vst.msk [vmem:[#allocation3 + $0x88] sm:$0xff] %vm3652, %v3622
      %3671 = vst.msk [vmem:[#allocation3 + $0x90] sm:$0xff] %vm3652, %v3623
      %3672 = vst.msk [vmem:[#allocation3 + $0x98] sm:$0xff] %vm3652, %v3624
      %3673 = vst.msk [vmem:[#allocation3 + $0xa0] sm:$0xff] %vm3652, %v3625
      %3674 = vst.msk [vmem:[#allocation3 + $0xa8] sm:$0xff] %vm3652, %v3626
      %3675 = vst.msk [vmem:[#allocation3 + $0xb0] sm:$0xff] %vm3652, %v3627
      %3676 = vst.msk [vmem:[#allocation3 + $0xb8] sm:$0xff] %vm3652, %v3628
      %3677 = vst.msk [vmem:[#allocation3 + $0xc0] sm:$0xff] %vm3652, %v3629
      %3678 = vst.msk [vmem:[#allocation3 + $0xc8] sm:$0xff] %vm3652, %v3630
      %3679 = vst.msk [vmem:[#allocation3 + $0xd0] sm:$0xff] %vm3652, %v3631
      %3680 = vst.msk [vmem:[#allocation3 + $0xd8] sm:$0xff] %vm3652, %v3632
      %3681 = vst.msk [vmem:[#allocation3 + $0xe0] sm:$0xff] %vm3652, %v3633
      %3682 = vst.msk [vmem:[#allocation3 + $0xe8] sm:$0xff] %vm3652, %v3634
      %3683 = vst.msk [vmem:[#allocation3 + $0xf0] sm:$0xff] %vm3652, %v3635
      %3684 = vst.msk [vmem:[#allocation3 + $0xf8] sm:$0xff] %vm3652, %v3636
      %3685 = vst.msk [vmem:[#allocation3 + $0x100] sm:$0xff] %vm3652, %v3637
      %3686 = vst.msk [vmem:[#allocation3 + $0x108] sm:$0xff] %vm3652, %v3638
      %3687 = vst.msk [vmem:[#allocation3 + $0x110] sm:$0xff] %vm3652, %v3639
      %3688 = vst.msk [vmem:[#allocation3 + $0x118] sm:$0xff] %vm3652, %v3640
      %3689 = vst.msk [vmem:[#allocation3 + $0x120] sm:$0xff] %vm3652, %v3641
      %3690 = vst.msk [vmem:[#allocation3 + $0x128] sm:$0xff] %vm3652, %v3642
      %3691 = vst.msk [vmem:[#allocation3 + $0x130] sm:$0xff] %vm3652, %v3643
      %3692 = vst.msk [vmem:[#allocation3 + $0x138] sm:$0xff] %vm3652, %v3644
      %3693 = vst.msk [vmem:[#allocation3 + $0x140] sm:$0xff] %vm3652, %v3645
      %3694 = vst.msk [vmem:[#allocation3 + $0x148] sm:$0xff] %vm3652, %v3646
      %3695 = vst.msk [vmem:[#allocation3 + $0x150] sm:$0xff] %vm3652, %v3647
      %3696 = vst.msk [vmem:[#allocation3 + $0x158] sm:$0xff] %vm3652, %v3648
      %3697 = vst.msk [vmem:[#allocation3 + $0x160] sm:$0xff] %vm3652, %v3649
      %3698 = vst.msk [vmem:[#allocation3 + $0x168] sm:$0xff] %vm3652, %v3650
      %3699 = vst.msk [vmem:[#allocation3 + $0x170] sm:$0xff] %vm3652, %v3651
      %v3700 = vld [vmem:[#allocation3] sm:$0xff]
      %v3701 = vld [vmem:[#allocation3 + $0x8] sm:$0xff]
      %v3702 = vld [vmem:[#allocation3 + $0x10] sm:$0xff]
      %v3703 = vld [vmem:[#allocation3 + $0x18] sm:$0xff]
      %v3704 = vld [vmem:[#allocation3 + $0x20] sm:$0xff]
      %v3705 = vld [vmem:[#allocation3 + $0x28] sm:$0xff]
      %v3706 = vld [vmem:[#allocation3 + $0x30] sm:$0xff]
      %v3707 = vld [vmem:[#allocation3 + $0x38] sm:$0xff]
      %v3708 = vld [vmem:[#allocation3 + $0x40] sm:$0xff]
      %v3709 = vld [vmem:[#allocation3 + $0x48] sm:$0xff]
      %v3710 = vld [vmem:[#allocation3 + $0x50] sm:$0xff]
      %v3711 = vld [vmem:[#allocation3 + $0x58] sm:$0xff]
      %v3712 = vld [vmem:[#allocation3 + $0x60] sm:$0xff]
      %v3713 = vld [vmem:[#allocation3 + $0x68] sm:$0xff]
      %v3714 = vld [vmem:[#allocation3 + $0x70] sm:$0xff]
      %v3715 = vld [vmem:[#allocation3 + $0x78] sm:$0xff]
      %v3716 = vld [vmem:[#allocation3 + $0x80] sm:$0xff]
      %v3717 = vld [vmem:[#allocation3 + $0x88] sm:$0xff]
      %v3718 = vld [vmem:[#allocation3 + $0x90] sm:$0xff]
      %v3719 = vld [vmem:[#allocation3 + $0x98] sm:$0xff]
      %v3720 = vld [vmem:[#allocation3 + $0xa0] sm:$0xff]
      %v3721 = vld [vmem:[#allocation3 + $0xa8] sm:$0xff]
      %v3722 = vld [vmem:[#allocation3 + $0xb0] sm:$0xff]
      %v3723 = vld [vmem:[#allocation3 + $0xb8] sm:$0xff]
      %v3724 = vld [vmem:[#allocation3 + $0xc0] sm:$0xff]
      %v3725 = vld [vmem:[#allocation3 + $0xc8] sm:$0xff]
      %v3726 = vld [vmem:[#allocation3 + $0xd0] sm:$0xff]
      %v3727 = vld [vmem:[#allocation3 + $0xd8] sm:$0xff]
      %v3728 = vld [vmem:[#allocation3 + $0xe0] sm:$0xff]
      %v3729 = vld [vmem:[#allocation3 + $0xe8] sm:$0xff]
      %v3730 = vld [vmem:[#allocation3 + $0xf0] sm:$0xff]
      %v3731 = vld [vmem:[#allocation3 + $0xf8] sm:$0xff]
      %v3732 = vld [vmem:[#allocation3 + $0x100] sm:$0xff]
      %v3733 = vld [vmem:[#allocation3 + $0x108] sm:$0xff]
      %v3734 = vld [vmem:[#allocation3 + $0x110] sm:$0xff]
      %v3735 = vld [vmem:[#allocation3 + $0x118] sm:$0xff]
      %v3736 = vld [vmem:[#allocation3 + $0x120] sm:$0xff]
      %v3737 = vld [vmem:[#allocation3 + $0x128] sm:$0xff]
      %v3738 = vld [vmem:[#allocation3 + $0x130] sm:$0xff]
      %v3739 = vld [vmem:[#allocation3 + $0x138] sm:$0xff]
      %v3740 = vld [vmem:[#allocation3 + $0x140] sm:$0xff]
      %v3741 = vld [vmem:[#allocation3 + $0x148] sm:$0xff]
      %v3742 = vld [vmem:[#allocation3 + $0x150] sm:$0xff]
      %v3743 = vld [vmem:[#allocation3 + $0x158] sm:$0xff]
      %v3744 = vld [vmem:[#allocation3 + $0x160] sm:$0xff]
      %v3745 = vld [vmem:[#allocation3 + $0x168] sm:$0xff]
      %v3746 = vld [vmem:[%s5] sm:$0xff]
      %v3747 = vld [vmem:[%s5 + $0x8] sm:$0xff]
      %v3748 = vld [vmem:[%s5 + $0x10] sm:$0xff]
      %v3749 = vld [vmem:[%s5 + $0x18] sm:$0xff]
      %v3750 = vld [vmem:[#allocation3 + $0x1] sm:$0xff]
      %v3751 = vld [vmem:[#allocation3 + $0x9] sm:$0xff]
      %v3752 = vld [vmem:[#allocation3 + $0x11] sm:$0xff]
      %v3753 = vld [vmem:[#allocation3 + $0x19] sm:$0xff]
      %v3754 = vld [vmem:[#allocation3 + $0x21] sm:$0xff]
      %v3755 = vld [vmem:[#allocation3 + $0x29] sm:$0xff]
      %v3756 = vld [vmem:[#allocation3 + $0x31] sm:$0xff]
      %v3757 = vld [vmem:[#allocation3 + $0x39] sm:$0xff]
      %v3758 = vld [vmem:[#allocation3 + $0x41] sm:$0xff]
      %v3759 = vld [vmem:[#allocation3 + $0x49] sm:$0xff]
      %v3760 = vld [vmem:[#allocation3 + $0x51] sm:$0xff]
      %v3761 = vld [vmem:[#allocation3 + $0x59] sm:$0xff]
      %v3762 = vld [vmem:[#allocation3 + $0x61] sm:$0xff]
      %v3763 = vld [vmem:[#allocation3 + $0x69] sm:$0xff]
      %v3764 = vld [vmem:[#allocation3 + $0x71] sm:$0xff]
      %v3765 = vld [vmem:[#allocation3 + $0x79] sm:$0xff]
      %v3766 = vld [vmem:[#allocation3 + $0x81] sm:$0xff]
      %v3767 = vld [vmem:[#allocation3 + $0x89] sm:$0xff]
      %v3768 = vld [vmem:[#allocation3 + $0x91] sm:$0xff]
      %v3769 = vld [vmem:[#allocation3 + $0x99] sm:$0xff]
      %v3770 = vld [vmem:[#allocation3 + $0xa1] sm:$0xff]
      %v3771 = vld [vmem:[#allocation3 + $0xa9] sm:$0xff]
      %v3772 = vld [vmem:[#allocation3 + $0xb1] sm:$0xff]
      %v3773 = vld [vmem:[#allocation3 + $0xb9] sm:$0xff]
      %v3774 = vld [vmem:[#allocation3 + $0xc1] sm:$0xff]
      %v3775 = vld [vmem:[#allocation3 + $0xc9] sm:$0xff]
      %v3776 = vld [vmem:[#allocation3 + $0xd1] sm:$0xff]
      %v3777 = vld [vmem:[#allocation3 + $0xd9] sm:$0xff]
      %v3778 = vld [vmem:[#allocation3 + $0xe1] sm:$0xff]
      %v3779 = vld [vmem:[#allocation3 + $0xe9] sm:$0xff]
      %v3780 = vld [vmem:[#allocation3 + $0xf1] sm:$0xff]
      %v3781 = vld [vmem:[#allocation3 + $0xf9] sm:$0xff]
      %v3782 = vld [vmem:[#allocation3 + $0x101] sm:$0xff]
      %v3783 = vld [vmem:[#allocation3 + $0x109] sm:$0xff]
      %v3784 = vld [vmem:[#allocation3 + $0x111] sm:$0xff]
      %v3785 = vld [vmem:[#allocation3 + $0x119] sm:$0xff]
      %v3786 = vld [vmem:[#allocation3 + $0x121] sm:$0xff]
      %v3787 = vld [vmem:[#allocation3 + $0x129] sm:$0xff]
      %v3788 = vld [vmem:[#allocation3 + $0x131] sm:$0xff]
      %v3789 = vld [vmem:[#allocation3 + $0x139] sm:$0xff]
      %v3790 = vld [vmem:[#allocation3 + $0x141] sm:$0xff]
      %v3791 = vld [vmem:[#allocation3 + $0x149] sm:$0xff]
      %v3792 = vld [vmem:[#allocation3 + $0x151] sm:$0xff]
      %v3793 = vld [vmem:[#allocation3 + $0x159] sm:$0xff]
      %v3794 = vld [vmem:[#allocation3 + $0x161] sm:$0xff]
      %v3795 = vld [vmem:[#allocation3 + $0x169] sm:$0xff]
      %s3796 = scalar_lea.vmem %s5, 32
      %v3797 = vld [vmem:[%s3796] sm:$0xff]
      %v3798 = vld [vmem:[%s3796 + $0x8] sm:$0xff]
      %v3799 = vld [vmem:[%s3796 + $0x10] sm:$0xff]
      %v3800 = vld [vmem:[%s3796 + $0x18] sm:$0xff]
      %v3802 = vsel %vm3652, %v3750, 0
      %v3805 = vsel %vm3652, %v3751, 0
      %v3808 = vsel %vm3652, %v3752, 0
      %v3811 = vsel %vm3652, %v3753, 0
      %v3814 = vsel %vm3652, %v3754, 0
      %v3817 = vsel %vm3652, %v3755, 0
      %v3820 = vsel %vm3652, %v3756, 0
      %v3823 = vsel %vm3652, %v3757, 0
      %v3826 = vsel %vm3652, %v3758, 0
      %v3829 = vsel %vm3652, %v3759, 0
      %v3832 = vsel %vm3652, %v3760, 0
      %v3835 = vsel %vm3652, %v3761, 0
      %v3838 = vsel %vm3652, %v3762, 0
      %v3841 = vsel %vm3652, %v3763, 0
      %v3844 = vsel %vm3652, %v3764, 0
      %v3847 = vsel %vm3652, %v3765, 0
      %v3850 = vsel %vm3652, %v3766, 0
      %v3853 = vsel %vm3652, %v3767, 0
      %v3856 = vsel %vm3652, %v3768, 0
      %v3859 = vsel %vm3652, %v3769, 0
      %v3862 = vsel %vm3652, %v3770, 0
      %v3865 = vsel %vm3652, %v3771, 0
      %v3868 = vsel %vm3652, %v3772, 0
      %v3871 = vsel %vm3652, %v3773, 0
      %v3874 = vsel %vm3652, %v3774, 0
      %v3877 = vsel %vm3652, %v3775, 0
      %v3880 = vsel %vm3652, %v3776, 0
      %v3883 = vsel %vm3652, %v3777, 0
      %v3886 = vsel %vm3652, %v3778, 0
      %v3889 = vsel %vm3652, %v3779, 0
      %v3892 = vsel %vm3652, %v3780, 0
      %v3895 = vsel %vm3652, %v3781, 0
      %v3898 = vsel %vm3652, %v3782, 0
      %v3901 = vsel %vm3652, %v3783, 0
      %v3904 = vsel %vm3652, %v3784, 0
      %v3907 = vsel %vm3652, %v3785, 0
      %v3910 = vsel %vm3652, %v3786, 0
      %v3913 = vsel %vm3652, %v3787, 0
      %v3916 = vsel %vm3652, %v3788, 0
      %v3919 = vsel %vm3652, %v3789, 0
      %v3922 = vsel %vm3652, %v3790, 0
      %v3925 = vsel %vm3652, %v3791, 0
      %v3928 = vsel %vm3652, %v3792, 0
      %v3931 = vsel %vm3652, %v3793, 0
      %v3934 = vsel %vm3652, %v3794, 0
      %v3937 = vsel %vm3652, %v3795, 0
      %3939 = vmatpush.msra.mxu0 0.0
      %3940 = vmatpush.msra.mxu0 0.0
      %3941 = vmatpush.msra.mxu0 0.0
      %3942 = vmatpush.msra.mxu0 0.0
      %3943 = vmatpush.msra.mxu0 0.0
      %3944 = vmatpush.msra.mxu0 0.0
      %3945 = vmatpush.msra.mxu0 0.0
      %3946 = vmatpush.msra.mxu0 0.0
      %3947 = vmatpush.msra.mxu0 0.0
      %3948 = vmatpush.msra.mxu0 0.0
      %3949 = vmatpush.msra.mxu0 0.0
      %3950 = vmatpush.msra.mxu0 0.0
      %3951 = vmatpush.msra.mxu0 %v3800
      %3952 = vmatpush.msra.mxu0 %v3799
      %3953 = vmatpush.msra.mxu0 %v3798
      %3954 = vmatpush.msra.mxu0 %v3797
      %3955 = vmatmul.f32.gmra.mxu0 %v3802
      %v3956 = vpop.f32.mrf.mxu0
      %v3957 = vadd.f32 0.0, %v3956
      %3958 = vmatmul.f32.gmra.mxu0 %v3805
      %v3959 = vpop.f32.mrf.mxu0
      %v3960 = vadd.f32 0.0, %v3959
      %3961 = vmatmul.f32.gmra.mxu0 %v3808
      %v3962 = vpop.f32.mrf.mxu0
      %v3963 = vadd.f32 0.0, %v3962
      %3964 = vmatmul.f32.gmra.mxu0 %v3811
      %v3965 = vpop.f32.mrf.mxu0
      %v3966 = vadd.f32 0.0, %v3965
      %3967 = vmatmul.f32.gmra.mxu0 %v3814
      %v3968 = vpop.f32.mrf.mxu0
      %v3969 = vadd.f32 0.0, %v3968
      %3970 = vmatmul.f32.gmra.mxu0 %v3817
      %v3971 = vpop.f32.mrf.mxu0
      %v3972 = vadd.f32 0.0, %v3971
      %3973 = vmatmul.f32.gmra.mxu0 %v3820
      %v3974 = vpop.f32.mrf.mxu0
      %v3975 = vadd.f32 0.0, %v3974
      %3976 = vmatmul.f32.gmra.mxu0 %v3823
      %v3977 = vpop.f32.mrf.mxu0
      %v3978 = vadd.f32 0.0, %v3977
      %3979 = vmatmul.f32.gmra.mxu0 %v3826
      %v3980 = vpop.f32.mrf.mxu0
      %v3981 = vadd.f32 0.0, %v3980
      %3982 = vmatmul.f32.gmra.mxu0 %v3829
      %v3983 = vpop.f32.mrf.mxu0
      %v3984 = vadd.f32 0.0, %v3983
      %3985 = vmatmul.f32.gmra.mxu0 %v3832
      %v3986 = vpop.f32.mrf.mxu0
      %v3987 = vadd.f32 0.0, %v3986
      %3988 = vmatmul.f32.gmra.mxu0 %v3835
      %v3989 = vpop.f32.mrf.mxu0
      %v3990 = vadd.f32 0.0, %v3989
      %3991 = vmatmul.f32.gmra.mxu0 %v3838
      %v3992 = vpop.f32.mrf.mxu0
      %v3993 = vadd.f32 0.0, %v3992
      %3994 = vmatmul.f32.gmra.mxu0 %v3841
      %v3995 = vpop.f32.mrf.mxu0
      %v3996 = vadd.f32 0.0, %v3995
      %3997 = vmatmul.f32.gmra.mxu0 %v3844
      %v3998 = vpop.f32.mrf.mxu0
      %v3999 = vadd.f32 0.0, %v3998
      %4000 = vmatmul.f32.gmra.mxu0 %v3847
      %v4001 = vpop.f32.mrf.mxu0
      %v4002 = vadd.f32 0.0, %v4001
      %4003 = vmatmul.f32.gmra.mxu0 %v3850
      %v4004 = vpop.f32.mrf.mxu0
      %v4005 = vadd.f32 0.0, %v4004
      %4006 = vmatmul.f32.gmra.mxu0 %v3853
      %v4007 = vpop.f32.mrf.mxu0
      %v4008 = vadd.f32 0.0, %v4007
      %4009 = vmatmul.f32.gmra.mxu0 %v3856
      %v4010 = vpop.f32.mrf.mxu0
      %v4011 = vadd.f32 0.0, %v4010
      %4012 = vmatmul.f32.gmra.mxu0 %v3859
      %v4013 = vpop.f32.mrf.mxu0
      %v4014 = vadd.f32 0.0, %v4013
      %4015 = vmatmul.f32.gmra.mxu0 %v3862
      %v4016 = vpop.f32.mrf.mxu0
      %v4017 = vadd.f32 0.0, %v4016
      %4018 = vmatmul.f32.gmra.mxu0 %v3865
      %v4019 = vpop.f32.mrf.mxu0
      %v4020 = vadd.f32 0.0, %v4019
      %4021 = vmatmul.f32.gmra.mxu0 %v3868
      %v4022 = vpop.f32.mrf.mxu0
      %v4023 = vadd.f32 0.0, %v4022
      %4024 = vmatmul.f32.gmra.mxu0 %v3871
      %v4025 = vpop.f32.mrf.mxu0
      %v4026 = vadd.f32 0.0, %v4025
      %4027 = vmatmul.f32.gmra.mxu0 %v3874
      %v4028 = vpop.f32.mrf.mxu0
      %v4029 = vadd.f32 0.0, %v4028
      %4030 = vmatmul.f32.gmra.mxu0 %v3877
      %v4031 = vpop.f32.mrf.mxu0
      %v4032 = vadd.f32 0.0, %v4031
      %4033 = vmatmul.f32.gmra.mxu0 %v3880
      %v4034 = vpop.f32.mrf.mxu0
      %v4035 = vadd.f32 0.0, %v4034
      %4036 = vmatmul.f32.gmra.mxu0 %v3883
      %v4037 = vpop.f32.mrf.mxu0
      %v4038 = vadd.f32 0.0, %v4037
      %4039 = vmatmul.f32.gmra.mxu0 %v3886
      %v4040 = vpop.f32.mrf.mxu0
      %v4041 = vadd.f32 0.0, %v4040
      %4042 = vmatmul.f32.gmra.mxu0 %v3889
      %v4043 = vpop.f32.mrf.mxu0
      %v4044 = vadd.f32 0.0, %v4043
      %4045 = vmatmul.f32.gmra.mxu0 %v3892
      %v4046 = vpop.f32.mrf.mxu0
      %v4047 = vadd.f32 0.0, %v4046
      %4048 = vmatmul.f32.gmra.mxu0 %v3895
      %v4049 = vpop.f32.mrf.mxu0
      %v4050 = vadd.f32 0.0, %v4049
      %4051 = vmatmul.f32.gmra.mxu0 %v3898
      %v4052 = vpop.f32.mrf.mxu0
      %v4053 = vadd.f32 0.0, %v4052
      %4054 = vmatmul.f32.gmra.mxu0 %v3901
      %v4055 = vpop.f32.mrf.mxu0
      %v4056 = vadd.f32 0.0, %v4055
      %4057 = vmatmul.f32.gmra.mxu0 %v3904
      %v4058 = vpop.f32.mrf.mxu0
      %v4059 = vadd.f32 0.0, %v4058
      %4060 = vmatmul.f32.gmra.mxu0 %v3907
      %v4061 = vpop.f32.mrf.mxu0
      %v4062 = vadd.f32 0.0, %v4061
      %4063 = vmatmul.f32.gmra.mxu0 %v3910
      %v4064 = vpop.f32.mrf.mxu0
      %v4065 = vadd.f32 0.0, %v4064
      %4066 = vmatmul.f32.gmra.mxu0 %v3913
      %v4067 = vpop.f32.mrf.mxu0
      %v4068 = vadd.f32 0.0, %v4067
      %4069 = vmatmul.f32.gmra.mxu0 %v3916
      %v4070 = vpop.f32.mrf.mxu0
      %v4071 = vadd.f32 0.0, %v4070
      %4072 = vmatmul.f32.gmra.mxu0 %v3919
      %v4073 = vpop.f32.mrf.mxu0
      %v4074 = vadd.f32 0.0, %v4073
      %4075 = vmatmul.f32.gmra.mxu0 %v3922
      %v4076 = vpop.f32.mrf.mxu0
      %v4077 = vadd.f32 0.0, %v4076
      %4078 = vmatmul.f32.gmra.mxu0 %v3925
      %v4079 = vpop.f32.mrf.mxu0
      %v4080 = vadd.f32 0.0, %v4079
      %4081 = vmatmul.f32.gmra.mxu0 %v3928
      %v4082 = vpop.f32.mrf.mxu0
      %v4083 = vadd.f32 0.0, %v4082
      %4084 = vmatmul.f32.gmra.mxu0 %v3931
      %v4085 = vpop.f32.mrf.mxu0
      %v4086 = vadd.f32 0.0, %v4085
      %4087 = vmatmul.f32.gmra.mxu0 %v3934
      %v4088 = vpop.f32.mrf.mxu0
      %v4089 = vadd.f32 0.0, %v4088
      %4090 = vmatmul.f32.gmra.mxu0 %v3937
      %v4091 = vpop.f32.mrf.mxu0
      %v4092 = vadd.f32 0.0, %v4091
      %4093 = vdwg.mxu0
      %v4095 = vsel %vm3652, %v3700, 0
      %v4098 = vsel %vm3652, %v3701, 0
      %v4101 = vsel %vm3652, %v3702, 0
      %v4104 = vsel %vm3652, %v3703, 0
      %v4107 = vsel %vm3652, %v3704, 0
      %v4110 = vsel %vm3652, %v3705, 0
      %v4113 = vsel %vm3652, %v3706, 0
      %v4116 = vsel %vm3652, %v3707, 0
      %v4119 = vsel %vm3652, %v3708, 0
      %v4122 = vsel %vm3652, %v3709, 0
      %v4125 = vsel %vm3652, %v3710, 0
      %v4128 = vsel %vm3652, %v3711, 0
      %v4131 = vsel %vm3652, %v3712, 0
      %v4134 = vsel %vm3652, %v3713, 0
      %v4137 = vsel %vm3652, %v3714, 0
      %v4140 = vsel %vm3652, %v3715, 0
      %v4143 = vsel %vm3652, %v3716, 0
      %v4146 = vsel %vm3652, %v3717, 0
      %v4149 = vsel %vm3652, %v3718, 0
      %v4152 = vsel %vm3652, %v3719, 0
      %v4155 = vsel %vm3652, %v3720, 0
      %v4158 = vsel %vm3652, %v3721, 0
      %v4161 = vsel %vm3652, %v3722, 0
      %v4164 = vsel %vm3652, %v3723, 0
      %v4167 = vsel %vm3652, %v3724, 0
      %v4170 = vsel %vm3652, %v3725, 0
      %v4173 = vsel %vm3652, %v3726, 0
      %v4176 = vsel %vm3652, %v3727, 0
      %v4179 = vsel %vm3652, %v3728, 0
      %v4182 = vsel %vm3652, %v3729, 0
      %v4185 = vsel %vm3652, %v3730, 0
      %v4188 = vsel %vm3652, %v3731, 0
      %v4191 = vsel %vm3652, %v3732, 0
      %v4194 = vsel %vm3652, %v3733, 0
      %v4197 = vsel %vm3652, %v3734, 0
      %v4200 = vsel %vm3652, %v3735, 0
      %v4203 = vsel %vm3652, %v3736, 0
      %v4206 = vsel %vm3652, %v3737, 0
      %v4209 = vsel %vm3652, %v3738, 0
      %v4212 = vsel %vm3652, %v3739, 0
      %v4215 = vsel %vm3652, %v3740, 0
      %v4218 = vsel %vm3652, %v3741, 0
      %v4221 = vsel %vm3652, %v3742, 0
      %v4224 = vsel %vm3652, %v3743, 0
      %v4227 = vsel %vm3652, %v3744, 0
      %v4230 = vsel %vm3652, %v3745, 0
      %4232 = vmatpush.msra.mxu0 0.0
      %4233 = vmatpush.msra.mxu0 0.0
      %4234 = vmatpush.msra.mxu0 0.0
      %4235 = vmatpush.msra.mxu0 0.0
      %4236 = vmatpush.msra.mxu0 0.0
      %4237 = vmatpush.msra.mxu0 0.0
      %4238 = vmatpush.msra.mxu0 0.0
      %4239 = vmatpush.msra.mxu0 0.0
      %4240 = vmatpush.msra.mxu0 0.0
      %4241 = vmatpush.msra.mxu0 0.0
      %4242 = vmatpush.msra.mxu0 0.0
      %4243 = vmatpush.msra.mxu0 0.0
      %4244 = vmatpush.msra.mxu0 %v3749
      %4245 = vmatpush.msra.mxu0 %v3748
      %4246 = vmatpush.msra.mxu0 %v3747
      %4247 = vmatpush.msra.mxu0 %v3746
      %4248 = vmatmul.f32.gmra.mxu0 %v4095
      %v4249 = vpop.f32.mrf.mxu0
      %v4250 = vadd.f32 %v3957, %v4249
      %4251 = vmatmul.f32.gmra.mxu0 %v4098
      %v4252 = vpop.f32.mrf.mxu0
      %v4253 = vadd.f32 %v3960, %v4252
      %4254 = vmatmul.f32.gmra.mxu0 %v4101
      %v4255 = vpop.f32.mrf.mxu0
      %v4256 = vadd.f32 %v3963, %v4255
      %4257 = vmatmul.f32.gmra.mxu0 %v4104
      %v4258 = vpop.f32.mrf.mxu0
      %v4259 = vadd.f32 %v3966, %v4258
      %4260 = vmatmul.f32.gmra.mxu0 %v4107
      %v4261 = vpop.f32.mrf.mxu0
      %v4262 = vadd.f32 %v3969, %v4261
      %4263 = vmatmul.f32.gmra.mxu0 %v4110
      %v4264 = vpop.f32.mrf.mxu0
      %v4265 = vadd.f32 %v3972, %v4264
      %4266 = vmatmul.f32.gmra.mxu0 %v4113
      %v4267 = vpop.f32.mrf.mxu0
      %v4268 = vadd.f32 %v3975, %v4267
      %4269 = vmatmul.f32.gmra.mxu0 %v4116
      %v4270 = vpop.f32.mrf.mxu0
      %v4271 = vadd.f32 %v3978, %v4270
      %4272 = vmatmul.f32.gmra.mxu0 %v4119
      %v4273 = vpop.f32.mrf.mxu0
      %v4274 = vadd.f32 %v3981, %v4273
      %4275 = vmatmul.f32.gmra.mxu0 %v4122
      %v4276 = vpop.f32.mrf.mxu0
      %v4277 = vadd.f32 %v3984, %v4276
      %4278 = vmatmul.f32.gmra.mxu0 %v4125
      %v4279 = vpop.f32.mrf.mxu0
      %v4280 = vadd.f32 %v3987, %v4279
      %4281 = vmatmul.f32.gmra.mxu0 %v4128
      %v4282 = vpop.f32.mrf.mxu0
      %v4283 = vadd.f32 %v3990, %v4282
      %4284 = vmatmul.f32.gmra.mxu0 %v4131
      %v4285 = vpop.f32.mrf.mxu0
      %v4286 = vadd.f32 %v3993, %v4285
      %4287 = vmatmul.f32.gmra.mxu0 %v4134
      %v4288 = vpop.f32.mrf.mxu0
      %v4289 = vadd.f32 %v3996, %v4288
      %4290 = vmatmul.f32.gmra.mxu0 %v4137
      %v4291 = vpop.f32.mrf.mxu0
      %v4292 = vadd.f32 %v3999, %v4291
      %4293 = vmatmul.f32.gmra.mxu0 %v4140
      %v4294 = vpop.f32.mrf.mxu0
      %v4295 = vadd.f32 %v4002, %v4294
      %4296 = vmatmul.f32.gmra.mxu0 %v4143
      %v4297 = vpop.f32.mrf.mxu0
      %v4298 = vadd.f32 %v4005, %v4297
      %4299 = vmatmul.f32.gmra.mxu0 %v4146
      %v4300 = vpop.f32.mrf.mxu0
      %v4301 = vadd.f32 %v4008, %v4300
      %4302 = vmatmul.f32.gmra.mxu0 %v4149
      %v4303 = vpop.f32.mrf.mxu0
      %v4304 = vadd.f32 %v4011, %v4303
      %4305 = vmatmul.f32.gmra.mxu0 %v4152
      %v4306 = vpop.f32.mrf.mxu0
      %v4307 = vadd.f32 %v4014, %v4306
      %4308 = vmatmul.f32.gmra.mxu0 %v4155
      %v4309 = vpop.f32.mrf.mxu0
      %v4310 = vadd.f32 %v4017, %v4309
      %4311 = vmatmul.f32.gmra.mxu0 %v4158
      %v4312 = vpop.f32.mrf.mxu0
      %v4313 = vadd.f32 %v4020, %v4312
      %4314 = vmatmul.f32.gmra.mxu0 %v4161
      %v4315 = vpop.f32.mrf.mxu0
      %v4316 = vadd.f32 %v4023, %v4315
      %4317 = vmatmul.f32.gmra.mxu0 %v4164
      %v4318 = vpop.f32.mrf.mxu0
      %v4319 = vadd.f32 %v4026, %v4318
      %4320 = vmatmul.f32.gmra.mxu0 %v4167
      %v4321 = vpop.f32.mrf.mxu0
      %v4322 = vadd.f32 %v4029, %v4321
      %4323 = vmatmul.f32.gmra.mxu0 %v4170
      %v4324 = vpop.f32.mrf.mxu0
      %v4325 = vadd.f32 %v4032, %v4324
      %4326 = vmatmul.f32.gmra.mxu0 %v4173
      %v4327 = vpop.f32.mrf.mxu0
      %v4328 = vadd.f32 %v4035, %v4327
      %4329 = vmatmul.f32.gmra.mxu0 %v4176
      %v4330 = vpop.f32.mrf.mxu0
      %v4331 = vadd.f32 %v4038, %v4330
      %4332 = vmatmul.f32.gmra.mxu0 %v4179
      %v4333 = vpop.f32.mrf.mxu0
      %v4334 = vadd.f32 %v4041, %v4333
      %4335 = vmatmul.f32.gmra.mxu0 %v4182
      %v4336 = vpop.f32.mrf.mxu0
      %v4337 = vadd.f32 %v4044, %v4336
      %4338 = vmatmul.f32.gmra.mxu0 %v4185
      %v4339 = vpop.f32.mrf.mxu0
      %v4340 = vadd.f32 %v4047, %v4339
      %4341 = vmatmul.f32.gmra.mxu0 %v4188
      %v4342 = vpop.f32.mrf.mxu0
      %v4343 = vadd.f32 %v4050, %v4342
      %4344 = vmatmul.f32.gmra.mxu0 %v4191
      %v4345 = vpop.f32.mrf.mxu0
      %v4346 = vadd.f32 %v4053, %v4345
      %4347 = vmatmul.f32.gmra.mxu0 %v4194
      %v4348 = vpop.f32.mrf.mxu0
      %v4349 = vadd.f32 %v4056, %v4348
      %4350 = vmatmul.f32.gmra.mxu0 %v4197
      %v4351 = vpop.f32.mrf.mxu0
      %v4352 = vadd.f32 %v4059, %v4351
      %4353 = vmatmul.f32.gmra.mxu0 %v4200
      %v4354 = vpop.f32.mrf.mxu0
      %v4355 = vadd.f32 %v4062, %v4354
      %4356 = vmatmul.f32.gmra.mxu0 %v4203
      %v4357 = vpop.f32.mrf.mxu0
      %v4358 = vadd.f32 %v4065, %v4357
      %4359 = vmatmul.f32.gmra.mxu0 %v4206
      %v4360 = vpop.f32.mrf.mxu0
      %v4361 = vadd.f32 %v4068, %v4360
      %4362 = vmatmul.f32.gmra.mxu0 %v4209
      %v4363 = vpop.f32.mrf.mxu0
      %v4364 = vadd.f32 %v4071, %v4363
      %4365 = vmatmul.f32.gmra.mxu0 %v4212
      %v4366 = vpop.f32.mrf.mxu0
      %v4367 = vadd.f32 %v4074, %v4366
      %4368 = vmatmul.f32.gmra.mxu0 %v4215
      %v4369 = vpop.f32.mrf.mxu0
      %v4370 = vadd.f32 %v4077, %v4369
      %4371 = vmatmul.f32.gmra.mxu0 %v4218
      %v4372 = vpop.f32.mrf.mxu0
      %v4373 = vadd.f32 %v4080, %v4372
      %4374 = vmatmul.f32.gmra.mxu0 %v4221
      %v4375 = vpop.f32.mrf.mxu0
      %v4376 = vadd.f32 %v4083, %v4375
      %4377 = vmatmul.f32.gmra.mxu0 %v4224
      %v4378 = vpop.f32.mrf.mxu0
      %v4379 = vadd.f32 %v4086, %v4378
      %4380 = vmatmul.f32.gmra.mxu0 %v4227
      %v4381 = vpop.f32.mrf.mxu0
      %v4382 = vadd.f32 %v4089, %v4381
      %4383 = vmatmul.f32.gmra.mxu0 %v4230
      %v4384 = vpop.f32.mrf.mxu0
      %v4385 = vadd.f32 %v4092, %v4384
      %4386 = vdwg.mxu0
      %v4387 = vld [vmem:[#allocation3 + $0x7] sm:$0xff]
      %v4388 = vld [vmem:[#allocation3 + $0xf] sm:$0xff]
      %v4389 = vld [vmem:[#allocation3 + $0x17] sm:$0xff]
      %v4390 = vld [vmem:[#allocation3 + $0x1f] sm:$0xff]
      %v4391 = vld [vmem:[#allocation3 + $0x27] sm:$0xff]
      %v4392 = vld [vmem:[#allocation3 + $0x2f] sm:$0xff]
      %v4393 = vld [vmem:[#allocation3 + $0x37] sm:$0xff]
      %v4394 = vld [vmem:[#allocation3 + $0x3f] sm:$0xff]
      %v4395 = vld [vmem:[#allocation3 + $0x47] sm:$0xff]
      %v4396 = vld [vmem:[#allocation3 + $0x4f] sm:$0xff]
      %v4397 = vld [vmem:[#allocation3 + $0x57] sm:$0xff]
      %v4398 = vld [vmem:[#allocation3 + $0x5f] sm:$0xff]
      %v4399 = vld [vmem:[#allocation3 + $0x67] sm:$0xff]
      %v4400 = vld [vmem:[#allocation3 + $0x6f] sm:$0xff]
      %v4401 = vld [vmem:[#allocation3 + $0x77] sm:$0xff]
      %v4402 = vld [vmem:[#allocation3 + $0x7f] sm:$0xff]
      %v4403 = vld [vmem:[#allocation3 + $0x87] sm:$0xff]
      %v4404 = vld [vmem:[#allocation3 + $0x8f] sm:$0xff]
      %v4405 = vld [vmem:[#allocation3 + $0x97] sm:$0xff]
      %v4406 = vld [vmem:[#allocation3 + $0x9f] sm:$0xff]
      %v4407 = vld [vmem:[#allocation3 + $0xa7] sm:$0xff]
      %v4408 = vld [vmem:[#allocation3 + $0xaf] sm:$0xff]
      %v4409 = vld [vmem:[#allocation3 + $0xb7] sm:$0xff]
      %v4410 = vld [vmem:[#allocation3 + $0xbf] sm:$0xff]
      %v4411 = vld [vmem:[#allocation3 + $0xc7] sm:$0xff]
      %v4412 = vld [vmem:[#allocation3 + $0xcf] sm:$0xff]
      %v4413 = vld [vmem:[#allocation3 + $0xd7] sm:$0xff]
      %v4414 = vld [vmem:[#allocation3 + $0xdf] sm:$0xff]
      %v4415 = vld [vmem:[#allocation3 + $0xe7] sm:$0xff]
      %v4416 = vld [vmem:[#allocation3 + $0xef] sm:$0xff]
      %v4417 = vld [vmem:[#allocation3 + $0xf7] sm:$0xff]
      %v4418 = vld [vmem:[#allocation3 + $0xff] sm:$0xff]
      %v4419 = vld [vmem:[#allocation3 + $0x107] sm:$0xff]
      %v4420 = vld [vmem:[#allocation3 + $0x10f] sm:$0xff]
      %v4421 = vld [vmem:[#allocation3 + $0x117] sm:$0xff]
      %v4422 = vld [vmem:[#allocation3 + $0x11f] sm:$0xff]
      %v4423 = vld [vmem:[#allocation3 + $0x127] sm:$0xff]
      %v4424 = vld [vmem:[#allocation3 + $0x12f] sm:$0xff]
      %v4425 = vld [vmem:[#allocation3 + $0x137] sm:$0xff]
      %v4426 = vld [vmem:[#allocation3 + $0x13f] sm:$0xff]
      %v4427 = vld [vmem:[#allocation3 + $0x147] sm:$0xff]
      %v4428 = vld [vmem:[#allocation3 + $0x14f] sm:$0xff]
      %v4429 = vld [vmem:[#allocation3 + $0x157] sm:$0xff]
      %v4430 = vld [vmem:[#allocation3 + $0x15f] sm:$0xff]
      %v4431 = vld [vmem:[#allocation3 + $0x167] sm:$0xff]
      %v4432 = vld [vmem:[#allocation3 + $0x16f] sm:$0xff]
      %s4433 = scalar_lea.vmem %s5, 64
      %v4434 = vld [vmem:[%s4433] sm:$0xff]
      %v4435 = vld [vmem:[%s4433 + $0x8] sm:$0xff]
      %v4436 = vld [vmem:[%s4433 + $0x10] sm:$0xff]
      %v4437 = vld [vmem:[%s4433 + $0x18] sm:$0xff]
      %v4439 = vsel %vm3652, %v4387, 0
      %v4442 = vsel %vm3652, %v4388, 0
      %v4445 = vsel %vm3652, %v4389, 0
      %v4448 = vsel %vm3652, %v4390, 0
      %v4451 = vsel %vm3652, %v4391, 0
      %v4454 = vsel %vm3652, %v4392, 0
      %v4457 = vsel %vm3652, %v4393, 0
      %v4460 = vsel %vm3652, %v4394, 0
      %v4463 = vsel %vm3652, %v4395, 0
      %v4466 = vsel %vm3652, %v4396, 0
      %v4469 = vsel %vm3652, %v4397, 0
      %v4472 = vsel %vm3652, %v4398, 0
      %v4475 = vsel %vm3652, %v4399, 0
      %v4478 = vsel %vm3652, %v4400, 0
      %v4481 = vsel %vm3652, %v4401, 0
      %v4484 = vsel %vm3652, %v4402, 0
      %v4487 = vsel %vm3652, %v4403, 0
      %v4490 = vsel %vm3652, %v4404, 0
      %v4493 = vsel %vm3652, %v4405, 0
      %v4496 = vsel %vm3652, %v4406, 0
      %v4499 = vsel %vm3652, %v4407, 0
      %v4502 = vsel %vm3652, %v4408, 0
      %v4505 = vsel %vm3652, %v4409, 0
      %v4508 = vsel %vm3652, %v4410, 0
      %v4511 = vsel %vm3652, %v4411, 0
      %v4514 = vsel %vm3652, %v4412, 0
      %v4517 = vsel %vm3652, %v4413, 0
      %v4520 = vsel %vm3652, %v4414, 0
      %v4523 = vsel %vm3652, %v4415, 0
      %v4526 = vsel %vm3652, %v4416, 0
      %v4529 = vsel %vm3652, %v4417, 0
      %v4532 = vsel %vm3652, %v4418, 0
      %v4535 = vsel %vm3652, %v4419, 0
      %v4538 = vsel %vm3652, %v4420, 0
      %v4541 = vsel %vm3652, %v4421, 0
      %v4544 = vsel %vm3652, %v4422, 0
      %v4547 = vsel %vm3652, %v4423, 0
      %v4550 = vsel %vm3652, %v4424, 0
      %v4553 = vsel %vm3652, %v4425, 0
      %v4556 = vsel %vm3652, %v4426, 0
      %v4559 = vsel %vm3652, %v4427, 0
      %v4562 = vsel %vm3652, %v4428, 0
      %v4565 = vsel %vm3652, %v4429, 0
      %v4568 = vsel %vm3652, %v4430, 0
      %v4571 = vsel %vm3652, %v4431, 0
      %v4574 = vsel %vm3652, %v4432, 0
      %4576 = vmatpush.msra.mxu0 0.0
      %4577 = vmatpush.msra.mxu0 0.0
      %4578 = vmatpush.msra.mxu0 0.0
      %4579 = vmatpush.msra.mxu0 0.0
      %4580 = vmatpush.msra.mxu0 0.0
      %4581 = vmatpush.msra.mxu0 0.0
      %4582 = vmatpush.msra.mxu0 0.0
      %4583 = vmatpush.msra.mxu0 0.0
      %4584 = vmatpush.msra.mxu0 0.0
      %4585 = vmatpush.msra.mxu0 0.0
      %4586 = vmatpush.msra.mxu0 0.0
      %4587 = vmatpush.msra.mxu0 0.0
      %4588 = vmatpush.msra.mxu0 %v4437
      %4589 = vmatpush.msra.mxu0 %v4436
      %4590 = vmatpush.msra.mxu0 %v4435
      %4591 = vmatpush.msra.mxu0 %v4434
      %4592 = vmatmul.f32.gmra.mxu0 %v4439
      %v4593 = vpop.f32.mrf.mxu0
      %v4594 = vadd.f32 0.0, %v4593
      %4595 = vmatmul.f32.gmra.mxu0 %v4442
      %v4596 = vpop.f32.mrf.mxu0
      %v4597 = vadd.f32 0.0, %v4596
      %4598 = vmatmul.f32.gmra.mxu0 %v4445
      %v4599 = vpop.f32.mrf.mxu0
      %v4600 = vadd.f32 0.0, %v4599
      %4601 = vmatmul.f32.gmra.mxu0 %v4448
      %v4602 = vpop.f32.mrf.mxu0
      %v4603 = vadd.f32 0.0, %v4602
      %4604 = vmatmul.f32.gmra.mxu0 %v4451
      %v4605 = vpop.f32.mrf.mxu0
      %v4606 = vadd.f32 0.0, %v4605
      %4607 = vmatmul.f32.gmra.mxu0 %v4454
      %v4608 = vpop.f32.mrf.mxu0
      %v4609 = vadd.f32 0.0, %v4608
      %4610 = vmatmul.f32.gmra.mxu0 %v4457
      %v4611 = vpop.f32.mrf.mxu0
      %v4612 = vadd.f32 0.0, %v4611
      %4613 = vmatmul.f32.gmra.mxu0 %v4460
      %v4614 = vpop.f32.mrf.mxu0
      %v4615 = vadd.f32 0.0, %v4614
      %4616 = vmatmul.f32.gmra.mxu0 %v4463
      %v4617 = vpop.f32.mrf.mxu0
      %v4618 = vadd.f32 0.0, %v4617
      %4619 = vmatmul.f32.gmra.mxu0 %v4466
      %v4620 = vpop.f32.mrf.mxu0
      %v4621 = vadd.f32 0.0, %v4620
      %4622 = vmatmul.f32.gmra.mxu0 %v4469
      %v4623 = vpop.f32.mrf.mxu0
      %v4624 = vadd.f32 0.0, %v4623
      %4625 = vmatmul.f32.gmra.mxu0 %v4472
      %v4626 = vpop.f32.mrf.mxu0
      %v4627 = vadd.f32 0.0, %v4626
      %4628 = vmatmul.f32.gmra.mxu0 %v4475
      %v4629 = vpop.f32.mrf.mxu0
      %v4630 = vadd.f32 0.0, %v4629
      %4631 = vmatmul.f32.gmra.mxu0 %v4478
      %v4632 = vpop.f32.mrf.mxu0
      %v4633 = vadd.f32 0.0, %v4632
      %4634 = vmatmul.f32.gmra.mxu0 %v4481
      %v4635 = vpop.f32.mrf.mxu0
      %v4636 = vadd.f32 0.0, %v4635
      %4637 = vmatmul.f32.gmra.mxu0 %v4484
      %v4638 = vpop.f32.mrf.mxu0
      %v4639 = vadd.f32 0.0, %v4638
      %4640 = vmatmul.f32.gmra.mxu0 %v4487
      %v4641 = vpop.f32.mrf.mxu0
      %v4642 = vadd.f32 0.0, %v4641
      %4643 = vmatmul.f32.gmra.mxu0 %v4490
      %v4644 = vpop.f32.mrf.mxu0
      %v4645 = vadd.f32 0.0, %v4644
      %4646 = vmatmul.f32.gmra.mxu0 %v4493
      %v4647 = vpop.f32.mrf.mxu0
      %v4648 = vadd.f32 0.0, %v4647
      %4649 = vmatmul.f32.gmra.mxu0 %v4496
      %v4650 = vpop.f32.mrf.mxu0
      %v4651 = vadd.f32 0.0, %v4650
      %4652 = vmatmul.f32.gmra.mxu0 %v4499
      %v4653 = vpop.f32.mrf.mxu0
      %v4654 = vadd.f32 0.0, %v4653
      %4655 = vmatmul.f32.gmra.mxu0 %v4502
      %v4656 = vpop.f32.mrf.mxu0
      %v4657 = vadd.f32 0.0, %v4656
      %4658 = vmatmul.f32.gmra.mxu0 %v4505
      %v4659 = vpop.f32.mrf.mxu0
      %v4660 = vadd.f32 0.0, %v4659
      %4661 = vmatmul.f32.gmra.mxu0 %v4508
      %v4662 = vpop.f32.mrf.mxu0
      %v4663 = vadd.f32 0.0, %v4662
      %4664 = vmatmul.f32.gmra.mxu0 %v4511
      %v4665 = vpop.f32.mrf.mxu0
      %v4666 = vadd.f32 0.0, %v4665
      %4667 = vmatmul.f32.gmra.mxu0 %v4514
      %v4668 = vpop.f32.mrf.mxu0
      %v4669 = vadd.f32 0.0, %v4668
      %4670 = vmatmul.f32.gmra.mxu0 %v4517
      %v4671 = vpop.f32.mrf.mxu0
      %v4672 = vadd.f32 0.0, %v4671
      %4673 = vmatmul.f32.gmra.mxu0 %v4520
      %v4674 = vpop.f32.mrf.mxu0
      %v4675 = vadd.f32 0.0, %v4674
      %4676 = vmatmul.f32.gmra.mxu0 %v4523
      %v4677 = vpop.f32.mrf.mxu0
      %v4678 = vadd.f32 0.0, %v4677
      %4679 = vmatmul.f32.gmra.mxu0 %v4526
      %v4680 = vpop.f32.mrf.mxu0
      %v4681 = vadd.f32 0.0, %v4680
      %4682 = vmatmul.f32.gmra.mxu0 %v4529
      %v4683 = vpop.f32.mrf.mxu0
      %v4684 = vadd.f32 0.0, %v4683
      %4685 = vmatmul.f32.gmra.mxu0 %v4532
      %v4686 = vpop.f32.mrf.mxu0
      %v4687 = vadd.f32 0.0, %v4686
      %4688 = vmatmul.f32.gmra.mxu0 %v4535
      %v4689 = vpop.f32.mrf.mxu0
      %v4690 = vadd.f32 0.0, %v4689
      %4691 = vmatmul.f32.gmra.mxu0 %v4538
      %v4692 = vpop.f32.mrf.mxu0
      %v4693 = vadd.f32 0.0, %v4692
      %4694 = vmatmul.f32.gmra.mxu0 %v4541
      %v4695 = vpop.f32.mrf.mxu0
      %v4696 = vadd.f32 0.0, %v4695
      %4697 = vmatmul.f32.gmra.mxu0 %v4544
      %v4698 = vpop.f32.mrf.mxu0
      %v4699 = vadd.f32 0.0, %v4698
      %4700 = vmatmul.f32.gmra.mxu0 %v4547
      %v4701 = vpop.f32.mrf.mxu0
      %v4702 = vadd.f32 0.0, %v4701
      %4703 = vmatmul.f32.gmra.mxu0 %v4550
      %v4704 = vpop.f32.mrf.mxu0
      %v4705 = vadd.f32 0.0, %v4704
      %4706 = vmatmul.f32.gmra.mxu0 %v4553
      %v4707 = vpop.f32.mrf.mxu0
      %v4708 = vadd.f32 0.0, %v4707
      %4709 = vmatmul.f32.gmra.mxu0 %v4556
      %v4710 = vpop.f32.mrf.mxu0
      %v4711 = vadd.f32 0.0, %v4710
      %4712 = vmatmul.f32.gmra.mxu0 %v4559
      %v4713 = vpop.f32.mrf.mxu0
      %v4714 = vadd.f32 0.0, %v4713
      %4715 = vmatmul.f32.gmra.mxu0 %v4562
      %v4716 = vpop.f32.mrf.mxu0
      %v4717 = vadd.f32 0.0, %v4716
      %4718 = vmatmul.f32.gmra.mxu0 %v4565
      %v4719 = vpop.f32.mrf.mxu0
      %v4720 = vadd.f32 0.0, %v4719
      %4721 = vmatmul.f32.gmra.mxu0 %v4568
      %v4722 = vpop.f32.mrf.mxu0
      %v4723 = vadd.f32 0.0, %v4722
      %4724 = vmatmul.f32.gmra.mxu0 %v4571
      %v4725 = vpop.f32.mrf.mxu0
      %v4726 = vadd.f32 0.0, %v4725
      %4727 = vmatmul.f32.gmra.mxu0 %v4574
      %v4728 = vpop.f32.mrf.mxu0
      %v4729 = vadd.f32 0.0, %v4728
      %4730 = vdwg.mxu0
      %v4731 = vadd.f32 %v4250, %v4594
      %v4732 = vadd.f32 %v4253, %v4597
      %v4733 = vadd.f32 %v4256, %v4600
      %v4734 = vadd.f32 %v4259, %v4603
      %v4735 = vadd.f32 %v4262, %v4606
      %v4736 = vadd.f32 %v4265, %v4609
      %v4737 = vadd.f32 %v4268, %v4612
      %v4738 = vadd.f32 %v4271, %v4615
      %v4739 = vadd.f32 %v4274, %v4618
      %v4740 = vadd.f32 %v4277, %v4621
      %v4741 = vadd.f32 %v4280, %v4624
      %v4742 = vadd.f32 %v4283, %v4627
      %v4743 = vadd.f32 %v4286, %v4630
      %v4744 = vadd.f32 %v4289, %v4633
      %v4745 = vadd.f32 %v4292, %v4636
      %v4746 = vadd.f32 %v4295, %v4639
      %v4747 = vadd.f32 %v4298, %v4642
      %v4748 = vadd.f32 %v4301, %v4645
      %v4749 = vadd.f32 %v4304, %v4648
      %v4750 = vadd.f32 %v4307, %v4651
      %v4751 = vadd.f32 %v4310, %v4654
      %v4752 = vadd.f32 %v4313, %v4657
      %v4753 = vadd.f32 %v4316, %v4660
      %v4754 = vadd.f32 %v4319, %v4663
      %v4755 = vadd.f32 %v4322, %v4666
      %v4756 = vadd.f32 %v4325, %v4669
      %v4757 = vadd.f32 %v4328, %v4672
      %v4758 = vadd.f32 %v4331, %v4675
      %v4759 = vadd.f32 %v4334, %v4678
      %v4760 = vadd.f32 %v4337, %v4681
      %v4761 = vadd.f32 %v4340, %v4684
      %v4762 = vadd.f32 %v4343, %v4687
      %v4763 = vadd.f32 %v4346, %v4690
      %v4764 = vadd.f32 %v4349, %v4693
      %v4765 = vadd.f32 %v4352, %v4696
      %v4766 = vadd.f32 %v4355, %v4699
      %v4767 = vadd.f32 %v4358, %v4702
      %v4768 = vadd.f32 %v4361, %v4705
      %v4769 = vadd.f32 %v4364, %v4708
      %v4770 = vadd.f32 %v4367, %v4711
      %v4771 = vadd.f32 %v4370, %v4714
      %v4772 = vadd.f32 %v4373, %v4717
      %v4773 = vadd.f32 %v4376, %v4720
      %v4774 = vadd.f32 %v4379, %v4723
      %v4775 = vadd.f32 %v4382, %v4726
      %v4776 = vadd.f32 %v4385, %v4729
      %v4777 = vld [vmem:[#allocation3 + $0x8] sm:$0xff]
      %v4778 = vld [vmem:[#allocation3 + $0x10] sm:$0xff]
      %v4779 = vld [vmem:[#allocation3 + $0x18] sm:$0xff]
      %v4780 = vld [vmem:[#allocation3 + $0x20] sm:$0xff]
      %v4781 = vld [vmem:[#allocation3 + $0x28] sm:$0xff]
      %v4782 = vld [vmem:[#allocation3 + $0x30] sm:$0xff]
      %v4783 = vld [vmem:[#allocation3 + $0x38] sm:$0xff]
      %v4784 = vld [vmem:[#allocation3 + $0x40] sm:$0xff]
      %v4785 = vld [vmem:[#allocation3 + $0x48] sm:$0xff]
      %v4786 = vld [vmem:[#allocation3 + $0x50] sm:$0xff]
      %v4787 = vld [vmem:[#allocation3 + $0x58] sm:$0xff]
      %v4788 = vld [vmem:[#allocation3 + $0x60] sm:$0xff]
      %v4789 = vld [vmem:[#allocation3 + $0x68] sm:$0xff]
      %v4790 = vld [vmem:[#allocation3 + $0x70] sm:$0xff]
      %v4791 = vld [vmem:[#allocation3 + $0x78] sm:$0xff]
      %v4792 = vld [vmem:[#allocation3 + $0x80] sm:$0xff]
      %v4793 = vld [vmem:[#allocation3 + $0x88] sm:$0xff]
      %v4794 = vld [vmem:[#allocation3 + $0x90] sm:$0xff]
      %v4795 = vld [vmem:[#allocation3 + $0x98] sm:$0xff]
      %v4796 = vld [vmem:[#allocation3 + $0xa0] sm:$0xff]
      %v4797 = vld [vmem:[#allocation3 + $0xa8] sm:$0xff]
      %v4798 = vld [vmem:[#allocation3 + $0xb0] sm:$0xff]
      %v4799 = vld [vmem:[#allocation3 + $0xb8] sm:$0xff]
      %v4800 = vld [vmem:[#allocation3 + $0xc0] sm:$0xff]
      %v4801 = vld [vmem:[#allocation3 + $0xc8] sm:$0xff]
      %v4802 = vld [vmem:[#allocation3 + $0xd0] sm:$0xff]
      %v4803 = vld [vmem:[#allocation3 + $0xd8] sm:$0xff]
      %v4804 = vld [vmem:[#allocation3 + $0xe0] sm:$0xff]
      %v4805 = vld [vmem:[#allocation3 + $0xe8] sm:$0xff]
      %v4806 = vld [vmem:[#allocation3 + $0xf0] sm:$0xff]
      %v4807 = vld [vmem:[#allocation3 + $0xf8] sm:$0xff]
      %v4808 = vld [vmem:[#allocation3 + $0x100] sm:$0xff]
      %v4809 = vld [vmem:[#allocation3 + $0x108] sm:$0xff]
      %v4810 = vld [vmem:[#allocation3 + $0x110] sm:$0xff]
      %v4811 = vld [vmem:[#allocation3 + $0x118] sm:$0xff]
      %v4812 = vld [vmem:[#allocation3 + $0x120] sm:$0xff]
      %v4813 = vld [vmem:[#allocation3 + $0x128] sm:$0xff]
      %v4814 = vld [vmem:[#allocation3 + $0x130] sm:$0xff]
      %v4815 = vld [vmem:[#allocation3 + $0x138] sm:$0xff]
      %v4816 = vld [vmem:[#allocation3 + $0x140] sm:$0xff]
      %v4817 = vld [vmem:[#allocation3 + $0x148] sm:$0xff]
      %v4818 = vld [vmem:[#allocation3 + $0x150] sm:$0xff]
      %v4819 = vld [vmem:[#allocation3 + $0x158] sm:$0xff]
      %v4820 = vld [vmem:[#allocation3 + $0x160] sm:$0xff]
      %v4821 = vld [vmem:[#allocation3 + $0x168] sm:$0xff]
      %v4822 = vld [vmem:[#allocation3 + $0x170] sm:$0xff]
      %s4823 = scalar_lea.vmem %s5, 96
      %v4824 = vld [vmem:[%s4823] sm:$0xff]
      %v4825 = vld [vmem:[%s4823 + $0x8] sm:$0xff]
      %v4826 = vld [vmem:[%s4823 + $0x10] sm:$0xff]
      %v4827 = vld [vmem:[%s4823 + $0x18] sm:$0xff]
      %v4829 = vsel %vm3652, %v4777, 0
      %v4832 = vsel %vm3652, %v4778, 0
      %v4835 = vsel %vm3652, %v4779, 0
      %v4838 = vsel %vm3652, %v4780, 0
      %v4841 = vsel %vm3652, %v4781, 0
      %v4844 = vsel %vm3652, %v4782, 0
      %v4847 = vsel %vm3652, %v4783, 0
      %v4850 = vsel %vm3652, %v4784, 0
      %v4853 = vsel %vm3652, %v4785, 0
      %v4856 = vsel %vm3652, %v4786, 0
      %v4859 = vsel %vm3652, %v4787, 0
      %v4862 = vsel %vm3652, %v4788, 0
      %v4865 = vsel %vm3652, %v4789, 0
      %v4868 = vsel %vm3652, %v4790, 0
      %v4871 = vsel %vm3652, %v4791, 0
      %v4874 = vsel %vm3652, %v4792, 0
      %v4877 = vsel %vm3652, %v4793, 0
      %v4880 = vsel %vm3652, %v4794, 0
      %v4883 = vsel %vm3652, %v4795, 0
      %v4886 = vsel %vm3652, %v4796, 0
      %v4889 = vsel %vm3652, %v4797, 0
      %v4892 = vsel %vm3652, %v4798, 0
      %v4895 = vsel %vm3652, %v4799, 0
      %v4898 = vsel %vm3652, %v4800, 0
      %v4901 = vsel %vm3652, %v4801, 0
      %v4904 = vsel %vm3652, %v4802, 0
      %v4907 = vsel %vm3652, %v4803, 0
      %v4910 = vsel %vm3652, %v4804, 0
      %v4913 = vsel %vm3652, %v4805, 0
      %v4916 = vsel %vm3652, %v4806, 0
      %v4919 = vsel %vm3652, %v4807, 0
      %v4922 = vsel %vm3652, %v4808, 0
      %v4925 = vsel %vm3652, %v4809, 0
      %v4928 = vsel %vm3652, %v4810, 0
      %v4931 = vsel %vm3652, %v4811, 0
      %v4934 = vsel %vm3652, %v4812, 0
      %v4937 = vsel %vm3652, %v4813, 0
      %v4940 = vsel %vm3652, %v4814, 0
      %v4943 = vsel %vm3652, %v4815, 0
      %v4946 = vsel %vm3652, %v4816, 0
      %v4949 = vsel %vm3652, %v4817, 0
      %v4952 = vsel %vm3652, %v4818, 0
      %v4955 = vsel %vm3652, %v4819, 0
      %v4958 = vsel %vm3652, %v4820, 0
      %v4961 = vsel %vm3652, %v4821, 0
      %v4964 = vsel %vm3652, %v4822, 0
      %4966 = vmatpush.msra.mxu0 0.0
      %4967 = vmatpush.msra.mxu0 0.0
      %4968 = vmatpush.msra.mxu0 0.0
      %4969 = vmatpush.msra.mxu0 0.0
      %4970 = vmatpush.msra.mxu0 0.0
      %4971 = vmatpush.msra.mxu0 0.0
      %4972 = vmatpush.msra.mxu0 0.0
      %4973 = vmatpush.msra.mxu0 0.0
      %4974 = vmatpush.msra.mxu0 0.0
      %4975 = vmatpush.msra.mxu0 0.0
      %4976 = vmatpush.msra.mxu0 0.0
      %4977 = vmatpush.msra.mxu0 0.0
      %4978 = vmatpush.msra.mxu0 %v4827
      %4979 = vmatpush.msra.mxu0 %v4826
      %4980 = vmatpush.msra.mxu0 %v4825
      %4981 = vmatpush.msra.mxu0 %v4824
      %4982 = vmatmul.f32.gmra.mxu0 %v4829
      %v4983 = vpop.f32.mrf.mxu0
      %v4984 = vadd.f32 0.0, %v4983
      %4985 = vmatmul.f32.gmra.mxu0 %v4832
      %v4986 = vpop.f32.mrf.mxu0
      %v4987 = vadd.f32 0.0, %v4986
      %4988 = vmatmul.f32.gmra.mxu0 %v4835
      %v4989 = vpop.f32.mrf.mxu0
      %v4990 = vadd.f32 0.0, %v4989
      %4991 = vmatmul.f32.gmra.mxu0 %v4838
      %v4992 = vpop.f32.mrf.mxu0
      %v4993 = vadd.f32 0.0, %v4992
      %4994 = vmatmul.f32.gmra.mxu0 %v4841
      %v4995 = vpop.f32.mrf.mxu0
      %v4996 = vadd.f32 0.0, %v4995
      %4997 = vmatmul.f32.gmra.mxu0 %v4844
      %v4998 = vpop.f32.mrf.mxu0
      %v4999 = vadd.f32 0.0, %v4998
      %5000 = vmatmul.f32.gmra.mxu0 %v4847
      %v5001 = vpop.f32.mrf.mxu0
      %v5002 = vadd.f32 0.0, %v5001
      %5003 = vmatmul.f32.gmra.mxu0 %v4850
      %v5004 = vpop.f32.mrf.mxu0
      %v5005 = vadd.f32 0.0, %v5004
      %5006 = vmatmul.f32.gmra.mxu0 %v4853
      %v5007 = vpop.f32.mrf.mxu0
      %v5008 = vadd.f32 0.0, %v5007
      %5009 = vmatmul.f32.gmra.mxu0 %v4856
      %v5010 = vpop.f32.mrf.mxu0
      %v5011 = vadd.f32 0.0, %v5010
      %5012 = vmatmul.f32.gmra.mxu0 %v4859
      %v5013 = vpop.f32.mrf.mxu0
      %v5014 = vadd.f32 0.0, %v5013
      %5015 = vmatmul.f32.gmra.mxu0 %v4862
      %v5016 = vpop.f32.mrf.mxu0
      %v5017 = vadd.f32 0.0, %v5016
      %5018 = vmatmul.f32.gmra.mxu0 %v4865
      %v5019 = vpop.f32.mrf.mxu0
      %v5020 = vadd.f32 0.0, %v5019
      %5021 = vmatmul.f32.gmra.mxu0 %v4868
      %v5022 = vpop.f32.mrf.mxu0
      %v5023 = vadd.f32 0.0, %v5022
      %5024 = vmatmul.f32.gmra.mxu0 %v4871
      %v5025 = vpop.f32.mrf.mxu0
      %v5026 = vadd.f32 0.0, %v5025
      %5027 = vmatmul.f32.gmra.mxu0 %v4874
      %v5028 = vpop.f32.mrf.mxu0
      %v5029 = vadd.f32 0.0, %v5028
      %5030 = vmatmul.f32.gmra.mxu0 %v4877
      %v5031 = vpop.f32.mrf.mxu0
      %v5032 = vadd.f32 0.0, %v5031
      %5033 = vmatmul.f32.gmra.mxu0 %v4880
      %v5034 = vpop.f32.mrf.mxu0
      %v5035 = vadd.f32 0.0, %v5034
      %5036 = vmatmul.f32.gmra.mxu0 %v4883
      %v5037 = vpop.f32.mrf.mxu0
      %v5038 = vadd.f32 0.0, %v5037
      %5039 = vmatmul.f32.gmra.mxu0 %v4886
      %v5040 = vpop.f32.mrf.mxu0
      %v5041 = vadd.f32 0.0, %v5040
      %5042 = vmatmul.f32.gmra.mxu0 %v4889
      %v5043 = vpop.f32.mrf.mxu0
      %v5044 = vadd.f32 0.0, %v5043
      %5045 = vmatmul.f32.gmra.mxu0 %v4892
      %v5046 = vpop.f32.mrf.mxu0
      %v5047 = vadd.f32 0.0, %v5046
      %5048 = vmatmul.f32.gmra.mxu0 %v4895
      %v5049 = vpop.f32.mrf.mxu0
      %v5050 = vadd.f32 0.0, %v5049
      %5051 = vmatmul.f32.gmra.mxu0 %v4898
      %v5052 = vpop.f32.mrf.mxu0
      %v5053 = vadd.f32 0.0, %v5052
      %5054 = vmatmul.f32.gmra.mxu0 %v4901
      %v5055 = vpop.f32.mrf.mxu0
      %v5056 = vadd.f32 0.0, %v5055
      %5057 = vmatmul.f32.gmra.mxu0 %v4904
      %v5058 = vpop.f32.mrf.mxu0
      %v5059 = vadd.f32 0.0, %v5058
      %5060 = vmatmul.f32.gmra.mxu0 %v4907
      %v5061 = vpop.f32.mrf.mxu0
      %v5062 = vadd.f32 0.0, %v5061
      %5063 = vmatmul.f32.gmra.mxu0 %v4910
      %v5064 = vpop.f32.mrf.mxu0
      %v5065 = vadd.f32 0.0, %v5064
      %5066 = vmatmul.f32.gmra.mxu0 %v4913
      %v5067 = vpop.f32.mrf.mxu0
      %v5068 = vadd.f32 0.0, %v5067
      %5069 = vmatmul.f32.gmra.mxu0 %v4916
      %v5070 = vpop.f32.mrf.mxu0
      %v5071 = vadd.f32 0.0, %v5070
      %5072 = vmatmul.f32.gmra.mxu0 %v4919
      %v5073 = vpop.f32.mrf.mxu0
      %v5074 = vadd.f32 0.0, %v5073
      %5075 = vmatmul.f32.gmra.mxu0 %v4922
      %v5076 = vpop.f32.mrf.mxu0
      %v5077 = vadd.f32 0.0, %v5076
      %5078 = vmatmul.f32.gmra.mxu0 %v4925
      %v5079 = vpop.f32.mrf.mxu0
      %v5080 = vadd.f32 0.0, %v5079
      %5081 = vmatmul.f32.gmra.mxu0 %v4928
      %v5082 = vpop.f32.mrf.mxu0
      %v5083 = vadd.f32 0.0, %v5082
      %5084 = vmatmul.f32.gmra.mxu0 %v4931
      %v5085 = vpop.f32.mrf.mxu0
      %v5086 = vadd.f32 0.0, %v5085
      %5087 = vmatmul.f32.gmra.mxu0 %v4934
      %v5088 = vpop.f32.mrf.mxu0
      %v5089 = vadd.f32 0.0, %v5088
      %5090 = vmatmul.f32.gmra.mxu0 %v4937
      %v5091 = vpop.f32.mrf.mxu0
      %v5092 = vadd.f32 0.0, %v5091
      %5093 = vmatmul.f32.gmra.mxu0 %v4940
      %v5094 = vpop.f32.mrf.mxu0
      %v5095 = vadd.f32 0.0, %v5094
      %5096 = vmatmul.f32.gmra.mxu0 %v4943
      %v5097 = vpop.f32.mrf.mxu0
      %v5098 = vadd.f32 0.0, %v5097
      %5099 = vmatmul.f32.gmra.mxu0 %v4946
      %v5100 = vpop.f32.mrf.mxu0
      %v5101 = vadd.f32 0.0, %v5100
      %5102 = vmatmul.f32.gmra.mxu0 %v4949
      %v5103 = vpop.f32.mrf.mxu0
      %v5104 = vadd.f32 0.0, %v5103
      %5105 = vmatmul.f32.gmra.mxu0 %v4952
      %v5106 = vpop.f32.mrf.mxu0
      %v5107 = vadd.f32 0.0, %v5106
      %5108 = vmatmul.f32.gmra.mxu0 %v4955
      %v5109 = vpop.f32.mrf.mxu0
      %v5110 = vadd.f32 0.0, %v5109
      %5111 = vmatmul.f32.gmra.mxu0 %v4958
      %v5112 = vpop.f32.mrf.mxu0
      %v5113 = vadd.f32 0.0, %v5112
      %5114 = vmatmul.f32.gmra.mxu0 %v4961
      %v5115 = vpop.f32.mrf.mxu0
      %v5116 = vadd.f32 0.0, %v5115
      %5117 = vmatmul.f32.gmra.mxu0 %v4964
      %v5118 = vpop.f32.mrf.mxu0
      %v5119 = vadd.f32 0.0, %v5118
      %5120 = vdwg.mxu0
      %v5121 = vadd.f32 %v4731, %v4984
      %v5122 = vadd.f32 %v4732, %v4987
      %v5123 = vadd.f32 %v4733, %v4990
      %v5124 = vadd.f32 %v4734, %v4993
      %v5125 = vadd.f32 %v4735, %v4996
      %v5126 = vadd.f32 %v4736, %v4999
      %v5127 = vadd.f32 %v4737, %v5002
      %v5128 = vadd.f32 %v4738, %v5005
      %v5129 = vadd.f32 %v4739, %v5008
      %v5130 = vadd.f32 %v4740, %v5011
      %v5131 = vadd.f32 %v4741, %v5014
      %v5132 = vadd.f32 %v4742, %v5017
      %v5133 = vadd.f32 %v4743, %v5020
      %v5134 = vadd.f32 %v4744, %v5023
      %v5135 = vadd.f32 %v4745, %v5026
      %v5136 = vadd.f32 %v4746, %v5029
      %v5137 = vadd.f32 %v4747, %v5032
      %v5138 = vadd.f32 %v4748, %v5035
      %v5139 = vadd.f32 %v4749, %v5038
      %v5140 = vadd.f32 %v4750, %v5041
      %v5141 = vadd.f32 %v4751, %v5044
      %v5142 = vadd.f32 %v4752, %v5047
      %v5143 = vadd.f32 %v4753, %v5050
      %v5144 = vadd.f32 %v4754, %v5053
      %v5145 = vadd.f32 %v4755, %v5056
      %v5146 = vadd.f32 %v4756, %v5059
      %v5147 = vadd.f32 %v4757, %v5062
      %v5148 = vadd.f32 %v4758, %v5065
      %v5149 = vadd.f32 %v4759, %v5068
      %v5150 = vadd.f32 %v4760, %v5071
      %v5151 = vadd.f32 %v4761, %v5074
      %v5152 = vadd.f32 %v4762, %v5077
      %v5153 = vadd.f32 %v4763, %v5080
      %v5154 = vadd.f32 %v4764, %v5083
      %v5155 = vadd.f32 %v4765, %v5086
      %v5156 = vadd.f32 %v4766, %v5089
      %v5157 = vadd.f32 %v4767, %v5092
      %v5158 = vadd.f32 %v4768, %v5095
      %v5159 = vadd.f32 %v4769, %v5098
      %v5160 = vadd.f32 %v4770, %v5101
      %v5161 = vadd.f32 %v4771, %v5104
      %v5162 = vadd.f32 %v4772, %v5107
      %v5163 = vadd.f32 %v4773, %v5110
      %v5164 = vadd.f32 %v4774, %v5113
      %v5165 = vadd.f32 %v4775, %v5116
      %v5166 = vadd.f32 %v4776, %v5119
      %v5167 = vld [vmem:[%s6] sm:$0x1]
      %v5169 = vperm.slane %v5167, 0
      %v5171 = vadd.f32 %v5121, %v5169
      %v5172 = vadd.f32 %v5122, %v5169
      %v5173 = vadd.f32 %v5123, %v5169
      %v5174 = vadd.f32 %v5124, %v5169
      %v5175 = vadd.f32 %v5125, %v5169
      %v5176 = vadd.f32 %v5126, %v5169
      %v5177 = vadd.f32 %v5127, %v5169
      %v5178 = vadd.f32 %v5128, %v5169
      %v5179 = vadd.f32 %v5129, %v5169
      %v5180 = vadd.f32 %v5130, %v5169
      %v5181 = vadd.f32 %v5131, %v5169
      %v5182 = vadd.f32 %v5132, %v5169
      %v5183 = vadd.f32 %v5133, %v5169
      %v5184 = vadd.f32 %v5134, %v5169
      %v5185 = vadd.f32 %v5135, %v5169
      %v5186 = vadd.f32 %v5136, %v5169
      %v5187 = vadd.f32 %v5137, %v5169
      %v5188 = vadd.f32 %v5138, %v5169
      %v5189 = vadd.f32 %v5139, %v5169
      %v5190 = vadd.f32 %v5140, %v5169
      %v5191 = vadd.f32 %v5141, %v5169
      %v5192 = vadd.f32 %v5142, %v5169
      %v5193 = vadd.f32 %v5143, %v5169
      %v5194 = vadd.f32 %v5144, %v5169
      %v5195 = vadd.f32 %v5145, %v5169
      %v5196 = vadd.f32 %v5146, %v5169
      %v5197 = vadd.f32 %v5147, %v5169
      %v5198 = vadd.f32 %v5148, %v5169
      %v5199 = vadd.f32 %v5149, %v5169
      %v5200 = vadd.f32 %v5150, %v5169
      %v5201 = vadd.f32 %v5151, %v5169
      %v5202 = vadd.f32 %v5152, %v5169
      %v5203 = vadd.f32 %v5153, %v5169
      %v5204 = vadd.f32 %v5154, %v5169
      %v5205 = vadd.f32 %v5155, %v5169
      %v5206 = vadd.f32 %v5156, %v5169
      %v5207 = vadd.f32 %v5157, %v5169
      %v5208 = vadd.f32 %v5158, %v5169
      %v5209 = vadd.f32 %v5159, %v5169
      %v5210 = vadd.f32 %v5160, %v5169
      %v5211 = vadd.f32 %v5161, %v5169
      %v5212 = vadd.f32 %v5162, %v5169
      %v5213 = vadd.f32 %v5163, %v5169
      %v5214 = vadd.f32 %v5164, %v5169
      %v5215 = vadd.f32 %v5165, %v5169
      %v5216 = vadd.f32 %v5166, %v5169
      %v5217 = vmax.f32 %v5171, 0.0
      %v5218 = vmax.f32 %v5172, 0.0
      %v5219 = vmax.f32 %v5173, 0.0
      %v5220 = vmax.f32 %v5174, 0.0
      %v5221 = vmax.f32 %v5175, 0.0
      %v5222 = vmax.f32 %v5176, 0.0
      %v5223 = vmax.f32 %v5177, 0.0
      %v5224 = vmax.f32 %v5178, 0.0
      %v5225 = vmax.f32 %v5179, 0.0
      %v5226 = vmax.f32 %v5180, 0.0
      %v5227 = vmax.f32 %v5181, 0.0
      %v5228 = vmax.f32 %v5182, 0.0
      %v5229 = vmax.f32 %v5183, 0.0
      %v5230 = vmax.f32 %v5184, 0.0
      %v5231 = vmax.f32 %v5185, 0.0
      %v5232 = vmax.f32 %v5186, 0.0
      %v5233 = vmax.f32 %v5187, 0.0
      %v5234 = vmax.f32 %v5188, 0.0
      %v5235 = vmax.f32 %v5189, 0.0
      %v5236 = vmax.f32 %v5190, 0.0
      %v5237 = vmax.f32 %v5191, 0.0
      %v5238 = vmax.f32 %v5192, 0.0
      %v5239 = vmax.f32 %v5193, 0.0
      %v5240 = vmax.f32 %v5194, 0.0
      %v5241 = vmax.f32 %v5195, 0.0
      %v5242 = vmax.f32 %v5196, 0.0
      %v5243 = vmax.f32 %v5197, 0.0
      %v5244 = vmax.f32 %v5198, 0.0
      %v5245 = vmax.f32 %v5199, 0.0
      %v5246 = vmax.f32 %v5200, 0.0
      %v5247 = vmax.f32 %v5201, 0.0
      %v5248 = vmax.f32 %v5202, 0.0
      %v5249 = vmax.f32 %v5203, 0.0
      %v5250 = vmax.f32 %v5204, 0.0
      %v5251 = vmax.f32 %v5205, 0.0
      %v5252 = vmax.f32 %v5206, 0.0
      %v5253 = vmax.f32 %v5207, 0.0
      %v5254 = vmax.f32 %v5208, 0.0
      %v5255 = vmax.f32 %v5209, 0.0
      %v5256 = vmax.f32 %v5210, 0.0
      %v5257 = vmax.f32 %v5211, 0.0
      %v5258 = vmax.f32 %v5212, 0.0
      %v5259 = vmax.f32 %v5213, 0.0
      %v5260 = vmax.f32 %v5214, 0.0
      %v5261 = vmax.f32 %v5215, 0.0
      %v5262 = vmax.f32 %v5216, 0.0
      %5263 = vst.msk [vmem:[#allocation4] sm:$0xff] %vm3652, %v5217
      %5264 = vst.msk [vmem:[#allocation4 + $0x8] sm:$0xff] %vm3652, %v5218
      %5265 = vst.msk [vmem:[#allocation4 + $0x10] sm:$0xff] %vm3652, %v5219
      %5266 = vst.msk [vmem:[#allocation4 + $0x18] sm:$0xff] %vm3652, %v5220
      %5267 = vst.msk [vmem:[#allocation4 + $0x20] sm:$0xff] %vm3652, %v5221
      %5268 = vst.msk [vmem:[#allocation4 + $0x28] sm:$0xff] %vm3652, %v5222
      %5269 = vst.msk [vmem:[#allocation4 + $0x30] sm:$0xff] %vm3652, %v5223
      %5270 = vst.msk [vmem:[#allocation4 + $0x38] sm:$0xff] %vm3652, %v5224
      %5271 = vst.msk [vmem:[#allocation4 + $0x40] sm:$0xff] %vm3652, %v5225
      %5272 = vst.msk [vmem:[#allocation4 + $0x48] sm:$0xff] %vm3652, %v5226
      %5273 = vst.msk [vmem:[#allocation4 + $0x50] sm:$0xff] %vm3652, %v5227
      %5274 = vst.msk [vmem:[#allocation4 + $0x58] sm:$0xff] %vm3652, %v5228
      %5275 = vst.msk [vmem:[#allocation4 + $0x60] sm:$0xff] %vm3652, %v5229
      %5276 = vst.msk [vmem:[#allocation4 + $0x68] sm:$0xff] %vm3652, %v5230
      %5277 = vst.msk [vmem:[#allocation4 + $0x70] sm:$0xff] %vm3652, %v5231
      %5278 = vst.msk [vmem:[#allocation4 + $0x78] sm:$0xff] %vm3652, %v5232
      %5279 = vst.msk [vmem:[#allocation4 + $0x80] sm:$0xff] %vm3652, %v5233
      %5280 = vst.msk [vmem:[#allocation4 + $0x88] sm:$0xff] %vm3652, %v5234
      %5281 = vst.msk [vmem:[#allocation4 + $0x90] sm:$0xff] %vm3652, %v5235
      %5282 = vst.msk [vmem:[#allocation4 + $0x98] sm:$0xff] %vm3652, %v5236
      %5283 = vst.msk [vmem:[#allocation4 + $0xa0] sm:$0xff] %vm3652, %v5237
      %5284 = vst.msk [vmem:[#allocation4 + $0xa8] sm:$0xff] %vm3652, %v5238
      %5285 = vst.msk [vmem:[#allocation4 + $0xb0] sm:$0xff] %vm3652, %v5239
      %5286 = vst.msk [vmem:[#allocation4 + $0xb8] sm:$0xff] %vm3652, %v5240
      %5287 = vst.msk [vmem:[#allocation4 + $0xc0] sm:$0xff] %vm3652, %v5241
      %5288 = vst.msk [vmem:[#allocation4 + $0xc8] sm:$0xff] %vm3652, %v5242
      %5289 = vst.msk [vmem:[#allocation4 + $0xd0] sm:$0xff] %vm3652, %v5243
      %5290 = vst.msk [vmem:[#allocation4 + $0xd8] sm:$0xff] %vm3652, %v5244
      %5291 = vst.msk [vmem:[#allocation4 + $0xe0] sm:$0xff] %vm3652, %v5245
      %5292 = vst.msk [vmem:[#allocation4 + $0xe8] sm:$0xff] %vm3652, %v5246
      %5293 = vst.msk [vmem:[#allocation4 + $0xf0] sm:$0xff] %vm3652, %v5247
      %5294 = vst.msk [vmem:[#allocation4 + $0xf8] sm:$0xff] %vm3652, %v5248
      %5295 = vst.msk [vmem:[#allocation4 + $0x100] sm:$0xff] %vm3652, %v5249
      %5296 = vst.msk [vmem:[#allocation4 + $0x108] sm:$0xff] %vm3652, %v5250
      %5297 = vst.msk [vmem:[#allocation4 + $0x110] sm:$0xff] %vm3652, %v5251
      %5298 = vst.msk [vmem:[#allocation4 + $0x118] sm:$0xff] %vm3652, %v5252
      %5299 = vst.msk [vmem:[#allocation4 + $0x120] sm:$0xff] %vm3652, %v5253
      %5300 = vst.msk [vmem:[#allocation4 + $0x128] sm:$0xff] %vm3652, %v5254
      %5301 = vst.msk [vmem:[#allocation4 + $0x130] sm:$0xff] %vm3652, %v5255
      %5302 = vst.msk [vmem:[#allocation4 + $0x138] sm:$0xff] %vm3652, %v5256
      %5303 = vst.msk [vmem:[#allocation4 + $0x140] sm:$0xff] %vm3652, %v5257
      %5304 = vst.msk [vmem:[#allocation4 + $0x148] sm:$0xff] %vm3652, %v5258
      %5305 = vst.msk [vmem:[#allocation4 + $0x150] sm:$0xff] %vm3652, %v5259
      %5306 = vst.msk [vmem:[#allocation4 + $0x158] sm:$0xff] %vm3652, %v5260
      %5307 = vst.msk [vmem:[#allocation4 + $0x160] sm:$0xff] %vm3652, %v5261
      %5308 = vst.msk [vmem:[#allocation4 + $0x168] sm:$0xff] %vm3652, %v5262
      %v5309 = vld [vmem:[#allocation4] sm:$0xf]
      %vm5310 = vcmask 257024
      %5311 = vst.msk [vmem:[#allocation5] sm:$0xf] %vm5310, %v5309
      %v5312 = vld [vmem:[#allocation4 + $0x7] sm:$0xf]
      %5313 = vst.msk [vmem:[#allocation5 + $0x4] sm:$0xf] %vm5310, %v5312
      %v5314 = vld [vmem:[#allocation4 + $0xe] sm:$0xf]
      %5315 = vst.msk [vmem:[#allocation5 + $0x8] sm:$0xf] %vm5310, %v5314
      %v5316 = vld [vmem:[#allocation4 + $0x15] sm:$0xf]
      %5317 = vst.msk [vmem:[#allocation5 + $0xc] sm:$0xf] %vm5310, %v5316
      %v5318 = vld [vmem:[#allocation4 + $0x31] sm:$0xf]
      %s5319 = scalar_lea.vmem [#allocation5], 16
      %5320 = vst.msk [vmem:[%s5319] sm:$0xf] %vm5310, %v5318
      %v5321 = vld [vmem:[#allocation4 + $0x38] sm:$0xf]
      %5322 = vst.msk [vmem:[%s5319 + $0x4] sm:$0xf] %vm5310, %v5321
      %v5323 = vld [vmem:[#allocation4 + $0x3f] sm:$0xf]
      %5324 = vst.msk [vmem:[%s5319 + $0x8] sm:$0xf] %vm5310, %v5323
      %v5325 = vld [vmem:[#allocation4 + $0x46] sm:$0xf]
      %5326 = vst.msk [vmem:[%s5319 + $0xc] sm:$0xf] %vm5310, %v5325
      %v5327 = vld [vmem:[#allocation4 + $0x62] sm:$0xf]
      %s5328 = scalar_lea.vmem [#allocation5], 32
      %5329 = vst.msk [vmem:[%s5328] sm:$0xf] %vm5310, %v5327
      %v5330 = vld [vmem:[#allocation4 + $0x69] sm:$0xf]
      %5331 = vst.msk [vmem:[%s5328 + $0x4] sm:$0xf] %vm5310, %v5330
      %v5332 = vld [vmem:[#allocation4 + $0x70] sm:$0xf]
      %5333 = vst.msk [vmem:[%s5328 + $0x8] sm:$0xf] %vm5310, %v5332
      %v5334 = vld [vmem:[#allocation4 + $0x77] sm:$0xf]
      %5335 = vst.msk [vmem:[%s5328 + $0xc] sm:$0xf] %vm5310, %v5334
      %v5336 = vld [vmem:[#allocation4 + $0x93] sm:$0xf]
      %s5337 = scalar_lea.vmem [#allocation5], 48
      %5338 = vst.msk [vmem:[%s5337] sm:$0xf] %vm5310, %v5336
      %v5339 = vld [vmem:[#allocation4 + $0x9a] sm:$0xf]
      %5340 = vst.msk [vmem:[%s5337 + $0x4] sm:$0xf] %vm5310, %v5339
      %v5341 = vld [vmem:[#allocation4 + $0xa1] sm:$0xf]
      %5342 = vst.msk [vmem:[%s5337 + $0x8] sm:$0xf] %vm5310, %v5341
      %v5343 = vld [vmem:[#allocation4 + $0xa8] sm:$0xf]
      %5344 = vst.msk [vmem:[%s5337 + $0xc] sm:$0xf] %vm5310, %v5343
      %v5345 = vld [vmem:[#allocation4 + $0xc4] sm:$0xf]
      %s5346 = scalar_lea.vmem [#allocation5], 64
      %5347 = vst.msk [vmem:[%s5346] sm:$0xf] %vm5310, %v5345
      %v5348 = vld [vmem:[#allocation4 + $0xcb] sm:$0xf]
      %5349 = vst.msk [vmem:[%s5346 + $0x4] sm:$0xf] %vm5310, %v5348
      %v5350 = vld [vmem:[#allocation4 + $0xd2] sm:$0xf]
      %5351 = vst.msk [vmem:[%s5346 + $0x8] sm:$0xf] %vm5310, %v5350
      %v5352 = vld [vmem:[#allocation4 + $0xd9] sm:$0xf]
      %5353 = vst.msk [vmem:[%s5346 + $0xc] sm:$0xf] %vm5310, %v5352
      %v5354 = vld [vmem:[#allocation4 + $0xf5] sm:$0xf]
      %s5355 = scalar_lea.vmem [#allocation5], 80
      %5356 = vst.msk [vmem:[%s5355] sm:$0xf] %vm5310, %v5354
      %v5357 = vld [vmem:[#allocation4 + $0xfc] sm:$0xf]
      %5358 = vst.msk [vmem:[%s5355 + $0x4] sm:$0xf] %vm5310, %v5357
      %v5359 = vld [vmem:[#allocation4 + $0x103] sm:$0xf]
      %5360 = vst.msk [vmem:[%s5355 + $0x8] sm:$0xf] %vm5310, %v5359
      %v5361 = vld [vmem:[#allocation4 + $0x10a] sm:$0xf]
      %5362 = vst.msk [vmem:[%s5355 + $0xc] sm:$0xf] %vm5310, %v5361
      %v5363 = vld [vmem:[#allocation4 + $0x126] sm:$0xf]
      %s5364 = scalar_lea.vmem [#allocation5], 96
      %5365 = vst.msk [vmem:[%s5364] sm:$0xf] %vm5310, %v5363
      %v5366 = vld [vmem:[#allocation4 + $0x12d] sm:$0xf]
      %5367 = vst.msk [vmem:[%s5364 + $0x4] sm:$0xf] %vm5310, %v5366
      %v5368 = vld [vmem:[#allocation4 + $0x134] sm:$0xf]
      %5369 = vst.msk [vmem:[%s5364 + $0x8] sm:$0xf] %vm5310, %v5368
      %v5370 = vld [vmem:[#allocation4 + $0x13b] sm:$0xf]
      %5371 = vst.msk [vmem:[%s5364 + $0xc] sm:$0xf] %vm5310, %v5370
      %v5372 = vld [vmem:[#allocation4 + $0x157] sm:$0xf]
      %s5373 = scalar_lea.vmem [#allocation5], 112
      %5374 = vst.msk [vmem:[%s5373] sm:$0xf] %vm5310, %v5372
      %v5375 = vld [vmem:[#allocation4 + $0x15e] sm:$0xf]
      %5376 = vst.msk [vmem:[%s5373 + $0x4] sm:$0xf] %vm5310, %v5375
      %v5377 = vld [vmem:[#allocation4 + $0x165] sm:$0xf]
      %5378 = vst.msk [vmem:[%s5373 + $0x8] sm:$0xf] %vm5310, %v5377
      %v5379 = vld [vmem:[#allocation4 + $0x16c] sm:$0xf]
      %5380 = vst.msk [vmem:[%s5373 + $0xc] sm:$0xf] %vm5310, %v5379
      %v5381 = vld [vmem:[#allocation5] sm:$0x1]
      %v5382 = vld [vmem:[#allocation5 + $0x10] sm:$0x1]
      %v5383 = vld [vmem:[#allocation5 + $0x20] sm:$0x1]
      %v5384 = vld [vmem:[#allocation5 + $0x30] sm:$0x1]
      %v5385 = vld [vmem:[#allocation5 + $0x40] sm:$0x1]
      %v5386 = vld [vmem:[#allocation5 + $0x50] sm:$0x1]
      %v5387 = vld [vmem:[#allocation5 + $0x60] sm:$0x1]
      %v5388 = vld [vmem:[#allocation5 + $0x70] sm:$0x1]
      %v5389 = vld [vmem:[%s7] sm:$0xff]
      %v5390 = vld [vmem:[%s7 + $0x8] sm:$0xff]
      %v5391 = vld [vmem:[%s7 + $0x10] sm:$0xff]
      %v5392 = vld [vmem:[%s7 + $0x18] sm:$0xff]
      %v5393 = vld [vmem:[#allocation5 + $0x1] sm:$0x1]
      %v5394 = vld [vmem:[#allocation5 + $0x11] sm:$0x1]
      %v5395 = vld [vmem:[#allocation5 + $0x21] sm:$0x1]
      %v5396 = vld [vmem:[#allocation5 + $0x31] sm:$0x1]
      %v5397 = vld [vmem:[#allocation5 + $0x41] sm:$0x1]
      %v5398 = vld [vmem:[#allocation5 + $0x51] sm:$0x1]
      %v5399 = vld [vmem:[#allocation5 + $0x61] sm:$0x1]
      %v5400 = vld [vmem:[#allocation5 + $0x71] sm:$0x1]
      %s5401 = scalar_lea.vmem %s7, 32
      %v5402 = vld [vmem:[%s5401] sm:$0xff]
      %v5403 = vld [vmem:[%s5401 + $0x8] sm:$0xff]
      %v5404 = vld [vmem:[%s5401 + $0x10] sm:$0xff]
      %v5405 = vld [vmem:[%s5401 + $0x18] sm:$0xff]
      %v5414 = vrot.slane %v5394, 7
      %vm5415 = vcmask 1041409
      %v5416 = vsel %vm5415, %v5414, %v5393
      %v5417 = vrot.slane %v5395, 6
      %vm5418 = vcmask 1042434
      %v5419 = vsel %vm5418, %v5417, %v5416
      %v5420 = vrot.slane %v5396, 5
      %vm5421 = vcmask 1043459
      %v5422 = vsel %vm5421, %v5420, %v5419
      %v5423 = vrot.slane %v5397, 4
      %vm5424 = vcmask 1044484
      %v5425 = vsel %vm5424, %v5423, %v5422
      %v5426 = vrot.slane %v5398, 3
      %vm5427 = vcmask 1045509
      %v5428 = vsel %vm5427, %v5426, %v5425
      %v5429 = vrot.slane %v5399, 2
      %vm5430 = vcmask 1046534
      %v5431 = vsel %vm5430, %v5429, %v5428
      %v5432 = vrot.slane %v5400, 1
      %vm5433 = vcmask 1047559
      %v5434 = vsel %vm5433, %v5432, %v5431
      %v5435 = vsel %vm3652, %v5434, 0
      %5437 = vmatpush.msra.mxu0 0.0
      %5438 = vmatpush.msra.mxu0 0.0
      %5439 = vmatpush.msra.mxu0 0.0
      %5440 = vmatpush.msra.mxu0 0.0
      %5441 = vmatpush.msra.mxu0 0.0
      %5442 = vmatpush.msra.mxu0 0.0
      %5443 = vmatpush.msra.mxu0 0.0
      %5444 = vmatpush.msra.mxu0 0.0
      %5445 = vmatpush.msra.mxu0 0.0
      %5446 = vmatpush.msra.mxu0 0.0
      %5447 = vmatpush.msra.mxu0 0.0
      %5448 = vmatpush.msra.mxu0 0.0
      %5449 = vmatpush.msra.mxu0 %v5405
      %5450 = vmatpush.msra.mxu0 %v5404
      %5451 = vmatpush.msra.mxu0 %v5403
      %5452 = vmatpush.msra.mxu0 %v5402
      %5453 = vmatmul.f32.gmra.mxu0 %v5435
      %v5454 = vpop.f32.mrf.mxu0
      %v5455 = vadd.f32 0.0, %v5454
      %5456 = vdwg.mxu0
      %v5465 = vrot.slane %v5382, 7
      %v5466 = vsel %vm5415, %v5465, %v5381
      %v5467 = vrot.slane %v5383, 6
      %v5468 = vsel %vm5418, %v5467, %v5466
      %v5469 = vrot.slane %v5384, 5
      %v5470 = vsel %vm5421, %v5469, %v5468
      %v5471 = vrot.slane %v5385, 4
      %v5472 = vsel %vm5424, %v5471, %v5470
      %v5473 = vrot.slane %v5386, 3
      %v5474 = vsel %vm5427, %v5473, %v5472
      %v5475 = vrot.slane %v5387, 2
      %v5476 = vsel %vm5430, %v5475, %v5474
      %v5477 = vrot.slane %v5388, 1
      %v5478 = vsel %vm5433, %v5477, %v5476
      %v5479 = vsel %vm3652, %v5478, 0
      %5481 = vmatpush.msra.mxu0 0.0
      %5482 = vmatpush.msra.mxu0 0.0
      %5483 = vmatpush.msra.mxu0 0.0
      %5484 = vmatpush.msra.mxu0 0.0
      %5485 = vmatpush.msra.mxu0 0.0
      %5486 = vmatpush.msra.mxu0 0.0
      %5487 = vmatpush.msra.mxu0 0.0
      %5488 = vmatpush.msra.mxu0 0.0
      %5489 = vmatpush.msra.mxu0 0.0
      %5490 = vmatpush.msra.mxu0 0.0
      %5491 = vmatpush.msra.mxu0 0.0
      %5492 = vmatpush.msra.mxu0 0.0
      %5493 = vmatpush.msra.mxu0 %v5392
      %5494 = vmatpush.msra.mxu0 %v5391
      %5495 = vmatpush.msra.mxu0 %v5390
      %5496 = vmatpush.msra.mxu0 %v5389
      %5497 = vmatmul.f32.gmra.mxu0 %v5479
      %v5498 = vpop.f32.mrf.mxu0
      %v5499 = vadd.f32 %v5455, %v5498
      %5500 = vdwg.mxu0
      %v5501 = vld [vmem:[#allocation5 + $0x2] sm:$0x1]
      %v5502 = vld [vmem:[#allocation5 + $0x12] sm:$0x1]
      %v5503 = vld [vmem:[#allocation5 + $0x22] sm:$0x1]
      %v5504 = vld [vmem:[#allocation5 + $0x32] sm:$0x1]
      %v5505 = vld [vmem:[#allocation5 + $0x42] sm:$0x1]
      %v5506 = vld [vmem:[#allocation5 + $0x52] sm:$0x1]
      %v5507 = vld [vmem:[#allocation5 + $0x62] sm:$0x1]
      %v5508 = vld [vmem:[#allocation5 + $0x72] sm:$0x1]
      %s5509 = scalar_lea.vmem %s7, 64
      %v5510 = vld [vmem:[%s5509] sm:$0xff]
      %v5511 = vld [vmem:[%s5509 + $0x8] sm:$0xff]
      %v5512 = vld [vmem:[%s5509 + $0x10] sm:$0xff]
      %v5513 = vld [vmem:[%s5509 + $0x18] sm:$0xff]
      %v5522 = vrot.slane %v5502, 7
      %v5523 = vsel %vm5415, %v5522, %v5501
      %v5524 = vrot.slane %v5503, 6
      %v5525 = vsel %vm5418, %v5524, %v5523
      %v5526 = vrot.slane %v5504, 5
      %v5527 = vsel %vm5421, %v5526, %v5525
      %v5528 = vrot.slane %v5505, 4
      %v5529 = vsel %vm5424, %v5528, %v5527
      %v5530 = vrot.slane %v5506, 3
      %v5531 = vsel %vm5427, %v5530, %v5529
      %v5532 = vrot.slane %v5507, 2
      %v5533 = vsel %vm5430, %v5532, %v5531
      %v5534 = vrot.slane %v5508, 1
      %v5535 = vsel %vm5433, %v5534, %v5533
      %v5536 = vsel %vm3652, %v5535, 0
      %5538 = vmatpush.msra.mxu0 0.0
      %5539 = vmatpush.msra.mxu0 0.0
      %5540 = vmatpush.msra.mxu0 0.0
      %5541 = vmatpush.msra.mxu0 0.0
      %5542 = vmatpush.msra.mxu0 0.0
      %5543 = vmatpush.msra.mxu0 0.0
      %5544 = vmatpush.msra.mxu0 0.0
      %5545 = vmatpush.msra.mxu0 0.0
      %5546 = vmatpush.msra.mxu0 0.0
      %5547 = vmatpush.msra.mxu0 0.0
      %5548 = vmatpush.msra.mxu0 0.0
      %5549 = vmatpush.msra.mxu0 0.0
      %5550 = vmatpush.msra.mxu0 %v5513
      %5551 = vmatpush.msra.mxu0 %v5512
      %5552 = vmatpush.msra.mxu0 %v5511
      %5553 = vmatpush.msra.mxu0 %v5510
      %5554 = vmatmul.f32.gmra.mxu0 %v5536
      %v5555 = vpop.f32.mrf.mxu0
      %v5556 = vadd.f32 0.0, %v5555
      %5557 = vdwg.mxu0
      %v5558 = vadd.f32 %v5499, %v5556
      %v5559 = vld [vmem:[#allocation5 + $0x3] sm:$0x1]
      %v5560 = vld [vmem:[#allocation5 + $0x13] sm:$0x1]
      %v5561 = vld [vmem:[#allocation5 + $0x23] sm:$0x1]
      %v5562 = vld [vmem:[#allocation5 + $0x33] sm:$0x1]
      %v5563 = vld [vmem:[#allocation5 + $0x43] sm:$0x1]
      %v5564 = vld [vmem:[#allocation5 + $0x53] sm:$0x1]
      %v5565 = vld [vmem:[#allocation5 + $0x63] sm:$0x1]
      %v5566 = vld [vmem:[#allocation5 + $0x73] sm:$0x1]
      %s5567 = scalar_lea.vmem %s7, 96
      %v5568 = vld [vmem:[%s5567] sm:$0xff]
      %v5569 = vld [vmem:[%s5567 + $0x8] sm:$0xff]
      %v5570 = vld [vmem:[%s5567 + $0x10] sm:$0xff]
      %v5571 = vld [vmem:[%s5567 + $0x18] sm:$0xff]
      %v5580 = vrot.slane %v5560, 7
      %v5581 = vsel %vm5415, %v5580, %v5559
      %v5582 = vrot.slane %v5561, 6
      %v5583 = vsel %vm5418, %v5582, %v5581
      %v5584 = vrot.slane %v5562, 5
      %v5585 = vsel %vm5421, %v5584, %v5583
      %v5586 = vrot.slane %v5563, 4
      %v5587 = vsel %vm5424, %v5586, %v5585
      %v5588 = vrot.slane %v5564, 3
      %v5589 = vsel %vm5427, %v5588, %v5587
      %v5590 = vrot.slane %v5565, 2
      %v5591 = vsel %vm5430, %v5590, %v5589
      %v5592 = vrot.slane %v5566, 1
      %v5593 = vsel %vm5433, %v5592, %v5591
      %v5594 = vsel %vm3652, %v5593, 0
      %5596 = vmatpush.msra.mxu0 0.0
      %5597 = vmatpush.msra.mxu0 0.0
      %5598 = vmatpush.msra.mxu0 0.0
      %5599 = vmatpush.msra.mxu0 0.0
      %5600 = vmatpush.msra.mxu0 0.0
      %5601 = vmatpush.msra.mxu0 0.0
      %5602 = vmatpush.msra.mxu0 0.0
      %5603 = vmatpush.msra.mxu0 0.0
      %5604 = vmatpush.msra.mxu0 0.0
      %5605 = vmatpush.msra.mxu0 0.0
      %5606 = vmatpush.msra.mxu0 0.0
      %5607 = vmatpush.msra.mxu0 0.0
      %5608 = vmatpush.msra.mxu0 %v5571
      %5609 = vmatpush.msra.mxu0 %v5570
      %5610 = vmatpush.msra.mxu0 %v5569
      %5611 = vmatpush.msra.mxu0 %v5568
      %5612 = vmatmul.f32.gmra.mxu0 %v5594
      %v5613 = vpop.f32.mrf.mxu0
      %v5614 = vadd.f32 0.0, %v5613
      %5615 = vdwg.mxu0
      %v5616 = vadd.f32 %v5558, %v5614
      %v5617 = vld [vmem:[#allocation5 + $0x4] sm:$0x1]
      %v5618 = vld [vmem:[#allocation5 + $0x14] sm:$0x1]
      %v5619 = vld [vmem:[#allocation5 + $0x24] sm:$0x1]
      %v5620 = vld [vmem:[#allocation5 + $0x34] sm:$0x1]
      %v5621 = vld [vmem:[#allocation5 + $0x44] sm:$0x1]
      %v5622 = vld [vmem:[#allocation5 + $0x54] sm:$0x1]
      %v5623 = vld [vmem:[#allocation5 + $0x64] sm:$0x1]
      %v5624 = vld [vmem:[#allocation5 + $0x74] sm:$0x1]
      %s5625 = scalar_lea.vmem %s7, 128
      %v5626 = vld [vmem:[%s5625] sm:$0xff]
      %v5627 = vld [vmem:[%s5625 + $0x8] sm:$0xff]
      %v5628 = vld [vmem:[%s5625 + $0x10] sm:$0xff]
      %v5629 = vld [vmem:[%s5625 + $0x18] sm:$0xff]
      %v5638 = vrot.slane %v5618, 7
      %v5639 = vsel %vm5415, %v5638, %v5617
      %v5640 = vrot.slane %v5619, 6
      %v5641 = vsel %vm5418, %v5640, %v5639
      %v5642 = vrot.slane %v5620, 5
      %v5643 = vsel %vm5421, %v5642, %v5641
      %v5644 = vrot.slane %v5621, 4
      %v5645 = vsel %vm5424, %v5644, %v5643
      %v5646 = vrot.slane %v5622, 3
      %v5647 = vsel %vm5427, %v5646, %v5645
      %v5648 = vrot.slane %v5623, 2
      %v5649 = vsel %vm5430, %v5648, %v5647
      %v5650 = vrot.slane %v5624, 1
      %v5651 = vsel %vm5433, %v5650, %v5649
      %v5652 = vsel %vm3652, %v5651, 0
      %5654 = vmatpush.msra.mxu0 0.0
      %5655 = vmatpush.msra.mxu0 0.0
      %5656 = vmatpush.msra.mxu0 0.0
      %5657 = vmatpush.msra.mxu0 0.0
      %5658 = vmatpush.msra.mxu0 0.0
      %5659 = vmatpush.msra.mxu0 0.0
      %5660 = vmatpush.msra.mxu0 0.0
      %5661 = vmatpush.msra.mxu0 0.0
      %5662 = vmatpush.msra.mxu0 0.0
      %5663 = vmatpush.msra.mxu0 0.0
      %5664 = vmatpush.msra.mxu0 0.0
      %5665 = vmatpush.msra.mxu0 0.0
      %5666 = vmatpush.msra.mxu0 %v5629
      %5667 = vmatpush.msra.mxu0 %v5628
      %5668 = vmatpush.msra.mxu0 %v5627
      %5669 = vmatpush.msra.mxu0 %v5626
      %5670 = vmatmul.f32.gmra.mxu0 %v5652
      %v5671 = vpop.f32.mrf.mxu0
      %v5672 = vadd.f32 0.0, %v5671
      %5673 = vdwg.mxu0
      %v5674 = vadd.f32 %v5616, %v5672
      %v5675 = vld [vmem:[#allocation5 + $0x5] sm:$0x1]
      %v5676 = vld [vmem:[#allocation5 + $0x15] sm:$0x1]
      %v5677 = vld [vmem:[#allocation5 + $0x25] sm:$0x1]
      %v5678 = vld [vmem:[#allocation5 + $0x35] sm:$0x1]
      %v5679 = vld [vmem:[#allocation5 + $0x45] sm:$0x1]
      %v5680 = vld [vmem:[#allocation5 + $0x55] sm:$0x1]
      %v5681 = vld [vmem:[#allocation5 + $0x65] sm:$0x1]
      %v5682 = vld [vmem:[#allocation5 + $0x75] sm:$0x1]
      %s5683 = scalar_lea.vmem %s7, 160
      %v5684 = vld [vmem:[%s5683] sm:$0xff]
      %v5685 = vld [vmem:[%s5683 + $0x8] sm:$0xff]
      %v5686 = vld [vmem:[%s5683 + $0x10] sm:$0xff]
      %v5687 = vld [vmem:[%s5683 + $0x18] sm:$0xff]
      %v5696 = vrot.slane %v5676, 7
      %v5697 = vsel %vm5415, %v5696, %v5675
      %v5698 = vrot.slane %v5677, 6
      %v5699 = vsel %vm5418, %v5698, %v5697
      %v5700 = vrot.slane %v5678, 5
      %v5701 = vsel %vm5421, %v5700, %v5699
      %v5702 = vrot.slane %v5679, 4
      %v5703 = vsel %vm5424, %v5702, %v5701
      %v5704 = vrot.slane %v5680, 3
      %v5705 = vsel %vm5427, %v5704, %v5703
      %v5706 = vrot.slane %v5681, 2
      %v5707 = vsel %vm5430, %v5706, %v5705
      %v5708 = vrot.slane %v5682, 1
      %v5709 = vsel %vm5433, %v5708, %v5707
      %v5710 = vsel %vm3652, %v5709, 0
      %5712 = vmatpush.msra.mxu0 0.0
      %5713 = vmatpush.msra.mxu0 0.0
      %5714 = vmatpush.msra.mxu0 0.0
      %5715 = vmatpush.msra.mxu0 0.0
      %5716 = vmatpush.msra.mxu0 0.0
      %5717 = vmatpush.msra.mxu0 0.0
      %5718 = vmatpush.msra.mxu0 0.0
      %5719 = vmatpush.msra.mxu0 0.0
      %5720 = vmatpush.msra.mxu0 0.0
      %5721 = vmatpush.msra.mxu0 0.0
      %5722 = vmatpush.msra.mxu0 0.0
      %5723 = vmatpush.msra.mxu0 0.0
      %5724 = vmatpush.msra.mxu0 %v5687
      %5725 = vmatpush.msra.mxu0 %v5686
      %5726 = vmatpush.msra.mxu0 %v5685
      %5727 = vmatpush.msra.mxu0 %v5684
      %5728 = vmatmul.f32.gmra.mxu0 %v5710
      %v5729 = vpop.f32.mrf.mxu0
      %v5730 = vadd.f32 0.0, %v5729
      %5731 = vdwg.mxu0
      %v5732 = vadd.f32 %v5674, %v5730
      %v5733 = vld [vmem:[#allocation5 + $0x6] sm:$0x1]
      %v5734 = vld [vmem:[#allocation5 + $0x16] sm:$0x1]
      %v5735 = vld [vmem:[#allocation5 + $0x26] sm:$0x1]
      %v5736 = vld [vmem:[#allocation5 + $0x36] sm:$0x1]
      %v5737 = vld [vmem:[#allocation5 + $0x46] sm:$0x1]
      %v5738 = vld [vmem:[#allocation5 + $0x56] sm:$0x1]
      %v5739 = vld [vmem:[#allocation5 + $0x66] sm:$0x1]
      %v5740 = vld [vmem:[#allocation5 + $0x76] sm:$0x1]
      %s5741 = scalar_lea.vmem %s7, 192
      %v5742 = vld [vmem:[%s5741] sm:$0xff]
      %v5743 = vld [vmem:[%s5741 + $0x8] sm:$0xff]
      %v5744 = vld [vmem:[%s5741 + $0x10] sm:$0xff]
      %v5745 = vld [vmem:[%s5741 + $0x18] sm:$0xff]
      %v5754 = vrot.slane %v5734, 7
      %v5755 = vsel %vm5415, %v5754, %v5733
      %v5756 = vrot.slane %v5735, 6
      %v5757 = vsel %vm5418, %v5756, %v5755
      %v5758 = vrot.slane %v5736, 5
      %v5759 = vsel %vm5421, %v5758, %v5757
      %v5760 = vrot.slane %v5737, 4
      %v5761 = vsel %vm5424, %v5760, %v5759
      %v5762 = vrot.slane %v5738, 3
      %v5763 = vsel %vm5427, %v5762, %v5761
      %v5764 = vrot.slane %v5739, 2
      %v5765 = vsel %vm5430, %v5764, %v5763
      %v5766 = vrot.slane %v5740, 1
      %v5767 = vsel %vm5433, %v5766, %v5765
      %v5768 = vsel %vm3652, %v5767, 0
      %5770 = vmatpush.msra.mxu0 0.0
      %5771 = vmatpush.msra.mxu0 0.0
      %5772 = vmatpush.msra.mxu0 0.0
      %5773 = vmatpush.msra.mxu0 0.0
      %5774 = vmatpush.msra.mxu0 0.0
      %5775 = vmatpush.msra.mxu0 0.0
      %5776 = vmatpush.msra.mxu0 0.0
      %5777 = vmatpush.msra.mxu0 0.0
      %5778 = vmatpush.msra.mxu0 0.0
      %5779 = vmatpush.msra.mxu0 0.0
      %5780 = vmatpush.msra.mxu0 0.0
      %5781 = vmatpush.msra.mxu0 0.0
      %5782 = vmatpush.msra.mxu0 %v5745
      %5783 = vmatpush.msra.mxu0 %v5744
      %5784 = vmatpush.msra.mxu0 %v5743
      %5785 = vmatpush.msra.mxu0 %v5742
      %5786 = vmatmul.f32.gmra.mxu0 %v5768
      %v5787 = vpop.f32.mrf.mxu0
      %v5788 = vadd.f32 0.0, %v5787
      %5789 = vdwg.mxu0
      %v5790 = vadd.f32 %v5732, %v5788
      %v5791 = vld [vmem:[#allocation5 + $0x7] sm:$0x1]
      %v5792 = vld [vmem:[#allocation5 + $0x17] sm:$0x1]
      %v5793 = vld [vmem:[#allocation5 + $0x27] sm:$0x1]
      %v5794 = vld [vmem:[#allocation5 + $0x37] sm:$0x1]
      %v5795 = vld [vmem:[#allocation5 + $0x47] sm:$0x1]
      %v5796 = vld [vmem:[#allocation5 + $0x57] sm:$0x1]
      %v5797 = vld [vmem:[#allocation5 + $0x67] sm:$0x1]
      %v5798 = vld [vmem:[#allocation5 + $0x77] sm:$0x1]
      %s5799 = scalar_lea.vmem %s7, 224
      %v5800 = vld [vmem:[%s5799] sm:$0xff]
      %v5801 = vld [vmem:[%s5799 + $0x8] sm:$0xff]
      %v5802 = vld [vmem:[%s5799 + $0x10] sm:$0xff]
      %v5803 = vld [vmem:[%s5799 + $0x18] sm:$0xff]
      %v5812 = vrot.slane %v5792, 7
      %v5813 = vsel %vm5415, %v5812, %v5791
      %v5814 = vrot.slane %v5793, 6
      %v5815 = vsel %vm5418, %v5814, %v5813
      %v5816 = vrot.slane %v5794, 5
      %v5817 = vsel %vm5421, %v5816, %v5815
      %v5818 = vrot.slane %v5795, 4
      %v5819 = vsel %vm5424, %v5818, %v5817
      %v5820 = vrot.slane %v5796, 3
      %v5821 = vsel %vm5427, %v5820, %v5819
      %v5822 = vrot.slane %v5797, 2
      %v5823 = vsel %vm5430, %v5822, %v5821
      %v5824 = vrot.slane %v5798, 1
      %v5825 = vsel %vm5433, %v5824, %v5823
      %v5826 = vsel %vm3652, %v5825, 0
      %5828 = vmatpush.msra.mxu0 0.0
      %5829 = vmatpush.msra.mxu0 0.0
      %5830 = vmatpush.msra.mxu0 0.0
      %5831 = vmatpush.msra.mxu0 0.0
      %5832 = vmatpush.msra.mxu0 0.0
      %5833 = vmatpush.msra.mxu0 0.0
      %5834 = vmatpush.msra.mxu0 0.0
      %5835 = vmatpush.msra.mxu0 0.0
      %5836 = vmatpush.msra.mxu0 0.0
      %5837 = vmatpush.msra.mxu0 0.0
      %5838 = vmatpush.msra.mxu0 0.0
      %5839 = vmatpush.msra.mxu0 0.0
      %5840 = vmatpush.msra.mxu0 %v5803
      %5841 = vmatpush.msra.mxu0 %v5802
      %5842 = vmatpush.msra.mxu0 %v5801
      %5843 = vmatpush.msra.mxu0 %v5800
      %5844 = vmatmul.f32.gmra.mxu0 %v5826
      %v5845 = vpop.f32.mrf.mxu0
      %v5846 = vadd.f32 0.0, %v5845
      %5847 = vdwg.mxu0
      %v5848 = vadd.f32 %v5790, %v5846
      %v5849 = vld [vmem:[#allocation5 + $0x8] sm:$0x1]
      %v5850 = vld [vmem:[#allocation5 + $0x18] sm:$0x1]
      %v5851 = vld [vmem:[#allocation5 + $0x28] sm:$0x1]
      %v5852 = vld [vmem:[#allocation5 + $0x38] sm:$0x1]
      %v5853 = vld [vmem:[#allocation5 + $0x48] sm:$0x1]
      %v5854 = vld [vmem:[#allocation5 + $0x58] sm:$0x1]
      %v5855 = vld [vmem:[#allocation5 + $0x68] sm:$0x1]
      %v5856 = vld [vmem:[#allocation5 + $0x78] sm:$0x1]
      %s5857 = scalar_lea.vmem %s7, 256
      %v5858 = vld [vmem:[%s5857] sm:$0xff]
      %v5859 = vld [vmem:[%s5857 + $0x8] sm:$0xff]
      %v5860 = vld [vmem:[%s5857 + $0x10] sm:$0xff]
      %v5861 = vld [vmem:[%s5857 + $0x18] sm:$0xff]
      %v5870 = vrot.slane %v5850, 7
      %v5871 = vsel %vm5415, %v5870, %v5849
      %v5872 = vrot.slane %v5851, 6
      %v5873 = vsel %vm5418, %v5872, %v5871
      %v5874 = vrot.slane %v5852, 5
      %v5875 = vsel %vm5421, %v5874, %v5873
      %v5876 = vrot.slane %v5853, 4
      %v5877 = vsel %vm5424, %v5876, %v5875
      %v5878 = vrot.slane %v5854, 3
      %v5879 = vsel %vm5427, %v5878, %v5877
      %v5880 = vrot.slane %v5855, 2
      %v5881 = vsel %vm5430, %v5880, %v5879
      %v5882 = vrot.slane %v5856, 1
      %v5883 = vsel %vm5433, %v5882, %v5881
      %v5884 = vsel %vm3652, %v5883, 0
      %5886 = vmatpush.msra.mxu0 0.0
      %5887 = vmatpush.msra.mxu0 0.0
      %5888 = vmatpush.msra.mxu0 0.0
      %5889 = vmatpush.msra.mxu0 0.0
      %5890 = vmatpush.msra.mxu0 0.0
      %5891 = vmatpush.msra.mxu0 0.0
      %5892 = vmatpush.msra.mxu0 0.0
      %5893 = vmatpush.msra.mxu0 0.0
      %5894 = vmatpush.msra.mxu0 0.0
      %5895 = vmatpush.msra.mxu0 0.0
      %5896 = vmatpush.msra.mxu0 0.0
      %5897 = vmatpush.msra.mxu0 0.0
      %5898 = vmatpush.msra.mxu0 %v5861
      %5899 = vmatpush.msra.mxu0 %v5860
      %5900 = vmatpush.msra.mxu0 %v5859
      %5901 = vmatpush.msra.mxu0 %v5858
      %5902 = vmatmul.f32.gmra.mxu0 %v5884
      %v5903 = vpop.f32.mrf.mxu0
      %v5904 = vadd.f32 0.0, %v5903
      %5905 = vdwg.mxu0
      %v5906 = vadd.f32 %v5848, %v5904
      %v5907 = vld [vmem:[#allocation5 + $0x9] sm:$0x1]
      %v5908 = vld [vmem:[#allocation5 + $0x19] sm:$0x1]
      %v5909 = vld [vmem:[#allocation5 + $0x29] sm:$0x1]
      %v5910 = vld [vmem:[#allocation5 + $0x39] sm:$0x1]
      %v5911 = vld [vmem:[#allocation5 + $0x49] sm:$0x1]
      %v5912 = vld [vmem:[#allocation5 + $0x59] sm:$0x1]
      %v5913 = vld [vmem:[#allocation5 + $0x69] sm:$0x1]
      %v5914 = vld [vmem:[#allocation5 + $0x79] sm:$0x1]
      %s5915 = scalar_lea.vmem %s7, 288
      %v5916 = vld [vmem:[%s5915] sm:$0xff]
      %v5917 = vld [vmem:[%s5915 + $0x8] sm:$0xff]
      %v5918 = vld [vmem:[%s5915 + $0x10] sm:$0xff]
      %v5919 = vld [vmem:[%s5915 + $0x18] sm:$0xff]
      %v5928 = vrot.slane %v5908, 7
      %v5929 = vsel %vm5415, %v5928, %v5907
      %v5930 = vrot.slane %v5909, 6
      %v5931 = vsel %vm5418, %v5930, %v5929
      %v5932 = vrot.slane %v5910, 5
      %v5933 = vsel %vm5421, %v5932, %v5931
      %v5934 = vrot.slane %v5911, 4
      %v5935 = vsel %vm5424, %v5934, %v5933
      %v5936 = vrot.slane %v5912, 3
      %v5937 = vsel %vm5427, %v5936, %v5935
      %v5938 = vrot.slane %v5913, 2
      %v5939 = vsel %vm5430, %v5938, %v5937
      %v5940 = vrot.slane %v5914, 1
      %v5941 = vsel %vm5433, %v5940, %v5939
      %v5942 = vsel %vm3652, %v5941, 0
      %5944 = vmatpush.msra.mxu0 0.0
      %5945 = vmatpush.msra.mxu0 0.0
      %5946 = vmatpush.msra.mxu0 0.0
      %5947 = vmatpush.msra.mxu0 0.0
      %5948 = vmatpush.msra.mxu0 0.0
      %5949 = vmatpush.msra.mxu0 0.0
      %5950 = vmatpush.msra.mxu0 0.0
      %5951 = vmatpush.msra.mxu0 0.0
      %5952 = vmatpush.msra.mxu0 0.0
      %5953 = vmatpush.msra.mxu0 0.0
      %5954 = vmatpush.msra.mxu0 0.0
      %5955 = vmatpush.msra.mxu0 0.0
      %5956 = vmatpush.msra.mxu0 %v5919
      %5957 = vmatpush.msra.mxu0 %v5918
      %5958 = vmatpush.msra.mxu0 %v5917
      %5959 = vmatpush.msra.mxu0 %v5916
      %5960 = vmatmul.f32.gmra.mxu0 %v5942
      %v5961 = vpop.f32.mrf.mxu0
      %v5962 = vadd.f32 0.0, %v5961
      %5963 = vdwg.mxu0
      %v5964 = vadd.f32 %v5906, %v5962
      %v5965 = vld [vmem:[#allocation5 + $0xa] sm:$0x1]
      %v5966 = vld [vmem:[#allocation5 + $0x1a] sm:$0x1]
      %v5967 = vld [vmem:[#allocation5 + $0x2a] sm:$0x1]
      %v5968 = vld [vmem:[#allocation5 + $0x3a] sm:$0x1]
      %v5969 = vld [vmem:[#allocation5 + $0x4a] sm:$0x1]
      %v5970 = vld [vmem:[#allocation5 + $0x5a] sm:$0x1]
      %v5971 = vld [vmem:[#allocation5 + $0x6a] sm:$0x1]
      %v5972 = vld [vmem:[#allocation5 + $0x7a] sm:$0x1]
      %s5973 = scalar_lea.vmem %s7, 320
      %v5974 = vld [vmem:[%s5973] sm:$0xff]
      %v5975 = vld [vmem:[%s5973 + $0x8] sm:$0xff]
      %v5976 = vld [vmem:[%s5973 + $0x10] sm:$0xff]
      %v5977 = vld [vmem:[%s5973 + $0x18] sm:$0xff]
      %v5986 = vrot.slane %v5966, 7
      %v5987 = vsel %vm5415, %v5986, %v5965
      %v5988 = vrot.slane %v5967, 6
      %v5989 = vsel %vm5418, %v5988, %v5987
      %v5990 = vrot.slane %v5968, 5
      %v5991 = vsel %vm5421, %v5990, %v5989
      %v5992 = vrot.slane %v5969, 4
      %v5993 = vsel %vm5424, %v5992, %v5991
      %v5994 = vrot.slane %v5970, 3
      %v5995 = vsel %vm5427, %v5994, %v5993
      %v5996 = vrot.slane %v5971, 2
      %v5997 = vsel %vm5430, %v5996, %v5995
      %v5998 = vrot.slane %v5972, 1
      %v5999 = vsel %vm5433, %v5998, %v5997
      %v6000 = vsel %vm3652, %v5999, 0
      %6002 = vmatpush.msra.mxu0 0.0
      %6003 = vmatpush.msra.mxu0 0.0
      %6004 = vmatpush.msra.mxu0 0.0
      %6005 = vmatpush.msra.mxu0 0.0
      %6006 = vmatpush.msra.mxu0 0.0
      %6007 = vmatpush.msra.mxu0 0.0
      %6008 = vmatpush.msra.mxu0 0.0
      %6009 = vmatpush.msra.mxu0 0.0
      %6010 = vmatpush.msra.mxu0 0.0
      %6011 = vmatpush.msra.mxu0 0.0
      %6012 = vmatpush.msra.mxu0 0.0
      %6013 = vmatpush.msra.mxu0 0.0
      %6014 = vmatpush.msra.mxu0 %v5977
      %6015 = vmatpush.msra.mxu0 %v5976
      %6016 = vmatpush.msra.mxu0 %v5975
      %6017 = vmatpush.msra.mxu0 %v5974
      %6018 = vmatmul.f32.gmra.mxu0 %v6000
      %v6019 = vpop.f32.mrf.mxu0
      %v6020 = vadd.f32 0.0, %v6019
      %6021 = vdwg.mxu0
      %v6022 = vadd.f32 %v5964, %v6020
      %v6023 = vld [vmem:[#allocation5 + $0xb] sm:$0x1]
      %v6024 = vld [vmem:[#allocation5 + $0x1b] sm:$0x1]
      %v6025 = vld [vmem:[#allocation5 + $0x2b] sm:$0x1]
      %v6026 = vld [vmem:[#allocation5 + $0x3b] sm:$0x1]
      %v6027 = vld [vmem:[#allocation5 + $0x4b] sm:$0x1]
      %v6028 = vld [vmem:[#allocation5 + $0x5b] sm:$0x1]
      %v6029 = vld [vmem:[#allocation5 + $0x6b] sm:$0x1]
      %v6030 = vld [vmem:[#allocation5 + $0x7b] sm:$0x1]
      %s6031 = scalar_lea.vmem %s7, 352
      %v6032 = vld [vmem:[%s6031] sm:$0xff]
      %v6033 = vld [vmem:[%s6031 + $0x8] sm:$0xff]
      %v6034 = vld [vmem:[%s6031 + $0x10] sm:$0xff]
      %v6035 = vld [vmem:[%s6031 + $0x18] sm:$0xff]
      %v6044 = vrot.slane %v6024, 7
      %v6045 = vsel %vm5415, %v6044, %v6023
      %v6046 = vrot.slane %v6025, 6
      %v6047 = vsel %vm5418, %v6046, %v6045
      %v6048 = vrot.slane %v6026, 5
      %v6049 = vsel %vm5421, %v6048, %v6047
      %v6050 = vrot.slane %v6027, 4
      %v6051 = vsel %vm5424, %v6050, %v6049
      %v6052 = vrot.slane %v6028, 3
      %v6053 = vsel %vm5427, %v6052, %v6051
      %v6054 = vrot.slane %v6029, 2
      %v6055 = vsel %vm5430, %v6054, %v6053
      %v6056 = vrot.slane %v6030, 1
      %v6057 = vsel %vm5433, %v6056, %v6055
      %v6058 = vsel %vm3652, %v6057, 0
      %6060 = vmatpush.msra.mxu0 0.0
      %6061 = vmatpush.msra.mxu0 0.0
      %6062 = vmatpush.msra.mxu0 0.0
      %6063 = vmatpush.msra.mxu0 0.0
      %6064 = vmatpush.msra.mxu0 0.0
      %6065 = vmatpush.msra.mxu0 0.0
      %6066 = vmatpush.msra.mxu0 0.0
      %6067 = vmatpush.msra.mxu0 0.0
      %6068 = vmatpush.msra.mxu0 0.0
      %6069 = vmatpush.msra.mxu0 0.0
      %6070 = vmatpush.msra.mxu0 0.0
      %6071 = vmatpush.msra.mxu0 0.0
      %6072 = vmatpush.msra.mxu0 %v6035
      %6073 = vmatpush.msra.mxu0 %v6034
      %6074 = vmatpush.msra.mxu0 %v6033
      %6075 = vmatpush.msra.mxu0 %v6032
      %6076 = vmatmul.f32.gmra.mxu0 %v6058
      %v6077 = vpop.f32.mrf.mxu0
      %v6078 = vadd.f32 0.0, %v6077
      %6079 = vdwg.mxu0
      %v6080 = vadd.f32 %v6022, %v6078
      %v6081 = vld [vmem:[#allocation5 + $0xc] sm:$0x1]
      %v6082 = vld [vmem:[#allocation5 + $0x1c] sm:$0x1]
      %v6083 = vld [vmem:[#allocation5 + $0x2c] sm:$0x1]
      %v6084 = vld [vmem:[#allocation5 + $0x3c] sm:$0x1]
      %v6085 = vld [vmem:[#allocation5 + $0x4c] sm:$0x1]
      %v6086 = vld [vmem:[#allocation5 + $0x5c] sm:$0x1]
      %v6087 = vld [vmem:[#allocation5 + $0x6c] sm:$0x1]
      %v6088 = vld [vmem:[#allocation5 + $0x7c] sm:$0x1]
      %s6089 = scalar_lea.vmem %s7, 384
      %v6090 = vld [vmem:[%s6089] sm:$0xff]
      %v6091 = vld [vmem:[%s6089 + $0x8] sm:$0xff]
      %v6092 = vld [vmem:[%s6089 + $0x10] sm:$0xff]
      %v6093 = vld [vmem:[%s6089 + $0x18] sm:$0xff]
      %v6102 = vrot.slane %v6082, 7
      %v6103 = vsel %vm5415, %v6102, %v6081
      %v6104 = vrot.slane %v6083, 6
      %v6105 = vsel %vm5418, %v6104, %v6103
      %v6106 = vrot.slane %v6084, 5
      %v6107 = vsel %vm5421, %v6106, %v6105
      %v6108 = vrot.slane %v6085, 4
      %v6109 = vsel %vm5424, %v6108, %v6107
      %v6110 = vrot.slane %v6086, 3
      %v6111 = vsel %vm5427, %v6110, %v6109
      %v6112 = vrot.slane %v6087, 2
      %v6113 = vsel %vm5430, %v6112, %v6111
      %v6114 = vrot.slane %v6088, 1
      %v6115 = vsel %vm5433, %v6114, %v6113
      %v6116 = vsel %vm3652, %v6115, 0
      %6118 = vmatpush.msra.mxu0 0.0
      %6119 = vmatpush.msra.mxu0 0.0
      %6120 = vmatpush.msra.mxu0 0.0
      %6121 = vmatpush.msra.mxu0 0.0
      %6122 = vmatpush.msra.mxu0 0.0
      %6123 = vmatpush.msra.mxu0 0.0
      %6124 = vmatpush.msra.mxu0 0.0
      %6125 = vmatpush.msra.mxu0 0.0
      %6126 = vmatpush.msra.mxu0 0.0
      %6127 = vmatpush.msra.mxu0 0.0
      %6128 = vmatpush.msra.mxu0 0.0
      %6129 = vmatpush.msra.mxu0 0.0
      %6130 = vmatpush.msra.mxu0 %v6093
      %6131 = vmatpush.msra.mxu0 %v6092
      %6132 = vmatpush.msra.mxu0 %v6091
      %6133 = vmatpush.msra.mxu0 %v6090
      %6134 = vmatmul.f32.gmra.mxu0 %v6116
      %v6135 = vpop.f32.mrf.mxu0
      %v6136 = vadd.f32 0.0, %v6135
      %6137 = vdwg.mxu0
      %v6138 = vadd.f32 %v6080, %v6136
      %v6139 = vld [vmem:[#allocation5 + $0xd] sm:$0x1]
      %v6140 = vld [vmem:[#allocation5 + $0x1d] sm:$0x1]
      %v6141 = vld [vmem:[#allocation5 + $0x2d] sm:$0x1]
      %v6142 = vld [vmem:[#allocation5 + $0x3d] sm:$0x1]
      %v6143 = vld [vmem:[#allocation5 + $0x4d] sm:$0x1]
      %v6144 = vld [vmem:[#allocation5 + $0x5d] sm:$0x1]
      %v6145 = vld [vmem:[#allocation5 + $0x6d] sm:$0x1]
      %v6146 = vld [vmem:[#allocation5 + $0x7d] sm:$0x1]
      %s6147 = scalar_lea.vmem %s7, 416
      %v6148 = vld [vmem:[%s6147] sm:$0xff]
      %v6149 = vld [vmem:[%s6147 + $0x8] sm:$0xff]
      %v6150 = vld [vmem:[%s6147 + $0x10] sm:$0xff]
      %v6151 = vld [vmem:[%s6147 + $0x18] sm:$0xff]
      %v6160 = vrot.slane %v6140, 7
      %v6161 = vsel %vm5415, %v6160, %v6139
      %v6162 = vrot.slane %v6141, 6
      %v6163 = vsel %vm5418, %v6162, %v6161
      %v6164 = vrot.slane %v6142, 5
      %v6165 = vsel %vm5421, %v6164, %v6163
      %v6166 = vrot.slane %v6143, 4
      %v6167 = vsel %vm5424, %v6166, %v6165
      %v6168 = vrot.slane %v6144, 3
      %v6169 = vsel %vm5427, %v6168, %v6167
      %v6170 = vrot.slane %v6145, 2
      %v6171 = vsel %vm5430, %v6170, %v6169
      %v6172 = vrot.slane %v6146, 1
      %v6173 = vsel %vm5433, %v6172, %v6171
      %v6174 = vsel %vm3652, %v6173, 0
      %6176 = vmatpush.msra.mxu0 0.0
      %6177 = vmatpush.msra.mxu0 0.0
      %6178 = vmatpush.msra.mxu0 0.0
      %6179 = vmatpush.msra.mxu0 0.0
      %6180 = vmatpush.msra.mxu0 0.0
      %6181 = vmatpush.msra.mxu0 0.0
      %6182 = vmatpush.msra.mxu0 0.0
      %6183 = vmatpush.msra.mxu0 0.0
      %6184 = vmatpush.msra.mxu0 0.0
      %6185 = vmatpush.msra.mxu0 0.0
      %6186 = vmatpush.msra.mxu0 0.0
      %6187 = vmatpush.msra.mxu0 0.0
      %6188 = vmatpush.msra.mxu0 %v6151
      %6189 = vmatpush.msra.mxu0 %v6150
      %6190 = vmatpush.msra.mxu0 %v6149
      %6191 = vmatpush.msra.mxu0 %v6148
      %6192 = vmatmul.f32.gmra.mxu0 %v6174
      %v6193 = vpop.f32.mrf.mxu0
      %v6194 = vadd.f32 0.0, %v6193
      %6195 = vdwg.mxu0
      %v6196 = vadd.f32 %v6138, %v6194
      %v6197 = vld [vmem:[#allocation5 + $0xe] sm:$0x1]
      %v6198 = vld [vmem:[#allocation5 + $0x1e] sm:$0x1]
      %v6199 = vld [vmem:[#allocation5 + $0x2e] sm:$0x1]
      %v6200 = vld [vmem:[#allocation5 + $0x3e] sm:$0x1]
      %v6201 = vld [vmem:[#allocation5 + $0x4e] sm:$0x1]
      %v6202 = vld [vmem:[#allocation5 + $0x5e] sm:$0x1]
      %v6203 = vld [vmem:[#allocation5 + $0x6e] sm:$0x1]
      %v6204 = vld [vmem:[#allocation5 + $0x7e] sm:$0x1]
      %s6205 = scalar_lea.vmem %s7, 448
      %v6206 = vld [vmem:[%s6205] sm:$0xff]
      %v6207 = vld [vmem:[%s6205 + $0x8] sm:$0xff]
      %v6208 = vld [vmem:[%s6205 + $0x10] sm:$0xff]
      %v6209 = vld [vmem:[%s6205 + $0x18] sm:$0xff]
      %v6218 = vrot.slane %v6198, 7
      %v6219 = vsel %vm5415, %v6218, %v6197
      %v6220 = vrot.slane %v6199, 6
      %v6221 = vsel %vm5418, %v6220, %v6219
      %v6222 = vrot.slane %v6200, 5
      %v6223 = vsel %vm5421, %v6222, %v6221
      %v6224 = vrot.slane %v6201, 4
      %v6225 = vsel %vm5424, %v6224, %v6223
      %v6226 = vrot.slane %v6202, 3
      %v6227 = vsel %vm5427, %v6226, %v6225
      %v6228 = vrot.slane %v6203, 2
      %v6229 = vsel %vm5430, %v6228, %v6227
      %v6230 = vrot.slane %v6204, 1
      %v6231 = vsel %vm5433, %v6230, %v6229
      %v6232 = vsel %vm3652, %v6231, 0
      %6234 = vmatpush.msra.mxu0 0.0
      %6235 = vmatpush.msra.mxu0 0.0
      %6236 = vmatpush.msra.mxu0 0.0
      %6237 = vmatpush.msra.mxu0 0.0
      %6238 = vmatpush.msra.mxu0 0.0
      %6239 = vmatpush.msra.mxu0 0.0
      %6240 = vmatpush.msra.mxu0 0.0
      %6241 = vmatpush.msra.mxu0 0.0
      %6242 = vmatpush.msra.mxu0 0.0
      %6243 = vmatpush.msra.mxu0 0.0
      %6244 = vmatpush.msra.mxu0 0.0
      %6245 = vmatpush.msra.mxu0 0.0
      %6246 = vmatpush.msra.mxu0 %v6209
      %6247 = vmatpush.msra.mxu0 %v6208
      %6248 = vmatpush.msra.mxu0 %v6207
      %6249 = vmatpush.msra.mxu0 %v6206
      %6250 = vmatmul.f32.gmra.mxu0 %v6232
      %v6251 = vpop.f32.mrf.mxu0
      %v6252 = vadd.f32 0.0, %v6251
      %6253 = vdwg.mxu0
      %v6254 = vadd.f32 %v6196, %v6252
      %v6255 = vld [vmem:[#allocation5 + $0xf] sm:$0x1]
      %v6256 = vld [vmem:[#allocation5 + $0x1f] sm:$0x1]
      %v6257 = vld [vmem:[#allocation5 + $0x2f] sm:$0x1]
      %v6258 = vld [vmem:[#allocation5 + $0x3f] sm:$0x1]
      %v6259 = vld [vmem:[#allocation5 + $0x4f] sm:$0x1]
      %v6260 = vld [vmem:[#allocation5 + $0x5f] sm:$0x1]
      %v6261 = vld [vmem:[#allocation5 + $0x6f] sm:$0x1]
      %v6262 = vld [vmem:[#allocation5 + $0x7f] sm:$0x1]
      %s6263 = scalar_lea.vmem %s7, 480
      %v6264 = vld [vmem:[%s6263] sm:$0xff]
      %v6265 = vld [vmem:[%s6263 + $0x8] sm:$0xff]
      %v6266 = vld [vmem:[%s6263 + $0x10] sm:$0xff]
      %v6267 = vld [vmem:[%s6263 + $0x18] sm:$0xff]
      %v6276 = vrot.slane %v6256, 7
      %v6277 = vsel %vm5415, %v6276, %v6255
      %v6278 = vrot.slane %v6257, 6
      %v6279 = vsel %vm5418, %v6278, %v6277
      %v6280 = vrot.slane %v6258, 5
      %v6281 = vsel %vm5421, %v6280, %v6279
      %v6282 = vrot.slane %v6259, 4
      %v6283 = vsel %vm5424, %v6282, %v6281
      %v6284 = vrot.slane %v6260, 3
      %v6285 = vsel %vm5427, %v6284, %v6283
      %v6286 = vrot.slane %v6261, 2
      %v6287 = vsel %vm5430, %v6286, %v6285
      %v6288 = vrot.slane %v6262, 1
      %v6289 = vsel %vm5433, %v6288, %v6287
      %v6290 = vsel %vm3652, %v6289, 0
      %6292 = vmatpush.msra.mxu0 0.0
      %6293 = vmatpush.msra.mxu0 0.0
      %6294 = vmatpush.msra.mxu0 0.0
      %6295 = vmatpush.msra.mxu0 0.0
      %6296 = vmatpush.msra.mxu0 0.0
      %6297 = vmatpush.msra.mxu0 0.0
      %6298 = vmatpush.msra.mxu0 0.0
      %6299 = vmatpush.msra.mxu0 0.0
      %6300 = vmatpush.msra.mxu0 0.0
      %6301 = vmatpush.msra.mxu0 0.0
      %6302 = vmatpush.msra.mxu0 0.0
      %6303 = vmatpush.msra.mxu0 0.0
      %6304 = vmatpush.msra.mxu0 %v6267
      %6305 = vmatpush.msra.mxu0 %v6266
      %6306 = vmatpush.msra.mxu0 %v6265
      %6307 = vmatpush.msra.mxu0 %v6264
      %6308 = vmatmul.f32.gmra.mxu0 %v6290
      %v6309 = vpop.f32.mrf.mxu0
      %v6310 = vadd.f32 0.0, %v6309
      %6311 = vdwg.mxu0
      %v6312 = vadd.f32 %v6254, %v6310
      %v6313 = vld [vmem:[%s8] sm:$0x1]
      %v6315 = vperm.slane %v6313, 0
      %v6317 = vadd.f32 %v6312, %v6315
      %v6318 = vmax.f32 %v6317, 0.0
      %v6319 = vld [vmem:[%s9] sm:$0xff]
      %v6320 = vld [vmem:[%s9 + $0x8] sm:$0xff]
      %v6321 = vld [vmem:[%s9 + $0x10] sm:$0xff]
      %v6322 = vld [vmem:[%s9 + $0x18] sm:$0xff]
      %v6323 = vld [vmem:[%s9 + $0x20] sm:$0xff]
      %v6324 = vld [vmem:[%s9 + $0x28] sm:$0xff]
      %v6325 = vld [vmem:[%s9 + $0x30] sm:$0xff]
      %v6326 = vld [vmem:[%s9 + $0x38] sm:$0xff]
      %v6327 = vld [vmem:[%s10] sm:$0x1]
      %v6329 = vperm.slane %v6327, 0
      %vm6331 = vcmask 523264
      %v6333 = vsel %vm6331, %v6318, 0
      %6335 = vmatpush.msra.mxu0 0.0
      %6336 = vmatpush.msra.mxu0 0.0
      %6337 = vmatpush.msra.mxu0 0.0
      %6338 = vmatpush.msra.mxu0 0.0
      %6339 = vmatpush.msra.mxu0 0.0
      %6340 = vmatpush.msra.mxu0 0.0
      %6341 = vmatpush.msra.mxu0 0.0
      %6342 = vmatpush.msra.mxu0 0.0
      %6343 = vmatpush.msra.mxu0 %v6326
      %6344 = vmatpush.msra.mxu0 %v6325
      %6345 = vmatpush.msra.mxu0 %v6324
      %6346 = vmatpush.msra.mxu0 %v6323
      %6347 = vmatpush.msra.mxu0 %v6322
      %6348 = vmatpush.msra.mxu0 %v6321
      %6349 = vmatpush.msra.mxu0 %v6320
      %6350 = vmatpush.msra.mxu0 %v6319
      %6351 = vmatmul.f32.gmra.mxu0 %v6333
      %v6352 = vpop.f32.mrf.mxu0
      %v6353 = vadd.f32 %v6329, %v6352
      %6354 = vdwg.mxu0
      %vm6355 = vcmask 48128
      %6356 = vst.msk [vmem:[%s386] sm:$0xff] %vm6355, %v6353
      %p6357 = scmp.lt.s32.totalorder %s22, 1
      %s6358 = scalar_select %p6357, %s22, 1
      %s6359 = smul.addr %s6358, 8
      %s6360 = scalar_lea.vmem %s11, %s6359
      // Predicated region
      $region65: #{minigrid_formula_dqn_forward.1} parent=63 // pred_check
        %p6361 = pneg %p276
      $region66: #{minigrid_formula_dqn_forward.1} parent=63 // pred_check_branch
        %6363 = sbr.rel (%p6361) target = $region68
      $region67: #{minigrid_formula_dqn_forward.1} parent=63 // pred_region
        _
      $region68: #{minigrid_formula_dqn_forward.1} parent=63 // pred_fallthru
        _
    $region64: #{minigrid_formula_dqn_forward.1} parent=5 // pred_fallthru
      _
    %p6364 = scmp.le.s32.totalorder 2, %s17
    // Predicated region
    $region69: #{minigrid_formula_dqn_forward.1} parent=5 // pred_check
      %p6365 = pneg %p6364
    $region70: #{minigrid_formula_dqn_forward.1} parent=5 // pred_check_branch
      %6367 = sbr.rel (%p6365) target = $region72
    $region71: #{minigrid_formula_dqn_forward.1} parent=5 // pred_region
      %s6368 = ssub.s32 %s17, 2
      // Predicated region
      $region73: #{minigrid_formula_dqn_forward.1} parent=71 // pred_check
        %p6369 = pneg %p282
      $region74: #{minigrid_formula_dqn_forward.1} parent=71 // pred_check_branch
        %6371 = sbr.rel (%p6369) target = $region76
      $region75: #{minigrid_formula_dqn_forward.1} parent=71 // pred_region
        %p6372 = scmp.lt.s32.totalorder %s23, 1
        %s6373 = scalar_select %p6372, %s23, 1
        %s6374 = smul.addr %s6373, 8
        %s6375 = scalar_lea.vmem %s11, %s6374
      $region76: #{minigrid_formula_dqn_forward.1} parent=71 // pred_fallthru
        _
    $region72: #{minigrid_formula_dqn_forward.1} parent=5 // pred_fallthru
      _
  $region6: #{minigrid_formula_dqn_forward.1} parent=0 // loop_footer
    %s21 = sadd.s32 1, %s17
  $region7: #{minigrid_formula_dqn_forward.1} parent=0 // loop_footer_branch
    %16 = sbr.rel target = $region3
  $region8: #{minigrid_formula_dqn_forward.1} parent=0 // loop_exit
    _

</llo_original>
